<compile_context>
chip_gen: v7x
topology: tpu7x:2x2x1
jax: 0.10.0
libtpu: 0.0.40
codegen_flags: <defaults>
</compile_context>

<pallas_src>
import numpy as np
import jax
import jax.numpy as jnp
from jax.experimental import pallas as pl
from jax.experimental.pallas import tpu as pltpu

# ----- configuration (small test shapes consistent with the module) ---------
B, C, H, W = 2, 4, 16, 16     # image batch / channels / spatial
P = 12                        # portion_dim
D = 128                       # latent_dim (module default 512; small here)
HP = 32                       # portion-encoder hidden dim
NH, HD = 4, 32                # attention heads / head dim (NH * HD == D)
HC = 64                       # classifier hidden dim
NC = 4                        # number of touch classes
OUT_PAD = 128                 # lane-padded classifier output width
EPS = 1e-5                    # LayerNorm eps (PyTorch default)


def _gelu(x):
    # TODO(synk): PyTorch nn.GELU defaults to the exact erf form; the tanh
    # approximation is used here (and in the reference) for TPU-friendliness.
    return jax.nn.gelu(x, approximate=True)


# ----------------------------- Pallas kernel --------------------------------
def galata_kernel(img_ref, por_ref,
                  wv1_ref, bv1_ref, wv2_ref, bv2_ref,
                  wp1_ref, bp1_ref, wp2_ref, bp2_ref,
                  gen_ref, ben_ref,
                  wqkv_ref, bqkv_ref, wo_ref, bo_ref,
                  gn_ref, bn_ref,
                  wc1_ref, bc1_ref, wc2_ref, bc2_ref,
                  out_ref):
    f32 = jnp.float32

    # ---- image encoder (CustomIbvisEncoder stand-in): GAP + 2-layer MLP ----
    pooled = jnp.mean(img_ref[...], axis=-1)                          # (B, C)
    hv = _gelu(jnp.dot(pooled, wv1_ref[...],
                       preferred_element_type=f32) + bv1_ref[...])
    vision = jnp.dot(hv, wv2_ref[...],
                     preferred_element_type=f32) + bv2_ref[...]       # (B, D)

    # ---- portion encoder (SimpleGELUEAE.encoder stand-in) ----
    hp = _gelu(jnp.dot(por_ref[...], wp1_ref[...],
                       preferred_element_type=f32) + bp1_ref[...])
    por = jnp.dot(hp, wp2_ref[...],
                  preferred_element_type=f32) + bp2_ref[...]          # (B, D)

    # ---- encoder_normalize: LayerNorm over latent dim ----
    mu = jnp.mean(por, axis=-1, keepdims=True)
    var = jnp.mean((por - mu) ** 2, axis=-1, keepdims=True)
    por = (por - mu) * jax.lax.rsqrt(var + EPS) * gen_ref[...] + ben_ref[...]

    # ---- outer-product embedding for the whole batch (VPU, no K=1 matmul) --
    # embed[b, i, j] = vision[b, i] * por[b, j]
    por_b = jnp.broadcast_to(por[:, None, :], (B, D, D))      # [b,i,j]=por[b,j]
    vis_b = jnp.transpose(jnp.broadcast_to(vision[:, None, :], (B, D, D)),
                          (0, 2, 1))                          # [b,i,j]=vision[b,i]
    embed2d = (vis_b * por_b).reshape(B * D, D)               # (B*D, D)

    # ---- multi-head self-attention over the D "tokens" (batched B & heads) -
    qkv = jnp.dot(embed2d, wqkv_ref[...],
                  preferred_element_type=f32) + bqkv_ref[...]         # (B*D, 3D)
    scale = 1.0 / np.sqrt(float(HD))
    q = qkv[:, 0 * D:1 * D] * scale       # fold 1/sqrt(HD) into q, not scores
    k = qkv[:, 1 * D:2 * D]
    v = qkv[:, 2 * D:3 * D]

    def split_heads_t(x):
        # (B*D, D) -> (B*NH, HD, D): head-features on sublanes, tokens on lanes
        xt = jnp.transpose(x.reshape(B, D, D), (0, 2, 1))     # (B, D_feat, D_tok)
        return xt.reshape(B * NH, HD, D)

    qt = split_heads_t(q)                                     # (B*NH, HD, D)
    kt = split_heads_t(k)
    vt = split_heads_t(v)
    qn = jnp.transpose(qt, (0, 2, 1))                         # (B*NH, D, HD)

    # scores[g, i, j] = sum_c q[g, i, c] * k[g, j, c]
    s = jax.lax.dot_general(qn, kt, (((2,), (1,)), ((0,), (0,))),
                            preferred_element_type=f32)       # (B*NH, D, D)
    s = s - jnp.max(s, axis=-1, keepdims=True)
    e = jnp.exp(s)
    a = e * pl.reciprocal(jnp.sum(e, axis=-1, keepdims=True), approx=True)
    # o^T[g, c, i] = sum_j v[g, j, c] * a[g, i, j]   (kept transposed -> dense)
    ot = jax.lax.dot_general(vt, a, (((2,), (2,)), ((0,), (0,))),
                             preferred_element_type=f32)      # (B*NH, HD, D)
    attn = jnp.transpose(ot.reshape(B, D, D), (0, 2, 1)).reshape(B * D, D)
    attn = jnp.dot(attn, wo_ref[...],
                   preferred_element_type=f32) + bo_ref[...]          # (B*D, D)

    # ---- residual + LayerNorm ("normalize"), whole batch ----
    x = embed2d + attn
    mu2 = jnp.mean(x, axis=-1, keepdims=True)
    var2 = jnp.mean((x - mu2) ** 2, axis=-1, keepdims=True)
    x = (x - mu2) * jax.lax.rsqrt(var2 + EPS) * gn_ref[...] + bn_ref[...]

    # ---- mean pool over tokens + 2-layer classifier head (padded lanes) ----
    tok = jnp.mean(x.reshape(B, D, D), axis=1)                        # (B, D)
    h2 = _gelu(jnp.dot(tok, wc1_ref[...],
                       preferred_element_type=f32) + bc1_ref[...])
    out_ref[...] = jnp.dot(h2, wc2_ref[...],
                           preferred_element_type=f32) + bc2_ref[...]  # (B, 128)


# ------------------------------ parameters ----------------------------------
def _w(key, shape, fan_in):
    return (jax.random.normal(key, shape, jnp.float32) /
            np.sqrt(float(fan_in))).astype(jnp.float32)


def _b(key, n):
    return (0.01 * jax.random.normal(key, (1, n), jnp.float32)).astype(jnp.float32)


def make_shared_params(seed):
    ks = jax.random.split(jax.random.PRNGKey(seed), 8)
    return dict(
        wv1=_w(ks[0], (C, D), C),    bv1=_b(ks[1], D),
        wv2=_w(ks[2], (D, D), D),    bv2=_b(ks[3], D),
        wp1=_w(ks[4], (P, HP), P),   bp1=_b(ks[5], HP),
        wp2=_w(ks[6], (HP, D), HP),  bp2=_b(ks[7], D),
        gen=jnp.ones((1, D), jnp.float32),
        ben=jnp.zeros((1, D), jnp.float32),
    )


def make_classifier_params(seed):
    ks = jax.random.split(jax.random.PRNGKey(seed), 8)
    return dict(
        wqkv=_w(ks[0], (D, 3 * D), D), bqkv=_b(ks[1], 3 * D),
        wo=_w(ks[2], (D, D), D),       bo=_b(ks[3], D),
        gn=jnp.ones((1, D), jnp.float32),
        bn=jnp.zeros((1, D), jnp.float32),
        wc1=_w(ks[4], (D, HC), D),     bc1=_b(ks[5], HC),
        wc2=_w(ks[6], (HC, NC), HC),   bc2=_b(ks[7], NC),
    )


# ------------------------------- wrapper -------------------------------------
def galata_forward(image, portion, touch, shared, classifiers):
    cls = classifiers[touch]                         # host-side dict dispatch
    img_flat = image.reshape(B, C, H * W).astype(jnp.float32)

    # Zero-pad the classifier output projection to 128 lanes so the kernel's
    # final store is a single unmasked lane-dense write; slice back below.
    wc2p = jnp.zeros((HC, OUT_PAD), jnp.float32).at[:, :NC].set(cls['wc2'])
    bc2p = jnp.zeros((1, OUT_PAD), jnp.float32).at[:, :NC].set(cls['bc2'])

    args = [img_flat, portion.astype(jnp.float32),
            shared['wv1'], shared['bv1'], shared['wv2'], shared['bv2'],
            shared['wp1'], shared['bp1'], shared['wp2'], shared['bp2'],
            shared['gen'], shared['ben'],
            cls['wqkv'], cls['bqkv'], cls['wo'], cls['bo'],
            cls['gn'], cls['bn'],
            cls['wc1'], cls['bc1'], wc2p, bc2p]
    vmem = pl.BlockSpec(memory_space=pltpu.MemorySpace.VMEM)
    padded = pl.pallas_call(
        galata_kernel,
        out_shape=jax.ShapeDtypeStruct((B, OUT_PAD), jnp.float32),
        in_specs=[vmem] * len(args),
        out_specs=vmem,
    )(*args)
    return padded[:, :NC]


# --------------------------- pure-JAX reference ------------------------------
def reference_forward(image, portion, sh, cl):
    img_flat = image.reshape(B, C, H * W)
    pooled = jnp.mean(img_flat, axis=-1)
    hv = _gelu(pooled @ sh['wv1'] + sh['bv1'])
    vision = hv @ sh['wv2'] + sh['bv2']
    hp = _gelu(portion @ sh['wp1'] + sh['bp1'])
    por = hp @ sh['wp2'] + sh['bp2']
    mu = jnp.mean(por, -1, keepdims=True)
    var = jnp.var(por, -1, keepdims=True)
    por = (por - mu) / jnp.sqrt(var + EPS) * sh['gen'] + sh['ben']
    embed = vision[:, :, None] * por[:, None, :]                  # (B, D, D)
    qkv = embed @ cl['wqkv'] + cl['bqkv']
    q, k, v = qkv[..., :D], qkv[..., D:2 * D], qkv[..., 2 * D:]
    qh = q.reshape(B, D, NH, HD)
    kh = k.reshape(B, D, NH, HD)
    vh = v.reshape(B, D, NH, HD)
    s = jnp.einsum('bqhd,bkhd->bhqk', qh, kh) / np.sqrt(float(HD))
    a = jax.nn.softmax(s, axis=-1)
    o = jnp.einsum('bhqk,bkhd->bqhd', a, vh).reshape(B, D, D)
    attn = o @ cl['wo'] + cl['bo']
    x = embed + attn
    mu2 = jnp.mean(x, -1, keepdims=True)
    var2 = jnp.var(x, -1, keepdims=True)
    x = (x - mu2) / jnp.sqrt(var2 + EPS) * cl['gn'] + cl['bn']
    tok = jnp.mean(x, axis=1)
    h2 = _gelu(tok @ cl['wc1'] + cl['bc1'])
    return h2 @ cl['wc2'] + cl['bc2']


# --------------------------------- main --------------------------------------
if __name__ == "__main__":
    key = jax.random.PRNGKey(0)
    k_img, k_por = jax.random.split(key)
    image = jax.random.normal(k_img, (B, C, H, W), jnp.float32)
    portion = jax.random.normal(k_por, (B, P), jnp.float32)

    shared = make_shared_params(1)
    classifiers = {name: make_classifier_params(10 + i)
                   for i, name in enumerate(
                       ['softness', 'smoothness', 'thickness', 'flexibility'])}

    out = galata_forward(image, portion, 'softness', shared, classifiers)
    out = jax.block_until_ready(out)

    ref = reference_forward(image, portion, shared, classifiers['softness'])
    assert out.shape == (B, NC)
    # Tolerance relaxed slightly: the only intentional numerical deviation is
    # the EUP approximate reciprocal in the softmax denominator.
    assert np.allclose(np.asarray(out), np.asarray(ref), rtol=1e-2, atol=1e-2), \
        "Pallas kernel output mismatch vs pure-JAX reference"
    print("KERNEL_OK")
</pallas_src>

<mosaic_0001>
module attributes {stable_mosaic.version = 11 : i64} {
  func.func @galata_kernel(%arg0: memref<2x4x256xf32, #tpu.memory_space<vmem>>, %arg1: memref<2x12xf32, #tpu.memory_space<vmem>>, %arg2: memref<4x128xf32, #tpu.memory_space<vmem>>, %arg3: memref<1x128xf32, #tpu.memory_space<vmem>>, %arg4: memref<128x128xf32, #tpu.memory_space<vmem>>, %arg5: memref<1x128xf32, #tpu.memory_space<vmem>>, %arg6: memref<12x32xf32, #tpu.memory_space<vmem>>, %arg7: memref<1x32xf32, #tpu.memory_space<vmem>>, %arg8: memref<32x128xf32, #tpu.memory_space<vmem>>, %arg9: memref<1x128xf32, #tpu.memory_space<vmem>>, %arg10: memref<1x128xf32, #tpu.memory_space<vmem>>, %arg11: memref<1x128xf32, #tpu.memory_space<vmem>>, %arg12: memref<128x384xf32, #tpu.memory_space<vmem>>, %arg13: memref<1x384xf32, #tpu.memory_space<vmem>>, %arg14: memref<128x128xf32, #tpu.memory_space<vmem>>, %arg15: memref<1x128xf32, #tpu.memory_space<vmem>>, %arg16: memref<1x128xf32, #tpu.memory_space<vmem>>, %arg17: memref<1x128xf32, #tpu.memory_space<vmem>>, %arg18: memref<128x64xf32, #tpu.memory_space<vmem>>, %arg19: memref<1x64xf32, #tpu.memory_space<vmem>>, %arg20: memref<64x128xf32, #tpu.memory_space<vmem>>, %arg21: memref<1x128xf32, #tpu.memory_space<vmem>>, %arg22: memref<2x128xf32, #tpu.memory_space<vmem>>) attributes {dimension_semantics = [], scalar_prefetch = 0 : i64, scratch_operands = 0 : i64, tpu.core_type = #tpu.core_type<tc>} {
    %c0 = arith.constant 0 : index
    %c0_0 = arith.constant 0 : index
    %c0_1 = arith.constant 0 : index
    %0 = vector.load %arg0[%c0, %c0_0, %c0_1] : memref<2x4x256xf32, #tpu.memory_space<vmem>>, vector<2x4x256xf32>
    %cst = arith.constant dense<0.000000e+00> : vector<2x4xf32>
    %1 = vector.multi_reduction <add>, %0, %cst [2] : vector<2x4x256xf32> to vector<2x4xf32>
    %cst_2 = arith.constant 2.560000e+02 : f32
    %2 = vector.broadcast %cst_2 : f32 to vector<2x4xf32>
    %3 = arith.divf %1, %2 : vector<2x4xf32>
    %c0_3 = arith.constant 0 : index
    %c0_4 = arith.constant 0 : index
    %4 = vector.load %arg2[%c0_3, %c0_4] : memref<4x128xf32, #tpu.memory_space<vmem>>, vector<4x128xf32>
    %cst_5 = arith.constant dense<0.000000e+00> : vector<2x128xf32>
    %5 = tpu.matmul %3, %4, %cst_5 {dimension_numbers = #tpu.dot_dimension_numbers<[1], [0], [0], [1], [0, 0, 1, 1], [], []>} : vector<2x4xf32>, vector<4x128xf32>, vector<2x128xf32> -> vector<2x128xf32>
    %c0_6 = arith.constant 0 : index
    %c0_7 = arith.constant 0 : index
    %6 = vector.load %arg3[%c0_6, %c0_7] : memref<1x128xf32, #tpu.memory_space<vmem>>, vector<1x128xf32>
    %7 = vector.broadcast %6 : vector<1x128xf32> to vector<2x128xf32>
    %8 = arith.addf %5, %7 : vector<2x128xf32>
    %9 = arith.mulf %8, %8 : vector<2x128xf32>
    %10 = arith.mulf %8, %9 : vector<2x128xf32>
    %cst_8 = arith.constant 4.471500e-02 : f32
    %11 = vector.broadcast %cst_8 : f32 to vector<2x128xf32>
    %12 = arith.mulf %11, %10 : vector<2x128xf32>
    %13 = arith.addf %8, %12 : vector<2x128xf32>
    %cst_9 = arith.constant 0.797884583 : f32
    %14 = vector.broadcast %cst_9 : f32 to vector<2x128xf32>
    %15 = arith.mulf %14, %13 : vector<2x128xf32>
    %16 = math.tanh %15 : vector<2x128xf32>
    %cst_10 = arith.constant 1.000000e+00 : f32
    %17 = vector.broadcast %cst_10 : f32 to vector<2x128xf32>
    %18 = arith.addf %17, %16 : vector<2x128xf32>
    %cst_11 = arith.constant 5.000000e-01 : f32
    %19 = vector.broadcast %cst_11 : f32 to vector<2x128xf32>
    %20 = arith.mulf %19, %18 : vector<2x128xf32>
    %21 = arith.mulf %8, %20 : vector<2x128xf32>
    %c0_12 = arith.constant 0 : index
    %c0_13 = arith.constant 0 : index
    %22 = vector.load %arg4[%c0_12, %c0_13] : memref<128x128xf32, #tpu.memory_space<vmem>>, vector<128x128xf32>
    %cst_14 = arith.constant dense<0.000000e+00> : vector<2x128xf32>
    %23 = tpu.matmul %21, %22, %cst_14 {dimension_numbers = #tpu.dot_dimension_numbers<[1], [0], [0], [1], [0, 0, 1, 1], [], []>} : vector<2x128xf32>, vector<128x128xf32>, vector<2x128xf32> -> vector<2x128xf32>
    %c0_15 = arith.constant 0 : index
    %c0_16 = arith.constant 0 : index
    %24 = vector.load %arg5[%c0_15, %c0_16] : memref<1x128xf32, #tpu.memory_space<vmem>>, vector<1x128xf32>
    %25 = vector.broadcast %24 : vector<1x128xf32> to vector<2x128xf32>
    %26 = arith.addf %23, %25 : vector<2x128xf32>
    %c0_17 = arith.constant 0 : index
    %c0_18 = arith.constant 0 : index
    %27 = vector.load %arg1[%c0_17, %c0_18] : memref<2x12xf32, #tpu.memory_space<vmem>>, vector<2x12xf32>
    %c0_19 = arith.constant 0 : index
    %c0_20 = arith.constant 0 : index
    %28 = vector.load %arg6[%c0_19, %c0_20] : memref<12x32xf32, #tpu.memory_space<vmem>>, vector<12x32xf32>
    %cst_21 = arith.constant dense<0.000000e+00> : vector<2x32xf32>
    %29 = tpu.matmul %27, %28, %cst_21 {dimension_numbers = #tpu.dot_dimension_numbers<[1], [0], [0], [1], [0, 0, 1, 1], [], []>} : vector<2x12xf32>, vector<12x32xf32>, vector<2x32xf32> -> vector<2x32xf32>
    %c0_22 = arith.constant 0 : index
    %c0_23 = arith.constant 0 : index
    %30 = vector.load %arg7[%c0_22, %c0_23] : memref<1x32xf32, #tpu.memory_space<vmem>>, vector<1x32xf32>
    %31 = vector.broadcast %30 : vector<1x32xf32> to vector<2x32xf32>
    %32 = arith.addf %29, %31 : vector<2x32xf32>
    %33 = arith.mulf %32, %32 : vector<2x32xf32>
    %34 = arith.mulf %32, %33 : vector<2x32xf32>
    %cst_24 = arith.constant 4.471500e-02 : f32
    %35 = vector.broadcast %cst_24 : f32 to vector<2x32xf32>
    %36 = arith.mulf %35, %34 : vector<2x32xf32>
    %37 = arith.addf %32, %36 : vector<2x32xf32>
    %cst_25 = arith.constant 0.797884583 : f32
    %38 = vector.broadcast %cst_25 : f32 to vector<2x32xf32>
    %39 = arith.mulf %38, %37 : vector<2x32xf32>
    %40 = math.tanh %39 : vector<2x32xf32>
    %cst_26 = arith.constant 1.000000e+00 : f32
    %41 = vector.broadcast %cst_26 : f32 to vector<2x32xf32>
    %42 = arith.addf %41, %40 : vector<2x32xf32>
    %cst_27 = arith.constant 5.000000e-01 : f32
    %43 = vector.broadcast %cst_27 : f32 to vector<2x32xf32>
    %44 = arith.mulf %43, %42 : vector<2x32xf32>
    %45 = arith.mulf %32, %44 : vector<2x32xf32>
    %c0_28 = arith.constant 0 : index
    %c0_29 = arith.constant 0 : index
    %46 = vector.load %arg8[%c0_28, %c0_29] : memref<32x128xf32, #tpu.memory_space<vmem>>, vector<32x128xf32>
    %cst_30 = arith.constant dense<0.000000e+00> : vector<2x128xf32>
    %47 = tpu.matmul %45, %46, %cst_30 {dimension_numbers = #tpu.dot_dimension_numbers<[1], [0], [0], [1], [0, 0, 1, 1], [], []>} : vector<2x32xf32>, vector<32x128xf32>, vector<2x128xf32> -> vector<2x128xf32>
    %c0_31 = arith.constant 0 : index
    %c0_32 = arith.constant 0 : index
    %48 = vector.load %arg9[%c0_31, %c0_32] : memref<1x128xf32, #tpu.memory_space<vmem>>, vector<1x128xf32>
    %49 = vector.broadcast %48 : vector<1x128xf32> to vector<2x128xf32>
    %50 = arith.addf %47, %49 : vector<2x128xf32>
    %cst_33 = arith.constant dense<0.000000e+00> : vector<2xf32>
    %51 = vector.multi_reduction <add>, %50, %cst_33 [1] : vector<2x128xf32> to vector<2xf32>
    %52 = vector.shape_cast %51 : vector<2xf32> to vector<2x1xf32>
    %cst_34 = arith.constant 1.280000e+02 : f32
    %53 = vector.broadcast %cst_34 : f32 to vector<2x1xf32>
    %54 = arith.divf %52, %53 : vector<2x1xf32>
    %55 = vector.broadcast %54 : vector<2x1xf32> to vector<2x128xf32>
    %56 = arith.subf %50, %55 : vector<2x128xf32>
    %57 = arith.mulf %56, %56 : vector<2x128xf32>
    %cst_35 = arith.constant dense<0.000000e+00> : vector<2xf32>
    %58 = vector.multi_reduction <add>, %57, %cst_35 [1] : vector<2x128xf32> to vector<2xf32>
    %59 = vector.shape_cast %58 : vector<2xf32> to vector<2x1xf32>
    %cst_36 = arith.constant 1.280000e+02 : f32
    %60 = vector.broadcast %cst_36 : f32 to vector<2x1xf32>
    %61 = arith.divf %59, %60 : vector<2x1xf32>
    %62 = vector.broadcast %54 : vector<2x1xf32> to vector<2x128xf32>
    %63 = arith.subf %50, %62 : vector<2x128xf32>
    %cst_37 = arith.constant 9.99999974E-6 : f32
    %64 = vector.broadcast %cst_37 : f32 to vector<2x1xf32>
    %65 = arith.addf %61, %64 : vector<2x1xf32>
    %66 = math.rsqrt %65 : vector<2x1xf32>
    %67 = vector.broadcast %66 : vector<2x1xf32> to vector<2x128xf32>
    %68 = arith.mulf %63, %67 : vector<2x128xf32>
    %c0_38 = arith.constant 0 : index
    %c0_39 = arith.constant 0 : index
    %69 = vector.load %arg10[%c0_38, %c0_39] : memref<1x128xf32, #tpu.memory_space<vmem>>, vector<1x128xf32>
    %70 = vector.broadcast %69 : vector<1x128xf32> to vector<2x128xf32>
    %71 = arith.mulf %68, %70 : vector<2x128xf32>
    %c0_40 = arith.constant 0 : index
    %c0_41 = arith.constant 0 : index
    %72 = vector.load %arg11[%c0_40, %c0_41] : memref<1x128xf32, #tpu.memory_space<vmem>>, vector<1x128xf32>
    %73 = vector.broadcast %72 : vector<1x128xf32> to vector<2x128xf32>
    %74 = arith.addf %71, %73 : vector<2x128xf32>
    %75 = vector.shape_cast %74 : vector<2x128xf32> to vector<2x1x128xf32>
    %76 = vector.shape_cast %75 : vector<2x1x128xf32> to vector<2x1x128xf32>
    %77 = vector.broadcast %76 : vector<2x1x128xf32> to vector<2x128x128xf32>
    %78 = vector.shape_cast %26 : vector<2x128xf32> to vector<2x1x128xf32>
    %79 = vector.shape_cast %78 : vector<2x1x128xf32> to vector<2x1x128xf32>
    %80 = vector.broadcast %79 : vector<2x1x128xf32> to vector<2x128x128xf32>
    %81 = tpu.transpose %80, [0, 2, 1] : vector<2x128x128xf32> -> vector<2x128x128xf32>
    %82 = arith.mulf %81, %77 : vector<2x128x128xf32>
    %83 = vector.shape_cast %82 : vector<2x128x128xf32> to vector<256x128xf32>
    %c0_42 = arith.constant 0 : index
    %c0_43 = arith.constant 0 : index
    %84 = vector.load %arg12[%c0_42, %c0_43] : memref<128x384xf32, #tpu.memory_space<vmem>>, vector<128x384xf32>
    %cst_44 = arith.constant dense<0.000000e+00> : vector<256x384xf32>
    %85 = tpu.matmul %83, %84, %cst_44 {dimension_numbers = #tpu.dot_dimension_numbers<[1], [0], [0], [1], [0, 0, 1, 1], [], []>} : vector<256x128xf32>, vector<128x384xf32>, vector<256x384xf32> -> vector<256x384xf32>
    %c0_45 = arith.constant 0 : index
    %c0_46 = arith.constant 0 : index
    %86 = vector.load %arg13[%c0_45, %c0_46] : memref<1x384xf32, #tpu.memory_space<vmem>>, vector<1x384xf32>
    %87 = vector.broadcast %86 : vector<1x384xf32> to vector<256x384xf32>
    %88 = arith.addf %85, %87 : vector<256x384xf32>
    %89 = vector.extract_strided_slice %88 {offsets = [0, 0], sizes = [256, 128], strides = [1, 1]} : vector<256x384xf32> to vector<256x128xf32>
    %cst_47 = arith.constant 0.176776692 : f32
    %90 = vector.broadcast %cst_47 : f32 to vector<256x128xf32>
    %91 = arith.mulf %89, %90 : vector<256x128xf32>
    %92 = vector.extract_strided_slice %88 {offsets = [0, 128], sizes = [256, 128], strides = [1, 1]} : vector<256x384xf32> to vector<256x128xf32>
    %93 = vector.extract_strided_slice %88 {offsets = [0, 256], sizes = [256, 128], strides = [1, 1]} : vector<256x384xf32> to vector<256x128xf32>
    %94 = vector.shape_cast %91 : vector<256x128xf32> to vector<2x128x128xf32>
    %95 = tpu.transpose %94, [0, 2, 1] : vector<2x128x128xf32> -> vector<2x128x128xf32>
    %96 = vector.shape_cast %95 : vector<2x128x128xf32> to vector<8x32x128xf32>
    %97 = vector.shape_cast %92 : vector<256x128xf32> to vector<2x128x128xf32>
    %98 = tpu.transpose %97, [0, 2, 1] : vector<2x128x128xf32> -> vector<2x128x128xf32>
    %99 = vector.shape_cast %98 : vector<2x128x128xf32> to vector<8x32x128xf32>
    %100 = vector.shape_cast %93 : vector<256x128xf32> to vector<2x128x128xf32>
    %101 = tpu.transpose %100, [0, 2, 1] : vector<2x128x128xf32> -> vector<2x128x128xf32>
    %102 = vector.shape_cast %101 : vector<2x128x128xf32> to vector<8x32x128xf32>
    %103 = tpu.transpose %96, [0, 2, 1] : vector<8x32x128xf32> -> vector<8x128x32xf32>
    %cst_48 = arith.constant dense<0.000000e+00> : vector<8x128x128xf32>
    %104 = tpu.matmul %103, %99, %cst_48 {dimension_numbers = #tpu.dot_dimension_numbers<[2], [1], [1], [2], [0, 0, 0, 1, 1, 2], [0], [0]>} : vector<8x128x32xf32>, vector<8x32x128xf32>, vector<8x128x128xf32> -> vector<8x128x128xf32>
    %cst_49 = arith.constant dense<0xFF800000> : vector<8x128xf32>
    %105 = vector.multi_reduction <maximumf>, %104, %cst_49 [2] : vector<8x128x128xf32> to vector<8x128xf32>
    %106 = vector.shape_cast %105 : vector<8x128xf32> to vector<8x128x1xf32>
    %107 = vector.broadcast %106 : vector<8x128x1xf32> to vector<8x128x128xf32>
    %108 = arith.subf %104, %107 : vector<8x128x128xf32>
    %109 = math.exp %108 : vector<8x128x128xf32>
    %cst_50 = arith.constant dense<0.000000e+00> : vector<8x128xf32>
    %110 = vector.multi_reduction <add>, %109, %cst_50 [2] : vector<8x128x128xf32> to vector<8x128xf32>
    %111 = vector.shape_cast %110 : vector<8x128xf32> to vector<8x128x1xf32>
    %112 = tpu.reciprocal %111 {approx = true} : vector<8x128x1xf32> -> vector<8x128x1xf32>
    %113 = vector.broadcast %112 : vector<8x128x1xf32> to vector<8x128x128xf32>
    %114 = arith.mulf %109, %113 : vector<8x128x128xf32>
    %cst_51 = arith.constant dense<0.000000e+00> : vector<8x32x128xf32>
    %115 = tpu.matmul %102, %114, %cst_51 {dimension_numbers = #tpu.dot_dimension_numbers<[2], [2], [1], [1], [0, 0, 0, 1, 1, 1], [0], [0]>} : vector<8x32x128xf32>, vector<8x128x128xf32>, vector<8x32x128xf32> -> vector<8x32x128xf32>
    %116 = vector.shape_cast %115 : vector<8x32x128xf32> to vector<2x128x128xf32>
    %117 = tpu.transpose %116, [0, 2, 1] : vector<2x128x128xf32> -> vector<2x128x128xf32>
    %118 = vector.shape_cast %117 : vector<2x128x128xf32> to vector<256x128xf32>
    %c0_52 = arith.constant 0 : index
    %c0_53 = arith.constant 0 : index
    %119 = vector.load %arg14[%c0_52, %c0_53] : memref<128x128xf32, #tpu.memory_space<vmem>>, vector<128x128xf32>
    %cst_54 = arith.constant dense<0.000000e+00> : vector<256x128xf32>
    %120 = tpu.matmul %118, %119, %cst_54 {dimension_numbers = #tpu.dot_dimension_numbers<[1], [0], [0], [1], [0, 0, 1, 1], [], []>} : vector<256x128xf32>, vector<128x128xf32>, vector<256x128xf32> -> vector<256x128xf32>
    %c0_55 = arith.constant 0 : index
    %c0_56 = arith.constant 0 : index
    %121 = vector.load %arg15[%c0_55, %c0_56] : memref<1x128xf32, #tpu.memory_space<vmem>>, vector<1x128xf32>
    %122 = vector.broadcast %121 : vector<1x128xf32> to vector<256x128xf32>
    %123 = arith.addf %120, %122 : vector<256x128xf32>
    %124 = arith.addf %83, %123 : vector<256x128xf32>
    %cst_57 = arith.constant dense<0.000000e+00> : vector<256xf32>
    %125 = vector.multi_reduction <add>, %124, %cst_57 [1] : vector<256x128xf32> to vector<256xf32>
    %126 = vector.shape_cast %125 : vector<256xf32> to vector<256x1xf32>
    %cst_58 = arith.constant 1.280000e+02 : f32
    %127 = vector.broadcast %cst_58 : f32 to vector<256x1xf32>
    %128 = arith.divf %126, %127 : vector<256x1xf32>
    %129 = vector.broadcast %128 : vector<256x1xf32> to vector<256x128xf32>
    %130 = arith.subf %124, %129 : vector<256x128xf32>
    %131 = arith.mulf %130, %130 : vector<256x128xf32>
    %cst_59 = arith.constant dense<0.000000e+00> : vector<256xf32>
    %132 = vector.multi_reduction <add>, %131, %cst_59 [1] : vector<256x128xf32> to vector<256xf32>
    %133 = vector.shape_cast %132 : vector<256xf32> to vector<256x1xf32>
    %cst_60 = arith.constant 1.280000e+02 : f32
    %134 = vector.broadcast %cst_60 : f32 to vector<256x1xf32>
    %135 = arith.divf %133, %134 : vector<256x1xf32>
    %136 = vector.broadcast %128 : vector<256x1xf32> to vector<256x128xf32>
    %137 = arith.subf %124, %136 : vector<256x128xf32>
    %cst_61 = arith.constant 9.99999974E-6 : f32
    %138 = vector.broadcast %cst_61 : f32 to vector<256x1xf32>
    %139 = arith.addf %135, %138 : vector<256x1xf32>
    %140 = math.rsqrt %139 : vector<256x1xf32>
    %141 = vector.broadcast %140 : vector<256x1xf32> to vector<256x128xf32>
    %142 = arith.mulf %137, %141 : vector<256x128xf32>
    %c0_62 = arith.constant 0 : index
    %c0_63 = arith.constant 0 : index
    %143 = vector.load %arg16[%c0_62, %c0_63] : memref<1x128xf32, #tpu.memory_space<vmem>>, vector<1x128xf32>
    %144 = vector.broadcast %143 : vector<1x128xf32> to vector<256x128xf32>
    %145 = arith.mulf %142, %144 : vector<256x128xf32>
    %c0_64 = arith.constant 0 : index
    %c0_65 = arith.constant 0 : index
    %146 = vector.load %arg17[%c0_64, %c0_65] : memref<1x128xf32, #tpu.memory_space<vmem>>, vector<1x128xf32>
    %147 = vector.broadcast %146 : vector<1x128xf32> to vector<256x128xf32>
    %148 = arith.addf %145, %147 : vector<256x128xf32>
    %149 = vector.shape_cast %148 : vector<256x128xf32> to vector<2x128x128xf32>
    %cst_66 = arith.constant dense<0.000000e+00> : vector<2x128xf32>
    %150 = vector.multi_reduction <add>, %149, %cst_66 [1] : vector<2x128x128xf32> to vector<2x128xf32>
    %cst_67 = arith.constant 1.280000e+02 : f32
    %151 = vector.broadcast %cst_67 : f32 to vector<2x128xf32>
    %152 = arith.divf %150, %151 : vector<2x128xf32>
    %c0_68 = arith.constant 0 : index
    %c0_69 = arith.constant 0 : index
    %153 = vector.load %arg18[%c0_68, %c0_69] : memref<128x64xf32, #tpu.memory_space<vmem>>, vector<128x64xf32>
    %cst_70 = arith.constant dense<0.000000e+00> : vector<2x64xf32>
    %154 = tpu.matmul %152, %153, %cst_70 {dimension_numbers = #tpu.dot_dimension_numbers<[1], [0], [0], [1], [0, 0, 1, 1], [], []>} : vector<2x128xf32>, vector<128x64xf32>, vector<2x64xf32> -> vector<2x64xf32>
    %c0_71 = arith.constant 0 : index
    %c0_72 = arith.constant 0 : index
    %155 = vector.load %arg19[%c0_71, %c0_72] : memref<1x64xf32, #tpu.memory_space<vmem>>, vector<1x64xf32>
    %156 = vector.broadcast %155 : vector<1x64xf32> to vector<2x64xf32>
    %157 = arith.addf %154, %156 : vector<2x64xf32>
    %158 = arith.mulf %157, %157 : vector<2x64xf32>
    %159 = arith.mulf %157, %158 : vector<2x64xf32>
    %cst_73 = arith.constant 4.471500e-02 : f32
    %160 = vector.broadcast %cst_73 : f32 to vector<2x64xf32>
    %161 = arith.mulf %160, %159 : vector<2x64xf32>
    %162 = arith.addf %157, %161 : vector<2x64xf32>
    %cst_74 = arith.constant 0.797884583 : f32
    %163 = vector.broadcast %cst_74 : f32 to vector<2x64xf32>
    %164 = arith.mulf %163, %162 : vector<2x64xf32>
    %165 = math.tanh %164 : vector<2x64xf32>
    %cst_75 = arith.constant 1.000000e+00 : f32
    %166 = vector.broadcast %cst_75 : f32 to vector<2x64xf32>
    %167 = arith.addf %166, %165 : vector<2x64xf32>
    %cst_76 = arith.constant 5.000000e-01 : f32
    %168 = vector.broadcast %cst_76 : f32 to vector<2x64xf32>
    %169 = arith.mulf %168, %167 : vector<2x64xf32>
    %170 = arith.mulf %157, %169 : vector<2x64xf32>
    %c0_77 = arith.constant 0 : index
    %c0_78 = arith.constant 0 : index
    %171 = vector.load %arg20[%c0_77, %c0_78] : memref<64x128xf32, #tpu.memory_space<vmem>>, vector<64x128xf32>
    %cst_79 = arith.constant dense<0.000000e+00> : vector<2x128xf32>
    %172 = tpu.matmul %170, %171, %cst_79 {dimension_numbers = #tpu.dot_dimension_numbers<[1], [0], [0], [1], [0, 0, 1, 1], [], []>} : vector<2x64xf32>, vector<64x128xf32>, vector<2x128xf32> -> vector<2x128xf32>
    %c0_80 = arith.constant 0 : index
    %c0_81 = arith.constant 0 : index
    %173 = vector.load %arg21[%c0_80, %c0_81] : memref<1x128xf32, #tpu.memory_space<vmem>>, vector<1x128xf32>
    %174 = vector.broadcast %173 : vector<1x128xf32> to vector<2x128xf32>
    %175 = arith.addf %172, %174 : vector<2x128xf32>
    %c0_82 = arith.constant 0 : index
    %c0_83 = arith.constant 0 : index
    %176 = vector.load %arg22[%c0_82, %c0_83] : memref<2x128xf32, #tpu.memory_space<vmem>>, vector<2x128xf32>
    tpu.vector_store %arg22[%c0_82, %c0_83], %175 {strides = array<i32>} : memref<2x128xf32, #tpu.memory_space<vmem>>, vector<2x128xf32>,
    return
  }
}

</mosaic_0001>

<llo_original>
// kernel: tpu_custom_call.1
$region0: #{tpu_custom_call.1}
  #allocation0 [shape = 'u32[]', space=smem, size = 0x4, offset = 0x4, fixed_abs, tag = 'smem constant byte address 0x4 - core index']
  #allocation1 [shape = 'u32[144,128]{1,0:T(1,128)}', space=vmem, size = 0x12000, scoped, tag = 'internal scratch']
  %s0 = inlined_call_operand.hbm [shape: f32[2,4,256], index: 0, kind: input, shape index: {}]
  %s1 = inlined_call_operand.hbm [shape: f32[2,12], index: 1, kind: input, shape index: {}]
  %s2 = inlined_call_operand.vmem [shape: f32[4,128], index: 2, kind: input, shape index: {}]
  %s3 = inlined_call_operand.hbm [shape: f32[1,128], index: 3, kind: input, shape index: {}]
  %s4 = inlined_call_operand.vmem [shape: f32[128,128], index: 4, kind: input, shape index: {}]
  %s5 = inlined_call_operand.hbm [shape: f32[1,128], index: 5, kind: input, shape index: {}]
  %s6 = inlined_call_operand.hbm [shape: f32[12,32], index: 6, kind: input, shape index: {}]
  %s7 = inlined_call_operand.hbm [shape: f32[1,32], index: 7, kind: input, shape index: {}]
  %s8 = inlined_call_operand.hbm [shape: f32[32,128], index: 8, kind: input, shape index: {}]
  %s9 = inlined_call_operand.hbm [shape: f32[1,128], index: 9, kind: input, shape index: {}]
  %s10 = inlined_call_operand.hbm [shape: f32[1,128], index: 10, kind: input, shape index: {}]
  %s11 = inlined_call_operand.hbm [shape: f32[1,128], index: 11, kind: input, shape index: {}]
  %s12 = inlined_call_operand.hbm [shape: f32[128,384], index: 12, kind: input, shape index: {}]
  %s13 = inlined_call_operand.hbm [shape: f32[1,384], index: 13, kind: input, shape index: {}]
  %s14 = inlined_call_operand.hbm [shape: f32[128,128], index: 14, kind: input, shape index: {}]
  %s15 = inlined_call_operand.hbm [shape: f32[1,128], index: 15, kind: input, shape index: {}]
  %s16 = inlined_call_operand.hbm [shape: f32[1,128], index: 16, kind: input, shape index: {}]
  %s17 = inlined_call_operand.hbm [shape: f32[1,128], index: 17, kind: input, shape index: {}]
  %s18 = inlined_call_operand.vmem [shape: f32[128,64], index: 18, kind: input, shape index: {}]
  %s19 = inlined_call_operand.vmem [shape: f32[1,64], index: 19, kind: input, shape index: {}]
  %s20 = inlined_call_operand.vmem [shape: f32[64,128], index: 20, kind: input, shape index: {}]
  %s21 = inlined_call_operand.vmem [shape: f32[1,128], index: 21, kind: input, shape index: {}]
  %s22 = inlined_call_operand.hbm [shape: f32[2,128], index: 22, kind: output, shape index: {}]
  %s23 = sld [smem:[#allocation0]]
  $region162: #{tpu_custom_call.1} parent=0
    _
  %s25 = ssub.s32 1, %s23
  %s26 = scalar_select 0, %s25, %s23
  $region1: #{tpu_custom_call.1} parent=0
    #allocation2 [shape = 'u8[8192]{0}', space=vmem, size = 0x2000, scoped, tag = 'input window, operand 0, single buffered']
    #allocation3 [shape = 's32[1]{0}', space=sflag, size = 0x4, scoped, tag = 'scoped memory for tpu_custom_call.1']
    #allocation4 [shape = 's32[1]{0}', space=sflag, size = 0x4, scoped, tag = 'scoped memory for tpu_custom_call.1']
    #allocation5 [shape = 'u8[1024]{0}', space=vmem, size = 0x400, scoped, tag = 'input window, operand 1, single buffered']
    #allocation6 [shape = 's32[1]{0}', space=sflag, size = 0x4, scoped, tag = 'scoped memory for tpu_custom_call.1']
    #allocation7 [shape = 'u8[512]{0}', space=vmem, size = 0x400, scoped, tag = 'input window, operand 3, single buffered']
    #allocation8 [shape = 'u8[512]{0}', space=vmem, size = 0x400, scoped, tag = 'input window, operand 5, single buffered']
    #allocation9 [shape = 's32[1]{0}', space=sflag, size = 0x4, scoped, tag = 'scoped memory for tpu_custom_call.1']
    #allocation10 [shape = 'u8[8192]{0}', space=vmem, size = 0x2000, scoped, tag = 'input window, operand 6, single buffered']
    #allocation11 [shape = 'u8[512]{0}', space=vmem, size = 0x400, scoped, tag = 'input window, operand 7, single buffered']
    #allocation12 [shape = 's32[1]{0}', space=sflag, size = 0x4, scoped, tag = 'scoped memory for tpu_custom_call.1']
    #allocation13 [shape = 'u8[16384]{0}', space=vmem, size = 0x4000, scoped, tag = 'input window, operand 8, single buffered']
    #allocation14 [shape = 'u8[512]{0}', space=vmem, size = 0x400, scoped, tag = 'input window, operand 9, single buffered']
    #allocation15 [shape = 's32[1]{0}', space=sflag, size = 0x4, scoped, tag = 'scoped memory for tpu_custom_call.1']
    #allocation16 [shape = 'u8[512]{0}', space=vmem, size = 0x400, scoped, tag = 'input window, operand 10, single buffered']
    #allocation17 [shape = 'u8[512]{0}', space=vmem, size = 0x400, scoped, tag = 'input window, operand 11, single buffered']
    #allocation18 [shape = 's32[1]{0}', space=sflag, size = 0x4, scoped, tag = 'scoped memory for tpu_custom_call.1']
    #allocation19 [shape = 'u8[196608]{0}', space=vmem, size = 0x30000, scoped, tag = 'input window, operand 12, single buffered']
    #allocation20 [shape = 'u8[1536]{0}', space=vmem, size = 0x800, scoped, tag = 'input window, operand 13, single buffered']
    #allocation21 [shape = 's32[1]{0}', space=sflag, size = 0x4, scoped, tag = 'scoped memory for tpu_custom_call.1']
    #allocation22 [shape = 'u8[65536]{0}', space=vmem, size = 0x10000, scoped, tag = 'input window, operand 14, single buffered']
    #allocation23 [shape = 'u8[512]{0}', space=vmem, size = 0x400, scoped, tag = 'input window, operand 15, single buffered']
    #allocation24 [shape = 's32[1]{0}', space=sflag, size = 0x4, scoped, tag = 'scoped memory for tpu_custom_call.1']
    #allocation25 [shape = 'u8[512]{0}', space=vmem, size = 0x400, scoped, tag = 'input window, operand 16, single buffered']
    #allocation26 [shape = 'u8[512]{0}', space=vmem, size = 0x400, scoped, tag = 'input window, operand 17, single buffered']
    #allocation27 [shape = 's32[1]{0}', space=sflag, size = 0x4, scoped, tag = 'scoped memory for tpu_custom_call.1']
    #allocation28 [shape = 'u8[1024]{0}', space=vmem, size = 0x400, scoped, tag = 'output window, operand 0, single buffered']
    %27 = vsyncpa [#allocation3], 0
    %28 = vsyncpa [#allocation6], 0
    %29 = vsyncpa [#allocation9], 0
    %30 = vsyncpa [#allocation12], 0
    %31 = vsyncpa [#allocation15], 0
    %32 = vsyncpa [#allocation18], 0
    %33 = vsyncpa [#allocation21], 0
    %34 = vsyncpa [#allocation24], 0
    %35 = vsyncpa [#allocation27], 0
    %36 = vsyncpa [#allocation4], 0
    // Predicated region
    $region2: #{tpu_custom_call.1} parent=1 // pred_check
      _
    $region3: #{tpu_custom_call.1} parent=1 // pred_check_branch
      %38 = sbr.rel (0) target = $region5
    $region4: #{tpu_custom_call.1} parent=1 // pred_region
      %s40 = ssub.s32 256, 256
      %41 = vsyncadd [#allocation3], %s40
      %s42 = sshll.u32 [#allocation2], 4
      %s43 = int_to_ptr.vmem [resolvable:$true] %s42
      %48 = dma.hbm_to_vmem [thread:$0]  %s0, 256, %s43, [#allocation3], 128, 128, 8
    $region5: #{tpu_custom_call.1} parent=1 // pred_fallthru
      _
    // Predicated region
    $region6: #{tpu_custom_call.1} parent=1 // pred_check
      _
    $region7: #{tpu_custom_call.1} parent=1 // pred_check_branch
      %50 = sbr.rel (0) target = $region9
    $region8: #{tpu_custom_call.1} parent=1 // pred_region
      %s52 = ssub.s32 32, 32
      %53 = vsyncadd [#allocation6], %s52
      %s55 = sshll.u32 [#allocation5], 4
      %s56 = int_to_ptr.vmem [resolvable:$true] %s55
      %58 = dma.hbm_to_vmem [thread:$0]  %s1, 32, %s56, [#allocation6]
    $region9: #{tpu_custom_call.1} parent=1 // pred_fallthru
      _
    // Predicated region
    $region10: #{tpu_custom_call.1} parent=1 // pred_check
      _
    $region11: #{tpu_custom_call.1} parent=1 // pred_check_branch
      %60 = sbr.rel (0) target = $region13
    $region12: #{tpu_custom_call.1} parent=1 // pred_region
      _
    $region13: #{tpu_custom_call.1} parent=1 // pred_fallthru
      _
    // Predicated region
    $region14: #{tpu_custom_call.1} parent=1 // pred_check
      _
    $region15: #{tpu_custom_call.1} parent=1 // pred_check_branch
      %62 = sbr.rel (0) target = $region17
    $region16: #{tpu_custom_call.1} parent=1 // pred_region
      %s64 = ssub.s32 16, 16
      %65 = vsyncadd [#allocation6], %s64
      %s67 = sshll.u32 [#allocation7], 4
      %s68 = int_to_ptr.vmem [resolvable:$true] %s67
      %70 = dma.hbm_to_vmem [thread:$0]  %s3, 16, %s68, [#allocation6]
    $region17: #{tpu_custom_call.1} parent=1 // pred_fallthru
      _
    // Predicated region
    $region18: #{tpu_custom_call.1} parent=1 // pred_check
      _
    $region19: #{tpu_custom_call.1} parent=1 // pred_check_branch
      %72 = sbr.rel (0) target = $region21
    $region20: #{tpu_custom_call.1} parent=1 // pred_region
      _
    $region21: #{tpu_custom_call.1} parent=1 // pred_fallthru
      _
    // Predicated region
    $region22: #{tpu_custom_call.1} parent=1 // pred_check
      _
    $region23: #{tpu_custom_call.1} parent=1 // pred_check_branch
      %74 = sbr.rel (0) target = $region25
    $region24: #{tpu_custom_call.1} parent=1 // pred_region
      %s76 = ssub.s32 16, 16
      %77 = vsyncadd [#allocation9], %s76
      %s79 = sshll.u32 [#allocation8], 4
      %s80 = int_to_ptr.vmem [resolvable:$true] %s79
      %82 = dma.hbm_to_vmem [thread:$0]  %s5, 16, %s80, [#allocation9]
    $region25: #{tpu_custom_call.1} parent=1 // pred_fallthru
      _
    // Predicated region
    $region26: #{tpu_custom_call.1} parent=1 // pred_check
      _
    $region27: #{tpu_custom_call.1} parent=1 // pred_check_branch
      %84 = sbr.rel (0) target = $region29
    $region28: #{tpu_custom_call.1} parent=1 // pred_region
      %s86 = ssub.s32 256, 256
      %87 = vsyncadd [#allocation9], %s86
      %s88 = sshll.u32 [#allocation10], 4
      %s89 = int_to_ptr.vmem [resolvable:$true] %s88
      %94 = dma.hbm_to_vmem [thread:$0]  %s6, 256, %s89, [#allocation9], 128, 128, 8
    $region29: #{tpu_custom_call.1} parent=1 // pred_fallthru
      _
    // Predicated region
    $region30: #{tpu_custom_call.1} parent=1 // pred_check
      _
    $region31: #{tpu_custom_call.1} parent=1 // pred_check_branch
      %96 = sbr.rel (0) target = $region33
    $region32: #{tpu_custom_call.1} parent=1 // pred_region
      %s98 = ssub.s32 16, 16
      %99 = vsyncadd [#allocation12], %s98
      %s101 = sshll.u32 [#allocation11], 4
      %s102 = int_to_ptr.vmem [resolvable:$true] %s101
      %104 = dma.hbm_to_vmem [thread:$0]  %s7, 16, %s102, [#allocation12]
    $region33: #{tpu_custom_call.1} parent=1 // pred_fallthru
      _
    // Predicated region
    $region34: #{tpu_custom_call.1} parent=1 // pred_check
      _
    $region35: #{tpu_custom_call.1} parent=1 // pred_check_branch
      %106 = sbr.rel (0) target = $region37
    $region36: #{tpu_custom_call.1} parent=1 // pred_region
      %s108 = ssub.s32 512, 512
      %109 = vsyncadd [#allocation12], %s108
      %s110 = sshll.u32 [#allocation13], 4
      %s111 = int_to_ptr.vmem [resolvable:$true] %s110
      %116 = dma.hbm_to_vmem [thread:$0]  %s8, 512, %s111, [#allocation12], 128, 128, 8
    $region37: #{tpu_custom_call.1} parent=1 // pred_fallthru
      _
    // Predicated region
    $region38: #{tpu_custom_call.1} parent=1 // pred_check
      _
    $region39: #{tpu_custom_call.1} parent=1 // pred_check_branch
      %118 = sbr.rel (0) target = $region41
    $region40: #{tpu_custom_call.1} parent=1 // pred_region
      %s120 = ssub.s32 16, 16
      %121 = vsyncadd [#allocation15], %s120
      %s123 = sshll.u32 [#allocation14], 4
      %s124 = int_to_ptr.vmem [resolvable:$true] %s123
      %126 = dma.hbm_to_vmem [thread:$0]  %s9, 16, %s124, [#allocation15]
    $region41: #{tpu_custom_call.1} parent=1 // pred_fallthru
      _
    // Predicated region
    $region42: #{tpu_custom_call.1} parent=1 // pred_check
      _
    $region43: #{tpu_custom_call.1} parent=1 // pred_check_branch
      %128 = sbr.rel (0) target = $region45
    $region44: #{tpu_custom_call.1} parent=1 // pred_region
      %s130 = ssub.s32 16, 16
      %131 = vsyncadd [#allocation15], %s130
      %s133 = sshll.u32 [#allocation16], 4
      %s134 = int_to_ptr.vmem [resolvable:$true] %s133
      %136 = dma.hbm_to_vmem [thread:$0]  %s10, 16, %s134, [#allocation15]
    $region45: #{tpu_custom_call.1} parent=1 // pred_fallthru
      _
    // Predicated region
    $region46: #{tpu_custom_call.1} parent=1 // pred_check
      _
    $region47: #{tpu_custom_call.1} parent=1 // pred_check_branch
      %138 = sbr.rel (0) target = $region49
    $region48: #{tpu_custom_call.1} parent=1 // pred_region
      %s140 = ssub.s32 16, 16
      %141 = vsyncadd [#allocation18], %s140
      %s143 = sshll.u32 [#allocation17], 4
      %s144 = int_to_ptr.vmem [resolvable:$true] %s143
      %146 = dma.hbm_to_vmem [thread:$0]  %s11, 16, %s144, [#allocation18]
    $region49: #{tpu_custom_call.1} parent=1 // pred_fallthru
      _
    // Predicated region
    $region50: #{tpu_custom_call.1} parent=1 // pred_check
      _
    $region51: #{tpu_custom_call.1} parent=1 // pred_check_branch
      %148 = sbr.rel (0) target = $region53
    $region52: #{tpu_custom_call.1} parent=1 // pred_region
      %s150 = ssub.s32 6144, 6144
      %151 = vsyncadd [#allocation18], %s150
      %s152 = sshll.u32 [#allocation19], 4
      %s153 = int_to_ptr.vmem [resolvable:$true] %s152
      %158 = dma.hbm_to_vmem [thread:$0]  %s12, 6144, %s153, [#allocation18], 384, 384, 24
    $region53: #{tpu_custom_call.1} parent=1 // pred_fallthru
      _
    // Predicated region
    $region54: #{tpu_custom_call.1} parent=1 // pred_check
      _
    $region55: #{tpu_custom_call.1} parent=1 // pred_check_branch
      %160 = sbr.rel (0) target = $region57
    $region56: #{tpu_custom_call.1} parent=1 // pred_region
      %s162 = ssub.s32 48, 48
      %163 = vsyncadd [#allocation21], %s162
      %s165 = sshll.u32 [#allocation20], 4
      %s166 = int_to_ptr.vmem [resolvable:$true] %s165
      %168 = dma.hbm_to_vmem [thread:$0]  %s13, 48, %s166, [#allocation21]
    $region57: #{tpu_custom_call.1} parent=1 // pred_fallthru
      _
    // Predicated region
    $region58: #{tpu_custom_call.1} parent=1 // pred_check
      _
    $region59: #{tpu_custom_call.1} parent=1 // pred_check_branch
      %170 = sbr.rel (0) target = $region61
    $region60: #{tpu_custom_call.1} parent=1 // pred_region
      %s172 = ssub.s32 2048, 2048
      %173 = vsyncadd [#allocation21], %s172
      %s174 = sshll.u32 [#allocation22], 4
      %s175 = int_to_ptr.vmem [resolvable:$true] %s174
      %180 = dma.hbm_to_vmem [thread:$0]  %s14, 2048, %s175, [#allocation21], 128, 128, 8
    $region61: #{tpu_custom_call.1} parent=1 // pred_fallthru
      _
    // Predicated region
    $region62: #{tpu_custom_call.1} parent=1 // pred_check
      _
    $region63: #{tpu_custom_call.1} parent=1 // pred_check_branch
      %182 = sbr.rel (0) target = $region65
    $region64: #{tpu_custom_call.1} parent=1 // pred_region
      %s184 = ssub.s32 16, 16
      %185 = vsyncadd [#allocation24], %s184
      %s187 = sshll.u32 [#allocation23], 4
      %s188 = int_to_ptr.vmem [resolvable:$true] %s187
      %190 = dma.hbm_to_vmem [thread:$0]  %s15, 16, %s188, [#allocation24]
    $region65: #{tpu_custom_call.1} parent=1 // pred_fallthru
      _
    // Predicated region
    $region66: #{tpu_custom_call.1} parent=1 // pred_check
      _
    $region67: #{tpu_custom_call.1} parent=1 // pred_check_branch
      %192 = sbr.rel (0) target = $region69
    $region68: #{tpu_custom_call.1} parent=1 // pred_region
      %s194 = ssub.s32 16, 16
      %195 = vsyncadd [#allocation24], %s194
      %s197 = sshll.u32 [#allocation25], 4
      %s198 = int_to_ptr.vmem [resolvable:$true] %s197
      %200 = dma.hbm_to_vmem [thread:$0]  %s16, 16, %s198, [#allocation24]
    $region69: #{tpu_custom_call.1} parent=1 // pred_fallthru
      _
    // Predicated region
    $region70: #{tpu_custom_call.1} parent=1 // pred_check
      _
    $region71: #{tpu_custom_call.1} parent=1 // pred_check_branch
      %202 = sbr.rel (0) target = $region73
    $region72: #{tpu_custom_call.1} parent=1 // pred_region
      %s204 = ssub.s32 16, 16
      %205 = vsyncadd [#allocation27], %s204
      %s207 = sshll.u32 [#allocation26], 4
      %s208 = int_to_ptr.vmem [resolvable:$true] %s207
      %210 = dma.hbm_to_vmem [thread:$0]  %s17, 16, %s208, [#allocation27]
    $region73: #{tpu_custom_call.1} parent=1 // pred_fallthru
      _
    // Predicated region
    $region74: #{tpu_custom_call.1} parent=1 // pred_check
      _
    $region75: #{tpu_custom_call.1} parent=1 // pred_check_branch
      %212 = sbr.rel (0) target = $region77
    $region76: #{tpu_custom_call.1} parent=1 // pred_region
      _
    $region77: #{tpu_custom_call.1} parent=1 // pred_fallthru
      _
    // Predicated region
    $region78: #{tpu_custom_call.1} parent=1 // pred_check
      _
    $region79: #{tpu_custom_call.1} parent=1 // pred_check_branch
      %214 = sbr.rel (0) target = $region81
    $region80: #{tpu_custom_call.1} parent=1 // pred_region
      _
    $region81: #{tpu_custom_call.1} parent=1 // pred_fallthru
      _
    // Predicated region
    $region82: #{tpu_custom_call.1} parent=1 // pred_check
      _
    $region83: #{tpu_custom_call.1} parent=1 // pred_check_branch
      %216 = sbr.rel (0) target = $region85
    $region84: #{tpu_custom_call.1} parent=1 // pred_region
      _
    $region85: #{tpu_custom_call.1} parent=1 // pred_fallthru
      _
    // Predicated region
    $region86: #{tpu_custom_call.1} parent=1 // pred_check
      _
    $region87: #{tpu_custom_call.1} parent=1 // pred_check_branch
      %218 = sbr.rel (0) target = $region89
    $region88: #{tpu_custom_call.1} parent=1 // pred_region
      _
    $region89: #{tpu_custom_call.1} parent=1 // pred_fallthru
      _
    // Predicated region
    $region90: #{tpu_custom_call.1} parent=1 // pred_check
      _
    $region91: #{tpu_custom_call.1} parent=1 // pred_check_branch
      %220 = sbr.rel (0) target = $region93
    $region92: #{tpu_custom_call.1} parent=1 // pred_region
      %221 = dma.done [#allocation3], 256
    $region93: #{tpu_custom_call.1} parent=1 // pred_fallthru
      _
    // Predicated region
    $region94: #{tpu_custom_call.1} parent=1 // pred_check
      _
    $region95: #{tpu_custom_call.1} parent=1 // pred_check_branch
      %223 = sbr.rel (0) target = $region97
    $region96: #{tpu_custom_call.1} parent=1 // pred_region
      %224 = dma.done [#allocation6], 32
    $region97: #{tpu_custom_call.1} parent=1 // pred_fallthru
      _
    // Predicated region
    $region98: #{tpu_custom_call.1} parent=1 // pred_check
      _
    $region99: #{tpu_custom_call.1} parent=1 // pred_check_branch
      %226 = sbr.rel (0) target = $region101
    $region100: #{tpu_custom_call.1} parent=1 // pred_region
      %227 = dma.done [#allocation6], 16
    $region101: #{tpu_custom_call.1} parent=1 // pred_fallthru
      _
    // Predicated region
    $region102: #{tpu_custom_call.1} parent=1 // pred_check
      _
    $region103: #{tpu_custom_call.1} parent=1 // pred_check_branch
      %229 = sbr.rel (0) target = $region105
    $region104: #{tpu_custom_call.1} parent=1 // pred_region
      %230 = dma.done [#allocation9], 16
    $region105: #{tpu_custom_call.1} parent=1 // pred_fallthru
      _
    // Predicated region
    $region106: #{tpu_custom_call.1} parent=1 // pred_check
      _
    $region107: #{tpu_custom_call.1} parent=1 // pred_check_branch
      %232 = sbr.rel (0) target = $region109
    $region108: #{tpu_custom_call.1} parent=1 // pred_region
      %233 = dma.done [#allocation9], 256
    $region109: #{tpu_custom_call.1} parent=1 // pred_fallthru
      _
    // Predicated region
    $region110: #{tpu_custom_call.1} parent=1 // pred_check
      _
    $region111: #{tpu_custom_call.1} parent=1 // pred_check_branch
      %235 = sbr.rel (0) target = $region113
    $region112: #{tpu_custom_call.1} parent=1 // pred_region
      %236 = dma.done [#allocation12], 16
    $region113: #{tpu_custom_call.1} parent=1 // pred_fallthru
      _
    // Predicated region
    $region114: #{tpu_custom_call.1} parent=1 // pred_check
      _
    $region115: #{tpu_custom_call.1} parent=1 // pred_check_branch
      %238 = sbr.rel (0) target = $region117
    $region116: #{tpu_custom_call.1} parent=1 // pred_region
      %239 = dma.done [#allocation12], 512
    $region117: #{tpu_custom_call.1} parent=1 // pred_fallthru
      _
    // Predicated region
    $region118: #{tpu_custom_call.1} parent=1 // pred_check
      _
    $region119: #{tpu_custom_call.1} parent=1 // pred_check_branch
      %241 = sbr.rel (0) target = $region121
    $region120: #{tpu_custom_call.1} parent=1 // pred_region
      %242 = dma.done [#allocation15], 16
    $region121: #{tpu_custom_call.1} parent=1 // pred_fallthru
      _
    // Predicated region
    $region122: #{tpu_custom_call.1} parent=1 // pred_check
      _
    $region123: #{tpu_custom_call.1} parent=1 // pred_check_branch
      %244 = sbr.rel (0) target = $region125
    $region124: #{tpu_custom_call.1} parent=1 // pred_region
      %245 = dma.done [#allocation15], 16
    $region125: #{tpu_custom_call.1} parent=1 // pred_fallthru
      _
    // Predicated region
    $region126: #{tpu_custom_call.1} parent=1 // pred_check
      _
    $region127: #{tpu_custom_call.1} parent=1 // pred_check_branch
      %247 = sbr.rel (0) target = $region129
    $region128: #{tpu_custom_call.1} parent=1 // pred_region
      %248 = dma.done [#allocation18], 16
    $region129: #{tpu_custom_call.1} parent=1 // pred_fallthru
      _
    // Predicated region
    $region130: #{tpu_custom_call.1} parent=1 // pred_check
      _
    $region131: #{tpu_custom_call.1} parent=1 // pred_check_branch
      %250 = sbr.rel (0) target = $region133
    $region132: #{tpu_custom_call.1} parent=1 // pred_region
      %251 = dma.done [#allocation18], 6144
    $region133: #{tpu_custom_call.1} parent=1 // pred_fallthru
      _
    // Predicated region
    $region134: #{tpu_custom_call.1} parent=1 // pred_check
      _
    $region135: #{tpu_custom_call.1} parent=1 // pred_check_branch
      %253 = sbr.rel (0) target = $region137
    $region136: #{tpu_custom_call.1} parent=1 // pred_region
      %254 = dma.done [#allocation21], 48
    $region137: #{tpu_custom_call.1} parent=1 // pred_fallthru
      _
    // Predicated region
    $region138: #{tpu_custom_call.1} parent=1 // pred_check
      _
    $region139: #{tpu_custom_call.1} parent=1 // pred_check_branch
      %256 = sbr.rel (0) target = $region141
    $region140: #{tpu_custom_call.1} parent=1 // pred_region
      %257 = dma.done [#allocation21], 2048
    $region141: #{tpu_custom_call.1} parent=1 // pred_fallthru
      _
    // Predicated region
    $region142: #{tpu_custom_call.1} parent=1 // pred_check
      _
    $region143: #{tpu_custom_call.1} parent=1 // pred_check_branch
      %259 = sbr.rel (0) target = $region145
    $region144: #{tpu_custom_call.1} parent=1 // pred_region
      %260 = dma.done [#allocation24], 16
    $region145: #{tpu_custom_call.1} parent=1 // pred_fallthru
      _
    // Predicated region
    $region146: #{tpu_custom_call.1} parent=1 // pred_check
      _
    $region147: #{tpu_custom_call.1} parent=1 // pred_check_branch
      %262 = sbr.rel (0) target = $region149
    $region148: #{tpu_custom_call.1} parent=1 // pred_region
      %263 = dma.done [#allocation24], 16
    $region149: #{tpu_custom_call.1} parent=1 // pred_fallthru
      _
    // Predicated region
    $region150: #{tpu_custom_call.1} parent=1 // pred_check
      _
    $region151: #{tpu_custom_call.1} parent=1 // pred_check_branch
      %265 = sbr.rel (0) target = $region153
    $region152: #{tpu_custom_call.1} parent=1 // pred_region
      %266 = dma.done [#allocation27], 16
    $region153: #{tpu_custom_call.1} parent=1 // pred_fallthru
      _
    %v267 = vld [vmem:[#allocation2] sm:$0xff]
    %v268 = vld [vmem:[#allocation2 + $0x8] sm:$0xff]
    %v271 = vcombine.high %v267, %v267
    %v272 = vcombine.high %v268, %v268
    %vm275 = vcmask 1043456
    %v276 = vsel %vm275, %v267, 0.0
    %v277 = vsel %vm275, %v271, 0.0
    %v278 = vadd.f32 %v276, %v277
    %279 = vadd.xlane.f32.xlu0 %v278
    %v280 = vpop.xlane.xlu0 %279
    %v281 = vsel %vm275, %v268, 0.0
    %v282 = vsel %vm275, %v272, 0.0
    %v283 = vadd.f32 %v281, %v282
    %284 = vadd.xlane.f32.xlu0 %v283
    %v285 = vpop.xlane.xlu0 %284
    %v286 = vrcp.pop 256.0
    %v287 = vmul.f32 %v280, %v286
    %v288 = vmul.f32 %v285, %v286
    %v289 = vld [vmem:[%s2] sm:$0xf]
    %v290 = vld [vmem:[#allocation7] sm:$0x1]
    %v292 = vlaneseq
    %v293 = vshrl.u32 %v292, 7
    %v294 = vsub.s32 0, %v293
    %v295 = vrot.slane %v290, %v294
    %v299 = vlaneseq
    %v300 = vand.u32 %v299, 127
    %v301 = vlaneseq
    %v302 = vshrl.u32 %v301, 7
    %v303 = vsub.s32 %v300, %v302
    %v304 = vrot.slane %v287, %v303
    %v305 = vlaneseq
    %v306 = vshrl.u32 %v305, 7
    %v307 = vsub.s32 %v300, %v306
    %v308 = vrot.slane %v288, %v307
    %vm309 = vcmask 1041409
    %v310 = vsel %vm309, %v308, %v304
    %vm311 = vcmask 31744
    %v312 = vsel %vm311, %v310, 0
    %v315 = vsel %vm275, %v289, 0
    %317 = vmatprep.subr.mxu0 0.0
    %318 = vmatpush1.msra.mxu0 %v315
    %319 = vmatprep.subr.mxu0 0.0
    %320 = vmatpush1.msra.mxu0 0.0
    %321 = vmatprep.subr.mxu0 0.0
    %322 = vmatpush1.msra.mxu0 0.0
    %323 = vmatprep.subr.mxu0 0.0
    %324 = vmatpush1.msra.mxu0 0.0
    %325 = vmatprep.subr.mxu0 0.0
    %326 = vmatpush1.msra.mxu0 0.0
    %327 = vmatprep.subr.mxu0 0.0
    %328 = vmatpush1.msra.mxu0 0.0
    %329 = vmatprep.subr.mxu0 0.0
    %330 = vmatpush1.msra.mxu0 0.0
    %331 = vmatprep.subr.mxu0 0.0
    %332 = vmatpush1.msra.mxu0 0.0
    %333 = vmatprep.subr.mxu0 0.0
    %334 = vmatpush1.msra.mxu0 0.0
    %335 = vmatprep.subr.mxu0 0.0
    %336 = vmatpush1.msra.mxu0 0.0
    %337 = vmatprep.subr.mxu0 0.0
    %338 = vmatpush1.msra.mxu0 0.0
    %339 = vmatprep.subr.mxu0 0.0
    %340 = vmatpush1.msra.mxu0 0.0
    %341 = vmatprep.subr.mxu0 0.0
    %342 = vmatpush1.msra.mxu0 0.0
    %343 = vmatprep.subr.mxu0 0.0
    %344 = vmatpush1.msra.mxu0 0.0
    %345 = vmatprep.subr.mxu0 0.0
    %346 = vmatpush1.msra.mxu0 0.0
    %347 = vmatprep.subr.mxu0 0.0
    %348 = vmatpush1.msra.mxu0 0.0
    %349 = vmatprep.subr.mxu0 0.0
    %350 = vmatpush1.msra.mxu0 0.0
    %351 = vmatprep.subr.mxu0 0.0
    %352 = vmatpush1.msra.mxu0 0.0
    %353 = vmatprep.subr.mxu0 0.0
    %354 = vmatpush1.msra.mxu0 0.0
    %355 = vmatprep.subr.mxu0 0.0
    %356 = vmatpush1.msra.mxu0 0.0
    %357 = vmatprep.subr.mxu0 0.0
    %358 = vmatpush1.msra.mxu0 0.0
    %359 = vmatprep.subr.mxu0 0.0
    %360 = vmatpush1.msra.mxu0 0.0
    %361 = vmatprep.subr.mxu0 0.0
    %362 = vmatpush1.msra.mxu0 0.0
    %363 = vmatprep.subr.mxu0 0.0
    %364 = vmatpush1.msra.mxu0 0.0
    %365 = vmatprep.subr.mxu0 0.0
    %366 = vmatpush1.msra.mxu0 0.0
    %367 = vmatprep.subr.mxu0 0.0
    %368 = vmatpush1.msra.mxu0 0.0
    %369 = vmatprep.subr.mxu0 0.0
    %370 = vmatpush1.msra.mxu0 0.0
    %371 = vmatprep.subr.mxu0 0.0
    %372 = vmatpush1.msra.mxu0 0.0
    %373 = vmatprep.subr.mxu0 0.0
    %374 = vmatpush1.msra.mxu0 0.0
    %375 = vmatprep.subr.mxu0 0.0
    %376 = vmatpush1.msra.mxu0 0.0
    %377 = vmatprep.subr.mxu0 0.0
    %378 = vmatpush1.msra.mxu0 0.0
    %379 = vmatprep.subr.mxu0 0.0
    %380 = vmatpush1.msra.mxu0 0.0
    %381 = vmatprep.mubr.f32.mxu0 0.0
    %382 = vmatmul.mubr.f32.gmra.mrb[0].mxu0 %v312
    %v383 = vpop.f32.mrb[0].mxu0
    %v384 = vadd.f32 %v295, %v383
    %v385 = vpop.f32.mrb[0].mxu0
    %386 = vdwg.mxu0
    %v387 = vmul.f32 %v384, %v384
    %v388 = vmul.f32 %v384, %v387
    %v389 = vmul.f32 %v388, 0.044715
    %v390 = vadd.f32 %v384, %v389
    %v391 = vmul.f32 %v390, 0.7978846
    %v392 = vtanh.pop %v391
    %v393 = vadd.f32 %v392, 1.0
    %v394 = vmul.f32 %v393, 0.5
    %v395 = vmul.f32 %v384, %v394
    %v396 = vld [vmem:[%s4] sm:$0xff]
    %v397 = vld [vmem:[%s4 + $0x8] sm:$0xff]
    %v398 = vld [vmem:[%s4 + $0x10] sm:$0xff]
    %v399 = vld [vmem:[%s4 + $0x18] sm:$0xff]
    %v400 = vld [vmem:[%s4 + $0x20] sm:$0xff]
    %v401 = vld [vmem:[%s4 + $0x28] sm:$0xff]
    %v402 = vld [vmem:[%s4 + $0x30] sm:$0xff]
    %v403 = vld [vmem:[%s4 + $0x38] sm:$0xff]
    %v404 = vld [vmem:[%s4 + $0x40] sm:$0xff]
    %v405 = vld [vmem:[%s4 + $0x48] sm:$0xff]
    %v406 = vld [vmem:[%s4 + $0x50] sm:$0xff]
    %v407 = vld [vmem:[%s4 + $0x58] sm:$0xff]
    %v408 = vld [vmem:[%s4 + $0x60] sm:$0xff]
    %v409 = vld [vmem:[%s4 + $0x68] sm:$0xff]
    %v410 = vld [vmem:[%s4 + $0x70] sm:$0xff]
    %v411 = vld [vmem:[%s4 + $0x78] sm:$0xff]
    %v412 = vld [vmem:[#allocation8] sm:$0x1]
    %v414 = vlaneseq
    %v415 = vshrl.u32 %v414, 7
    %v416 = vsub.s32 0, %v415
    %v417 = vrot.slane %v412, %v416
    %419 = vmatprep.subr.mxu0 0.0
    %420 = vmatpush1.msra.mxu0 %v396
    %421 = vmatprep.subr.mxu0 0.0
    %422 = vmatpush1.msra.mxu0 %v397
    %423 = vmatprep.subr.mxu0 0.0
    %424 = vmatpush1.msra.mxu0 %v398
    %425 = vmatprep.subr.mxu0 0.0
    %426 = vmatpush1.msra.mxu0 %v399
    %427 = vmatprep.subr.mxu0 0.0
    %428 = vmatpush1.msra.mxu0 %v400
    %429 = vmatprep.subr.mxu0 0.0
    %430 = vmatpush1.msra.mxu0 %v401
    %431 = vmatprep.subr.mxu0 0.0
    %432 = vmatpush1.msra.mxu0 %v402
    %433 = vmatprep.subr.mxu0 0.0
    %434 = vmatpush1.msra.mxu0 %v403
    %435 = vmatprep.subr.mxu0 0.0
    %436 = vmatpush1.msra.mxu0 %v404
    %437 = vmatprep.subr.mxu0 0.0
    %438 = vmatpush1.msra.mxu0 %v405
    %439 = vmatprep.subr.mxu0 0.0
    %440 = vmatpush1.msra.mxu0 %v406
    %441 = vmatprep.subr.mxu0 0.0
    %442 = vmatpush1.msra.mxu0 %v407
    %443 = vmatprep.subr.mxu0 0.0
    %444 = vmatpush1.msra.mxu0 %v408
    %445 = vmatprep.subr.mxu0 0.0
    %446 = vmatpush1.msra.mxu0 %v409
    %447 = vmatprep.subr.mxu0 0.0
    %448 = vmatpush1.msra.mxu0 %v410
    %449 = vmatprep.subr.mxu0 0.0
    %450 = vmatpush1.msra.mxu0 %v411
    %451 = vmatprep.subr.mxu0 0.0
    %452 = vmatpush1.msra.mxu0 0.0
    %453 = vmatprep.subr.mxu0 0.0
    %454 = vmatpush1.msra.mxu0 0.0
    %455 = vmatprep.subr.mxu0 0.0
    %456 = vmatpush1.msra.mxu0 0.0
    %457 = vmatprep.subr.mxu0 0.0
    %458 = vmatpush1.msra.mxu0 0.0
    %459 = vmatprep.subr.mxu0 0.0
    %460 = vmatpush1.msra.mxu0 0.0
    %461 = vmatprep.subr.mxu0 0.0
    %462 = vmatpush1.msra.mxu0 0.0
    %463 = vmatprep.subr.mxu0 0.0
    %464 = vmatpush1.msra.mxu0 0.0
    %465 = vmatprep.subr.mxu0 0.0
    %466 = vmatpush1.msra.mxu0 0.0
    %467 = vmatprep.subr.mxu0 0.0
    %468 = vmatpush1.msra.mxu0 0.0
    %469 = vmatprep.subr.mxu0 0.0
    %470 = vmatpush1.msra.mxu0 0.0
    %471 = vmatprep.subr.mxu0 0.0
    %472 = vmatpush1.msra.mxu0 0.0
    %473 = vmatprep.subr.mxu0 0.0
    %474 = vmatpush1.msra.mxu0 0.0
    %475 = vmatprep.subr.mxu0 0.0
    %476 = vmatpush1.msra.mxu0 0.0
    %477 = vmatprep.subr.mxu0 0.0
    %478 = vmatpush1.msra.mxu0 0.0
    %479 = vmatprep.subr.mxu0 0.0
    %480 = vmatpush1.msra.mxu0 0.0
    %481 = vmatprep.subr.mxu0 0.0
    %482 = vmatpush1.msra.mxu0 0.0
    %483 = vmatprep.mubr.f32.mxu0 0.0
    %484 = vmatmul.mubr.f32.gmra.mrb[0].mxu0 %v395
    %v485 = vpop.f32.mrb[0].mxu0
    %v486 = vadd.f32 %v417, %v485
    %v487 = vpop.f32.mrb[0].mxu0
    %488 = vdwg.mxu0
    %v489 = vld [vmem:[#allocation5] sm:$0x3]
    %v490 = vld [vmem:[#allocation10] sm:$0xff]
    %v491 = vld [vmem:[#allocation10 + $0x8] sm:$0xf]
    %v492 = vld [vmem:[#allocation11] sm:$0x1]
    %v494 = vlaneseq
    %v495 = vshrl.u32 %v494, 7
    %v496 = vsub.s32 0, %v495
    %v497 = vrot.slane %v492, %v496
    %vm499 = vcmask 97280
    %v501 = vsel %vm499, %v489, 0
    %v504 = vsel %vm275, %v491, 0
    %506 = vmatprep.subr.mxu0 0.0
    %507 = vmatpush1.msra.mxu0 %v490
    %508 = vmatprep.subr.mxu0 0.0
    %509 = vmatpush1.msra.mxu0 %v504
    %510 = vmatprep.subr.mxu0 0.0
    %511 = vmatpush1.msra.mxu0 0.0
    %512 = vmatprep.subr.mxu0 0.0
    %513 = vmatpush1.msra.mxu0 0.0
    %514 = vmatprep.subr.mxu0 0.0
    %515 = vmatpush1.msra.mxu0 0.0
    %516 = vmatprep.subr.mxu0 0.0
    %517 = vmatpush1.msra.mxu0 0.0
    %518 = vmatprep.subr.mxu0 0.0
    %519 = vmatpush1.msra.mxu0 0.0
    %520 = vmatprep.subr.mxu0 0.0
    %521 = vmatpush1.msra.mxu0 0.0
    %522 = vmatprep.subr.mxu0 0.0
    %523 = vmatpush1.msra.mxu0 0.0
    %524 = vmatprep.subr.mxu0 0.0
    %525 = vmatpush1.msra.mxu0 0.0
    %526 = vmatprep.subr.mxu0 0.0
    %527 = vmatpush1.msra.mxu0 0.0
    %528 = vmatprep.subr.mxu0 0.0
    %529 = vmatpush1.msra.mxu0 0.0
    %530 = vmatprep.subr.mxu0 0.0
    %531 = vmatpush1.msra.mxu0 0.0
    %532 = vmatprep.subr.mxu0 0.0
    %533 = vmatpush1.msra.mxu0 0.0
    %534 = vmatprep.subr.mxu0 0.0
    %535 = vmatpush1.msra.mxu0 0.0
    %536 = vmatprep.subr.mxu0 0.0
    %537 = vmatpush1.msra.mxu0 0.0
    %538 = vmatprep.subr.mxu0 0.0
    %539 = vmatpush1.msra.mxu0 0.0
    %540 = vmatprep.subr.mxu0 0.0
    %541 = vmatpush1.msra.mxu0 0.0
    %542 = vmatprep.subr.mxu0 0.0
    %543 = vmatpush1.msra.mxu0 0.0
    %544 = vmatprep.subr.mxu0 0.0
    %545 = vmatpush1.msra.mxu0 0.0
    %546 = vmatprep.subr.mxu0 0.0
    %547 = vmatpush1.msra.mxu0 0.0
    %548 = vmatprep.subr.mxu0 0.0
    %549 = vmatpush1.msra.mxu0 0.0
    %550 = vmatprep.subr.mxu0 0.0
    %551 = vmatpush1.msra.mxu0 0.0
    %552 = vmatprep.subr.mxu0 0.0
    %553 = vmatpush1.msra.mxu0 0.0
    %554 = vmatprep.subr.mxu0 0.0
    %555 = vmatpush1.msra.mxu0 0.0
    %556 = vmatprep.subr.mxu0 0.0
    %557 = vmatpush1.msra.mxu0 0.0
    %558 = vmatprep.subr.mxu0 0.0
    %559 = vmatpush1.msra.mxu0 0.0
    %560 = vmatprep.subr.mxu0 0.0
    %561 = vmatpush1.msra.mxu0 0.0
    %562 = vmatprep.subr.mxu0 0.0
    %563 = vmatpush1.msra.mxu0 0.0
    %564 = vmatprep.subr.mxu0 0.0
    %565 = vmatpush1.msra.mxu0 0.0
    %566 = vmatprep.subr.mxu0 0.0
    %567 = vmatpush1.msra.mxu0 0.0
    %568 = vmatprep.subr.mxu0 0.0
    %569 = vmatpush1.msra.mxu0 0.0
    %570 = vmatprep.mubr.f32.mxu0 0.0
    %571 = vmatmul.mubr.f32.gmra.mrb[0].mxu0 %v501
    %v572 = vpop.f32.mrb[0].mxu0
    %v573 = vadd.f32 %v497, %v572
    %v574 = vpop.f32.mrb[0].mxu0
    %575 = vdwg.mxu0
    %v576 = vmul.f32 %v573, %v573
    %v577 = vmul.f32 %v573, %v576
    %v578 = vmul.f32 %v577, 0.044715
    %v579 = vadd.f32 %v573, %v578
    %v580 = vmul.f32 %v579, 0.7978846
    %v581 = vtanh.pop %v580
    %v582 = vadd.f32 %v581, 1.0
    %v583 = vmul.f32 %v582, 0.5
    %v584 = vmul.f32 %v573, %v583
    %v585 = vld [vmem:[#allocation13] sm:$0xff]
    %v586 = vld [vmem:[#allocation13 + $0x8] sm:$0xff]
    %v587 = vld [vmem:[#allocation13 + $0x10] sm:$0xff]
    %v588 = vld [vmem:[#allocation13 + $0x18] sm:$0xff]
    %v589 = vld [vmem:[#allocation14] sm:$0x1]
    %v591 = vlaneseq
    %v592 = vshrl.u32 %v591, 7
    %v593 = vsub.s32 0, %v592
    %v594 = vrot.slane %v589, %v593
    %vm596 = vcmask 261120
    %v598 = vsel %vm596, %v584, 0
    %600 = vmatprep.subr.mxu0 0.0
    %601 = vmatpush1.msra.mxu0 %v585
    %602 = vmatprep.subr.mxu0 0.0
    %603 = vmatpush1.msra.mxu0 %v586
    %604 = vmatprep.subr.mxu0 0.0
    %605 = vmatpush1.msra.mxu0 %v587
    %606 = vmatprep.subr.mxu0 0.0
    %607 = vmatpush1.msra.mxu0 %v588
    %608 = vmatprep.subr.mxu0 0.0
    %609 = vmatpush1.msra.mxu0 0.0
    %610 = vmatprep.subr.mxu0 0.0
    %611 = vmatpush1.msra.mxu0 0.0
    %612 = vmatprep.subr.mxu0 0.0
    %613 = vmatpush1.msra.mxu0 0.0
    %614 = vmatprep.subr.mxu0 0.0
    %615 = vmatpush1.msra.mxu0 0.0
    %616 = vmatprep.subr.mxu0 0.0
    %617 = vmatpush1.msra.mxu0 0.0
    %618 = vmatprep.subr.mxu0 0.0
    %619 = vmatpush1.msra.mxu0 0.0
    %620 = vmatprep.subr.mxu0 0.0
    %621 = vmatpush1.msra.mxu0 0.0
    %622 = vmatprep.subr.mxu0 0.0
    %623 = vmatpush1.msra.mxu0 0.0
    %624 = vmatprep.subr.mxu0 0.0
    %625 = vmatpush1.msra.mxu0 0.0
    %626 = vmatprep.subr.mxu0 0.0
    %627 = vmatpush1.msra.mxu0 0.0
    %628 = vmatprep.subr.mxu0 0.0
    %629 = vmatpush1.msra.mxu0 0.0
    %630 = vmatprep.subr.mxu0 0.0
    %631 = vmatpush1.msra.mxu0 0.0
    %632 = vmatprep.subr.mxu0 0.0
    %633 = vmatpush1.msra.mxu0 0.0
    %634 = vmatprep.subr.mxu0 0.0
    %635 = vmatpush1.msra.mxu0 0.0
    %636 = vmatprep.subr.mxu0 0.0
    %637 = vmatpush1.msra.mxu0 0.0
    %638 = vmatprep.subr.mxu0 0.0
    %639 = vmatpush1.msra.mxu0 0.0
    %640 = vmatprep.subr.mxu0 0.0
    %641 = vmatpush1.msra.mxu0 0.0
    %642 = vmatprep.subr.mxu0 0.0
    %643 = vmatpush1.msra.mxu0 0.0
    %644 = vmatprep.subr.mxu0 0.0
    %645 = vmatpush1.msra.mxu0 0.0
    %646 = vmatprep.subr.mxu0 0.0
    %647 = vmatpush1.msra.mxu0 0.0
    %648 = vmatprep.subr.mxu0 0.0
    %649 = vmatpush1.msra.mxu0 0.0
    %650 = vmatprep.subr.mxu0 0.0
    %651 = vmatpush1.msra.mxu0 0.0
    %652 = vmatprep.subr.mxu0 0.0
    %653 = vmatpush1.msra.mxu0 0.0
    %654 = vmatprep.subr.mxu0 0.0
    %655 = vmatpush1.msra.mxu0 0.0
    %656 = vmatprep.subr.mxu0 0.0
    %657 = vmatpush1.msra.mxu0 0.0
    %658 = vmatprep.subr.mxu0 0.0
    %659 = vmatpush1.msra.mxu0 0.0
    %660 = vmatprep.subr.mxu0 0.0
    %661 = vmatpush1.msra.mxu0 0.0
    %662 = vmatprep.subr.mxu0 0.0
    %663 = vmatpush1.msra.mxu0 0.0
    %664 = vmatprep.mubr.f32.mxu0 0.0
    %665 = vmatmul.mubr.f32.gmra.mrb[0].mxu0 %v598
    %v666 = vpop.f32.mrb[0].mxu0
    %v667 = vadd.f32 %v594, %v666
    %v668 = vpop.f32.mrb[0].mxu0
    %669 = vdwg.mxu0
    %vm670 = vcmask 1041408
    %v671 = vsel %vm670, %v667, 0.0
    %672 = vadd.xlane.f32.xlu0 %v671
    %v673 = vpop.xlane.xlu0 %672
    %v674 = vrcp.pop 128.0
    %v675 = vmul.f32 %v673, %v674
    %v676 = vsub.f32 %v667, %v675
    %v677 = vmul.f32 %v676, %v676
    %v678 = vsel %vm670, %v677, 0.0
    %679 = vadd.xlane.f32.xlu0 %v678
    %v680 = vpop.xlane.xlu0 %679
    %v681 = vmul.f32 %v680, %v674
    %v682 = vadd.f32 %v681, 1e-05
    %v683 = vrsqrt.pop %v682
    %v684 = vmul.f32 %v676, %v683
    %v685 = vld [vmem:[#allocation16] sm:$0x1]
    %v687 = vlaneseq
    %v688 = vshrl.u32 %v687, 7
    %v689 = vsub.s32 0, %v688
    %v690 = vrot.slane %v685, %v689
    %v692 = vmul.f32 %v684, %v690
    %v693 = vld [vmem:[#allocation17] sm:$0x1]
    %v695 = vlaneseq
    %v696 = vshrl.u32 %v695, 7
    %v697 = vsub.s32 0, %v696
    %v698 = vrot.slane %v693, %v697
    %v700 = vadd.f32 %v692, %v698
    %v703 = vunpack.c.l.s4 1966171168
    %v704 = vunpack.c.0.s8 %v703
    %v705 = vlaneseq
    %v706 = vshrl.u32 %v705, 7
    %v707 = vsub.s32 %v704, %v706
    %v708 = vrot.slane %v700, %v707
    %v709 = vcombine.high %v708, %v708
    %v711 = vunpack.c.l.s4 1966171168
    %v712 = vunpack.c.0.s8 %v711
    %v713 = vlaneseq
    %v714 = vshrl.u32 %v713, 7
    %v715 = vsub.s32 %v712, %v714
    %v716 = vrot.slane %v708, %v715
    %v718 = vunpack.c.l.s4 1966171168
    %v719 = vunpack.c.0.s8 %v718
    %v720 = vlaneseq
    %v721 = vshrl.u32 %v720, 7
    %v722 = vsub.s32 %v719, %v721
    %v723 = vrot.slane %v709, %v722
    %v724 = vlaneseq
    %v725 = vshrl.u32 %v724, 7
    %v726 = vsub.s32 0, %v725
    %v727 = vrot.slane %v716, %v726
    %v728 = vlaneseq
    %v729 = vshrl.u32 %v728, 7
    %v730 = vsub.s32 0, %v729
    %v731 = vrot.slane %v723, %v730
    %v736 = vunpack.c.l.s4 1966171168
    %v737 = vunpack.c.0.s8 %v736
    %v738 = vlaneseq
    %v739 = vshrl.u32 %v738, 7
    %v740 = vsub.s32 %v737, %v739
    %v741 = vrot.slane %v486, %v740
    %v742 = vcombine.high %v741, %v741
    %v744 = vunpack.c.l.s4 1966171168
    %v745 = vunpack.c.0.s8 %v744
    %v746 = vlaneseq
    %v747 = vshrl.u32 %v746, 7
    %v748 = vsub.s32 %v745, %v747
    %v749 = vrot.slane %v741, %v748
    %v751 = vunpack.c.l.s4 1966171168
    %v752 = vunpack.c.0.s8 %v751
    %v753 = vlaneseq
    %v754 = vshrl.u32 %v753, 7
    %v755 = vsub.s32 %v752, %v754
    %v756 = vrot.slane %v742, %v755
    %v757 = vlaneseq
    %v758 = vshrl.u32 %v757, 7
    %v759 = vsub.s32 0, %v758
    %v760 = vrot.slane %v749, %v759
    %v761 = vlaneseq
    %v762 = vshrl.u32 %v761, 7
    %v763 = vsub.s32 0, %v762
    %v764 = vrot.slane %v756, %v763
    %767 = vxpose.xlu0.b32.start [1/16] %v760, 128
    %768 = vxpose.xlu0.b32.cont [2/16] %v760, 128
    %769 = vxpose.xlu0.b32.cont [3/16] %v760, 128
    %770 = vxpose.xlu0.b32.cont [4/16] %v760, 128
    %771 = vxpose.xlu0.b32.cont [5/16] %v760, 128
    %772 = vxpose.xlu0.b32.cont [6/16] %v760, 128
    %773 = vxpose.xlu0.b32.cont [7/16] %v760, 128
    %774 = vxpose.xlu0.b32.cont [8/16] %v760, 128
    %775 = vxpose.xlu0.b32.cont [9/16] %v760, 128
    %776 = vxpose.xlu0.b32.cont [10/16] %v760, 128
    %777 = vxpose.xlu0.b32.cont [11/16] %v760, 128
    %778 = vxpose.xlu0.b32.cont [12/16] %v760, 128
    %779 = vxpose.xlu0.b32.cont [13/16] %v760, 128
    %780 = vxpose.xlu0.b32.cont [14/16] %v760, 128
    %781 = vxpose.xlu0.b32.cont [15/16] %v760, 128
    %782 = vxpose.xlu0.b32.end [16/16] %v760, 128
    %v783 = vpop.trf.xlu0
    %v784 = vpop.trf.xlu0
    %v785 = vpop.trf.xlu0
    %v786 = vpop.trf.xlu0
    %v787 = vpop.trf.xlu0
    %v788 = vpop.trf.xlu0
    %v789 = vpop.trf.xlu0
    %v790 = vpop.trf.xlu0
    %v791 = vpop.trf.xlu0
    %v792 = vpop.trf.xlu0
    %v793 = vpop.trf.xlu0
    %v794 = vpop.trf.xlu0
    %v795 = vpop.trf.xlu0
    %v796 = vpop.trf.xlu0
    %v797 = vpop.trf.xlu0
    %v798 = vpop.trf.xlu0
    %799 = vxpose.xlu0.b32.start [1/16] %v764, 128
    %800 = vxpose.xlu0.b32.cont [2/16] %v764, 128
    %801 = vxpose.xlu0.b32.cont [3/16] %v764, 128
    %802 = vxpose.xlu0.b32.cont [4/16] %v764, 128
    %803 = vxpose.xlu0.b32.cont [5/16] %v764, 128
    %804 = vxpose.xlu0.b32.cont [6/16] %v764, 128
    %805 = vxpose.xlu0.b32.cont [7/16] %v764, 128
    %806 = vxpose.xlu0.b32.cont [8/16] %v764, 128
    %807 = vxpose.xlu0.b32.cont [9/16] %v764, 128
    %808 = vxpose.xlu0.b32.cont [10/16] %v764, 128
    %809 = vxpose.xlu0.b32.cont [11/16] %v764, 128
    %810 = vxpose.xlu0.b32.cont [12/16] %v764, 128
    %811 = vxpose.xlu0.b32.cont [13/16] %v764, 128
    %812 = vxpose.xlu0.b32.cont [14/16] %v764, 128
    %813 = vxpose.xlu0.b32.cont [15/16] %v764, 128
    %814 = vxpose.xlu0.b32.end [16/16] %v764, 128
    %v815 = vpop.trf.xlu0
    %v816 = vpop.trf.xlu0
    %v817 = vpop.trf.xlu0
    %v818 = vpop.trf.xlu0
    %v819 = vpop.trf.xlu0
    %v820 = vpop.trf.xlu0
    %v821 = vpop.trf.xlu0
    %v822 = vpop.trf.xlu0
    %v823 = vpop.trf.xlu0
    %v824 = vpop.trf.xlu0
    %v825 = vpop.trf.xlu0
    %v826 = vpop.trf.xlu0
    %v827 = vpop.trf.xlu0
    %v828 = vpop.trf.xlu0
    %v829 = vpop.trf.xlu0
    %v830 = vpop.trf.xlu0
    %v831 = vmul.f32 %v783, %v727
    %v832 = vmul.f32 %v784, %v727
    %v833 = vmul.f32 %v785, %v727
    %v834 = vmul.f32 %v786, %v727
    %v835 = vmul.f32 %v787, %v727
    %v836 = vmul.f32 %v788, %v727
    %v837 = vmul.f32 %v789, %v727
    %v838 = vmul.f32 %v790, %v727
    %v839 = vmul.f32 %v791, %v727
    %v840 = vmul.f32 %v792, %v727
    %v841 = vmul.f32 %v793, %v727
    %v842 = vmul.f32 %v794, %v727
    %v843 = vmul.f32 %v795, %v727
    %v844 = vmul.f32 %v796, %v727
    %v845 = vmul.f32 %v797, %v727
    %v846 = vmul.f32 %v798, %v727
    %v847 = vmul.f32 %v815, %v731
    %v848 = vmul.f32 %v816, %v731
    %v849 = vmul.f32 %v817, %v731
    %v850 = vmul.f32 %v818, %v731
    %v851 = vmul.f32 %v819, %v731
    %v852 = vmul.f32 %v820, %v731
    %v853 = vmul.f32 %v821, %v731
    %v854 = vmul.f32 %v822, %v731
    %v855 = vmul.f32 %v823, %v731
    %v856 = vmul.f32 %v824, %v731
    %v857 = vmul.f32 %v825, %v731
    %v858 = vmul.f32 %v826, %v731
    %v859 = vmul.f32 %v827, %v731
    %v860 = vmul.f32 %v828, %v731
    %v861 = vmul.f32 %v829, %v731
    %v862 = vmul.f32 %v830, %v731
    %v863 = vld [vmem:[#allocation19] sm:$0xff]
    %v864 = vld [vmem:[#allocation19 + $0x8] sm:$0xff]
    %v865 = vld [vmem:[#allocation19 + $0x10] sm:$0xff]
    %v866 = vld [vmem:[#allocation19 + $0x18] sm:$0xff]
    %v867 = vld [vmem:[#allocation19 + $0x20] sm:$0xff]
    %v868 = vld [vmem:[#allocation19 + $0x28] sm:$0xff]
    %v869 = vld [vmem:[#allocation19 + $0x30] sm:$0xff]
    %v870 = vld [vmem:[#allocation19 + $0x38] sm:$0xff]
    %v871 = vld [vmem:[#allocation19 + $0x40] sm:$0xff]
    %v872 = vld [vmem:[#allocation19 + $0x48] sm:$0xff]
    %v873 = vld [vmem:[#allocation19 + $0x50] sm:$0xff]
    %v874 = vld [vmem:[#allocation19 + $0x58] sm:$0xff]
    %v875 = vld [vmem:[#allocation19 + $0x60] sm:$0xff]
    %v876 = vld [vmem:[#allocation19 + $0x68] sm:$0xff]
    %v877 = vld [vmem:[#allocation19 + $0x70] sm:$0xff]
    %v878 = vld [vmem:[#allocation19 + $0x78] sm:$0xff]
    %v879 = vld [vmem:[#allocation19 + $0x80] sm:$0xff]
    %v880 = vld [vmem:[#allocation19 + $0x88] sm:$0xff]
    %v881 = vld [vmem:[#allocation19 + $0x90] sm:$0xff]
    %v882 = vld [vmem:[#allocation19 + $0x98] sm:$0xff]
    %v883 = vld [vmem:[#allocation19 + $0xa0] sm:$0xff]
    %v884 = vld [vmem:[#allocation19 + $0xa8] sm:$0xff]
    %v885 = vld [vmem:[#allocation19 + $0xb0] sm:$0xff]
    %v886 = vld [vmem:[#allocation19 + $0xb8] sm:$0xff]
    %v887 = vld [vmem:[#allocation19 + $0xc0] sm:$0xff]
    %v888 = vld [vmem:[#allocation19 + $0xc8] sm:$0xff]
    %v889 = vld [vmem:[#allocation19 + $0xd0] sm:$0xff]
    %v890 = vld [vmem:[#allocation19 + $0xd8] sm:$0xff]
    %v891 = vld [vmem:[#allocation19 + $0xe0] sm:$0xff]
    %v892 = vld [vmem:[#allocation19 + $0xe8] sm:$0xff]
    %v893 = vld [vmem:[#allocation19 + $0xf0] sm:$0xff]
    %v894 = vld [vmem:[#allocation19 + $0xf8] sm:$0xff]
    %v895 = vld [vmem:[#allocation19 + $0x100] sm:$0xff]
    %v896 = vld [vmem:[#allocation19 + $0x108] sm:$0xff]
    %v897 = vld [vmem:[#allocation19 + $0x110] sm:$0xff]
    %v898 = vld [vmem:[#allocation19 + $0x118] sm:$0xff]
    %v899 = vld [vmem:[#allocation19 + $0x120] sm:$0xff]
    %v900 = vld [vmem:[#allocation19 + $0x128] sm:$0xff]
    %v901 = vld [vmem:[#allocation19 + $0x130] sm:$0xff]
    %v902 = vld [vmem:[#allocation19 + $0x138] sm:$0xff]
    %v903 = vld [vmem:[#allocation19 + $0x140] sm:$0xff]
    %v904 = vld [vmem:[#allocation19 + $0x148] sm:$0xff]
    %v905 = vld [vmem:[#allocation19 + $0x150] sm:$0xff]
    %v906 = vld [vmem:[#allocation19 + $0x158] sm:$0xff]
    %v907 = vld [vmem:[#allocation19 + $0x160] sm:$0xff]
    %v908 = vld [vmem:[#allocation19 + $0x168] sm:$0xff]
    %v909 = vld [vmem:[#allocation19 + $0x170] sm:$0xff]
    %v910 = vld [vmem:[#allocation19 + $0x178] sm:$0xff]
    %v911 = vld [vmem:[#allocation20] sm:$0x7]
    %v913 = vlaneseq
    %v914 = vshrl.u32 %v913, 7
    %v915 = vsub.s32 0, %v914
    %v916 = vrot.slane %v911, %v915
    %v917 = vlaneseq
    %v918 = vshrl.u32 %v917, 7
    %v919 = vsub.s32 1, %v918
    %v920 = vrot.slane %v911, %v919
    %v921 = vlaneseq
    %v922 = vshrl.u32 %v921, 7
    %v923 = vsub.s32 2, %v922
    %v924 = vrot.slane %v911, %v923
    %928 = vmatprep.subr.mxu0 %v864
    %929 = vmatpush1.msra.mxu0 %v863
    %930 = vmatprep.subr.mxu0 %v867
    %931 = vmatpush1.msra.mxu0 %v866
    %932 = vmatprep.subr.mxu0 %v870
    %933 = vmatpush1.msra.mxu0 %v869
    %934 = vmatprep.subr.mxu0 %v873
    %935 = vmatpush1.msra.mxu0 %v872
    %936 = vmatprep.subr.mxu0 %v876
    %937 = vmatpush1.msra.mxu0 %v875
    %938 = vmatprep.subr.mxu0 %v879
    %939 = vmatpush1.msra.mxu0 %v878
    %940 = vmatprep.subr.mxu0 %v882
    %941 = vmatpush1.msra.mxu0 %v881
    %942 = vmatprep.subr.mxu0 %v885
    %943 = vmatpush1.msra.mxu0 %v884
    %944 = vmatprep.subr.mxu0 %v888
    %945 = vmatpush1.msra.mxu0 %v887
    %946 = vmatprep.subr.mxu0 %v891
    %947 = vmatpush1.msra.mxu0 %v890
    %948 = vmatprep.subr.mxu0 %v894
    %949 = vmatpush1.msra.mxu0 %v893
    %950 = vmatprep.subr.mxu0 %v897
    %951 = vmatpush1.msra.mxu0 %v896
    %952 = vmatprep.subr.mxu0 %v900
    %953 = vmatpush1.msra.mxu0 %v899
    %954 = vmatprep.subr.mxu0 %v903
    %955 = vmatpush1.msra.mxu0 %v902
    %956 = vmatprep.subr.mxu0 %v906
    %957 = vmatpush1.msra.mxu0 %v905
    %958 = vmatprep.subr.mxu0 %v909
    %959 = vmatpush1.msra.mxu0 %v908
    %960 = vmatprep.subr.mxu0 0.0
    %961 = vmatpush1.msra.mxu0 0.0
    %962 = vmatprep.subr.mxu0 0.0
    %963 = vmatpush1.msra.mxu0 0.0
    %964 = vmatprep.subr.mxu0 0.0
    %965 = vmatpush1.msra.mxu0 0.0
    %966 = vmatprep.subr.mxu0 0.0
    %967 = vmatpush1.msra.mxu0 0.0
    %968 = vmatprep.subr.mxu0 0.0
    %969 = vmatpush1.msra.mxu0 0.0
    %970 = vmatprep.subr.mxu0 0.0
    %971 = vmatpush1.msra.mxu0 0.0
    %972 = vmatprep.subr.mxu0 0.0
    %973 = vmatpush1.msra.mxu0 0.0
    %974 = vmatprep.subr.mxu0 0.0
    %975 = vmatpush1.msra.mxu0 0.0
    %976 = vmatprep.subr.mxu0 0.0
    %977 = vmatpush1.msra.mxu0 0.0
    %978 = vmatprep.subr.mxu0 0.0
    %979 = vmatpush1.msra.mxu0 0.0
    %980 = vmatprep.subr.mxu0 0.0
    %981 = vmatpush1.msra.mxu0 0.0
    %982 = vmatprep.subr.mxu0 0.0
    %983 = vmatpush1.msra.mxu0 0.0
    %984 = vmatprep.subr.mxu0 0.0
    %985 = vmatpush1.msra.mxu0 0.0
    %986 = vmatprep.subr.mxu0 0.0
    %987 = vmatpush1.msra.mxu0 0.0
    %988 = vmatprep.subr.mxu0 0.0
    %989 = vmatpush1.msra.mxu0 0.0
    %990 = vmatprep.subr.mxu0 0.0
    %991 = vmatpush1.msra.mxu0 0.0
    %992 = vmatprep.mubr.f32.mxu0 0.0
    %993 = vmatmul.mubr.f32.gmra.mrb[0].mxu0 %v831
    %v994 = vpop.f32.mrb[0].mxu0
    %v995 = vadd.f32 %v916, %v994
    %v996 = vpop.f32.mrb[0].mxu0
    %v997 = vadd.f32 %v920, %v996
    %998 = vmatprep.mubr.f32.mxu0 0.0
    %999 = vmatmul.mubr.f32.gmra.mrb[0].mxu0 %v832
    %v1000 = vpop.f32.mrb[0].mxu0
    %v1001 = vadd.f32 %v916, %v1000
    %v1002 = vpop.f32.mrb[0].mxu0
    %v1003 = vadd.f32 %v920, %v1002
    %1004 = vmatprep.mubr.f32.mxu0 0.0
    %1005 = vmatmul.mubr.f32.gmra.mrb[0].mxu0 %v833
    %v1006 = vpop.f32.mrb[0].mxu0
    %v1007 = vadd.f32 %v916, %v1006
    %v1008 = vpop.f32.mrb[0].mxu0
    %v1009 = vadd.f32 %v920, %v1008
    %1010 = vmatprep.mubr.f32.mxu0 0.0
    %1011 = vmatmul.mubr.f32.gmra.mrb[0].mxu0 %v834
    %v1012 = vpop.f32.mrb[0].mxu0
    %v1013 = vadd.f32 %v916, %v1012
    %v1014 = vpop.f32.mrb[0].mxu0
    %v1015 = vadd.f32 %v920, %v1014
    %1016 = vmatprep.mubr.f32.mxu0 0.0
    %1017 = vmatmul.mubr.f32.gmra.mrb[0].mxu0 %v835
    %v1018 = vpop.f32.mrb[0].mxu0
    %v1019 = vadd.f32 %v916, %v1018
    %v1020 = vpop.f32.mrb[0].mxu0
    %v1021 = vadd.f32 %v920, %v1020
    %1022 = vmatprep.mubr.f32.mxu0 0.0
    %1023 = vmatmul.mubr.f32.gmra.mrb[0].mxu0 %v836
    %v1024 = vpop.f32.mrb[0].mxu0
    %v1025 = vadd.f32 %v916, %v1024
    %v1026 = vpop.f32.mrb[0].mxu0
    %v1027 = vadd.f32 %v920, %v1026
    %1028 = vmatprep.mubr.f32.mxu0 0.0
    %1029 = vmatmul.mubr.f32.gmra.mrb[0].mxu0 %v837
    %v1030 = vpop.f32.mrb[0].mxu0
    %v1031 = vadd.f32 %v916, %v1030
    %v1032 = vpop.f32.mrb[0].mxu0
    %v1033 = vadd.f32 %v920, %v1032
    %1034 = vmatprep.mubr.f32.mxu0 0.0
    %1035 = vmatmul.mubr.f32.gmra.mrb[0].mxu0 %v838
    %v1036 = vpop.f32.mrb[0].mxu0
    %v1037 = vadd.f32 %v916, %v1036
    %v1038 = vpop.f32.mrb[0].mxu0
    %v1039 = vadd.f32 %v920, %v1038
    %1040 = vmatprep.mubr.f32.mxu0 0.0
    %1041 = vmatmul.mubr.f32.gmra.mrb[0].mxu0 %v839
    %v1042 = vpop.f32.mrb[0].mxu0
    %v1043 = vadd.f32 %v916, %v1042
    %v1044 = vpop.f32.mrb[0].mxu0
    %v1045 = vadd.f32 %v920, %v1044
    %1046 = vmatprep.mubr.f32.mxu0 0.0
    %1047 = vmatmul.mubr.f32.gmra.mrb[0].mxu0 %v840
    %v1048 = vpop.f32.mrb[0].mxu0
    %v1049 = vadd.f32 %v916, %v1048
    %v1050 = vpop.f32.mrb[0].mxu0
    %v1051 = vadd.f32 %v920, %v1050
    %1052 = vmatprep.mubr.f32.mxu0 0.0
    %1053 = vmatmul.mubr.f32.gmra.mrb[0].mxu0 %v841
    %v1054 = vpop.f32.mrb[0].mxu0
    %v1055 = vadd.f32 %v916, %v1054
    %v1056 = vpop.f32.mrb[0].mxu0
    %v1057 = vadd.f32 %v920, %v1056
    %1058 = vmatprep.mubr.f32.mxu0 0.0
    %1059 = vmatmul.mubr.f32.gmra.mrb[0].mxu0 %v842
    %v1060 = vpop.f32.mrb[0].mxu0
    %v1061 = vadd.f32 %v916, %v1060
    %v1062 = vpop.f32.mrb[0].mxu0
    %v1063 = vadd.f32 %v920, %v1062
    %1064 = vmatprep.mubr.f32.mxu0 0.0
    %1065 = vmatmul.mubr.f32.gmra.mrb[0].mxu0 %v843
    %v1066 = vpop.f32.mrb[0].mxu0
    %v1067 = vadd.f32 %v916, %v1066
    %v1068 = vpop.f32.mrb[0].mxu0
    %v1069 = vadd.f32 %v920, %v1068
    %1070 = vmatprep.mubr.f32.mxu0 0.0
    %1071 = vmatmul.mubr.f32.gmra.mrb[0].mxu0 %v844
    %v1072 = vpop.f32.mrb[0].mxu0
    %v1073 = vadd.f32 %v916, %v1072
    %v1074 = vpop.f32.mrb[0].mxu0
    %v1075 = vadd.f32 %v920, %v1074
    %1076 = vmatprep.mubr.f32.mxu0 0.0
    %1077 = vmatmul.mubr.f32.gmra.mrb[0].mxu0 %v845
    %v1078 = vpop.f32.mrb[0].mxu0
    %v1079 = vadd.f32 %v916, %v1078
    %v1080 = vpop.f32.mrb[0].mxu0
    %v1081 = vadd.f32 %v920, %v1080
    %1082 = vmatprep.mubr.f32.mxu0 0.0
    %1083 = vmatmul.mubr.f32.gmra.mrb[0].mxu0 %v846
    %v1084 = vpop.f32.mrb[0].mxu0
    %v1085 = vadd.f32 %v916, %v1084
    %v1086 = vpop.f32.mrb[0].mxu0
    %v1087 = vadd.f32 %v920, %v1086
    %1088 = vmatprep.mubr.f32.mxu0 0.0
    %1089 = vmatmul.mubr.f32.gmra.mrb[0].mxu0 %v847
    %v1090 = vpop.f32.mrb[0].mxu0
    %v1091 = vadd.f32 %v916, %v1090
    %v1092 = vpop.f32.mrb[0].mxu0
    %v1093 = vadd.f32 %v920, %v1092
    %1094 = vmatprep.mubr.f32.mxu0 0.0
    %1095 = vmatmul.mubr.f32.gmra.mrb[0].mxu0 %v848
    %v1096 = vpop.f32.mrb[0].mxu0
    %v1097 = vadd.f32 %v916, %v1096
    %v1098 = vpop.f32.mrb[0].mxu0
    %v1099 = vadd.f32 %v920, %v1098
    %1100 = vmatprep.mubr.f32.mxu0 0.0
    %1101 = vmatmul.mubr.f32.gmra.mrb[0].mxu0 %v849
    %v1102 = vpop.f32.mrb[0].mxu0
    %v1103 = vadd.f32 %v916, %v1102
    %v1104 = vpop.f32.mrb[0].mxu0
    %v1105 = vadd.f32 %v920, %v1104
    %1106 = vmatprep.mubr.f32.mxu0 0.0
    %1107 = vmatmul.mubr.f32.gmra.mrb[0].mxu0 %v850
    %v1108 = vpop.f32.mrb[0].mxu0
    %v1109 = vadd.f32 %v916, %v1108
    %v1110 = vpop.f32.mrb[0].mxu0
    %v1111 = vadd.f32 %v920, %v1110
    %1112 = vmatprep.mubr.f32.mxu0 0.0
    %1113 = vmatmul.mubr.f32.gmra.mrb[0].mxu0 %v851
    %v1114 = vpop.f32.mrb[0].mxu0
    %v1115 = vadd.f32 %v916, %v1114
    %v1116 = vpop.f32.mrb[0].mxu0
    %v1117 = vadd.f32 %v920, %v1116
    %1118 = vmatprep.mubr.f32.mxu0 0.0
    %1119 = vmatmul.mubr.f32.gmra.mrb[0].mxu0 %v852
    %v1120 = vpop.f32.mrb[0].mxu0
    %v1121 = vadd.f32 %v916, %v1120
    %v1122 = vpop.f32.mrb[0].mxu0
    %v1123 = vadd.f32 %v920, %v1122
    %1124 = vmatprep.mubr.f32.mxu0 0.0
    %1125 = vmatmul.mubr.f32.gmra.mrb[0].mxu0 %v853
    %v1126 = vpop.f32.mrb[0].mxu0
    %v1127 = vadd.f32 %v916, %v1126
    %v1128 = vpop.f32.mrb[0].mxu0
    %v1129 = vadd.f32 %v920, %v1128
    %1130 = vmatprep.mubr.f32.mxu0 0.0
    %1131 = vmatmul.mubr.f32.gmra.mrb[0].mxu0 %v854
    %v1132 = vpop.f32.mrb[0].mxu0
    %v1133 = vadd.f32 %v916, %v1132
    %v1134 = vpop.f32.mrb[0].mxu0
    %v1135 = vadd.f32 %v920, %v1134
    %1136 = vmatprep.mubr.f32.mxu0 0.0
    %1137 = vmatmul.mubr.f32.gmra.mrb[0].mxu0 %v855
    %v1138 = vpop.f32.mrb[0].mxu0
    %v1139 = vadd.f32 %v916, %v1138
    %v1140 = vpop.f32.mrb[0].mxu0
    %v1141 = vadd.f32 %v920, %v1140
    %1142 = vmatprep.mubr.f32.mxu0 0.0
    %1143 = vmatmul.mubr.f32.gmra.mrb[0].mxu0 %v856
    %v1144 = vpop.f32.mrb[0].mxu0
    %v1145 = vadd.f32 %v916, %v1144
    %v1146 = vpop.f32.mrb[0].mxu0
    %v1147 = vadd.f32 %v920, %v1146
    %1148 = vmatprep.mubr.f32.mxu0 0.0
    %1149 = vmatmul.mubr.f32.gmra.mrb[0].mxu0 %v857
    %v1150 = vpop.f32.mrb[0].mxu0
    %v1151 = vadd.f32 %v916, %v1150
    %v1152 = vpop.f32.mrb[0].mxu0
    %v1153 = vadd.f32 %v920, %v1152
    %1154 = vmatprep.mubr.f32.mxu0 0.0
    %1155 = vmatmul.mubr.f32.gmra.mrb[0].mxu0 %v858
    %v1156 = vpop.f32.mrb[0].mxu0
    %v1157 = vadd.f32 %v916, %v1156
    %v1158 = vpop.f32.mrb[0].mxu0
    %v1159 = vadd.f32 %v920, %v1158
    %1160 = vmatprep.mubr.f32.mxu0 0.0
    %1161 = vmatmul.mubr.f32.gmra.mrb[0].mxu0 %v859
    %v1162 = vpop.f32.mrb[0].mxu0
    %v1163 = vadd.f32 %v916, %v1162
    %v1164 = vpop.f32.mrb[0].mxu0
    %v1165 = vadd.f32 %v920, %v1164
    %1166 = vmatprep.mubr.f32.mxu0 0.0
    %1167 = vmatmul.mubr.f32.gmra.mrb[0].mxu0 %v860
    %v1168 = vpop.f32.mrb[0].mxu0
    %v1169 = vadd.f32 %v916, %v1168
    %v1170 = vpop.f32.mrb[0].mxu0
    %v1171 = vadd.f32 %v920, %v1170
    %1172 = vmatprep.mubr.f32.mxu0 0.0
    %1173 = vmatmul.mubr.f32.gmra.mrb[0].mxu0 %v861
    %v1174 = vpop.f32.mrb[0].mxu0
    %v1175 = vadd.f32 %v916, %v1174
    %v1176 = vpop.f32.mrb[0].mxu0
    %v1177 = vadd.f32 %v920, %v1176
    %1178 = vmatprep.mubr.f32.mxu0 0.0
    %1179 = vmatmul.mubr.f32.gmra.mrb[0].mxu0 %v862
    %v1180 = vpop.f32.mrb[0].mxu0
    %v1181 = vadd.f32 %v916, %v1180
    %v1182 = vpop.f32.mrb[0].mxu0
    %v1183 = vadd.f32 %v920, %v1182
    %1184 = vdwg.mxu0
    %1185 = vmatprep.subr.mxu0 0.0
    %1186 = vmatpush1.msra.mxu0 %v865
    %1187 = vmatprep.subr.mxu0 0.0
    %1188 = vmatpush1.msra.mxu0 %v868
    %1189 = vmatprep.subr.mxu0 0.0
    %1190 = vmatpush1.msra.mxu0 %v871
    %1191 = vmatprep.subr.mxu0 0.0
    %1192 = vmatpush1.msra.mxu0 %v874
    %1193 = vmatprep.subr.mxu0 0.0
    %1194 = vmatpush1.msra.mxu0 %v877
    %1195 = vmatprep.subr.mxu0 0.0
    %1196 = vmatpush1.msra.mxu0 %v880
    %1197 = vmatprep.subr.mxu0 0.0
    %1198 = vmatpush1.msra.mxu0 %v883
    %1199 = vmatprep.subr.mxu0 0.0
    %1200 = vmatpush1.msra.mxu0 %v886
    %1201 = vmatprep.subr.mxu0 0.0
    %1202 = vmatpush1.msra.mxu0 %v889
    %1203 = vmatprep.subr.mxu0 0.0
    %1204 = vmatpush1.msra.mxu0 %v892
    %1205 = vmatprep.subr.mxu0 0.0
    %1206 = vmatpush1.msra.mxu0 %v895
    %1207 = vmatprep.subr.mxu0 0.0
    %1208 = vmatpush1.msra.mxu0 %v898
    %1209 = vmatprep.subr.mxu0 0.0
    %1210 = vmatpush1.msra.mxu0 %v901
    %1211 = vmatprep.subr.mxu0 0.0
    %1212 = vmatpush1.msra.mxu0 %v904
    %1213 = vmatprep.subr.mxu0 0.0
    %1214 = vmatpush1.msra.mxu0 %v907
    %1215 = vmatprep.subr.mxu0 0.0
    %1216 = vmatpush1.msra.mxu0 %v910
    %1217 = vmatprep.subr.mxu0 0.0
    %1218 = vmatpush1.msra.mxu0 0.0
    %1219 = vmatprep.subr.mxu0 0.0
    %1220 = vmatpush1.msra.mxu0 0.0
    %1221 = vmatprep.subr.mxu0 0.0
    %1222 = vmatpush1.msra.mxu0 0.0
    %1223 = vmatprep.subr.mxu0 0.0
    %1224 = vmatpush1.msra.mxu0 0.0
    %1225 = vmatprep.subr.mxu0 0.0
    %1226 = vmatpush1.msra.mxu0 0.0
    %1227 = vmatprep.subr.mxu0 0.0
    %1228 = vmatpush1.msra.mxu0 0.0
    %1229 = vmatprep.subr.mxu0 0.0
    %1230 = vmatpush1.msra.mxu0 0.0
    %1231 = vmatprep.subr.mxu0 0.0
    %1232 = vmatpush1.msra.mxu0 0.0
    %1233 = vmatprep.subr.mxu0 0.0
    %1234 = vmatpush1.msra.mxu0 0.0
    %1235 = vmatprep.subr.mxu0 0.0
    %1236 = vmatpush1.msra.mxu0 0.0
    %1237 = vmatprep.subr.mxu0 0.0
    %1238 = vmatpush1.msra.mxu0 0.0
    %1239 = vmatprep.subr.mxu0 0.0
    %1240 = vmatpush1.msra.mxu0 0.0
    %1241 = vmatprep.subr.mxu0 0.0
    %1242 = vmatpush1.msra.mxu0 0.0
    %1243 = vmatprep.subr.mxu0 0.0
    %1244 = vmatpush1.msra.mxu0 0.0
    %1245 = vmatprep.subr.mxu0 0.0
    %1246 = vmatpush1.msra.mxu0 0.0
    %1247 = vmatprep.subr.mxu0 0.0
    %1248 = vmatpush1.msra.mxu0 0.0
    %1249 = vmatprep.mubr.f32.mxu0 0.0
    %1250 = vmatmul.mubr.f32.gmra.mrb[0].mxu0 %v831
    %v1251 = vpop.f32.mrb[0].mxu0
    %v1252 = vadd.f32 %v924, %v1251
    %v1253 = vpop.f32.mrb[0].mxu0
    %1254 = vmatprep.mubr.f32.mxu0 0.0
    %1255 = vmatmul.mubr.f32.gmra.mrb[0].mxu0 %v832
    %v1256 = vpop.f32.mrb[0].mxu0
    %v1257 = vadd.f32 %v924, %v1256
    %v1258 = vpop.f32.mrb[0].mxu0
    %1259 = vmatprep.mubr.f32.mxu0 0.0
    %1260 = vmatmul.mubr.f32.gmra.mrb[0].mxu0 %v833
    %v1261 = vpop.f32.mrb[0].mxu0
    %v1262 = vadd.f32 %v924, %v1261
    %v1263 = vpop.f32.mrb[0].mxu0
    %1264 = vmatprep.mubr.f32.mxu0 0.0
    %1265 = vmatmul.mubr.f32.gmra.mrb[0].mxu0 %v834
    %v1266 = vpop.f32.mrb[0].mxu0
    %v1267 = vadd.f32 %v924, %v1266
    %v1268 = vpop.f32.mrb[0].mxu0
    %1269 = vmatprep.mubr.f32.mxu0 0.0
    %1270 = vmatmul.mubr.f32.gmra.mrb[0].mxu0 %v835
    %v1271 = vpop.f32.mrb[0].mxu0
    %v1272 = vadd.f32 %v924, %v1271
    %v1273 = vpop.f32.mrb[0].mxu0
    %1274 = vmatprep.mubr.f32.mxu0 0.0
    %1275 = vmatmul.mubr.f32.gmra.mrb[0].mxu0 %v836
    %v1276 = vpop.f32.mrb[0].mxu0
    %v1277 = vadd.f32 %v924, %v1276
    %v1278 = vpop.f32.mrb[0].mxu0
    %1279 = vmatprep.mubr.f32.mxu0 0.0
    %1280 = vmatmul.mubr.f32.gmra.mrb[0].mxu0 %v837
    %v1281 = vpop.f32.mrb[0].mxu0
    %v1282 = vadd.f32 %v924, %v1281
    %v1283 = vpop.f32.mrb[0].mxu0
    %1284 = vmatprep.mubr.f32.mxu0 0.0
    %1285 = vmatmul.mubr.f32.gmra.mrb[0].mxu0 %v838
    %v1286 = vpop.f32.mrb[0].mxu0
    %v1287 = vadd.f32 %v924, %v1286
    %v1288 = vpop.f32.mrb[0].mxu0
    %1289 = vmatprep.mubr.f32.mxu0 0.0
    %1290 = vmatmul.mubr.f32.gmra.mrb[0].mxu0 %v839
    %v1291 = vpop.f32.mrb[0].mxu0
    %v1292 = vadd.f32 %v924, %v1291
    %v1293 = vpop.f32.mrb[0].mxu0
    %1294 = vmatprep.mubr.f32.mxu0 0.0
    %1295 = vmatmul.mubr.f32.gmra.mrb[0].mxu0 %v840
    %v1296 = vpop.f32.mrb[0].mxu0
    %v1297 = vadd.f32 %v924, %v1296
    %v1298 = vpop.f32.mrb[0].mxu0
    %1299 = vmatprep.mubr.f32.mxu0 0.0
    %1300 = vmatmul.mubr.f32.gmra.mrb[0].mxu0 %v841
    %v1301 = vpop.f32.mrb[0].mxu0
    %v1302 = vadd.f32 %v924, %v1301
    %v1303 = vpop.f32.mrb[0].mxu0
    %1304 = vmatprep.mubr.f32.mxu0 0.0
    %1305 = vmatmul.mubr.f32.gmra.mrb[0].mxu0 %v842
    %v1306 = vpop.f32.mrb[0].mxu0
    %v1307 = vadd.f32 %v924, %v1306
    %v1308 = vpop.f32.mrb[0].mxu0
    %1309 = vmatprep.mubr.f32.mxu0 0.0
    %1310 = vmatmul.mubr.f32.gmra.mrb[0].mxu0 %v843
    %v1311 = vpop.f32.mrb[0].mxu0
    %v1312 = vadd.f32 %v924, %v1311
    %v1313 = vpop.f32.mrb[0].mxu0
    %1314 = vmatprep.mubr.f32.mxu0 0.0
    %1315 = vmatmul.mubr.f32.gmra.mrb[0].mxu0 %v844
    %v1316 = vpop.f32.mrb[0].mxu0
    %v1317 = vadd.f32 %v924, %v1316
    %v1318 = vpop.f32.mrb[0].mxu0
    %1319 = vmatprep.mubr.f32.mxu0 0.0
    %1320 = vmatmul.mubr.f32.gmra.mrb[0].mxu0 %v845
    %v1321 = vpop.f32.mrb[0].mxu0
    %v1322 = vadd.f32 %v924, %v1321
    %v1323 = vpop.f32.mrb[0].mxu0
    %1324 = vmatprep.mubr.f32.mxu0 0.0
    %1325 = vmatmul.mubr.f32.gmra.mrb[0].mxu0 %v846
    %v1326 = vpop.f32.mrb[0].mxu0
    %v1327 = vadd.f32 %v924, %v1326
    %v1328 = vpop.f32.mrb[0].mxu0
    %1329 = vmatprep.mubr.f32.mxu0 0.0
    %1330 = vmatmul.mubr.f32.gmra.mrb[0].mxu0 %v847
    %v1331 = vpop.f32.mrb[0].mxu0
    %v1332 = vadd.f32 %v924, %v1331
    %v1333 = vpop.f32.mrb[0].mxu0
    %1334 = vmatprep.mubr.f32.mxu0 0.0
    %1335 = vmatmul.mubr.f32.gmra.mrb[0].mxu0 %v848
    %v1336 = vpop.f32.mrb[0].mxu0
    %v1337 = vadd.f32 %v924, %v1336
    %v1338 = vpop.f32.mrb[0].mxu0
    %1339 = vmatprep.mubr.f32.mxu0 0.0
    %1340 = vmatmul.mubr.f32.gmra.mrb[0].mxu0 %v849
    %v1341 = vpop.f32.mrb[0].mxu0
    %v1342 = vadd.f32 %v924, %v1341
    %v1343 = vpop.f32.mrb[0].mxu0
    %1344 = vmatprep.mubr.f32.mxu0 0.0
    %1345 = vmatmul.mubr.f32.gmra.mrb[0].mxu0 %v850
    %v1346 = vpop.f32.mrb[0].mxu0
    %v1347 = vadd.f32 %v924, %v1346
    %v1348 = vpop.f32.mrb[0].mxu0
    %1349 = vmatprep.mubr.f32.mxu0 0.0
    %1350 = vmatmul.mubr.f32.gmra.mrb[0].mxu0 %v851
    %v1351 = vpop.f32.mrb[0].mxu0
    %v1352 = vadd.f32 %v924, %v1351
    %v1353 = vpop.f32.mrb[0].mxu0
    %1354 = vmatprep.mubr.f32.mxu0 0.0
    %1355 = vmatmul.mubr.f32.gmra.mrb[0].mxu0 %v852
    %v1356 = vpop.f32.mrb[0].mxu0
    %v1357 = vadd.f32 %v924, %v1356
    %v1358 = vpop.f32.mrb[0].mxu0
    %1359 = vmatprep.mubr.f32.mxu0 0.0
    %1360 = vmatmul.mubr.f32.gmra.mrb[0].mxu0 %v853
    %v1361 = vpop.f32.mrb[0].mxu0
    %v1362 = vadd.f32 %v924, %v1361
    %v1363 = vpop.f32.mrb[0].mxu0
    %1364 = vmatprep.mubr.f32.mxu0 0.0
    %1365 = vmatmul.mubr.f32.gmra.mrb[0].mxu0 %v854
    %v1366 = vpop.f32.mrb[0].mxu0
    %v1367 = vadd.f32 %v924, %v1366
    %v1368 = vpop.f32.mrb[0].mxu0
    %1369 = vmatprep.mubr.f32.mxu0 0.0
    %1370 = vmatmul.mubr.f32.gmra.mrb[0].mxu0 %v855
    %v1371 = vpop.f32.mrb[0].mxu0
    %v1372 = vadd.f32 %v924, %v1371
    %v1373 = vpop.f32.mrb[0].mxu0
    %1374 = vmatprep.mubr.f32.mxu0 0.0
    %1375 = vmatmul.mubr.f32.gmra.mrb[0].mxu0 %v856
    %v1376 = vpop.f32.mrb[0].mxu0
    %v1377 = vadd.f32 %v924, %v1376
    %v1378 = vpop.f32.mrb[0].mxu0
    %1379 = vmatprep.mubr.f32.mxu0 0.0
    %1380 = vmatmul.mubr.f32.gmra.mrb[0].mxu0 %v857
    %v1381 = vpop.f32.mrb[0].mxu0
    %v1382 = vadd.f32 %v924, %v1381
    %v1383 = vpop.f32.mrb[0].mxu0
    %1384 = vmatprep.mubr.f32.mxu0 0.0
    %1385 = vmatmul.mubr.f32.gmra.mrb[0].mxu0 %v858
    %v1386 = vpop.f32.mrb[0].mxu0
    %v1387 = vadd.f32 %v924, %v1386
    %v1388 = vpop.f32.mrb[0].mxu0
    %1389 = vmatprep.mubr.f32.mxu0 0.0
    %1390 = vmatmul.mubr.f32.gmra.mrb[0].mxu0 %v859
    %v1391 = vpop.f32.mrb[0].mxu0
    %v1392 = vadd.f32 %v924, %v1391
    %v1393 = vpop.f32.mrb[0].mxu0
    %1394 = vmatprep.mubr.f32.mxu0 0.0
    %1395 = vmatmul.mubr.f32.gmra.mrb[0].mxu0 %v860
    %v1396 = vpop.f32.mrb[0].mxu0
    %v1397 = vadd.f32 %v924, %v1396
    %v1398 = vpop.f32.mrb[0].mxu0
    %1399 = vmatprep.mubr.f32.mxu0 0.0
    %1400 = vmatmul.mubr.f32.gmra.mrb[0].mxu0 %v861
    %v1401 = vpop.f32.mrb[0].mxu0
    %v1402 = vadd.f32 %v924, %v1401
    %v1403 = vpop.f32.mrb[0].mxu0
    %1404 = vmatprep.mubr.f32.mxu0 0.0
    %1405 = vmatmul.mubr.f32.gmra.mrb[0].mxu0 %v862
    %v1406 = vpop.f32.mrb[0].mxu0
    %v1407 = vadd.f32 %v924, %v1406
    %v1408 = vpop.f32.mrb[0].mxu0
    %1409 = vdwg.mxu0
    %v1410 = vmul.f32 %v995, 0.17677669
    %v1411 = vmul.f32 %v1001, 0.17677669
    %v1412 = vmul.f32 %v1007, 0.17677669
    %v1413 = vmul.f32 %v1013, 0.17677669
    %v1414 = vmul.f32 %v1019, 0.17677669
    %v1415 = vmul.f32 %v1025, 0.17677669
    %v1416 = vmul.f32 %v1031, 0.17677669
    %v1417 = vmul.f32 %v1037, 0.17677669
    %v1418 = vmul.f32 %v1043, 0.17677669
    %v1419 = vmul.f32 %v1049, 0.17677669
    %v1420 = vmul.f32 %v1055, 0.17677669
    %v1421 = vmul.f32 %v1061, 0.17677669
    %v1422 = vmul.f32 %v1067, 0.17677669
    %v1423 = vmul.f32 %v1073, 0.17677669
    %v1424 = vmul.f32 %v1079, 0.17677669
    %v1425 = vmul.f32 %v1085, 0.17677669
    %v1426 = vmul.f32 %v1091, 0.17677669
    %v1427 = vmul.f32 %v1097, 0.17677669
    %v1428 = vmul.f32 %v1103, 0.17677669
    %v1429 = vmul.f32 %v1109, 0.17677669
    %v1430 = vmul.f32 %v1115, 0.17677669
    %v1431 = vmul.f32 %v1121, 0.17677669
    %v1432 = vmul.f32 %v1127, 0.17677669
    %v1433 = vmul.f32 %v1133, 0.17677669
    %v1434 = vmul.f32 %v1139, 0.17677669
    %v1435 = vmul.f32 %v1145, 0.17677669
    %v1436 = vmul.f32 %v1151, 0.17677669
    %v1437 = vmul.f32 %v1157, 0.17677669
    %v1438 = vmul.f32 %v1163, 0.17677669
    %v1439 = vmul.f32 %v1169, 0.17677669
    %v1440 = vmul.f32 %v1175, 0.17677669
    %v1441 = vmul.f32 %v1181, 0.17677669
    %1442 = vxpose.xlu0.b32.start [1/16] %v1410, 128
    %1443 = vxpose.xlu0.b32.cont [2/16] %v1411, 128
    %1444 = vxpose.xlu0.b32.cont [3/16] %v1412, 128
    %1445 = vxpose.xlu0.b32.cont [4/16] %v1413, 128
    %1446 = vxpose.xlu0.b32.cont [5/16] %v1414, 128
    %1447 = vxpose.xlu0.b32.cont [6/16] %v1415, 128
    %1448 = vxpose.xlu0.b32.cont [7/16] %v1416, 128
    %1449 = vxpose.xlu0.b32.cont [8/16] %v1417, 128
    %1450 = vxpose.xlu0.b32.cont [9/16] %v1418, 128
    %1451 = vxpose.xlu0.b32.cont [10/16] %v1419, 128
    %1452 = vxpose.xlu0.b32.cont [11/16] %v1420, 128
    %1453 = vxpose.xlu0.b32.cont [12/16] %v1421, 128
    %1454 = vxpose.xlu0.b32.cont [13/16] %v1422, 128
    %1455 = vxpose.xlu0.b32.cont [14/16] %v1423, 128
    %1456 = vxpose.xlu0.b32.cont [15/16] %v1424, 128
    %1457 = vxpose.xlu0.b32.end [16/16] %v1425, 128
    %v1458 = vpop.trf.xlu0
    %v1459 = vpop.trf.xlu0
    %v1460 = vpop.trf.xlu0
    %v1461 = vpop.trf.xlu0
    %v1462 = vpop.trf.xlu0
    %v1463 = vpop.trf.xlu0
    %v1464 = vpop.trf.xlu0
    %v1465 = vpop.trf.xlu0
    %v1466 = vpop.trf.xlu0
    %v1467 = vpop.trf.xlu0
    %v1468 = vpop.trf.xlu0
    %v1469 = vpop.trf.xlu0
    %v1470 = vpop.trf.xlu0
    %v1471 = vpop.trf.xlu0
    %v1472 = vpop.trf.xlu0
    %v1473 = vpop.trf.xlu0
    %1474 = vxpose.xlu0.b32.start [1/16] %v1426, 128
    %1475 = vxpose.xlu0.b32.cont [2/16] %v1427, 128
    %1476 = vxpose.xlu0.b32.cont [3/16] %v1428, 128
    %1477 = vxpose.xlu0.b32.cont [4/16] %v1429, 128
    %1478 = vxpose.xlu0.b32.cont [5/16] %v1430, 128
    %1479 = vxpose.xlu0.b32.cont [6/16] %v1431, 128
    %1480 = vxpose.xlu0.b32.cont [7/16] %v1432, 128
    %1481 = vxpose.xlu0.b32.cont [8/16] %v1433, 128
    %1482 = vxpose.xlu0.b32.cont [9/16] %v1434, 128
    %1483 = vxpose.xlu0.b32.cont [10/16] %v1435, 128
    %1484 = vxpose.xlu0.b32.cont [11/16] %v1436, 128
    %1485 = vxpose.xlu0.b32.cont [12/16] %v1437, 128
    %1486 = vxpose.xlu0.b32.cont [13/16] %v1438, 128
    %1487 = vxpose.xlu0.b32.cont [14/16] %v1439, 128
    %1488 = vxpose.xlu0.b32.cont [15/16] %v1440, 128
    %1489 = vxpose.xlu0.b32.end [16/16] %v1441, 128
    %v1490 = vpop.trf.xlu0
    %v1491 = vpop.trf.xlu0
    %v1492 = vpop.trf.xlu0
    %v1493 = vpop.trf.xlu0
    %v1494 = vpop.trf.xlu0
    %v1495 = vpop.trf.xlu0
    %v1496 = vpop.trf.xlu0
    %v1497 = vpop.trf.xlu0
    %v1498 = vpop.trf.xlu0
    %v1499 = vpop.trf.xlu0
    %v1500 = vpop.trf.xlu0
    %v1501 = vpop.trf.xlu0
    %v1502 = vpop.trf.xlu0
    %v1503 = vpop.trf.xlu0
    %v1504 = vpop.trf.xlu0
    %v1505 = vpop.trf.xlu0
    %1506 = vxpose.xlu0.b32.start [1/16] %v997, 128
    %1507 = vxpose.xlu0.b32.cont [2/16] %v1003, 128
    %1508 = vxpose.xlu0.b32.cont [3/16] %v1009, 128
    %1509 = vxpose.xlu0.b32.cont [4/16] %v1015, 128
    %1510 = vxpose.xlu0.b32.cont [5/16] %v1021, 128
    %1511 = vxpose.xlu0.b32.cont [6/16] %v1027, 128
    %1512 = vxpose.xlu0.b32.cont [7/16] %v1033, 128
    %1513 = vxpose.xlu0.b32.cont [8/16] %v1039, 128
    %1514 = vxpose.xlu0.b32.cont [9/16] %v1045, 128
    %1515 = vxpose.xlu0.b32.cont [10/16] %v1051, 128
    %1516 = vxpose.xlu0.b32.cont [11/16] %v1057, 128
    %1517 = vxpose.xlu0.b32.cont [12/16] %v1063, 128
    %1518 = vxpose.xlu0.b32.cont [13/16] %v1069, 128
    %1519 = vxpose.xlu0.b32.cont [14/16] %v1075, 128
    %1520 = vxpose.xlu0.b32.cont [15/16] %v1081, 128
    %1521 = vxpose.xlu0.b32.end [16/16] %v1087, 128
    %v1522 = vpop.trf.xlu0
    %v1523 = vpop.trf.xlu0
    %v1524 = vpop.trf.xlu0
    %v1525 = vpop.trf.xlu0
    %v1526 = vpop.trf.xlu0
    %v1527 = vpop.trf.xlu0
    %v1528 = vpop.trf.xlu0
    %v1529 = vpop.trf.xlu0
    %v1530 = vpop.trf.xlu0
    %v1531 = vpop.trf.xlu0
    %v1532 = vpop.trf.xlu0
    %v1533 = vpop.trf.xlu0
    %v1534 = vpop.trf.xlu0
    %v1535 = vpop.trf.xlu0
    %v1536 = vpop.trf.xlu0
    %v1537 = vpop.trf.xlu0
    %1538 = vxpose.xlu0.b32.start [1/16] %v1093, 128
    %1539 = vxpose.xlu0.b32.cont [2/16] %v1099, 128
    %1540 = vxpose.xlu0.b32.cont [3/16] %v1105, 128
    %1541 = vxpose.xlu0.b32.cont [4/16] %v1111, 128
    %1542 = vxpose.xlu0.b32.cont [5/16] %v1117, 128
    %1543 = vxpose.xlu0.b32.cont [6/16] %v1123, 128
    %1544 = vxpose.xlu0.b32.cont [7/16] %v1129, 128
    %1545 = vxpose.xlu0.b32.cont [8/16] %v1135, 128
    %1546 = vxpose.xlu0.b32.cont [9/16] %v1141, 128
    %1547 = vxpose.xlu0.b32.cont [10/16] %v1147, 128
    %1548 = vxpose.xlu0.b32.cont [11/16] %v1153, 128
    %1549 = vxpose.xlu0.b32.cont [12/16] %v1159, 128
    %1550 = vxpose.xlu0.b32.cont [13/16] %v1165, 128
    %1551 = vxpose.xlu0.b32.cont [14/16] %v1171, 128
    %1552 = vxpose.xlu0.b32.cont [15/16] %v1177, 128
    %1553 = vxpose.xlu0.b32.end [16/16] %v1183, 128
    %v1554 = vpop.trf.xlu0
    %v1555 = vpop.trf.xlu0
    %v1556 = vpop.trf.xlu0
    %v1557 = vpop.trf.xlu0
    %v1558 = vpop.trf.xlu0
    %v1559 = vpop.trf.xlu0
    %v1560 = vpop.trf.xlu0
    %v1561 = vpop.trf.xlu0
    %v1562 = vpop.trf.xlu0
    %v1563 = vpop.trf.xlu0
    %v1564 = vpop.trf.xlu0
    %v1565 = vpop.trf.xlu0
    %v1566 = vpop.trf.xlu0
    %v1567 = vpop.trf.xlu0
    %v1568 = vpop.trf.xlu0
    %v1569 = vpop.trf.xlu0
    %1570 = vxpose.xlu0.b32.start [1/16] %v1252, 128
    %1571 = vxpose.xlu0.b32.cont [2/16] %v1257, 128
    %1572 = vxpose.xlu0.b32.cont [3/16] %v1262, 128
    %1573 = vxpose.xlu0.b32.cont [4/16] %v1267, 128
    %1574 = vxpose.xlu0.b32.cont [5/16] %v1272, 128
    %1575 = vxpose.xlu0.b32.cont [6/16] %v1277, 128
    %1576 = vxpose.xlu0.b32.cont [7/16] %v1282, 128
    %1577 = vxpose.xlu0.b32.cont [8/16] %v1287, 128
    %1578 = vxpose.xlu0.b32.cont [9/16] %v1292, 128
    %1579 = vxpose.xlu0.b32.cont [10/16] %v1297, 128
    %1580 = vxpose.xlu0.b32.cont [11/16] %v1302, 128
    %1581 = vxpose.xlu0.b32.cont [12/16] %v1307, 128
    %1582 = vxpose.xlu0.b32.cont [13/16] %v1312, 128
    %1583 = vxpose.xlu0.b32.cont [14/16] %v1317, 128
    %1584 = vxpose.xlu0.b32.cont [15/16] %v1322, 128
    %1585 = vxpose.xlu0.b32.end [16/16] %v1327, 128
    %v1586 = vpop.trf.xlu0
    %v1587 = vpop.trf.xlu0
    %v1588 = vpop.trf.xlu0
    %v1589 = vpop.trf.xlu0
    %v1590 = vpop.trf.xlu0
    %v1591 = vpop.trf.xlu0
    %v1592 = vpop.trf.xlu0
    %v1593 = vpop.trf.xlu0
    %v1594 = vpop.trf.xlu0
    %v1595 = vpop.trf.xlu0
    %v1596 = vpop.trf.xlu0
    %v1597 = vpop.trf.xlu0
    %v1598 = vpop.trf.xlu0
    %v1599 = vpop.trf.xlu0
    %v1600 = vpop.trf.xlu0
    %v1601 = vpop.trf.xlu0
    %1602 = vxpose.xlu0.b32.start [1/16] %v1332, 128
    %1603 = vxpose.xlu0.b32.cont [2/16] %v1337, 128
    %1604 = vxpose.xlu0.b32.cont [3/16] %v1342, 128
    %1605 = vxpose.xlu0.b32.cont [4/16] %v1347, 128
    %1606 = vxpose.xlu0.b32.cont [5/16] %v1352, 128
    %1607 = vxpose.xlu0.b32.cont [6/16] %v1357, 128
    %1608 = vxpose.xlu0.b32.cont [7/16] %v1362, 128
    %1609 = vxpose.xlu0.b32.cont [8/16] %v1367, 128
    %1610 = vxpose.xlu0.b32.cont [9/16] %v1372, 128
    %1611 = vxpose.xlu0.b32.cont [10/16] %v1377, 128
    %1612 = vxpose.xlu0.b32.cont [11/16] %v1382, 128
    %1613 = vxpose.xlu0.b32.cont [12/16] %v1387, 128
    %1614 = vxpose.xlu0.b32.cont [13/16] %v1392, 128
    %1615 = vxpose.xlu0.b32.cont [14/16] %v1397, 128
    %1616 = vxpose.xlu0.b32.cont [15/16] %v1402, 128
    %1617 = vxpose.xlu0.b32.end [16/16] %v1407, 128
    %v1618 = vpop.trf.xlu0
    %v1619 = vpop.trf.xlu0
    %v1620 = vpop.trf.xlu0
    %v1621 = vpop.trf.xlu0
    %v1622 = vpop.trf.xlu0
    %v1623 = vpop.trf.xlu0
    %v1624 = vpop.trf.xlu0
    %v1625 = vpop.trf.xlu0
    %v1626 = vpop.trf.xlu0
    %v1627 = vpop.trf.xlu0
    %v1628 = vpop.trf.xlu0
    %v1629 = vpop.trf.xlu0
    %v1630 = vpop.trf.xlu0
    %v1631 = vpop.trf.xlu0
    %v1632 = vpop.trf.xlu0
    %v1633 = vpop.trf.xlu0
    %1634 = vxpose.xlu0.b32.start [1/16] %v1458, 128
    %1635 = vxpose.xlu0.b32.cont [2/16] %v1459, 128
    %1636 = vxpose.xlu0.b32.cont [3/16] %v1460, 128
    %1637 = vxpose.xlu0.b32.cont [4/16] %v1461, 128
    %1638 = vxpose.xlu0.b32.cont [5/16] 0.0, 128
    %1639 = vxpose.xlu0.b32.cont [6/16] 0.0, 128
    %1640 = vxpose.xlu0.b32.cont [7/16] 0.0, 128
    %1641 = vxpose.xlu0.b32.cont [8/16] 0.0, 128
    %1642 = vxpose.xlu0.b32.cont [9/16] 0.0, 128
    %1643 = vxpose.xlu0.b32.cont [10/16] 0.0, 128
    %1644 = vxpose.xlu0.b32.cont [11/16] 0.0, 128
    %1645 = vxpose.xlu0.b32.cont [12/16] 0.0, 128
    %1646 = vxpose.xlu0.b32.cont [13/16] 0.0, 128
    %1647 = vxpose.xlu0.b32.cont [14/16] 0.0, 128
    %1648 = vxpose.xlu0.b32.cont [15/16] 0.0, 128
    %1649 = vxpose.xlu0.b32.end [16/16] 0.0, 128
    %v1650 = vpop.trf.xlu0
    %v1651 = vpop.trf.xlu0
    %v1652 = vpop.trf.xlu0
    %v1653 = vpop.trf.xlu0
    %v1654 = vpop.trf.xlu0
    %v1655 = vpop.trf.xlu0
    %v1656 = vpop.trf.xlu0
    %v1657 = vpop.trf.xlu0
    %v1658 = vpop.trf.xlu0
    %v1659 = vpop.trf.xlu0
    %v1660 = vpop.trf.xlu0
    %v1661 = vpop.trf.xlu0
    %v1662 = vpop.trf.xlu0
    %v1663 = vpop.trf.xlu0
    %v1664 = vpop.trf.xlu0
    %v1665 = vpop.trf.xlu0
    %1666 = vxpose.xlu0.b32.start [1/16] %v1462, 128
    %1667 = vxpose.xlu0.b32.cont [2/16] %v1463, 128
    %1668 = vxpose.xlu0.b32.cont [3/16] %v1464, 128
    %1669 = vxpose.xlu0.b32.cont [4/16] %v1465, 128
    %1670 = vxpose.xlu0.b32.cont [5/16] 0.0, 128
    %1671 = vxpose.xlu0.b32.cont [6/16] 0.0, 128
    %1672 = vxpose.xlu0.b32.cont [7/16] 0.0, 128
    %1673 = vxpose.xlu0.b32.cont [8/16] 0.0, 128
    %1674 = vxpose.xlu0.b32.cont [9/16] 0.0, 128
    %1675 = vxpose.xlu0.b32.cont [10/16] 0.0, 128
    %1676 = vxpose.xlu0.b32.cont [11/16] 0.0, 128
    %1677 = vxpose.xlu0.b32.cont [12/16] 0.0, 128
    %1678 = vxpose.xlu0.b32.cont [13/16] 0.0, 128
    %1679 = vxpose.xlu0.b32.cont [14/16] 0.0, 128
    %1680 = vxpose.xlu0.b32.cont [15/16] 0.0, 128
    %1681 = vxpose.xlu0.b32.end [16/16] 0.0, 128
    %v1682 = vpop.trf.xlu0
    %v1683 = vpop.trf.xlu0
    %v1684 = vpop.trf.xlu0
    %v1685 = vpop.trf.xlu0
    %v1686 = vpop.trf.xlu0
    %v1687 = vpop.trf.xlu0
    %v1688 = vpop.trf.xlu0
    %v1689 = vpop.trf.xlu0
    %v1690 = vpop.trf.xlu0
    %v1691 = vpop.trf.xlu0
    %v1692 = vpop.trf.xlu0
    %v1693 = vpop.trf.xlu0
    %v1694 = vpop.trf.xlu0
    %v1695 = vpop.trf.xlu0
    %v1696 = vpop.trf.xlu0
    %v1697 = vpop.trf.xlu0
    %1698 = vxpose.xlu0.b32.start [1/16] %v1466, 128
    %1699 = vxpose.xlu0.b32.cont [2/16] %v1467, 128
    %1700 = vxpose.xlu0.b32.cont [3/16] %v1468, 128
    %1701 = vxpose.xlu0.b32.cont [4/16] %v1469, 128
    %1702 = vxpose.xlu0.b32.cont [5/16] 0.0, 128
    %1703 = vxpose.xlu0.b32.cont [6/16] 0.0, 128
    %1704 = vxpose.xlu0.b32.cont [7/16] 0.0, 128
    %1705 = vxpose.xlu0.b32.cont [8/16] 0.0, 128
    %1706 = vxpose.xlu0.b32.cont [9/16] 0.0, 128
    %1707 = vxpose.xlu0.b32.cont [10/16] 0.0, 128
    %1708 = vxpose.xlu0.b32.cont [11/16] 0.0, 128
    %1709 = vxpose.xlu0.b32.cont [12/16] 0.0, 128
    %1710 = vxpose.xlu0.b32.cont [13/16] 0.0, 128
    %1711 = vxpose.xlu0.b32.cont [14/16] 0.0, 128
    %1712 = vxpose.xlu0.b32.cont [15/16] 0.0, 128
    %1713 = vxpose.xlu0.b32.end [16/16] 0.0, 128
    %v1714 = vpop.trf.xlu0
    %v1715 = vpop.trf.xlu0
    %v1716 = vpop.trf.xlu0
    %v1717 = vpop.trf.xlu0
    %v1718 = vpop.trf.xlu0
    %v1719 = vpop.trf.xlu0
    %v1720 = vpop.trf.xlu0
    %v1721 = vpop.trf.xlu0
    %v1722 = vpop.trf.xlu0
    %v1723 = vpop.trf.xlu0
    %v1724 = vpop.trf.xlu0
    %v1725 = vpop.trf.xlu0
    %v1726 = vpop.trf.xlu0
    %v1727 = vpop.trf.xlu0
    %v1728 = vpop.trf.xlu0
    %v1729 = vpop.trf.xlu0
    %1730 = vxpose.xlu0.b32.start [1/16] %v1470, 128
    %1731 = vxpose.xlu0.b32.cont [2/16] %v1471, 128
    %1732 = vxpose.xlu0.b32.cont [3/16] %v1472, 128
    %1733 = vxpose.xlu0.b32.cont [4/16] %v1473, 128
    %1734 = vxpose.xlu0.b32.cont [5/16] 0.0, 128
    %1735 = vxpose.xlu0.b32.cont [6/16] 0.0, 128
    %1736 = vxpose.xlu0.b32.cont [7/16] 0.0, 128
    %1737 = vxpose.xlu0.b32.cont [8/16] 0.0, 128
    %1738 = vxpose.xlu0.b32.cont [9/16] 0.0, 128
    %1739 = vxpose.xlu0.b32.cont [10/16] 0.0, 128
    %1740 = vxpose.xlu0.b32.cont [11/16] 0.0, 128
    %1741 = vxpose.xlu0.b32.cont [12/16] 0.0, 128
    %1742 = vxpose.xlu0.b32.cont [13/16] 0.0, 128
    %1743 = vxpose.xlu0.b32.cont [14/16] 0.0, 128
    %1744 = vxpose.xlu0.b32.cont [15/16] 0.0, 128
    %1745 = vxpose.xlu0.b32.end [16/16] 0.0, 128
    %v1746 = vpop.trf.xlu0
    %v1747 = vpop.trf.xlu0
    %v1748 = vpop.trf.xlu0
    %v1749 = vpop.trf.xlu0
    %v1750 = vpop.trf.xlu0
    %v1751 = vpop.trf.xlu0
    %v1752 = vpop.trf.xlu0
    %v1753 = vpop.trf.xlu0
    %v1754 = vpop.trf.xlu0
    %v1755 = vpop.trf.xlu0
    %v1756 = vpop.trf.xlu0
    %v1757 = vpop.trf.xlu0
    %v1758 = vpop.trf.xlu0
    %v1759 = vpop.trf.xlu0
    %v1760 = vpop.trf.xlu0
    %v1761 = vpop.trf.xlu0
    %1762 = vxpose.xlu0.b32.start [1/16] %v1490, 128
    %1763 = vxpose.xlu0.b32.cont [2/16] %v1491, 128
    %1764 = vxpose.xlu0.b32.cont [3/16] %v1492, 128
    %1765 = vxpose.xlu0.b32.cont [4/16] %v1493, 128
    %1766 = vxpose.xlu0.b32.cont [5/16] 0.0, 128
    %1767 = vxpose.xlu0.b32.cont [6/16] 0.0, 128
    %1768 = vxpose.xlu0.b32.cont [7/16] 0.0, 128
    %1769 = vxpose.xlu0.b32.cont [8/16] 0.0, 128
    %1770 = vxpose.xlu0.b32.cont [9/16] 0.0, 128
    %1771 = vxpose.xlu0.b32.cont [10/16] 0.0, 128
    %1772 = vxpose.xlu0.b32.cont [11/16] 0.0, 128
    %1773 = vxpose.xlu0.b32.cont [12/16] 0.0, 128
    %1774 = vxpose.xlu0.b32.cont [13/16] 0.0, 128
    %1775 = vxpose.xlu0.b32.cont [14/16] 0.0, 128
    %1776 = vxpose.xlu0.b32.cont [15/16] 0.0, 128
    %1777 = vxpose.xlu0.b32.end [16/16] 0.0, 128
    %v1778 = vpop.trf.xlu0
    %v1779 = vpop.trf.xlu0
    %v1780 = vpop.trf.xlu0
    %v1781 = vpop.trf.xlu0
    %v1782 = vpop.trf.xlu0
    %v1783 = vpop.trf.xlu0
    %v1784 = vpop.trf.xlu0
    %v1785 = vpop.trf.xlu0
    %v1786 = vpop.trf.xlu0
    %v1787 = vpop.trf.xlu0
    %v1788 = vpop.trf.xlu0
    %v1789 = vpop.trf.xlu0
    %v1790 = vpop.trf.xlu0
    %v1791 = vpop.trf.xlu0
    %v1792 = vpop.trf.xlu0
    %v1793 = vpop.trf.xlu0
    %1794 = vxpose.xlu0.b32.start [1/16] %v1494, 128
    %1795 = vxpose.xlu0.b32.cont [2/16] %v1495, 128
    %1796 = vxpose.xlu0.b32.cont [3/16] %v1496, 128
    %1797 = vxpose.xlu0.b32.cont [4/16] %v1497, 128
    %1798 = vxpose.xlu0.b32.cont [5/16] 0.0, 128
    %1799 = vxpose.xlu0.b32.cont [6/16] 0.0, 128
    %1800 = vxpose.xlu0.b32.cont [7/16] 0.0, 128
    %1801 = vxpose.xlu0.b32.cont [8/16] 0.0, 128
    %1802 = vxpose.xlu0.b32.cont [9/16] 0.0, 128
    %1803 = vxpose.xlu0.b32.cont [10/16] 0.0, 128
    %1804 = vxpose.xlu0.b32.cont [11/16] 0.0, 128
    %1805 = vxpose.xlu0.b32.cont [12/16] 0.0, 128
    %1806 = vxpose.xlu0.b32.cont [13/16] 0.0, 128
    %1807 = vxpose.xlu0.b32.cont [14/16] 0.0, 128
    %1808 = vxpose.xlu0.b32.cont [15/16] 0.0, 128
    %1809 = vxpose.xlu0.b32.end [16/16] 0.0, 128
    %v1810 = vpop.trf.xlu0
    %v1811 = vpop.trf.xlu0
    %v1812 = vpop.trf.xlu0
    %v1813 = vpop.trf.xlu0
    %v1814 = vpop.trf.xlu0
    %v1815 = vpop.trf.xlu0
    %v1816 = vpop.trf.xlu0
    %v1817 = vpop.trf.xlu0
    %v1818 = vpop.trf.xlu0
    %v1819 = vpop.trf.xlu0
    %v1820 = vpop.trf.xlu0
    %v1821 = vpop.trf.xlu0
    %v1822 = vpop.trf.xlu0
    %v1823 = vpop.trf.xlu0
    %v1824 = vpop.trf.xlu0
    %v1825 = vpop.trf.xlu0
    %1826 = vxpose.xlu0.b32.start [1/16] %v1498, 128
    %1827 = vxpose.xlu0.b32.cont [2/16] %v1499, 128
    %1828 = vxpose.xlu0.b32.cont [3/16] %v1500, 128
    %1829 = vxpose.xlu0.b32.cont [4/16] %v1501, 128
    %1830 = vxpose.xlu0.b32.cont [5/16] 0.0, 128
    %1831 = vxpose.xlu0.b32.cont [6/16] 0.0, 128
    %1832 = vxpose.xlu0.b32.cont [7/16] 0.0, 128
    %1833 = vxpose.xlu0.b32.cont [8/16] 0.0, 128
    %1834 = vxpose.xlu0.b32.cont [9/16] 0.0, 128
    %1835 = vxpose.xlu0.b32.cont [10/16] 0.0, 128
    %1836 = vxpose.xlu0.b32.cont [11/16] 0.0, 128
    %1837 = vxpose.xlu0.b32.cont [12/16] 0.0, 128
    %1838 = vxpose.xlu0.b32.cont [13/16] 0.0, 128
    %1839 = vxpose.xlu0.b32.cont [14/16] 0.0, 128
    %1840 = vxpose.xlu0.b32.cont [15/16] 0.0, 128
    %1841 = vxpose.xlu0.b32.end [16/16] 0.0, 128
    %v1842 = vpop.trf.xlu0
    %v1843 = vpop.trf.xlu0
    %v1844 = vpop.trf.xlu0
    %v1845 = vpop.trf.xlu0
    %v1846 = vpop.trf.xlu0
    %v1847 = vpop.trf.xlu0
    %v1848 = vpop.trf.xlu0
    %v1849 = vpop.trf.xlu0
    %v1850 = vpop.trf.xlu0
    %v1851 = vpop.trf.xlu0
    %v1852 = vpop.trf.xlu0
    %v1853 = vpop.trf.xlu0
    %v1854 = vpop.trf.xlu0
    %v1855 = vpop.trf.xlu0
    %v1856 = vpop.trf.xlu0
    %v1857 = vpop.trf.xlu0
    %1858 = vxpose.xlu0.b32.start [1/16] %v1502, 128
    %1859 = vxpose.xlu0.b32.cont [2/16] %v1503, 128
    %1860 = vxpose.xlu0.b32.cont [3/16] %v1504, 128
    %1861 = vxpose.xlu0.b32.cont [4/16] %v1505, 128
    %1862 = vxpose.xlu0.b32.cont [5/16] 0.0, 128
    %1863 = vxpose.xlu0.b32.cont [6/16] 0.0, 128
    %1864 = vxpose.xlu0.b32.cont [7/16] 0.0, 128
    %1865 = vxpose.xlu0.b32.cont [8/16] 0.0, 128
    %1866 = vxpose.xlu0.b32.cont [9/16] 0.0, 128
    %1867 = vxpose.xlu0.b32.cont [10/16] 0.0, 128
    %1868 = vxpose.xlu0.b32.cont [11/16] 0.0, 128
    %1869 = vxpose.xlu0.b32.cont [12/16] 0.0, 128
    %1870 = vxpose.xlu0.b32.cont [13/16] 0.0, 128
    %1871 = vxpose.xlu0.b32.cont [14/16] 0.0, 128
    %1872 = vxpose.xlu0.b32.cont [15/16] 0.0, 128
    %1873 = vxpose.xlu0.b32.end [16/16] 0.0, 128
    %v1874 = vpop.trf.xlu0
    %v1875 = vpop.trf.xlu0
    %v1876 = vpop.trf.xlu0
    %v1877 = vpop.trf.xlu0
    %v1878 = vpop.trf.xlu0
    %v1879 = vpop.trf.xlu0
    %v1880 = vpop.trf.xlu0
    %v1881 = vpop.trf.xlu0
    %v1882 = vpop.trf.xlu0
    %v1883 = vpop.trf.xlu0
    %v1884 = vpop.trf.xlu0
    %v1885 = vpop.trf.xlu0
    %v1886 = vpop.trf.xlu0
    %v1887 = vpop.trf.xlu0
    %v1888 = vpop.trf.xlu0
    %v1889 = vpop.trf.xlu0
    %v1891 = vsel %vm596, %v1650, 0
    %v1894 = vsel %vm596, %v1651, 0
    %v1897 = vsel %vm596, %v1652, 0
    %v1900 = vsel %vm596, %v1653, 0
    %v1903 = vsel %vm596, %v1654, 0
    %v1906 = vsel %vm596, %v1655, 0
    %v1909 = vsel %vm596, %v1656, 0
    %v1912 = vsel %vm596, %v1657, 0
    %v1915 = vsel %vm596, %v1658, 0
    %v1918 = vsel %vm596, %v1659, 0
    %v1921 = vsel %vm596, %v1660, 0
    %v1924 = vsel %vm596, %v1661, 0
    %v1927 = vsel %vm596, %v1662, 0
    %v1930 = vsel %vm596, %v1663, 0
    %v1933 = vsel %vm596, %v1664, 0
    %v1936 = vsel %vm596, %v1665, 0
    %1938 = vmatprep.subr.mxu0 0.0
    %1939 = vmatpush1.msra.mxu0 %v1522
    %1940 = vmatprep.subr.mxu0 0.0
    %1941 = vmatpush1.msra.mxu0 %v1523
    %1942 = vmatprep.subr.mxu0 0.0
    %1943 = vmatpush1.msra.mxu0 %v1524
    %1944 = vmatprep.subr.mxu0 0.0
    %1945 = vmatpush1.msra.mxu0 %v1525
    %1946 = vmatprep.subr.mxu0 0.0
    %1947 = vmatpush1.msra.mxu0 0.0
    %1948 = vmatprep.subr.mxu0 0.0
    %1949 = vmatpush1.msra.mxu0 0.0
    %1950 = vmatprep.subr.mxu0 0.0
    %1951 = vmatpush1.msra.mxu0 0.0
    %1952 = vmatprep.subr.mxu0 0.0
    %1953 = vmatpush1.msra.mxu0 0.0
    %1954 = vmatprep.subr.mxu0 0.0
    %1955 = vmatpush1.msra.mxu0 0.0
    %1956 = vmatprep.subr.mxu0 0.0
    %1957 = vmatpush1.msra.mxu0 0.0
    %1958 = vmatprep.subr.mxu0 0.0
    %1959 = vmatpush1.msra.mxu0 0.0
    %1960 = vmatprep.subr.mxu0 0.0
    %1961 = vmatpush1.msra.mxu0 0.0
    %1962 = vmatprep.subr.mxu0 0.0
    %1963 = vmatpush1.msra.mxu0 0.0
    %1964 = vmatprep.subr.mxu0 0.0
    %1965 = vmatpush1.msra.mxu0 0.0
    %1966 = vmatprep.subr.mxu0 0.0
    %1967 = vmatpush1.msra.mxu0 0.0
    %1968 = vmatprep.subr.mxu0 0.0
    %1969 = vmatpush1.msra.mxu0 0.0
    %1970 = vmatprep.subr.mxu0 0.0
    %1971 = vmatpush1.msra.mxu0 0.0
    %1972 = vmatprep.subr.mxu0 0.0
    %1973 = vmatpush1.msra.mxu0 0.0
    %1974 = vmatprep.subr.mxu0 0.0
    %1975 = vmatpush1.msra.mxu0 0.0
    %1976 = vmatprep.subr.mxu0 0.0
    %1977 = vmatpush1.msra.mxu0 0.0
    %1978 = vmatprep.subr.mxu0 0.0
    %1979 = vmatpush1.msra.mxu0 0.0
    %1980 = vmatprep.subr.mxu0 0.0
    %1981 = vmatpush1.msra.mxu0 0.0
    %1982 = vmatprep.subr.mxu0 0.0
    %1983 = vmatpush1.msra.mxu0 0.0
    %1984 = vmatprep.subr.mxu0 0.0
    %1985 = vmatpush1.msra.mxu0 0.0
    %1986 = vmatprep.subr.mxu0 0.0
    %1987 = vmatpush1.msra.mxu0 0.0
    %1988 = vmatprep.subr.mxu0 0.0
    %1989 = vmatpush1.msra.mxu0 0.0
    %1990 = vmatprep.subr.mxu0 0.0
    %1991 = vmatpush1.msra.mxu0 0.0
    %1992 = vmatprep.subr.mxu0 0.0
    %1993 = vmatpush1.msra.mxu0 0.0
    %1994 = vmatprep.subr.mxu0 0.0
    %1995 = vmatpush1.msra.mxu0 0.0
    %1996 = vmatprep.subr.mxu0 0.0
    %1997 = vmatpush1.msra.mxu0 0.0
    %1998 = vmatprep.subr.mxu0 0.0
    %1999 = vmatpush1.msra.mxu0 0.0
    %2000 = vmatprep.subr.mxu0 0.0
    %2001 = vmatpush1.msra.mxu0 0.0
    %2002 = vmatprep.mubr.f32.mxu0 0.0
    %2003 = vmatmul.mubr.f32.gmra.mrb[0].mxu0 %v1891
    %v2004 = vpop.f32.mrb[0].mxu0
    %v2005 = vadd.f32 0.0, %v2004
    %v2006 = vpop.f32.mrb[0].mxu0
    %2007 = vmatprep.mubr.f32.mxu0 0.0
    %2008 = vmatmul.mubr.f32.gmra.mrb[0].mxu0 %v1894
    %v2009 = vpop.f32.mrb[0].mxu0
    %v2010 = vadd.f32 0.0, %v2009
    %v2011 = vpop.f32.mrb[0].mxu0
    %2012 = vmatprep.mubr.f32.mxu0 0.0
    %2013 = vmatmul.mubr.f32.gmra.mrb[0].mxu0 %v1897
    %v2014 = vpop.f32.mrb[0].mxu0
    %v2015 = vadd.f32 0.0, %v2014
    %v2016 = vpop.f32.mrb[0].mxu0
    %2017 = vmatprep.mubr.f32.mxu0 0.0
    %2018 = vmatmul.mubr.f32.gmra.mrb[0].mxu0 %v1900
    %v2019 = vpop.f32.mrb[0].mxu0
    %v2020 = vadd.f32 0.0, %v2019
    %v2021 = vpop.f32.mrb[0].mxu0
    %2022 = vmatprep.mubr.f32.mxu0 0.0
    %2023 = vmatmul.mubr.f32.gmra.mrb[0].mxu0 %v1903
    %v2024 = vpop.f32.mrb[0].mxu0
    %v2025 = vadd.f32 0.0, %v2024
    %v2026 = vpop.f32.mrb[0].mxu0
    %2027 = vmatprep.mubr.f32.mxu0 0.0
    %2028 = vmatmul.mubr.f32.gmra.mrb[0].mxu0 %v1906
    %v2029 = vpop.f32.mrb[0].mxu0
    %v2030 = vadd.f32 0.0, %v2029
    %v2031 = vpop.f32.mrb[0].mxu0
    %2032 = vmatprep.mubr.f32.mxu0 0.0
    %2033 = vmatmul.mubr.f32.gmra.mrb[0].mxu0 %v1909
    %v2034 = vpop.f32.mrb[0].mxu0
    %v2035 = vadd.f32 0.0, %v2034
    %v2036 = vpop.f32.mrb[0].mxu0
    %2037 = vmatprep.mubr.f32.mxu0 0.0
    %2038 = vmatmul.mubr.f32.gmra.mrb[0].mxu0 %v1912
    %v2039 = vpop.f32.mrb[0].mxu0
    %v2040 = vadd.f32 0.0, %v2039
    %v2041 = vpop.f32.mrb[0].mxu0
    %2042 = vmatprep.mubr.f32.mxu0 0.0
    %2043 = vmatmul.mubr.f32.gmra.mrb[0].mxu0 %v1915
    %v2044 = vpop.f32.mrb[0].mxu0
    %v2045 = vadd.f32 0.0, %v2044
    %v2046 = vpop.f32.mrb[0].mxu0
    %2047 = vmatprep.mubr.f32.mxu0 0.0
    %2048 = vmatmul.mubr.f32.gmra.mrb[0].mxu0 %v1918
    %v2049 = vpop.f32.mrb[0].mxu0
    %v2050 = vadd.f32 0.0, %v2049
    %v2051 = vpop.f32.mrb[0].mxu0
    %2052 = vmatprep.mubr.f32.mxu0 0.0
    %2053 = vmatmul.mubr.f32.gmra.mrb[0].mxu0 %v1921
    %v2054 = vpop.f32.mrb[0].mxu0
    %v2055 = vadd.f32 0.0, %v2054
    %v2056 = vpop.f32.mrb[0].mxu0
    %2057 = vmatprep.mubr.f32.mxu0 0.0
    %2058 = vmatmul.mubr.f32.gmra.mrb[0].mxu0 %v1924
    %v2059 = vpop.f32.mrb[0].mxu0
    %v2060 = vadd.f32 0.0, %v2059
    %v2061 = vpop.f32.mrb[0].mxu0
    %2062 = vmatprep.mubr.f32.mxu0 0.0
    %2063 = vmatmul.mubr.f32.gmra.mrb[0].mxu0 %v1927
    %v2064 = vpop.f32.mrb[0].mxu0
    %v2065 = vadd.f32 0.0, %v2064
    %v2066 = vpop.f32.mrb[0].mxu0
    %2067 = vmatprep.mubr.f32.mxu0 0.0
    %2068 = vmatmul.mubr.f32.gmra.mrb[0].mxu0 %v1930
    %v2069 = vpop.f32.mrb[0].mxu0
    %v2070 = vadd.f32 0.0, %v2069
    %v2071 = vpop.f32.mrb[0].mxu0
    %2072 = vmatprep.mubr.f32.mxu0 0.0
    %2073 = vmatmul.mubr.f32.gmra.mrb[0].mxu0 %v1933
    %v2074 = vpop.f32.mrb[0].mxu0
    %v2075 = vadd.f32 0.0, %v2074
    %v2076 = vpop.f32.mrb[0].mxu0
    %2077 = vmatprep.mubr.f32.mxu0 0.0
    %2078 = vmatmul.mubr.f32.gmra.mrb[0].mxu0 %v1936
    %v2079 = vpop.f32.mrb[0].mxu0
    %v2080 = vadd.f32 0.0, %v2079
    %v2081 = vpop.f32.mrb[0].mxu0
    %2082 = vdwg.mxu0
    %v2084 = vsel %vm596, %v1682, 0
    %v2087 = vsel %vm596, %v1683, 0
    %v2090 = vsel %vm596, %v1684, 0
    %v2093 = vsel %vm596, %v1685, 0
    %v2096 = vsel %vm596, %v1686, 0
    %v2099 = vsel %vm596, %v1687, 0
    %v2102 = vsel %vm596, %v1688, 0
    %v2105 = vsel %vm596, %v1689, 0
    %v2108 = vsel %vm596, %v1690, 0
    %v2111 = vsel %vm596, %v1691, 0
    %v2114 = vsel %vm596, %v1692, 0
    %v2117 = vsel %vm596, %v1693, 0
    %v2120 = vsel %vm596, %v1694, 0
    %v2123 = vsel %vm596, %v1695, 0
    %v2126 = vsel %vm596, %v1696, 0
    %v2129 = vsel %vm596, %v1697, 0
    %2131 = vmatprep.subr.mxu0 0.0
    %2132 = vmatpush1.msra.mxu0 %v1526
    %2133 = vmatprep.subr.mxu0 0.0
    %2134 = vmatpush1.msra.mxu0 %v1527
    %2135 = vmatprep.subr.mxu0 0.0
    %2136 = vmatpush1.msra.mxu0 %v1528
    %2137 = vmatprep.subr.mxu0 0.0
    %2138 = vmatpush1.msra.mxu0 %v1529
    %2139 = vmatprep.subr.mxu0 0.0
    %2140 = vmatpush1.msra.mxu0 0.0
    %2141 = vmatprep.subr.mxu0 0.0
    %2142 = vmatpush1.msra.mxu0 0.0
    %2143 = vmatprep.subr.mxu0 0.0
    %2144 = vmatpush1.msra.mxu0 0.0
    %2145 = vmatprep.subr.mxu0 0.0
    %2146 = vmatpush1.msra.mxu0 0.0
    %2147 = vmatprep.subr.mxu0 0.0
    %2148 = vmatpush1.msra.mxu0 0.0
    %2149 = vmatprep.subr.mxu0 0.0
    %2150 = vmatpush1.msra.mxu0 0.0
    %2151 = vmatprep.subr.mxu0 0.0
    %2152 = vmatpush1.msra.mxu0 0.0
    %2153 = vmatprep.subr.mxu0 0.0
    %2154 = vmatpush1.msra.mxu0 0.0
    %2155 = vmatprep.subr.mxu0 0.0
    %2156 = vmatpush1.msra.mxu0 0.0
    %2157 = vmatprep.subr.mxu0 0.0
    %2158 = vmatpush1.msra.mxu0 0.0
    %2159 = vmatprep.subr.mxu0 0.0
    %2160 = vmatpush1.msra.mxu0 0.0
    %2161 = vmatprep.subr.mxu0 0.0
    %2162 = vmatpush1.msra.mxu0 0.0
    %2163 = vmatprep.subr.mxu0 0.0
    %2164 = vmatpush1.msra.mxu0 0.0
    %2165 = vmatprep.subr.mxu0 0.0
    %2166 = vmatpush1.msra.mxu0 0.0
    %2167 = vmatprep.subr.mxu0 0.0
    %2168 = vmatpush1.msra.mxu0 0.0
    %2169 = vmatprep.subr.mxu0 0.0
    %2170 = vmatpush1.msra.mxu0 0.0
    %2171 = vmatprep.subr.mxu0 0.0
    %2172 = vmatpush1.msra.mxu0 0.0
    %2173 = vmatprep.subr.mxu0 0.0
    %2174 = vmatpush1.msra.mxu0 0.0
    %2175 = vmatprep.subr.mxu0 0.0
    %2176 = vmatpush1.msra.mxu0 0.0
    %2177 = vmatprep.subr.mxu0 0.0
    %2178 = vmatpush1.msra.mxu0 0.0
    %2179 = vmatprep.subr.mxu0 0.0
    %2180 = vmatpush1.msra.mxu0 0.0
    %2181 = vmatprep.subr.mxu0 0.0
    %2182 = vmatpush1.msra.mxu0 0.0
    %2183 = vmatprep.subr.mxu0 0.0
    %2184 = vmatpush1.msra.mxu0 0.0
    %2185 = vmatprep.subr.mxu0 0.0
    %2186 = vmatpush1.msra.mxu0 0.0
    %2187 = vmatprep.subr.mxu0 0.0
    %2188 = vmatpush1.msra.mxu0 0.0
    %2189 = vmatprep.subr.mxu0 0.0
    %2190 = vmatpush1.msra.mxu0 0.0
    %2191 = vmatprep.subr.mxu0 0.0
    %2192 = vmatpush1.msra.mxu0 0.0
    %2193 = vmatprep.subr.mxu0 0.0
    %2194 = vmatpush1.msra.mxu0 0.0
    %2195 = vmatprep.mubr.f32.mxu0 0.0
    %2196 = vmatmul.mubr.f32.gmra.mrb[0].mxu0 %v2084
    %v2197 = vpop.f32.mrb[0].mxu0
    %v2198 = vadd.f32 0.0, %v2197
    %v2199 = vpop.f32.mrb[0].mxu0
    %2200 = vmatprep.mubr.f32.mxu0 0.0
    %2201 = vmatmul.mubr.f32.gmra.mrb[0].mxu0 %v2087
    %v2202 = vpop.f32.mrb[0].mxu0
    %v2203 = vadd.f32 0.0, %v2202
    %v2204 = vpop.f32.mrb[0].mxu0
    %2205 = vmatprep.mubr.f32.mxu0 0.0
    %2206 = vmatmul.mubr.f32.gmra.mrb[0].mxu0 %v2090
    %v2207 = vpop.f32.mrb[0].mxu0
    %v2208 = vadd.f32 0.0, %v2207
    %v2209 = vpop.f32.mrb[0].mxu0
    %2210 = vmatprep.mubr.f32.mxu0 0.0
    %2211 = vmatmul.mubr.f32.gmra.mrb[0].mxu0 %v2093
    %v2212 = vpop.f32.mrb[0].mxu0
    %v2213 = vadd.f32 0.0, %v2212
    %v2214 = vpop.f32.mrb[0].mxu0
    %2215 = vmatprep.mubr.f32.mxu0 0.0
    %2216 = vmatmul.mubr.f32.gmra.mrb[0].mxu0 %v2096
    %v2217 = vpop.f32.mrb[0].mxu0
    %v2218 = vadd.f32 0.0, %v2217
    %v2219 = vpop.f32.mrb[0].mxu0
    %2220 = vmatprep.mubr.f32.mxu0 0.0
    %2221 = vmatmul.mubr.f32.gmra.mrb[0].mxu0 %v2099
    %v2222 = vpop.f32.mrb[0].mxu0
    %v2223 = vadd.f32 0.0, %v2222
    %v2224 = vpop.f32.mrb[0].mxu0
    %2225 = vmatprep.mubr.f32.mxu0 0.0
    %2226 = vmatmul.mubr.f32.gmra.mrb[0].mxu0 %v2102
    %v2227 = vpop.f32.mrb[0].mxu0
    %v2228 = vadd.f32 0.0, %v2227
    %v2229 = vpop.f32.mrb[0].mxu0
    %2230 = vmatprep.mubr.f32.mxu0 0.0
    %2231 = vmatmul.mubr.f32.gmra.mrb[0].mxu0 %v2105
    %v2232 = vpop.f32.mrb[0].mxu0
    %v2233 = vadd.f32 0.0, %v2232
    %v2234 = vpop.f32.mrb[0].mxu0
    %2235 = vmatprep.mubr.f32.mxu0 0.0
    %2236 = vmatmul.mubr.f32.gmra.mrb[0].mxu0 %v2108
    %v2237 = vpop.f32.mrb[0].mxu0
    %v2238 = vadd.f32 0.0, %v2237
    %v2239 = vpop.f32.mrb[0].mxu0
    %2240 = vmatprep.mubr.f32.mxu0 0.0
    %2241 = vmatmul.mubr.f32.gmra.mrb[0].mxu0 %v2111
    %v2242 = vpop.f32.mrb[0].mxu0
    %v2243 = vadd.f32 0.0, %v2242
    %v2244 = vpop.f32.mrb[0].mxu0
    %2245 = vmatprep.mubr.f32.mxu0 0.0
    %2246 = vmatmul.mubr.f32.gmra.mrb[0].mxu0 %v2114
    %v2247 = vpop.f32.mrb[0].mxu0
    %v2248 = vadd.f32 0.0, %v2247
    %v2249 = vpop.f32.mrb[0].mxu0
    %2250 = vmatprep.mubr.f32.mxu0 0.0
    %2251 = vmatmul.mubr.f32.gmra.mrb[0].mxu0 %v2117
    %v2252 = vpop.f32.mrb[0].mxu0
    %v2253 = vadd.f32 0.0, %v2252
    %v2254 = vpop.f32.mrb[0].mxu0
    %2255 = vmatprep.mubr.f32.mxu0 0.0
    %2256 = vmatmul.mubr.f32.gmra.mrb[0].mxu0 %v2120
    %v2257 = vpop.f32.mrb[0].mxu0
    %v2258 = vadd.f32 0.0, %v2257
    %v2259 = vpop.f32.mrb[0].mxu0
    %2260 = vmatprep.mubr.f32.mxu0 0.0
    %2261 = vmatmul.mubr.f32.gmra.mrb[0].mxu0 %v2123
    %v2262 = vpop.f32.mrb[0].mxu0
    %v2263 = vadd.f32 0.0, %v2262
    %v2264 = vpop.f32.mrb[0].mxu0
    %2265 = vmatprep.mubr.f32.mxu0 0.0
    %2266 = vmatmul.mubr.f32.gmra.mrb[0].mxu0 %v2126
    %v2267 = vpop.f32.mrb[0].mxu0
    %v2268 = vadd.f32 0.0, %v2267
    %v2269 = vpop.f32.mrb[0].mxu0
    %2270 = vmatprep.mubr.f32.mxu0 0.0
    %2271 = vmatmul.mubr.f32.gmra.mrb[0].mxu0 %v2129
    %v2272 = vpop.f32.mrb[0].mxu0
    %v2273 = vadd.f32 0.0, %v2272
    %v2274 = vpop.f32.mrb[0].mxu0
    %2275 = vdwg.mxu0
    %v2277 = vsel %vm596, %v1714, 0
    %v2280 = vsel %vm596, %v1715, 0
    %v2283 = vsel %vm596, %v1716, 0
    %v2286 = vsel %vm596, %v1717, 0
    %v2289 = vsel %vm596, %v1718, 0
    %v2292 = vsel %vm596, %v1719, 0
    %v2295 = vsel %vm596, %v1720, 0
    %v2298 = vsel %vm596, %v1721, 0
    %v2301 = vsel %vm596, %v1722, 0
    %v2304 = vsel %vm596, %v1723, 0
    %v2307 = vsel %vm596, %v1724, 0
    %v2310 = vsel %vm596, %v1725, 0
    %v2313 = vsel %vm596, %v1726, 0
    %v2316 = vsel %vm596, %v1727, 0
    %v2319 = vsel %vm596, %v1728, 0
    %v2322 = vsel %vm596, %v1729, 0
    %2324 = vmatprep.subr.mxu0 0.0
    %2325 = vmatpush1.msra.mxu0 %v1530
    %2326 = vmatprep.subr.mxu0 0.0
    %2327 = vmatpush1.msra.mxu0 %v1531
    %2328 = vmatprep.subr.mxu0 0.0
    %2329 = vmatpush1.msra.mxu0 %v1532
    %2330 = vmatprep.subr.mxu0 0.0
    %2331 = vmatpush1.msra.mxu0 %v1533
    %2332 = vmatprep.subr.mxu0 0.0
    %2333 = vmatpush1.msra.mxu0 0.0
    %2334 = vmatprep.subr.mxu0 0.0
    %2335 = vmatpush1.msra.mxu0 0.0
    %2336 = vmatprep.subr.mxu0 0.0
    %2337 = vmatpush1.msra.mxu0 0.0
    %2338 = vmatprep.subr.mxu0 0.0
    %2339 = vmatpush1.msra.mxu0 0.0
    %2340 = vmatprep.subr.mxu0 0.0
    %2341 = vmatpush1.msra.mxu0 0.0
    %2342 = vmatprep.subr.mxu0 0.0
    %2343 = vmatpush1.msra.mxu0 0.0
    %2344 = vmatprep.subr.mxu0 0.0
    %2345 = vmatpush1.msra.mxu0 0.0
    %2346 = vmatprep.subr.mxu0 0.0
    %2347 = vmatpush1.msra.mxu0 0.0
    %2348 = vmatprep.subr.mxu0 0.0
    %2349 = vmatpush1.msra.mxu0 0.0
    %2350 = vmatprep.subr.mxu0 0.0
    %2351 = vmatpush1.msra.mxu0 0.0
    %2352 = vmatprep.subr.mxu0 0.0
    %2353 = vmatpush1.msra.mxu0 0.0
    %2354 = vmatprep.subr.mxu0 0.0
    %2355 = vmatpush1.msra.mxu0 0.0
    %2356 = vmatprep.subr.mxu0 0.0
    %2357 = vmatpush1.msra.mxu0 0.0
    %2358 = vmatprep.subr.mxu0 0.0
    %2359 = vmatpush1.msra.mxu0 0.0
    %2360 = vmatprep.subr.mxu0 0.0
    %2361 = vmatpush1.msra.mxu0 0.0
    %2362 = vmatprep.subr.mxu0 0.0
    %2363 = vmatpush1.msra.mxu0 0.0
    %2364 = vmatprep.subr.mxu0 0.0
    %2365 = vmatpush1.msra.mxu0 0.0
    %2366 = vmatprep.subr.mxu0 0.0
    %2367 = vmatpush1.msra.mxu0 0.0
    %2368 = vmatprep.subr.mxu0 0.0
    %2369 = vmatpush1.msra.mxu0 0.0
    %2370 = vmatprep.subr.mxu0 0.0
    %2371 = vmatpush1.msra.mxu0 0.0
    %2372 = vmatprep.subr.mxu0 0.0
    %2373 = vmatpush1.msra.mxu0 0.0
    %2374 = vmatprep.subr.mxu0 0.0
    %2375 = vmatpush1.msra.mxu0 0.0
    %2376 = vmatprep.subr.mxu0 0.0
    %2377 = vmatpush1.msra.mxu0 0.0
    %2378 = vmatprep.subr.mxu0 0.0
    %2379 = vmatpush1.msra.mxu0 0.0
    %2380 = vmatprep.subr.mxu0 0.0
    %2381 = vmatpush1.msra.mxu0 0.0
    %2382 = vmatprep.subr.mxu0 0.0
    %2383 = vmatpush1.msra.mxu0 0.0
    %2384 = vmatprep.subr.mxu0 0.0
    %2385 = vmatpush1.msra.mxu0 0.0
    %2386 = vmatprep.subr.mxu0 0.0
    %2387 = vmatpush1.msra.mxu0 0.0
    %2388 = vmatprep.mubr.f32.mxu0 0.0
    %2389 = vmatmul.mubr.f32.gmra.mrb[0].mxu0 %v2277
    %v2390 = vpop.f32.mrb[0].mxu0
    %v2391 = vadd.f32 0.0, %v2390
    %v2392 = vpop.f32.mrb[0].mxu0
    %2393 = vmatprep.mubr.f32.mxu0 0.0
    %2394 = vmatmul.mubr.f32.gmra.mrb[0].mxu0 %v2280
    %v2395 = vpop.f32.mrb[0].mxu0
    %v2396 = vadd.f32 0.0, %v2395
    %v2397 = vpop.f32.mrb[0].mxu0
    %2398 = vmatprep.mubr.f32.mxu0 0.0
    %2399 = vmatmul.mubr.f32.gmra.mrb[0].mxu0 %v2283
    %v2400 = vpop.f32.mrb[0].mxu0
    %v2401 = vadd.f32 0.0, %v2400
    %v2402 = vpop.f32.mrb[0].mxu0
    %2403 = vmatprep.mubr.f32.mxu0 0.0
    %2404 = vmatmul.mubr.f32.gmra.mrb[0].mxu0 %v2286
    %v2405 = vpop.f32.mrb[0].mxu0
    %v2406 = vadd.f32 0.0, %v2405
    %v2407 = vpop.f32.mrb[0].mxu0
    %2408 = vmatprep.mubr.f32.mxu0 0.0
    %2409 = vmatmul.mubr.f32.gmra.mrb[0].mxu0 %v2289
    %v2410 = vpop.f32.mrb[0].mxu0
    %v2411 = vadd.f32 0.0, %v2410
    %v2412 = vpop.f32.mrb[0].mxu0
    %2413 = vmatprep.mubr.f32.mxu0 0.0
    %2414 = vmatmul.mubr.f32.gmra.mrb[0].mxu0 %v2292
    %v2415 = vpop.f32.mrb[0].mxu0
    %v2416 = vadd.f32 0.0, %v2415
    %v2417 = vpop.f32.mrb[0].mxu0
    %2418 = vmatprep.mubr.f32.mxu0 0.0
    %2419 = vmatmul.mubr.f32.gmra.mrb[0].mxu0 %v2295
    %v2420 = vpop.f32.mrb[0].mxu0
    %v2421 = vadd.f32 0.0, %v2420
    %v2422 = vpop.f32.mrb[0].mxu0
    %2423 = vmatprep.mubr.f32.mxu0 0.0
    %2424 = vmatmul.mubr.f32.gmra.mrb[0].mxu0 %v2298
    %v2425 = vpop.f32.mrb[0].mxu0
    %v2426 = vadd.f32 0.0, %v2425
    %v2427 = vpop.f32.mrb[0].mxu0
    %2428 = vmatprep.mubr.f32.mxu0 0.0
    %2429 = vmatmul.mubr.f32.gmra.mrb[0].mxu0 %v2301
    %v2430 = vpop.f32.mrb[0].mxu0
    %v2431 = vadd.f32 0.0, %v2430
    %v2432 = vpop.f32.mrb[0].mxu0
    %2433 = vmatprep.mubr.f32.mxu0 0.0
    %2434 = vmatmul.mubr.f32.gmra.mrb[0].mxu0 %v2304
    %v2435 = vpop.f32.mrb[0].mxu0
    %v2436 = vadd.f32 0.0, %v2435
    %v2437 = vpop.f32.mrb[0].mxu0
    %2438 = vmatprep.mubr.f32.mxu0 0.0
    %2439 = vmatmul.mubr.f32.gmra.mrb[0].mxu0 %v2307
    %v2440 = vpop.f32.mrb[0].mxu0
    %v2441 = vadd.f32 0.0, %v2440
    %v2442 = vpop.f32.mrb[0].mxu0
    %2443 = vmatprep.mubr.f32.mxu0 0.0
    %2444 = vmatmul.mubr.f32.gmra.mrb[0].mxu0 %v2310
    %v2445 = vpop.f32.mrb[0].mxu0
    %v2446 = vadd.f32 0.0, %v2445
    %v2447 = vpop.f32.mrb[0].mxu0
    %2448 = vmatprep.mubr.f32.mxu0 0.0
    %2449 = vmatmul.mubr.f32.gmra.mrb[0].mxu0 %v2313
    %v2450 = vpop.f32.mrb[0].mxu0
    %v2451 = vadd.f32 0.0, %v2450
    %v2452 = vpop.f32.mrb[0].mxu0
    %2453 = vmatprep.mubr.f32.mxu0 0.0
    %2454 = vmatmul.mubr.f32.gmra.mrb[0].mxu0 %v2316
    %v2455 = vpop.f32.mrb[0].mxu0
    %v2456 = vadd.f32 0.0, %v2455
    %v2457 = vpop.f32.mrb[0].mxu0
    %2458 = vmatprep.mubr.f32.mxu0 0.0
    %2459 = vmatmul.mubr.f32.gmra.mrb[0].mxu0 %v2319
    %v2460 = vpop.f32.mrb[0].mxu0
    %v2461 = vadd.f32 0.0, %v2460
    %v2462 = vpop.f32.mrb[0].mxu0
    %2463 = vmatprep.mubr.f32.mxu0 0.0
    %2464 = vmatmul.mubr.f32.gmra.mrb[0].mxu0 %v2322
    %v2465 = vpop.f32.mrb[0].mxu0
    %v2466 = vadd.f32 0.0, %v2465
    %v2467 = vpop.f32.mrb[0].mxu0
    %2468 = vdwg.mxu0
    %v2470 = vsel %vm596, %v1746, 0
    %v2473 = vsel %vm596, %v1747, 0
    %v2476 = vsel %vm596, %v1748, 0
    %v2479 = vsel %vm596, %v1749, 0
    %v2482 = vsel %vm596, %v1750, 0
    %v2485 = vsel %vm596, %v1751, 0
    %v2488 = vsel %vm596, %v1752, 0
    %v2491 = vsel %vm596, %v1753, 0
    %v2494 = vsel %vm596, %v1754, 0
    %v2497 = vsel %vm596, %v1755, 0
    %v2500 = vsel %vm596, %v1756, 0
    %v2503 = vsel %vm596, %v1757, 0
    %v2506 = vsel %vm596, %v1758, 0
    %v2509 = vsel %vm596, %v1759, 0
    %v2512 = vsel %vm596, %v1760, 0
    %v2515 = vsel %vm596, %v1761, 0
    %2517 = vmatprep.subr.mxu0 0.0
    %2518 = vmatpush1.msra.mxu0 %v1534
    %2519 = vmatprep.subr.mxu0 0.0
    %2520 = vmatpush1.msra.mxu0 %v1535
    %2521 = vmatprep.subr.mxu0 0.0
    %2522 = vmatpush1.msra.mxu0 %v1536
    %2523 = vmatprep.subr.mxu0 0.0
    %2524 = vmatpush1.msra.mxu0 %v1537
    %2525 = vmatprep.subr.mxu0 0.0
    %2526 = vmatpush1.msra.mxu0 0.0
    %2527 = vmatprep.subr.mxu0 0.0
    %2528 = vmatpush1.msra.mxu0 0.0
    %2529 = vmatprep.subr.mxu0 0.0
    %2530 = vmatpush1.msra.mxu0 0.0
    %2531 = vmatprep.subr.mxu0 0.0
    %2532 = vmatpush1.msra.mxu0 0.0
    %2533 = vmatprep.subr.mxu0 0.0
    %2534 = vmatpush1.msra.mxu0 0.0
    %2535 = vmatprep.subr.mxu0 0.0
    %2536 = vmatpush1.msra.mxu0 0.0
    %2537 = vmatprep.subr.mxu0 0.0
    %2538 = vmatpush1.msra.mxu0 0.0
    %2539 = vmatprep.subr.mxu0 0.0
    %2540 = vmatpush1.msra.mxu0 0.0
    %2541 = vmatprep.subr.mxu0 0.0
    %2542 = vmatpush1.msra.mxu0 0.0
    %2543 = vmatprep.subr.mxu0 0.0
    %2544 = vmatpush1.msra.mxu0 0.0
    %2545 = vmatprep.subr.mxu0 0.0
    %2546 = vmatpush1.msra.mxu0 0.0
    %2547 = vmatprep.subr.mxu0 0.0
    %2548 = vmatpush1.msra.mxu0 0.0
    %2549 = vmatprep.subr.mxu0 0.0
    %2550 = vmatpush1.msra.mxu0 0.0
    %2551 = vmatprep.subr.mxu0 0.0
    %2552 = vmatpush1.msra.mxu0 0.0
    %2553 = vmatprep.subr.mxu0 0.0
    %2554 = vmatpush1.msra.mxu0 0.0
    %2555 = vmatprep.subr.mxu0 0.0
    %2556 = vmatpush1.msra.mxu0 0.0
    %2557 = vmatprep.subr.mxu0 0.0
    %2558 = vmatpush1.msra.mxu0 0.0
    %2559 = vmatprep.subr.mxu0 0.0
    %2560 = vmatpush1.msra.mxu0 0.0
    %2561 = vmatprep.subr.mxu0 0.0
    %2562 = vmatpush1.msra.mxu0 0.0
    %2563 = vmatprep.subr.mxu0 0.0
    %2564 = vmatpush1.msra.mxu0 0.0
    %2565 = vmatprep.subr.mxu0 0.0
    %2566 = vmatpush1.msra.mxu0 0.0
    %2567 = vmatprep.subr.mxu0 0.0
    %2568 = vmatpush1.msra.mxu0 0.0
    %2569 = vmatprep.subr.mxu0 0.0
    %2570 = vmatpush1.msra.mxu0 0.0
    %2571 = vmatprep.subr.mxu0 0.0
    %2572 = vmatpush1.msra.mxu0 0.0
    %2573 = vmatprep.subr.mxu0 0.0
    %2574 = vmatpush1.msra.mxu0 0.0
    %2575 = vmatprep.subr.mxu0 0.0
    %2576 = vmatpush1.msra.mxu0 0.0
    %2577 = vmatprep.subr.mxu0 0.0
    %2578 = vmatpush1.msra.mxu0 0.0
    %2579 = vmatprep.subr.mxu0 0.0
    %2580 = vmatpush1.msra.mxu0 0.0
    %2581 = vmatprep.mubr.f32.mxu0 0.0
    %2582 = vmatmul.mubr.f32.gmra.mrb[0].mxu0 %v2470
    %v2583 = vpop.f32.mrb[0].mxu0
    %v2584 = vadd.f32 0.0, %v2583
    %v2585 = vpop.f32.mrb[0].mxu0
    %2586 = vmatprep.mubr.f32.mxu0 0.0
    %2587 = vmatmul.mubr.f32.gmra.mrb[0].mxu0 %v2473
    %v2588 = vpop.f32.mrb[0].mxu0
    %v2589 = vadd.f32 0.0, %v2588
    %v2590 = vpop.f32.mrb[0].mxu0
    %2591 = vmatprep.mubr.f32.mxu0 0.0
    %2592 = vmatmul.mubr.f32.gmra.mrb[0].mxu0 %v2476
    %v2593 = vpop.f32.mrb[0].mxu0
    %v2594 = vadd.f32 0.0, %v2593
    %v2595 = vpop.f32.mrb[0].mxu0
    %2596 = vmatprep.mubr.f32.mxu0 0.0
    %2597 = vmatmul.mubr.f32.gmra.mrb[0].mxu0 %v2479
    %v2598 = vpop.f32.mrb[0].mxu0
    %v2599 = vadd.f32 0.0, %v2598
    %v2600 = vpop.f32.mrb[0].mxu0
    %2601 = vmatprep.mubr.f32.mxu0 0.0
    %2602 = vmatmul.mubr.f32.gmra.mrb[0].mxu0 %v2482
    %v2603 = vpop.f32.mrb[0].mxu0
    %v2604 = vadd.f32 0.0, %v2603
    %v2605 = vpop.f32.mrb[0].mxu0
    %2606 = vmatprep.mubr.f32.mxu0 0.0
    %2607 = vmatmul.mubr.f32.gmra.mrb[0].mxu0 %v2485
    %v2608 = vpop.f32.mrb[0].mxu0
    %v2609 = vadd.f32 0.0, %v2608
    %v2610 = vpop.f32.mrb[0].mxu0
    %2611 = vmatprep.mubr.f32.mxu0 0.0
    %2612 = vmatmul.mubr.f32.gmra.mrb[0].mxu0 %v2488
    %v2613 = vpop.f32.mrb[0].mxu0
    %v2614 = vadd.f32 0.0, %v2613
    %v2615 = vpop.f32.mrb[0].mxu0
    %2616 = vmatprep.mubr.f32.mxu0 0.0
    %2617 = vmatmul.mubr.f32.gmra.mrb[0].mxu0 %v2491
    %v2618 = vpop.f32.mrb[0].mxu0
    %v2619 = vadd.f32 0.0, %v2618
    %v2620 = vpop.f32.mrb[0].mxu0
    %2621 = vmatprep.mubr.f32.mxu0 0.0
    %2622 = vmatmul.mubr.f32.gmra.mrb[0].mxu0 %v2494
    %v2623 = vpop.f32.mrb[0].mxu0
    %v2624 = vadd.f32 0.0, %v2623
    %v2625 = vpop.f32.mrb[0].mxu0
    %2626 = vmatprep.mubr.f32.mxu0 0.0
    %2627 = vmatmul.mubr.f32.gmra.mrb[0].mxu0 %v2497
    %v2628 = vpop.f32.mrb[0].mxu0
    %v2629 = vadd.f32 0.0, %v2628
    %v2630 = vpop.f32.mrb[0].mxu0
    %2631 = vmatprep.mubr.f32.mxu0 0.0
    %2632 = vmatmul.mubr.f32.gmra.mrb[0].mxu0 %v2500
    %v2633 = vpop.f32.mrb[0].mxu0
    %v2634 = vadd.f32 0.0, %v2633
    %v2635 = vpop.f32.mrb[0].mxu0
    %2636 = vmatprep.mubr.f32.mxu0 0.0
    %2637 = vmatmul.mubr.f32.gmra.mrb[0].mxu0 %v2503
    %v2638 = vpop.f32.mrb[0].mxu0
    %v2639 = vadd.f32 0.0, %v2638
    %v2640 = vpop.f32.mrb[0].mxu0
    %2641 = vmatprep.mubr.f32.mxu0 0.0
    %2642 = vmatmul.mubr.f32.gmra.mrb[0].mxu0 %v2506
    %v2643 = vpop.f32.mrb[0].mxu0
    %v2644 = vadd.f32 0.0, %v2643
    %v2645 = vpop.f32.mrb[0].mxu0
    %2646 = vmatprep.mubr.f32.mxu0 0.0
    %2647 = vmatmul.mubr.f32.gmra.mrb[0].mxu0 %v2509
    %v2648 = vpop.f32.mrb[0].mxu0
    %v2649 = vadd.f32 0.0, %v2648
    %v2650 = vpop.f32.mrb[0].mxu0
    %2651 = vmatprep.mubr.f32.mxu0 0.0
    %2652 = vmatmul.mubr.f32.gmra.mrb[0].mxu0 %v2512
    %v2653 = vpop.f32.mrb[0].mxu0
    %v2654 = vadd.f32 0.0, %v2653
    %v2655 = vpop.f32.mrb[0].mxu0
    %2656 = vmatprep.mubr.f32.mxu0 0.0
    %2657 = vmatmul.mubr.f32.gmra.mrb[0].mxu0 %v2515
    %v2658 = vpop.f32.mrb[0].mxu0
    %v2659 = vadd.f32 0.0, %v2658
    %v2660 = vpop.f32.mrb[0].mxu0
    %2661 = vdwg.mxu0
    %v2663 = vsel %vm596, %v1778, 0
    %v2666 = vsel %vm596, %v1779, 0
    %v2669 = vsel %vm596, %v1780, 0
    %v2672 = vsel %vm596, %v1781, 0
    %v2675 = vsel %vm596, %v1782, 0
    %v2678 = vsel %vm596, %v1783, 0
    %v2681 = vsel %vm596, %v1784, 0
    %v2684 = vsel %vm596, %v1785, 0
    %v2687 = vsel %vm596, %v1786, 0
    %v2690 = vsel %vm596, %v1787, 0
    %v2693 = vsel %vm596, %v1788, 0
    %v2696 = vsel %vm596, %v1789, 0
    %v2699 = vsel %vm596, %v1790, 0
    %v2702 = vsel %vm596, %v1791, 0
    %v2705 = vsel %vm596, %v1792, 0
    %v2708 = vsel %vm596, %v1793, 0
    %2710 = vmatprep.subr.mxu0 0.0
    %2711 = vmatpush1.msra.mxu0 %v1554
    %2712 = vmatprep.subr.mxu0 0.0
    %2713 = vmatpush1.msra.mxu0 %v1555
    %2714 = vmatprep.subr.mxu0 0.0
    %2715 = vmatpush1.msra.mxu0 %v1556
    %2716 = vmatprep.subr.mxu0 0.0
    %2717 = vmatpush1.msra.mxu0 %v1557
    %2718 = vmatprep.subr.mxu0 0.0
    %2719 = vmatpush1.msra.mxu0 0.0
    %2720 = vmatprep.subr.mxu0 0.0
    %2721 = vmatpush1.msra.mxu0 0.0
    %2722 = vmatprep.subr.mxu0 0.0
    %2723 = vmatpush1.msra.mxu0 0.0
    %2724 = vmatprep.subr.mxu0 0.0
    %2725 = vmatpush1.msra.mxu0 0.0
    %2726 = vmatprep.subr.mxu0 0.0
    %2727 = vmatpush1.msra.mxu0 0.0
    %2728 = vmatprep.subr.mxu0 0.0
    %2729 = vmatpush1.msra.mxu0 0.0
    %2730 = vmatprep.subr.mxu0 0.0
    %2731 = vmatpush1.msra.mxu0 0.0
    %2732 = vmatprep.subr.mxu0 0.0
    %2733 = vmatpush1.msra.mxu0 0.0
    %2734 = vmatprep.subr.mxu0 0.0
    %2735 = vmatpush1.msra.mxu0 0.0
    %2736 = vmatprep.subr.mxu0 0.0
    %2737 = vmatpush1.msra.mxu0 0.0
    %2738 = vmatprep.subr.mxu0 0.0
    %2739 = vmatpush1.msra.mxu0 0.0
    %2740 = vmatprep.subr.mxu0 0.0
    %2741 = vmatpush1.msra.mxu0 0.0
    %2742 = vmatprep.subr.mxu0 0.0
    %2743 = vmatpush1.msra.mxu0 0.0
    %2744 = vmatprep.subr.mxu0 0.0
    %2745 = vmatpush1.msra.mxu0 0.0
    %2746 = vmatprep.subr.mxu0 0.0
    %2747 = vmatpush1.msra.mxu0 0.0
    %2748 = vmatprep.subr.mxu0 0.0
    %2749 = vmatpush1.msra.mxu0 0.0
    %2750 = vmatprep.subr.mxu0 0.0
    %2751 = vmatpush1.msra.mxu0 0.0
    %2752 = vmatprep.subr.mxu0 0.0
    %2753 = vmatpush1.msra.mxu0 0.0
    %2754 = vmatprep.subr.mxu0 0.0
    %2755 = vmatpush1.msra.mxu0 0.0
    %2756 = vmatprep.subr.mxu0 0.0
    %2757 = vmatpush1.msra.mxu0 0.0
    %2758 = vmatprep.subr.mxu0 0.0
    %2759 = vmatpush1.msra.mxu0 0.0
    %2760 = vmatprep.subr.mxu0 0.0
    %2761 = vmatpush1.msra.mxu0 0.0
    %2762 = vmatprep.subr.mxu0 0.0
    %2763 = vmatpush1.msra.mxu0 0.0
    %2764 = vmatprep.subr.mxu0 0.0
    %2765 = vmatpush1.msra.mxu0 0.0
    %2766 = vmatprep.subr.mxu0 0.0
    %2767 = vmatpush1.msra.mxu0 0.0
    %2768 = vmatprep.subr.mxu0 0.0
    %2769 = vmatpush1.msra.mxu0 0.0
    %2770 = vmatprep.subr.mxu0 0.0
    %2771 = vmatpush1.msra.mxu0 0.0
    %2772 = vmatprep.subr.mxu0 0.0
    %2773 = vmatpush1.msra.mxu0 0.0
    %2774 = vmatprep.mubr.f32.mxu0 0.0
    %2775 = vmatmul.mubr.f32.gmra.mrb[0].mxu0 %v2663
    %v2776 = vpop.f32.mrb[0].mxu0
    %v2777 = vadd.f32 0.0, %v2776
    %v2778 = vpop.f32.mrb[0].mxu0
    %2779 = vmatprep.mubr.f32.mxu0 0.0
    %2780 = vmatmul.mubr.f32.gmra.mrb[0].mxu0 %v2666
    %v2781 = vpop.f32.mrb[0].mxu0
    %v2782 = vadd.f32 0.0, %v2781
    %v2783 = vpop.f32.mrb[0].mxu0
    %2784 = vmatprep.mubr.f32.mxu0 0.0
    %2785 = vmatmul.mubr.f32.gmra.mrb[0].mxu0 %v2669
    %v2786 = vpop.f32.mrb[0].mxu0
    %v2787 = vadd.f32 0.0, %v2786
    %v2788 = vpop.f32.mrb[0].mxu0
    %2789 = vmatprep.mubr.f32.mxu0 0.0
    %2790 = vmatmul.mubr.f32.gmra.mrb[0].mxu0 %v2672
    %v2791 = vpop.f32.mrb[0].mxu0
    %v2792 = vadd.f32 0.0, %v2791
    %v2793 = vpop.f32.mrb[0].mxu0
    %2794 = vmatprep.mubr.f32.mxu0 0.0
    %2795 = vmatmul.mubr.f32.gmra.mrb[0].mxu0 %v2675
    %v2796 = vpop.f32.mrb[0].mxu0
    %v2797 = vadd.f32 0.0, %v2796
    %v2798 = vpop.f32.mrb[0].mxu0
    %2799 = vmatprep.mubr.f32.mxu0 0.0
    %2800 = vmatmul.mubr.f32.gmra.mrb[0].mxu0 %v2678
    %v2801 = vpop.f32.mrb[0].mxu0
    %v2802 = vadd.f32 0.0, %v2801
    %v2803 = vpop.f32.mrb[0].mxu0
    %2804 = vmatprep.mubr.f32.mxu0 0.0
    %2805 = vmatmul.mubr.f32.gmra.mrb[0].mxu0 %v2681
    %v2806 = vpop.f32.mrb[0].mxu0
    %v2807 = vadd.f32 0.0, %v2806
    %v2808 = vpop.f32.mrb[0].mxu0
    %2809 = vmatprep.mubr.f32.mxu0 0.0
    %2810 = vmatmul.mubr.f32.gmra.mrb[0].mxu0 %v2684
    %v2811 = vpop.f32.mrb[0].mxu0
    %v2812 = vadd.f32 0.0, %v2811
    %v2813 = vpop.f32.mrb[0].mxu0
    %2814 = vmatprep.mubr.f32.mxu0 0.0
    %2815 = vmatmul.mubr.f32.gmra.mrb[0].mxu0 %v2687
    %v2816 = vpop.f32.mrb[0].mxu0
    %v2817 = vadd.f32 0.0, %v2816
    %v2818 = vpop.f32.mrb[0].mxu0
    %2819 = vmatprep.mubr.f32.mxu0 0.0
    %2820 = vmatmul.mubr.f32.gmra.mrb[0].mxu0 %v2690
    %v2821 = vpop.f32.mrb[0].mxu0
    %v2822 = vadd.f32 0.0, %v2821
    %v2823 = vpop.f32.mrb[0].mxu0
    %2824 = vmatprep.mubr.f32.mxu0 0.0
    %2825 = vmatmul.mubr.f32.gmra.mrb[0].mxu0 %v2693
    %v2826 = vpop.f32.mrb[0].mxu0
    %v2827 = vadd.f32 0.0, %v2826
    %v2828 = vpop.f32.mrb[0].mxu0
    %2829 = vmatprep.mubr.f32.mxu0 0.0
    %2830 = vmatmul.mubr.f32.gmra.mrb[0].mxu0 %v2696
    %v2831 = vpop.f32.mrb[0].mxu0
    %v2832 = vadd.f32 0.0, %v2831
    %v2833 = vpop.f32.mrb[0].mxu0
    %2834 = vmatprep.mubr.f32.mxu0 0.0
    %2835 = vmatmul.mubr.f32.gmra.mrb[0].mxu0 %v2699
    %v2836 = vpop.f32.mrb[0].mxu0
    %v2837 = vadd.f32 0.0, %v2836
    %v2838 = vpop.f32.mrb[0].mxu0
    %2839 = vmatprep.mubr.f32.mxu0 0.0
    %2840 = vmatmul.mubr.f32.gmra.mrb[0].mxu0 %v2702
    %v2841 = vpop.f32.mrb[0].mxu0
    %v2842 = vadd.f32 0.0, %v2841
    %v2843 = vpop.f32.mrb[0].mxu0
    %2844 = vmatprep.mubr.f32.mxu0 0.0
    %2845 = vmatmul.mubr.f32.gmra.mrb[0].mxu0 %v2705
    %v2846 = vpop.f32.mrb[0].mxu0
    %v2847 = vadd.f32 0.0, %v2846
    %v2848 = vpop.f32.mrb[0].mxu0
    %2849 = vmatprep.mubr.f32.mxu0 0.0
    %2850 = vmatmul.mubr.f32.gmra.mrb[0].mxu0 %v2708
    %v2851 = vpop.f32.mrb[0].mxu0
    %v2852 = vadd.f32 0.0, %v2851
    %v2853 = vpop.f32.mrb[0].mxu0
    %2854 = vdwg.mxu0
    %v2856 = vsel %vm596, %v1810, 0
    %v2859 = vsel %vm596, %v1811, 0
    %v2862 = vsel %vm596, %v1812, 0
    %v2865 = vsel %vm596, %v1813, 0
    %v2868 = vsel %vm596, %v1814, 0
    %v2871 = vsel %vm596, %v1815, 0
    %v2874 = vsel %vm596, %v1816, 0
    %v2877 = vsel %vm596, %v1817, 0
    %v2880 = vsel %vm596, %v1818, 0
    %v2883 = vsel %vm596, %v1819, 0
    %v2886 = vsel %vm596, %v1820, 0
    %v2889 = vsel %vm596, %v1821, 0
    %v2892 = vsel %vm596, %v1822, 0
    %v2895 = vsel %vm596, %v1823, 0
    %v2898 = vsel %vm596, %v1824, 0
    %v2901 = vsel %vm596, %v1825, 0
    %2903 = vmatprep.subr.mxu0 0.0
    %2904 = vmatpush1.msra.mxu0 %v1558
    %2905 = vmatprep.subr.mxu0 0.0
    %2906 = vmatpush1.msra.mxu0 %v1559
    %2907 = vmatprep.subr.mxu0 0.0
    %2908 = vmatpush1.msra.mxu0 %v1560
    %2909 = vmatprep.subr.mxu0 0.0
    %2910 = vmatpush1.msra.mxu0 %v1561
    %2911 = vmatprep.subr.mxu0 0.0
    %2912 = vmatpush1.msra.mxu0 0.0
    %2913 = vmatprep.subr.mxu0 0.0
    %2914 = vmatpush1.msra.mxu0 0.0
    %2915 = vmatprep.subr.mxu0 0.0
    %2916 = vmatpush1.msra.mxu0 0.0
    %2917 = vmatprep.subr.mxu0 0.0
    %2918 = vmatpush1.msra.mxu0 0.0
    %2919 = vmatprep.subr.mxu0 0.0
    %2920 = vmatpush1.msra.mxu0 0.0
    %2921 = vmatprep.subr.mxu0 0.0
    %2922 = vmatpush1.msra.mxu0 0.0
    %2923 = vmatprep.subr.mxu0 0.0
    %2924 = vmatpush1.msra.mxu0 0.0
    %2925 = vmatprep.subr.mxu0 0.0
    %2926 = vmatpush1.msra.mxu0 0.0
    %2927 = vmatprep.subr.mxu0 0.0
    %2928 = vmatpush1.msra.mxu0 0.0
    %2929 = vmatprep.subr.mxu0 0.0
    %2930 = vmatpush1.msra.mxu0 0.0
    %2931 = vmatprep.subr.mxu0 0.0
    %2932 = vmatpush1.msra.mxu0 0.0
    %2933 = vmatprep.subr.mxu0 0.0
    %2934 = vmatpush1.msra.mxu0 0.0
    %2935 = vmatprep.subr.mxu0 0.0
    %2936 = vmatpush1.msra.mxu0 0.0
    %2937 = vmatprep.subr.mxu0 0.0
    %2938 = vmatpush1.msra.mxu0 0.0
    %2939 = vmatprep.subr.mxu0 0.0
    %2940 = vmatpush1.msra.mxu0 0.0
    %2941 = vmatprep.subr.mxu0 0.0
    %2942 = vmatpush1.msra.mxu0 0.0
    %2943 = vmatprep.subr.mxu0 0.0
    %2944 = vmatpush1.msra.mxu0 0.0
    %2945 = vmatprep.subr.mxu0 0.0
    %2946 = vmatpush1.msra.mxu0 0.0
    %2947 = vmatprep.subr.mxu0 0.0
    %2948 = vmatpush1.msra.mxu0 0.0
    %2949 = vmatprep.subr.mxu0 0.0
    %2950 = vmatpush1.msra.mxu0 0.0
    %2951 = vmatprep.subr.mxu0 0.0
    %2952 = vmatpush1.msra.mxu0 0.0
    %2953 = vmatprep.subr.mxu0 0.0
    %2954 = vmatpush1.msra.mxu0 0.0
    %2955 = vmatprep.subr.mxu0 0.0
    %2956 = vmatpush1.msra.mxu0 0.0
    %2957 = vmatprep.subr.mxu0 0.0
    %2958 = vmatpush1.msra.mxu0 0.0
    %2959 = vmatprep.subr.mxu0 0.0
    %2960 = vmatpush1.msra.mxu0 0.0
    %2961 = vmatprep.subr.mxu0 0.0
    %2962 = vmatpush1.msra.mxu0 0.0
    %2963 = vmatprep.subr.mxu0 0.0
    %2964 = vmatpush1.msra.mxu0 0.0
    %2965 = vmatprep.subr.mxu0 0.0
    %2966 = vmatpush1.msra.mxu0 0.0
    %2967 = vmatprep.mubr.f32.mxu0 0.0
    %2968 = vmatmul.mubr.f32.gmra.mrb[0].mxu0 %v2856
    %v2969 = vpop.f32.mrb[0].mxu0
    %v2970 = vadd.f32 0.0, %v2969
    %v2971 = vpop.f32.mrb[0].mxu0
    %2972 = vmatprep.mubr.f32.mxu0 0.0
    %2973 = vmatmul.mubr.f32.gmra.mrb[0].mxu0 %v2859
    %v2974 = vpop.f32.mrb[0].mxu0
    %v2975 = vadd.f32 0.0, %v2974
    %v2976 = vpop.f32.mrb[0].mxu0
    %2977 = vmatprep.mubr.f32.mxu0 0.0
    %2978 = vmatmul.mubr.f32.gmra.mrb[0].mxu0 %v2862
    %v2979 = vpop.f32.mrb[0].mxu0
    %v2980 = vadd.f32 0.0, %v2979
    %v2981 = vpop.f32.mrb[0].mxu0
    %2982 = vmatprep.mubr.f32.mxu0 0.0
    %2983 = vmatmul.mubr.f32.gmra.mrb[0].mxu0 %v2865
    %v2984 = vpop.f32.mrb[0].mxu0
    %v2985 = vadd.f32 0.0, %v2984
    %v2986 = vpop.f32.mrb[0].mxu0
    %2987 = vmatprep.mubr.f32.mxu0 0.0
    %2988 = vmatmul.mubr.f32.gmra.mrb[0].mxu0 %v2868
    %v2989 = vpop.f32.mrb[0].mxu0
    %v2990 = vadd.f32 0.0, %v2989
    %v2991 = vpop.f32.mrb[0].mxu0
    %2992 = vmatprep.mubr.f32.mxu0 0.0
    %2993 = vmatmul.mubr.f32.gmra.mrb[0].mxu0 %v2871
    %v2994 = vpop.f32.mrb[0].mxu0
    %v2995 = vadd.f32 0.0, %v2994
    %v2996 = vpop.f32.mrb[0].mxu0
    %2997 = vmatprep.mubr.f32.mxu0 0.0
    %2998 = vmatmul.mubr.f32.gmra.mrb[0].mxu0 %v2874
    %v2999 = vpop.f32.mrb[0].mxu0
    %v3000 = vadd.f32 0.0, %v2999
    %v3001 = vpop.f32.mrb[0].mxu0
    %3002 = vmatprep.mubr.f32.mxu0 0.0
    %3003 = vmatmul.mubr.f32.gmra.mrb[0].mxu0 %v2877
    %v3004 = vpop.f32.mrb[0].mxu0
    %v3005 = vadd.f32 0.0, %v3004
    %v3006 = vpop.f32.mrb[0].mxu0
    %3007 = vmatprep.mubr.f32.mxu0 0.0
    %3008 = vmatmul.mubr.f32.gmra.mrb[0].mxu0 %v2880
    %v3009 = vpop.f32.mrb[0].mxu0
    %v3010 = vadd.f32 0.0, %v3009
    %v3011 = vpop.f32.mrb[0].mxu0
    %3012 = vmatprep.mubr.f32.mxu0 0.0
    %3013 = vmatmul.mubr.f32.gmra.mrb[0].mxu0 %v2883
    %v3014 = vpop.f32.mrb[0].mxu0
    %v3015 = vadd.f32 0.0, %v3014
    %v3016 = vpop.f32.mrb[0].mxu0
    %3017 = vmatprep.mubr.f32.mxu0 0.0
    %3018 = vmatmul.mubr.f32.gmra.mrb[0].mxu0 %v2886
    %v3019 = vpop.f32.mrb[0].mxu0
    %v3020 = vadd.f32 0.0, %v3019
    %v3021 = vpop.f32.mrb[0].mxu0
    %3022 = vmatprep.mubr.f32.mxu0 0.0
    %3023 = vmatmul.mubr.f32.gmra.mrb[0].mxu0 %v2889
    %v3024 = vpop.f32.mrb[0].mxu0
    %v3025 = vadd.f32 0.0, %v3024
    %v3026 = vpop.f32.mrb[0].mxu0
    %3027 = vmatprep.mubr.f32.mxu0 0.0
    %3028 = vmatmul.mubr.f32.gmra.mrb[0].mxu0 %v2892
    %v3029 = vpop.f32.mrb[0].mxu0
    %v3030 = vadd.f32 0.0, %v3029
    %v3031 = vpop.f32.mrb[0].mxu0
    %3032 = vmatprep.mubr.f32.mxu0 0.0
    %3033 = vmatmul.mubr.f32.gmra.mrb[0].mxu0 %v2895
    %v3034 = vpop.f32.mrb[0].mxu0
    %v3035 = vadd.f32 0.0, %v3034
    %v3036 = vpop.f32.mrb[0].mxu0
    %3037 = vmatprep.mubr.f32.mxu0 0.0
    %3038 = vmatmul.mubr.f32.gmra.mrb[0].mxu0 %v2898
    %v3039 = vpop.f32.mrb[0].mxu0
    %v3040 = vadd.f32 0.0, %v3039
    %v3041 = vpop.f32.mrb[0].mxu0
    %3042 = vmatprep.mubr.f32.mxu0 0.0
    %3043 = vmatmul.mubr.f32.gmra.mrb[0].mxu0 %v2901
    %v3044 = vpop.f32.mrb[0].mxu0
    %v3045 = vadd.f32 0.0, %v3044
    %v3046 = vpop.f32.mrb[0].mxu0
    %3047 = vdwg.mxu0
    %v3049 = vsel %vm596, %v1842, 0
    %v3052 = vsel %vm596, %v1843, 0
    %v3055 = vsel %vm596, %v1844, 0
    %v3058 = vsel %vm596, %v1845, 0
    %v3061 = vsel %vm596, %v1846, 0
    %v3064 = vsel %vm596, %v1847, 0
    %v3067 = vsel %vm596, %v1848, 0
    %v3070 = vsel %vm596, %v1849, 0
    %v3073 = vsel %vm596, %v1850, 0
    %v3076 = vsel %vm596, %v1851, 0
    %v3079 = vsel %vm596, %v1852, 0
    %v3082 = vsel %vm596, %v1853, 0
    %v3085 = vsel %vm596, %v1854, 0
    %v3088 = vsel %vm596, %v1855, 0
    %v3091 = vsel %vm596, %v1856, 0
    %v3094 = vsel %vm596, %v1857, 0
    %3096 = vmatprep.subr.mxu0 0.0
    %3097 = vmatpush1.msra.mxu0 %v1562
    %3098 = vmatprep.subr.mxu0 0.0
    %3099 = vmatpush1.msra.mxu0 %v1563
    %3100 = vmatprep.subr.mxu0 0.0
    %3101 = vmatpush1.msra.mxu0 %v1564
    %3102 = vmatprep.subr.mxu0 0.0
    %3103 = vmatpush1.msra.mxu0 %v1565
    %3104 = vmatprep.subr.mxu0 0.0
    %3105 = vmatpush1.msra.mxu0 0.0
    %3106 = vmatprep.subr.mxu0 0.0
    %3107 = vmatpush1.msra.mxu0 0.0
    %3108 = vmatprep.subr.mxu0 0.0
    %3109 = vmatpush1.msra.mxu0 0.0
    %3110 = vmatprep.subr.mxu0 0.0
    %3111 = vmatpush1.msra.mxu0 0.0
    %3112 = vmatprep.subr.mxu0 0.0
    %3113 = vmatpush1.msra.mxu0 0.0
    %3114 = vmatprep.subr.mxu0 0.0
    %3115 = vmatpush1.msra.mxu0 0.0
    %3116 = vmatprep.subr.mxu0 0.0
    %3117 = vmatpush1.msra.mxu0 0.0
    %3118 = vmatprep.subr.mxu0 0.0
    %3119 = vmatpush1.msra.mxu0 0.0
    %3120 = vmatprep.subr.mxu0 0.0
    %3121 = vmatpush1.msra.mxu0 0.0
    %3122 = vmatprep.subr.mxu0 0.0
    %3123 = vmatpush1.msra.mxu0 0.0
    %3124 = vmatprep.subr.mxu0 0.0
    %3125 = vmatpush1.msra.mxu0 0.0
    %3126 = vmatprep.subr.mxu0 0.0
    %3127 = vmatpush1.msra.mxu0 0.0
    %3128 = vmatprep.subr.mxu0 0.0
    %3129 = vmatpush1.msra.mxu0 0.0
    %3130 = vmatprep.subr.mxu0 0.0
    %3131 = vmatpush1.msra.mxu0 0.0
    %3132 = vmatprep.subr.mxu0 0.0
    %3133 = vmatpush1.msra.mxu0 0.0
    %3134 = vmatprep.subr.mxu0 0.0
    %3135 = vmatpush1.msra.mxu0 0.0
    %3136 = vmatprep.subr.mxu0 0.0
    %3137 = vmatpush1.msra.mxu0 0.0
    %3138 = vmatprep.subr.mxu0 0.0
    %3139 = vmatpush1.msra.mxu0 0.0
    %3140 = vmatprep.subr.mxu0 0.0
    %3141 = vmatpush1.msra.mxu0 0.0
    %3142 = vmatprep.subr.mxu0 0.0
    %3143 = vmatpush1.msra.mxu0 0.0
    %3144 = vmatprep.subr.mxu0 0.0
    %3145 = vmatpush1.msra.mxu0 0.0
    %3146 = vmatprep.subr.mxu0 0.0
    %3147 = vmatpush1.msra.mxu0 0.0
    %3148 = vmatprep.subr.mxu0 0.0
    %3149 = vmatpush1.msra.mxu0 0.0
    %3150 = vmatprep.subr.mxu0 0.0
    %3151 = vmatpush1.msra.mxu0 0.0
    %3152 = vmatprep.subr.mxu0 0.0
    %3153 = vmatpush1.msra.mxu0 0.0
    %3154 = vmatprep.subr.mxu0 0.0
    %3155 = vmatpush1.msra.mxu0 0.0
    %3156 = vmatprep.subr.mxu0 0.0
    %3157 = vmatpush1.msra.mxu0 0.0
    %3158 = vmatprep.subr.mxu0 0.0
    %3159 = vmatpush1.msra.mxu0 0.0
    %3160 = vmatprep.mubr.f32.mxu0 0.0
    %3161 = vmatmul.mubr.f32.gmra.mrb[0].mxu0 %v3049
    %v3162 = vpop.f32.mrb[0].mxu0
    %v3163 = vadd.f32 0.0, %v3162
    %v3164 = vpop.f32.mrb[0].mxu0
    %3165 = vmatprep.mubr.f32.mxu0 0.0
    %3166 = vmatmul.mubr.f32.gmra.mrb[0].mxu0 %v3052
    %v3167 = vpop.f32.mrb[0].mxu0
    %v3168 = vadd.f32 0.0, %v3167
    %v3169 = vpop.f32.mrb[0].mxu0
    %3170 = vmatprep.mubr.f32.mxu0 0.0
    %3171 = vmatmul.mubr.f32.gmra.mrb[0].mxu0 %v3055
    %v3172 = vpop.f32.mrb[0].mxu0
    %v3173 = vadd.f32 0.0, %v3172
    %v3174 = vpop.f32.mrb[0].mxu0
    %3175 = vmatprep.mubr.f32.mxu0 0.0
    %3176 = vmatmul.mubr.f32.gmra.mrb[0].mxu0 %v3058
    %v3177 = vpop.f32.mrb[0].mxu0
    %v3178 = vadd.f32 0.0, %v3177
    %v3179 = vpop.f32.mrb[0].mxu0
    %3180 = vmatprep.mubr.f32.mxu0 0.0
    %3181 = vmatmul.mubr.f32.gmra.mrb[0].mxu0 %v3061
    %v3182 = vpop.f32.mrb[0].mxu0
    %v3183 = vadd.f32 0.0, %v3182
    %v3184 = vpop.f32.mrb[0].mxu0
    %3185 = vmatprep.mubr.f32.mxu0 0.0
    %3186 = vmatmul.mubr.f32.gmra.mrb[0].mxu0 %v3064
    %v3187 = vpop.f32.mrb[0].mxu0
    %v3188 = vadd.f32 0.0, %v3187
    %v3189 = vpop.f32.mrb[0].mxu0
    %3190 = vmatprep.mubr.f32.mxu0 0.0
    %3191 = vmatmul.mubr.f32.gmra.mrb[0].mxu0 %v3067
    %v3192 = vpop.f32.mrb[0].mxu0
    %v3193 = vadd.f32 0.0, %v3192
    %v3194 = vpop.f32.mrb[0].mxu0
    %3195 = vmatprep.mubr.f32.mxu0 0.0
    %3196 = vmatmul.mubr.f32.gmra.mrb[0].mxu0 %v3070
    %v3197 = vpop.f32.mrb[0].mxu0
    %v3198 = vadd.f32 0.0, %v3197
    %v3199 = vpop.f32.mrb[0].mxu0
    %3200 = vmatprep.mubr.f32.mxu0 0.0
    %3201 = vmatmul.mubr.f32.gmra.mrb[0].mxu0 %v3073
    %v3202 = vpop.f32.mrb[0].mxu0
    %v3203 = vadd.f32 0.0, %v3202
    %v3204 = vpop.f32.mrb[0].mxu0
    %3205 = vmatprep.mubr.f32.mxu0 0.0
    %3206 = vmatmul.mubr.f32.gmra.mrb[0].mxu0 %v3076
    %v3207 = vpop.f32.mrb[0].mxu0
    %v3208 = vadd.f32 0.0, %v3207
    %v3209 = vpop.f32.mrb[0].mxu0
    %3210 = vmatprep.mubr.f32.mxu0 0.0
    %3211 = vmatmul.mubr.f32.gmra.mrb[0].mxu0 %v3079
    %v3212 = vpop.f32.mrb[0].mxu0
    %v3213 = vadd.f32 0.0, %v3212
    %v3214 = vpop.f32.mrb[0].mxu0
    %3215 = vmatprep.mubr.f32.mxu0 0.0
    %3216 = vmatmul.mubr.f32.gmra.mrb[0].mxu0 %v3082
    %v3217 = vpop.f32.mrb[0].mxu0
    %v3218 = vadd.f32 0.0, %v3217
    %v3219 = vpop.f32.mrb[0].mxu0
    %3220 = vmatprep.mubr.f32.mxu0 0.0
    %3221 = vmatmul.mubr.f32.gmra.mrb[0].mxu0 %v3085
    %v3222 = vpop.f32.mrb[0].mxu0
    %v3223 = vadd.f32 0.0, %v3222
    %v3224 = vpop.f32.mrb[0].mxu0
    %3225 = vmatprep.mubr.f32.mxu0 0.0
    %3226 = vmatmul.mubr.f32.gmra.mrb[0].mxu0 %v3088
    %v3227 = vpop.f32.mrb[0].mxu0
    %v3228 = vadd.f32 0.0, %v3227
    %v3229 = vpop.f32.mrb[0].mxu0
    %3230 = vmatprep.mubr.f32.mxu0 0.0
    %3231 = vmatmul.mubr.f32.gmra.mrb[0].mxu0 %v3091
    %v3232 = vpop.f32.mrb[0].mxu0
    %v3233 = vadd.f32 0.0, %v3232
    %v3234 = vpop.f32.mrb[0].mxu0
    %3235 = vmatprep.mubr.f32.mxu0 0.0
    %3236 = vmatmul.mubr.f32.gmra.mrb[0].mxu0 %v3094
    %v3237 = vpop.f32.mrb[0].mxu0
    %v3238 = vadd.f32 0.0, %v3237
    %v3239 = vpop.f32.mrb[0].mxu0
    %3240 = vdwg.mxu0
    %v3242 = vsel %vm596, %v1874, 0
    %v3245 = vsel %vm596, %v1875, 0
    %v3248 = vsel %vm596, %v1876, 0
    %v3251 = vsel %vm596, %v1877, 0
    %v3254 = vsel %vm596, %v1878, 0
    %v3257 = vsel %vm596, %v1879, 0
    %v3260 = vsel %vm596, %v1880, 0
    %v3263 = vsel %vm596, %v1881, 0
    %v3266 = vsel %vm596, %v1882, 0
    %v3269 = vsel %vm596, %v1883, 0
    %v3272 = vsel %vm596, %v1884, 0
    %v3275 = vsel %vm596, %v1885, 0
    %v3278 = vsel %vm596, %v1886, 0
    %v3281 = vsel %vm596, %v1887, 0
    %v3284 = vsel %vm596, %v1888, 0
    %v3287 = vsel %vm596, %v1889, 0
    %3289 = vmatprep.subr.mxu0 0.0
    %3290 = vmatpush1.msra.mxu0 %v1566
    %3291 = vmatprep.subr.mxu0 0.0
    %3292 = vmatpush1.msra.mxu0 %v1567
    %3293 = vmatprep.subr.mxu0 0.0
    %3294 = vmatpush1.msra.mxu0 %v1568
    %3295 = vmatprep.subr.mxu0 0.0
    %3296 = vmatpush1.msra.mxu0 %v1569
    %3297 = vmatprep.subr.mxu0 0.0
    %3298 = vmatpush1.msra.mxu0 0.0
    %3299 = vmatprep.subr.mxu0 0.0
    %3300 = vmatpush1.msra.mxu0 0.0
    %3301 = vmatprep.subr.mxu0 0.0
    %3302 = vmatpush1.msra.mxu0 0.0
    %3303 = vmatprep.subr.mxu0 0.0
    %3304 = vmatpush1.msra.mxu0 0.0
    %3305 = vmatprep.subr.mxu0 0.0
    %3306 = vmatpush1.msra.mxu0 0.0
    %3307 = vmatprep.subr.mxu0 0.0
    %3308 = vmatpush1.msra.mxu0 0.0
    %3309 = vmatprep.subr.mxu0 0.0
    %3310 = vmatpush1.msra.mxu0 0.0
    %3311 = vmatprep.subr.mxu0 0.0
    %3312 = vmatpush1.msra.mxu0 0.0
    %3313 = vmatprep.subr.mxu0 0.0
    %3314 = vmatpush1.msra.mxu0 0.0
    %3315 = vmatprep.subr.mxu0 0.0
    %3316 = vmatpush1.msra.mxu0 0.0
    %3317 = vmatprep.subr.mxu0 0.0
    %3318 = vmatpush1.msra.mxu0 0.0
    %3319 = vmatprep.subr.mxu0 0.0
    %3320 = vmatpush1.msra.mxu0 0.0
    %3321 = vmatprep.subr.mxu0 0.0
    %3322 = vmatpush1.msra.mxu0 0.0
    %3323 = vmatprep.subr.mxu0 0.0
    %3324 = vmatpush1.msra.mxu0 0.0
    %3325 = vmatprep.subr.mxu0 0.0
    %3326 = vmatpush1.msra.mxu0 0.0
    %3327 = vmatprep.subr.mxu0 0.0
    %3328 = vmatpush1.msra.mxu0 0.0
    %3329 = vmatprep.subr.mxu0 0.0
    %3330 = vmatpush1.msra.mxu0 0.0
    %3331 = vmatprep.subr.mxu0 0.0
    %3332 = vmatpush1.msra.mxu0 0.0
    %3333 = vmatprep.subr.mxu0 0.0
    %3334 = vmatpush1.msra.mxu0 0.0
    %3335 = vmatprep.subr.mxu0 0.0
    %3336 = vmatpush1.msra.mxu0 0.0
    %3337 = vmatprep.subr.mxu0 0.0
    %3338 = vmatpush1.msra.mxu0 0.0
    %3339 = vmatprep.subr.mxu0 0.0
    %3340 = vmatpush1.msra.mxu0 0.0
    %3341 = vmatprep.subr.mxu0 0.0
    %3342 = vmatpush1.msra.mxu0 0.0
    %3343 = vmatprep.subr.mxu0 0.0
    %3344 = vmatpush1.msra.mxu0 0.0
    %3345 = vmatprep.subr.mxu0 0.0
    %3346 = vmatpush1.msra.mxu0 0.0
    %3347 = vmatprep.subr.mxu0 0.0
    %3348 = vmatpush1.msra.mxu0 0.0
    %3349 = vmatprep.subr.mxu0 0.0
    %3350 = vmatpush1.msra.mxu0 0.0
    %3351 = vmatprep.subr.mxu0 0.0
    %3352 = vmatpush1.msra.mxu0 0.0
    %3353 = vmatprep.mubr.f32.mxu0 0.0
    %3354 = vmatmul.mubr.f32.gmra.mrb[0].mxu0 %v3242
    %v3355 = vpop.f32.mrb[0].mxu0
    %v3356 = vadd.f32 0.0, %v3355
    %v3357 = vpop.f32.mrb[0].mxu0
    %3358 = vmatprep.mubr.f32.mxu0 0.0
    %3359 = vmatmul.mubr.f32.gmra.mrb[0].mxu0 %v3245
    %v3360 = vpop.f32.mrb[0].mxu0
    %v3361 = vadd.f32 0.0, %v3360
    %v3362 = vpop.f32.mrb[0].mxu0
    %3363 = vmatprep.mubr.f32.mxu0 0.0
    %3364 = vmatmul.mubr.f32.gmra.mrb[0].mxu0 %v3248
    %v3365 = vpop.f32.mrb[0].mxu0
    %v3366 = vadd.f32 0.0, %v3365
    %v3367 = vpop.f32.mrb[0].mxu0
    %3368 = vmatprep.mubr.f32.mxu0 0.0
    %3369 = vmatmul.mubr.f32.gmra.mrb[0].mxu0 %v3251
    %v3370 = vpop.f32.mrb[0].mxu0
    %v3371 = vadd.f32 0.0, %v3370
    %v3372 = vpop.f32.mrb[0].mxu0
    %3373 = vmatprep.mubr.f32.mxu0 0.0
    %3374 = vmatmul.mubr.f32.gmra.mrb[0].mxu0 %v3254
    %v3375 = vpop.f32.mrb[0].mxu0
    %v3376 = vadd.f32 0.0, %v3375
    %v3377 = vpop.f32.mrb[0].mxu0
    %3378 = vmatprep.mubr.f32.mxu0 0.0
    %3379 = vmatmul.mubr.f32.gmra.mrb[0].mxu0 %v3257
    %v3380 = vpop.f32.mrb[0].mxu0
    %v3381 = vadd.f32 0.0, %v3380
    %v3382 = vpop.f32.mrb[0].mxu0
    %3383 = vmatprep.mubr.f32.mxu0 0.0
    %3384 = vmatmul.mubr.f32.gmra.mrb[0].mxu0 %v3260
    %v3385 = vpop.f32.mrb[0].mxu0
    %v3386 = vadd.f32 0.0, %v3385
    %v3387 = vpop.f32.mrb[0].mxu0
    %3388 = vmatprep.mubr.f32.mxu0 0.0
    %3389 = vmatmul.mubr.f32.gmra.mrb[0].mxu0 %v3263
    %v3390 = vpop.f32.mrb[0].mxu0
    %v3391 = vadd.f32 0.0, %v3390
    %v3392 = vpop.f32.mrb[0].mxu0
    %3393 = vmatprep.mubr.f32.mxu0 0.0
    %3394 = vmatmul.mubr.f32.gmra.mrb[0].mxu0 %v3266
    %v3395 = vpop.f32.mrb[0].mxu0
    %v3396 = vadd.f32 0.0, %v3395
    %v3397 = vpop.f32.mrb[0].mxu0
    %3398 = vmatprep.mubr.f32.mxu0 0.0
    %3399 = vmatmul.mubr.f32.gmra.mrb[0].mxu0 %v3269
    %v3400 = vpop.f32.mrb[0].mxu0
    %v3401 = vadd.f32 0.0, %v3400
    %v3402 = vpop.f32.mrb[0].mxu0
    %3403 = vmatprep.mubr.f32.mxu0 0.0
    %3404 = vmatmul.mubr.f32.gmra.mrb[0].mxu0 %v3272
    %v3405 = vpop.f32.mrb[0].mxu0
    %v3406 = vadd.f32 0.0, %v3405
    %v3407 = vpop.f32.mrb[0].mxu0
    %3408 = vmatprep.mubr.f32.mxu0 0.0
    %3409 = vmatmul.mubr.f32.gmra.mrb[0].mxu0 %v3275
    %v3410 = vpop.f32.mrb[0].mxu0
    %v3411 = vadd.f32 0.0, %v3410
    %v3412 = vpop.f32.mrb[0].mxu0
    %3413 = vmatprep.mubr.f32.mxu0 0.0
    %3414 = vmatmul.mubr.f32.gmra.mrb[0].mxu0 %v3278
    %v3415 = vpop.f32.mrb[0].mxu0
    %v3416 = vadd.f32 0.0, %v3415
    %v3417 = vpop.f32.mrb[0].mxu0
    %3418 = vmatprep.mubr.f32.mxu0 0.0
    %3419 = vmatmul.mubr.f32.gmra.mrb[0].mxu0 %v3281
    %v3420 = vpop.f32.mrb[0].mxu0
    %v3421 = vadd.f32 0.0, %v3420
    %v3422 = vpop.f32.mrb[0].mxu0
    %3423 = vmatprep.mubr.f32.mxu0 0.0
    %3424 = vmatmul.mubr.f32.gmra.mrb[0].mxu0 %v3284
    %v3425 = vpop.f32.mrb[0].mxu0
    %v3426 = vadd.f32 0.0, %v3425
    %v3427 = vpop.f32.mrb[0].mxu0
    %3428 = vmatprep.mubr.f32.mxu0 0.0
    %3429 = vmatmul.mubr.f32.gmra.mrb[0].mxu0 %v3287
    %v3430 = vpop.f32.mrb[0].mxu0
    %v3431 = vadd.f32 0.0, %v3430
    %v3432 = vpop.f32.mrb[0].mxu0
    %3433 = vdwg.mxu0
    %3434 = vmax.xlane.f32.xlu0 %v2005
    %v3435 = vpop.xlane.xlu0 %3434
    %3436 = vmax.xlane.f32.xlu0 %v2010
    %v3437 = vpop.xlane.xlu0 %3436
    %3438 = vmax.xlane.f32.xlu0 %v2015
    %v3439 = vpop.xlane.xlu0 %3438
    %3440 = vmax.xlane.f32.xlu0 %v2020
    %v3441 = vpop.xlane.xlu0 %3440
    %3442 = vmax.xlane.f32.xlu0 %v2025
    %v3443 = vpop.xlane.xlu0 %3442
    %3444 = vmax.xlane.f32.xlu0 %v2030
    %v3445 = vpop.xlane.xlu0 %3444
    %3446 = vmax.xlane.f32.xlu0 %v2035
    %v3447 = vpop.xlane.xlu0 %3446
    %3448 = vmax.xlane.f32.xlu0 %v2040
    %v3449 = vpop.xlane.xlu0 %3448
    %3450 = vmax.xlane.f32.xlu0 %v2045
    %v3451 = vpop.xlane.xlu0 %3450
    %3452 = vmax.xlane.f32.xlu0 %v2050
    %v3453 = vpop.xlane.xlu0 %3452
    %3454 = vmax.xlane.f32.xlu0 %v2055
    %v3455 = vpop.xlane.xlu0 %3454
    %3456 = vmax.xlane.f32.xlu0 %v2060
    %v3457 = vpop.xlane.xlu0 %3456
    %3458 = vmax.xlane.f32.xlu0 %v2065
    %v3459 = vpop.xlane.xlu0 %3458
    %3460 = vmax.xlane.f32.xlu0 %v2070
    %v3461 = vpop.xlane.xlu0 %3460
    %3462 = vmax.xlane.f32.xlu0 %v2075
    %v3463 = vpop.xlane.xlu0 %3462
    %3464 = vmax.xlane.f32.xlu0 %v2080
    %v3465 = vpop.xlane.xlu0 %3464
    %3466 = vmax.xlane.f32.xlu0 %v2198
    %v3467 = vpop.xlane.xlu0 %3466
    %3468 = vmax.xlane.f32.xlu0 %v2203
    %v3469 = vpop.xlane.xlu0 %3468
    %3470 = vmax.xlane.f32.xlu0 %v2208
    %v3471 = vpop.xlane.xlu0 %3470
    %3472 = vmax.xlane.f32.xlu0 %v2213
    %v3473 = vpop.xlane.xlu0 %3472
    %3474 = vmax.xlane.f32.xlu0 %v2218
    %v3475 = vpop.xlane.xlu0 %3474
    %3476 = vmax.xlane.f32.xlu0 %v2223
    %v3477 = vpop.xlane.xlu0 %3476
    %3478 = vmax.xlane.f32.xlu0 %v2228
    %v3479 = vpop.xlane.xlu0 %3478
    %3480 = vmax.xlane.f32.xlu0 %v2233
    %v3481 = vpop.xlane.xlu0 %3480
    %3482 = vmax.xlane.f32.xlu0 %v2238
    %v3483 = vpop.xlane.xlu0 %3482
    %3484 = vmax.xlane.f32.xlu0 %v2243
    %v3485 = vpop.xlane.xlu0 %3484
    %3486 = vmax.xlane.f32.xlu0 %v2248
    %v3487 = vpop.xlane.xlu0 %3486
    %3488 = vmax.xlane.f32.xlu0 %v2253
    %v3489 = vpop.xlane.xlu0 %3488
    %3490 = vmax.xlane.f32.xlu0 %v2258
    %v3491 = vpop.xlane.xlu0 %3490
    %3492 = vmax.xlane.f32.xlu0 %v2263
    %v3493 = vpop.xlane.xlu0 %3492
    %3494 = vmax.xlane.f32.xlu0 %v2268
    %v3495 = vpop.xlane.xlu0 %3494
    %3496 = vmax.xlane.f32.xlu0 %v2273
    %v3497 = vpop.xlane.xlu0 %3496
    %3498 = vmax.xlane.f32.xlu0 %v2391
    %v3499 = vpop.xlane.xlu0 %3498
    %3500 = vmax.xlane.f32.xlu0 %v2396
    %v3501 = vpop.xlane.xlu0 %3500
    %3502 = vmax.xlane.f32.xlu0 %v2401
    %v3503 = vpop.xlane.xlu0 %3502
    %3504 = vmax.xlane.f32.xlu0 %v2406
    %v3505 = vpop.xlane.xlu0 %3504
    %3506 = vmax.xlane.f32.xlu0 %v2411
    %v3507 = vpop.xlane.xlu0 %3506
    %3508 = vmax.xlane.f32.xlu0 %v2416
    %v3509 = vpop.xlane.xlu0 %3508
    %3510 = vmax.xlane.f32.xlu0 %v2421
    %v3511 = vpop.xlane.xlu0 %3510
    %3512 = vmax.xlane.f32.xlu0 %v2426
    %v3513 = vpop.xlane.xlu0 %3512
    %3514 = vmax.xlane.f32.xlu0 %v2431
    %v3515 = vpop.xlane.xlu0 %3514
    %3516 = vmax.xlane.f32.xlu0 %v2436
    %v3517 = vpop.xlane.xlu0 %3516
    %3518 = vmax.xlane.f32.xlu0 %v2441
    %v3519 = vpop.xlane.xlu0 %3518
    %3520 = vmax.xlane.f32.xlu0 %v2446
    %v3521 = vpop.xlane.xlu0 %3520
    %3522 = vmax.xlane.f32.xlu0 %v2451
    %v3523 = vpop.xlane.xlu0 %3522
    %3524 = vmax.xlane.f32.xlu0 %v2456
    %v3525 = vpop.xlane.xlu0 %3524
    %3526 = vmax.xlane.f32.xlu0 %v2461
    %v3527 = vpop.xlane.xlu0 %3526
    %3528 = vmax.xlane.f32.xlu0 %v2466
    %v3529 = vpop.xlane.xlu0 %3528
    %3530 = vmax.xlane.f32.xlu0 %v2584
    %v3531 = vpop.xlane.xlu0 %3530
    %3532 = vmax.xlane.f32.xlu0 %v2589
    %v3533 = vpop.xlane.xlu0 %3532
    %3534 = vmax.xlane.f32.xlu0 %v2594
    %v3535 = vpop.xlane.xlu0 %3534
    %3536 = vmax.xlane.f32.xlu0 %v2599
    %v3537 = vpop.xlane.xlu0 %3536
    %3538 = vmax.xlane.f32.xlu0 %v2604
    %v3539 = vpop.xlane.xlu0 %3538
    %3540 = vmax.xlane.f32.xlu0 %v2609
    %v3541 = vpop.xlane.xlu0 %3540
    %3542 = vmax.xlane.f32.xlu0 %v2614
    %v3543 = vpop.xlane.xlu0 %3542
    %3544 = vmax.xlane.f32.xlu0 %v2619
    %v3545 = vpop.xlane.xlu0 %3544
    %3546 = vmax.xlane.f32.xlu0 %v2624
    %v3547 = vpop.xlane.xlu0 %3546
    %3548 = vmax.xlane.f32.xlu0 %v2629
    %v3549 = vpop.xlane.xlu0 %3548
    %3550 = vmax.xlane.f32.xlu0 %v2634
    %v3551 = vpop.xlane.xlu0 %3550
    %3552 = vmax.xlane.f32.xlu0 %v2639
    %v3553 = vpop.xlane.xlu0 %3552
    %3554 = vmax.xlane.f32.xlu0 %v2644
    %v3555 = vpop.xlane.xlu0 %3554
    %3556 = vmax.xlane.f32.xlu0 %v2649
    %v3557 = vpop.xlane.xlu0 %3556
    %3558 = vmax.xlane.f32.xlu0 %v2654
    %v3559 = vpop.xlane.xlu0 %3558
    %3560 = vmax.xlane.f32.xlu0 %v2659
    %v3561 = vpop.xlane.xlu0 %3560
    %3562 = vmax.xlane.f32.xlu0 %v2777
    %v3563 = vpop.xlane.xlu0 %3562
    %3564 = vmax.xlane.f32.xlu0 %v2782
    %v3565 = vpop.xlane.xlu0 %3564
    %3566 = vmax.xlane.f32.xlu0 %v2787
    %v3567 = vpop.xlane.xlu0 %3566
    %3568 = vmax.xlane.f32.xlu0 %v2792
    %v3569 = vpop.xlane.xlu0 %3568
    %3570 = vmax.xlane.f32.xlu0 %v2797
    %v3571 = vpop.xlane.xlu0 %3570
    %3572 = vmax.xlane.f32.xlu0 %v2802
    %v3573 = vpop.xlane.xlu0 %3572
    %3574 = vmax.xlane.f32.xlu0 %v2807
    %v3575 = vpop.xlane.xlu0 %3574
    %3576 = vmax.xlane.f32.xlu0 %v2812
    %v3577 = vpop.xlane.xlu0 %3576
    %3578 = vmax.xlane.f32.xlu0 %v2817
    %v3579 = vpop.xlane.xlu0 %3578
    %3580 = vmax.xlane.f32.xlu0 %v2822
    %v3581 = vpop.xlane.xlu0 %3580
    %3582 = vmax.xlane.f32.xlu0 %v2827
    %v3583 = vpop.xlane.xlu0 %3582
    %3584 = vmax.xlane.f32.xlu0 %v2832
    %v3585 = vpop.xlane.xlu0 %3584
    %3586 = vmax.xlane.f32.xlu0 %v2837
    %v3587 = vpop.xlane.xlu0 %3586
    %3588 = vmax.xlane.f32.xlu0 %v2842
    %v3589 = vpop.xlane.xlu0 %3588
    %3590 = vmax.xlane.f32.xlu0 %v2847
    %v3591 = vpop.xlane.xlu0 %3590
    %3592 = vmax.xlane.f32.xlu0 %v2852
    %v3593 = vpop.xlane.xlu0 %3592
    %3594 = vmax.xlane.f32.xlu0 %v2970
    %v3595 = vpop.xlane.xlu0 %3594
    %3596 = vmax.xlane.f32.xlu0 %v2975
    %v3597 = vpop.xlane.xlu0 %3596
    %3598 = vmax.xlane.f32.xlu0 %v2980
    %v3599 = vpop.xlane.xlu0 %3598
    %3600 = vmax.xlane.f32.xlu0 %v2985
    %v3601 = vpop.xlane.xlu0 %3600
    %3602 = vmax.xlane.f32.xlu0 %v2990
    %v3603 = vpop.xlane.xlu0 %3602
    %3604 = vmax.xlane.f32.xlu0 %v2995
    %v3605 = vpop.xlane.xlu0 %3604
    %3606 = vmax.xlane.f32.xlu0 %v3000
    %v3607 = vpop.xlane.xlu0 %3606
    %3608 = vmax.xlane.f32.xlu0 %v3005
    %v3609 = vpop.xlane.xlu0 %3608
    %3610 = vmax.xlane.f32.xlu0 %v3010
    %v3611 = vpop.xlane.xlu0 %3610
    %3612 = vmax.xlane.f32.xlu0 %v3015
    %v3613 = vpop.xlane.xlu0 %3612
    %3614 = vmax.xlane.f32.xlu0 %v3020
    %v3615 = vpop.xlane.xlu0 %3614
    %3616 = vmax.xlane.f32.xlu0 %v3025
    %v3617 = vpop.xlane.xlu0 %3616
    %3618 = vmax.xlane.f32.xlu0 %v3030
    %v3619 = vpop.xlane.xlu0 %3618
    %3620 = vmax.xlane.f32.xlu0 %v3035
    %v3621 = vpop.xlane.xlu0 %3620
    %3622 = vmax.xlane.f32.xlu0 %v3040
    %v3623 = vpop.xlane.xlu0 %3622
    %3624 = vmax.xlane.f32.xlu0 %v3045
    %v3625 = vpop.xlane.xlu0 %3624
    %3626 = vmax.xlane.f32.xlu0 %v3163
    %v3627 = vpop.xlane.xlu0 %3626
    %3628 = vmax.xlane.f32.xlu0 %v3168
    %v3629 = vpop.xlane.xlu0 %3628
    %3630 = vmax.xlane.f32.xlu0 %v3173
    %v3631 = vpop.xlane.xlu0 %3630
    %3632 = vmax.xlane.f32.xlu0 %v3178
    %v3633 = vpop.xlane.xlu0 %3632
    %3634 = vmax.xlane.f32.xlu0 %v3183
    %v3635 = vpop.xlane.xlu0 %3634
    %3636 = vmax.xlane.f32.xlu0 %v3188
    %v3637 = vpop.xlane.xlu0 %3636
    %3638 = vmax.xlane.f32.xlu0 %v3193
    %v3639 = vpop.xlane.xlu0 %3638
    %3640 = vmax.xlane.f32.xlu0 %v3198
    %v3641 = vpop.xlane.xlu0 %3640
    %3642 = vmax.xlane.f32.xlu0 %v3203
    %v3643 = vpop.xlane.xlu0 %3642
    %3644 = vmax.xlane.f32.xlu0 %v3208
    %v3645 = vpop.xlane.xlu0 %3644
    %3646 = vmax.xlane.f32.xlu0 %v3213
    %v3647 = vpop.xlane.xlu0 %3646
    %3648 = vmax.xlane.f32.xlu0 %v3218
    %v3649 = vpop.xlane.xlu0 %3648
    %3650 = vmax.xlane.f32.xlu0 %v3223
    %v3651 = vpop.xlane.xlu0 %3650
    %3652 = vmax.xlane.f32.xlu0 %v3228
    %v3653 = vpop.xlane.xlu0 %3652
    %3654 = vmax.xlane.f32.xlu0 %v3233
    %v3655 = vpop.xlane.xlu0 %3654
    %3656 = vmax.xlane.f32.xlu0 %v3238
    %v3657 = vpop.xlane.xlu0 %3656
    %3658 = vmax.xlane.f32.xlu0 %v3356
    %v3659 = vpop.xlane.xlu0 %3658
    %3660 = vmax.xlane.f32.xlu0 %v3361
    %v3661 = vpop.xlane.xlu0 %3660
    %3662 = vmax.xlane.f32.xlu0 %v3366
    %v3663 = vpop.xlane.xlu0 %3662
    %3664 = vmax.xlane.f32.xlu0 %v3371
    %v3665 = vpop.xlane.xlu0 %3664
    %3666 = vmax.xlane.f32.xlu0 %v3376
    %v3667 = vpop.xlane.xlu0 %3666
    %3668 = vmax.xlane.f32.xlu0 %v3381
    %v3669 = vpop.xlane.xlu0 %3668
    %3670 = vmax.xlane.f32.xlu0 %v3386
    %v3671 = vpop.xlane.xlu0 %3670
    %3672 = vmax.xlane.f32.xlu0 %v3391
    %v3673 = vpop.xlane.xlu0 %3672
    %3674 = vmax.xlane.f32.xlu0 %v3396
    %v3675 = vpop.xlane.xlu0 %3674
    %3676 = vmax.xlane.f32.xlu0 %v3401
    %v3677 = vpop.xlane.xlu0 %3676
    %3678 = vmax.xlane.f32.xlu0 %v3406
    %v3679 = vpop.xlane.xlu0 %3678
    %3680 = vmax.xlane.f32.xlu0 %v3411
    %v3681 = vpop.xlane.xlu0 %3680
    %3682 = vmax.xlane.f32.xlu0 %v3416
    %v3683 = vpop.xlane.xlu0 %3682
    %3684 = vmax.xlane.f32.xlu0 %v3421
    %v3685 = vpop.xlane.xlu0 %3684
    %3686 = vmax.xlane.f32.xlu0 %v3426
    %v3687 = vpop.xlane.xlu0 %3686
    %3688 = vmax.xlane.f32.xlu0 %v3431
    %v3689 = vpop.xlane.xlu0 %3688
    %v3690 = vsub.f32 %v2005, %v3435
    %v3691 = vsub.f32 %v2010, %v3437
    %v3692 = vsub.f32 %v2015, %v3439
    %v3693 = vsub.f32 %v2020, %v3441
    %v3694 = vsub.f32 %v2025, %v3443
    %v3695 = vsub.f32 %v2030, %v3445
    %v3696 = vsub.f32 %v2035, %v3447
    %v3697 = vsub.f32 %v2040, %v3449
    %v3698 = vsub.f32 %v2045, %v3451
    %v3699 = vsub.f32 %v2050, %v3453
    %v3700 = vsub.f32 %v2055, %v3455
    %v3701 = vsub.f32 %v2060, %v3457
    %v3702 = vsub.f32 %v2065, %v3459
    %v3703 = vsub.f32 %v2070, %v3461
    %v3704 = vsub.f32 %v2075, %v3463
    %v3705 = vsub.f32 %v2080, %v3465
    %v3706 = vsub.f32 %v2198, %v3467
    %v3707 = vsub.f32 %v2203, %v3469
    %v3708 = vsub.f32 %v2208, %v3471
    %v3709 = vsub.f32 %v2213, %v3473
    %v3710 = vsub.f32 %v2218, %v3475
    %v3711 = vsub.f32 %v2223, %v3477
    %v3712 = vsub.f32 %v2228, %v3479
    %v3713 = vsub.f32 %v2233, %v3481
    %v3714 = vsub.f32 %v2238, %v3483
    %v3715 = vsub.f32 %v2243, %v3485
    %v3716 = vsub.f32 %v2248, %v3487
    %v3717 = vsub.f32 %v2253, %v3489
    %v3718 = vsub.f32 %v2258, %v3491
    %v3719 = vsub.f32 %v2263, %v3493
    %v3720 = vsub.f32 %v2268, %v3495
    %v3721 = vsub.f32 %v2273, %v3497
    %v3722 = vsub.f32 %v2391, %v3499
    %v3723 = vsub.f32 %v2396, %v3501
    %v3724 = vsub.f32 %v2401, %v3503
    %v3725 = vsub.f32 %v2406, %v3505
    %v3726 = vsub.f32 %v2411, %v3507
    %v3727 = vsub.f32 %v2416, %v3509
    %v3728 = vsub.f32 %v2421, %v3511
    %v3729 = vsub.f32 %v2426, %v3513
    %v3730 = vsub.f32 %v2431, %v3515
    %v3731 = vsub.f32 %v2436, %v3517
    %v3732 = vsub.f32 %v2441, %v3519
    %v3733 = vsub.f32 %v2446, %v3521
    %v3734 = vsub.f32 %v2451, %v3523
    %v3735 = vsub.f32 %v2456, %v3525
    %v3736 = vsub.f32 %v2461, %v3527
    %v3737 = vsub.f32 %v2466, %v3529
    %v3738 = vsub.f32 %v2584, %v3531
    %v3739 = vsub.f32 %v2589, %v3533
    %v3740 = vsub.f32 %v2594, %v3535
    %v3741 = vsub.f32 %v2599, %v3537
    %v3742 = vsub.f32 %v2604, %v3539
    %v3743 = vsub.f32 %v2609, %v3541
    %v3744 = vsub.f32 %v2614, %v3543
    %v3745 = vsub.f32 %v2619, %v3545
    %v3746 = vsub.f32 %v2624, %v3547
    %v3747 = vsub.f32 %v2629, %v3549
    %v3748 = vsub.f32 %v2634, %v3551
    %v3749 = vsub.f32 %v2639, %v3553
    %v3750 = vsub.f32 %v2644, %v3555
    %v3751 = vsub.f32 %v2649, %v3557
    %v3752 = vsub.f32 %v2654, %v3559
    %v3753 = vsub.f32 %v2659, %v3561
    %v3754 = vsub.f32 %v2777, %v3563
    %v3755 = vsub.f32 %v2782, %v3565
    %v3756 = vsub.f32 %v2787, %v3567
    %v3757 = vsub.f32 %v2792, %v3569
    %v3758 = vsub.f32 %v2797, %v3571
    %v3759 = vsub.f32 %v2802, %v3573
    %v3760 = vsub.f32 %v2807, %v3575
    %v3761 = vsub.f32 %v2812, %v3577
    %v3762 = vsub.f32 %v2817, %v3579
    %v3763 = vsub.f32 %v2822, %v3581
    %v3764 = vsub.f32 %v2827, %v3583
    %v3765 = vsub.f32 %v2832, %v3585
    %v3766 = vsub.f32 %v2837, %v3587
    %v3767 = vsub.f32 %v2842, %v3589
    %v3768 = vsub.f32 %v2847, %v3591
    %v3769 = vsub.f32 %v2852, %v3593
    %v3770 = vsub.f32 %v2970, %v3595
    %v3771 = vsub.f32 %v2975, %v3597
    %v3772 = vsub.f32 %v2980, %v3599
    %v3773 = vsub.f32 %v2985, %v3601
    %v3774 = vsub.f32 %v2990, %v3603
    %v3775 = vsub.f32 %v2995, %v3605
    %v3776 = vsub.f32 %v3000, %v3607
    %v3777 = vsub.f32 %v3005, %v3609
    %v3778 = vsub.f32 %v3010, %v3611
    %v3779 = vsub.f32 %v3015, %v3613
    %v3780 = vsub.f32 %v3020, %v3615
    %v3781 = vsub.f32 %v3025, %v3617
    %v3782 = vsub.f32 %v3030, %v3619
    %v3783 = vsub.f32 %v3035, %v3621
    %v3784 = vsub.f32 %v3040, %v3623
    %v3785 = vsub.f32 %v3045, %v3625
    %v3786 = vsub.f32 %v3163, %v3627
    %v3787 = vsub.f32 %v3168, %v3629
    %v3788 = vsub.f32 %v3173, %v3631
    %v3789 = vsub.f32 %v3178, %v3633
    %v3790 = vsub.f32 %v3183, %v3635
    %v3791 = vsub.f32 %v3188, %v3637
    %v3792 = vsub.f32 %v3193, %v3639
    %v3793 = vsub.f32 %v3198, %v3641
    %v3794 = vsub.f32 %v3203, %v3643
    %v3795 = vsub.f32 %v3208, %v3645
    %v3796 = vsub.f32 %v3213, %v3647
    %v3797 = vsub.f32 %v3218, %v3649
    %v3798 = vsub.f32 %v3223, %v3651
    %v3799 = vsub.f32 %v3228, %v3653
    %v3800 = vsub.f32 %v3233, %v3655
    %v3801 = vsub.f32 %v3238, %v3657
    %v3802 = vsub.f32 %v3356, %v3659
    %v3803 = vsub.f32 %v3361, %v3661
    %v3804 = vsub.f32 %v3366, %v3663
    %v3805 = vsub.f32 %v3371, %v3665
    %v3806 = vsub.f32 %v3376, %v3667
    %v3807 = vsub.f32 %v3381, %v3669
    %v3808 = vsub.f32 %v3386, %v3671
    %v3809 = vsub.f32 %v3391, %v3673
    %v3810 = vsub.f32 %v3396, %v3675
    %v3811 = vsub.f32 %v3401, %v3677
    %v3812 = vsub.f32 %v3406, %v3679
    %v3813 = vsub.f32 %v3411, %v3681
    %v3814 = vsub.f32 %v3416, %v3683
    %v3815 = vsub.f32 %v3421, %v3685
    %v3816 = vsub.f32 %v3426, %v3687
    %v3817 = vsub.f32 %v3431, %v3689
    %v3818 = vmul.f32 %v3690, 1.442695
    %v3819 = vpow.pop %v3818
    %v3820 = vmul.f32 %v3691, 1.442695
    %v3821 = vpow.pop %v3820
    %v3822 = vmul.f32 %v3692, 1.442695
    %v3823 = vpow.pop %v3822
    %v3824 = vmul.f32 %v3693, 1.442695
    %v3825 = vpow.pop %v3824
    %v3826 = vmul.f32 %v3694, 1.442695
    %v3827 = vpow.pop %v3826
    %v3828 = vmul.f32 %v3695, 1.442695
    %v3829 = vpow.pop %v3828
    %v3830 = vmul.f32 %v3696, 1.442695
    %v3831 = vpow.pop %v3830
    %v3832 = vmul.f32 %v3697, 1.442695
    %v3833 = vpow.pop %v3832
    %v3834 = vmul.f32 %v3698, 1.442695
    %v3835 = vpow.pop %v3834
    %v3836 = vmul.f32 %v3699, 1.442695
    %v3837 = vpow.pop %v3836
    %v3838 = vmul.f32 %v3700, 1.442695
    %v3839 = vpow.pop %v3838
    %v3840 = vmul.f32 %v3701, 1.442695
    %v3841 = vpow.pop %v3840
    %v3842 = vmul.f32 %v3702, 1.442695
    %v3843 = vpow.pop %v3842
    %v3844 = vmul.f32 %v3703, 1.442695
    %v3845 = vpow.pop %v3844
    %v3846 = vmul.f32 %v3704, 1.442695
    %v3847 = vpow.pop %v3846
    %v3848 = vmul.f32 %v3705, 1.442695
    %v3849 = vpow.pop %v3848
    %v3850 = vmul.f32 %v3706, 1.442695
    %v3851 = vpow.pop %v3850
    %v3852 = vmul.f32 %v3707, 1.442695
    %v3853 = vpow.pop %v3852
    %v3854 = vmul.f32 %v3708, 1.442695
    %v3855 = vpow.pop %v3854
    %v3856 = vmul.f32 %v3709, 1.442695
    %v3857 = vpow.pop %v3856
    %v3858 = vmul.f32 %v3710, 1.442695
    %v3859 = vpow.pop %v3858
    %v3860 = vmul.f32 %v3711, 1.442695
    %v3861 = vpow.pop %v3860
    %v3862 = vmul.f32 %v3712, 1.442695
    %v3863 = vpow.pop %v3862
    %v3864 = vmul.f32 %v3713, 1.442695
    %v3865 = vpow.pop %v3864
    %v3866 = vmul.f32 %v3714, 1.442695
    %v3867 = vpow.pop %v3866
    %v3868 = vmul.f32 %v3715, 1.442695
    %v3869 = vpow.pop %v3868
    %v3870 = vmul.f32 %v3716, 1.442695
    %v3871 = vpow.pop %v3870
    %v3872 = vmul.f32 %v3717, 1.442695
    %v3873 = vpow.pop %v3872
    %v3874 = vmul.f32 %v3718, 1.442695
    %v3875 = vpow.pop %v3874
    %v3876 = vmul.f32 %v3719, 1.442695
    %v3877 = vpow.pop %v3876
    %v3878 = vmul.f32 %v3720, 1.442695
    %v3879 = vpow.pop %v3878
    %v3880 = vmul.f32 %v3721, 1.442695
    %v3881 = vpow.pop %v3880
    %v3882 = vmul.f32 %v3722, 1.442695
    %v3883 = vpow.pop %v3882
    %v3884 = vmul.f32 %v3723, 1.442695
    %v3885 = vpow.pop %v3884
    %v3886 = vmul.f32 %v3724, 1.442695
    %v3887 = vpow.pop %v3886
    %v3888 = vmul.f32 %v3725, 1.442695
    %v3889 = vpow.pop %v3888
    %v3890 = vmul.f32 %v3726, 1.442695
    %v3891 = vpow.pop %v3890
    %v3892 = vmul.f32 %v3727, 1.442695
    %v3893 = vpow.pop %v3892
    %v3894 = vmul.f32 %v3728, 1.442695
    %v3895 = vpow.pop %v3894
    %v3896 = vmul.f32 %v3729, 1.442695
    %v3897 = vpow.pop %v3896
    %v3898 = vmul.f32 %v3730, 1.442695
    %v3899 = vpow.pop %v3898
    %v3900 = vmul.f32 %v3731, 1.442695
    %v3901 = vpow.pop %v3900
    %v3902 = vmul.f32 %v3732, 1.442695
    %v3903 = vpow.pop %v3902
    %v3904 = vmul.f32 %v3733, 1.442695
    %v3905 = vpow.pop %v3904
    %v3906 = vmul.f32 %v3734, 1.442695
    %v3907 = vpow.pop %v3906
    %v3908 = vmul.f32 %v3735, 1.442695
    %v3909 = vpow.pop %v3908
    %v3910 = vmul.f32 %v3736, 1.442695
    %v3911 = vpow.pop %v3910
    %v3912 = vmul.f32 %v3737, 1.442695
    %v3913 = vpow.pop %v3912
    %v3914 = vmul.f32 %v3738, 1.442695
    %v3915 = vpow.pop %v3914
    %v3916 = vmul.f32 %v3739, 1.442695
    %v3917 = vpow.pop %v3916
    %v3918 = vmul.f32 %v3740, 1.442695
    %v3919 = vpow.pop %v3918
    %v3920 = vmul.f32 %v3741, 1.442695
    %v3921 = vpow.pop %v3920
    %v3922 = vmul.f32 %v3742, 1.442695
    %v3923 = vpow.pop %v3922
    %v3924 = vmul.f32 %v3743, 1.442695
    %v3925 = vpow.pop %v3924
    %v3926 = vmul.f32 %v3744, 1.442695
    %v3927 = vpow.pop %v3926
    %v3928 = vmul.f32 %v3745, 1.442695
    %v3929 = vpow.pop %v3928
    %v3930 = vmul.f32 %v3746, 1.442695
    %v3931 = vpow.pop %v3930
    %v3932 = vmul.f32 %v3747, 1.442695
    %v3933 = vpow.pop %v3932
    %v3934 = vmul.f32 %v3748, 1.442695
    %v3935 = vpow.pop %v3934
    %v3936 = vmul.f32 %v3749, 1.442695
    %v3937 = vpow.pop %v3936
    %v3938 = vmul.f32 %v3750, 1.442695
    %v3939 = vpow.pop %v3938
    %v3940 = vmul.f32 %v3751, 1.442695
    %v3941 = vpow.pop %v3940
    %v3942 = vmul.f32 %v3752, 1.442695
    %v3943 = vpow.pop %v3942
    %v3944 = vmul.f32 %v3753, 1.442695
    %v3945 = vpow.pop %v3944
    %v3946 = vmul.f32 %v3754, 1.442695
    %v3947 = vpow.pop %v3946
    %v3948 = vmul.f32 %v3755, 1.442695
    %v3949 = vpow.pop %v3948
    %v3950 = vmul.f32 %v3756, 1.442695
    %v3951 = vpow.pop %v3950
    %v3952 = vmul.f32 %v3757, 1.442695
    %v3953 = vpow.pop %v3952
    %v3954 = vmul.f32 %v3758, 1.442695
    %v3955 = vpow.pop %v3954
    %v3956 = vmul.f32 %v3759, 1.442695
    %v3957 = vpow.pop %v3956
    %v3958 = vmul.f32 %v3760, 1.442695
    %v3959 = vpow.pop %v3958
    %v3960 = vmul.f32 %v3761, 1.442695
    %v3961 = vpow.pop %v3960
    %v3962 = vmul.f32 %v3762, 1.442695
    %v3963 = vpow.pop %v3962
    %v3964 = vmul.f32 %v3763, 1.442695
    %v3965 = vpow.pop %v3964
    %v3966 = vmul.f32 %v3764, 1.442695
    %v3967 = vpow.pop %v3966
    %v3968 = vmul.f32 %v3765, 1.442695
    %v3969 = vpow.pop %v3968
    %v3970 = vmul.f32 %v3766, 1.442695
    %v3971 = vpow.pop %v3970
    %v3972 = vmul.f32 %v3767, 1.442695
    %v3973 = vpow.pop %v3972
    %v3974 = vmul.f32 %v3768, 1.442695
    %v3975 = vpow.pop %v3974
    %v3976 = vmul.f32 %v3769, 1.442695
    %v3977 = vpow.pop %v3976
    %v3978 = vmul.f32 %v3770, 1.442695
    %v3979 = vpow.pop %v3978
    %v3980 = vmul.f32 %v3771, 1.442695
    %v3981 = vpow.pop %v3980
    %v3982 = vmul.f32 %v3772, 1.442695
    %v3983 = vpow.pop %v3982
    %v3984 = vmul.f32 %v3773, 1.442695
    %v3985 = vpow.pop %v3984
    %v3986 = vmul.f32 %v3774, 1.442695
    %v3987 = vpow.pop %v3986
    %v3988 = vmul.f32 %v3775, 1.442695
    %v3989 = vpow.pop %v3988
    %v3990 = vmul.f32 %v3776, 1.442695
    %v3991 = vpow.pop %v3990
    %v3992 = vmul.f32 %v3777, 1.442695
    %v3993 = vpow.pop %v3992
    %v3994 = vmul.f32 %v3778, 1.442695
    %v3995 = vpow.pop %v3994
    %v3996 = vmul.f32 %v3779, 1.442695
    %v3997 = vpow.pop %v3996
    %v3998 = vmul.f32 %v3780, 1.442695
    %v3999 = vpow.pop %v3998
    %v4000 = vmul.f32 %v3781, 1.442695
    %v4001 = vpow.pop %v4000
    %v4002 = vmul.f32 %v3782, 1.442695
    %v4003 = vpow.pop %v4002
    %v4004 = vmul.f32 %v3783, 1.442695
    %v4005 = vpow.pop %v4004
    %v4006 = vmul.f32 %v3784, 1.442695
    %v4007 = vpow.pop %v4006
    %v4008 = vmul.f32 %v3785, 1.442695
    %v4009 = vpow.pop %v4008
    %v4010 = vmul.f32 %v3786, 1.442695
    %v4011 = vpow.pop %v4010
    %v4012 = vmul.f32 %v3787, 1.442695
    %v4013 = vpow.pop %v4012
    %v4014 = vmul.f32 %v3788, 1.442695
    %v4015 = vpow.pop %v4014
    %v4016 = vmul.f32 %v3789, 1.442695
    %v4017 = vpow.pop %v4016
    %v4018 = vmul.f32 %v3790, 1.442695
    %v4019 = vpow.pop %v4018
    %v4020 = vmul.f32 %v3791, 1.442695
    %v4021 = vpow.pop %v4020
    %v4022 = vmul.f32 %v3792, 1.442695
    %v4023 = vpow.pop %v4022
    %v4024 = vmul.f32 %v3793, 1.442695
    %v4025 = vpow.pop %v4024
    %v4026 = vmul.f32 %v3794, 1.442695
    %v4027 = vpow.pop %v4026
    %v4028 = vmul.f32 %v3795, 1.442695
    %v4029 = vpow.pop %v4028
    %v4030 = vmul.f32 %v3796, 1.442695
    %v4031 = vpow.pop %v4030
    %v4032 = vmul.f32 %v3797, 1.442695
    %v4033 = vpow.pop %v4032
    %v4034 = vmul.f32 %v3798, 1.442695
    %v4035 = vpow.pop %v4034
    %v4036 = vmul.f32 %v3799, 1.442695
    %v4037 = vpow.pop %v4036
    %v4038 = vmul.f32 %v3800, 1.442695
    %v4039 = vpow.pop %v4038
    %v4040 = vmul.f32 %v3801, 1.442695
    %v4041 = vpow.pop %v4040
    %v4042 = vmul.f32 %v3802, 1.442695
    %v4043 = vpow.pop %v4042
    %v4044 = vmul.f32 %v3803, 1.442695
    %v4045 = vpow.pop %v4044
    %v4046 = vmul.f32 %v3804, 1.442695
    %v4047 = vpow.pop %v4046
    %v4048 = vmul.f32 %v3805, 1.442695
    %v4049 = vpow.pop %v4048
    %v4050 = vmul.f32 %v3806, 1.442695
    %v4051 = vpow.pop %v4050
    %v4052 = vmul.f32 %v3807, 1.442695
    %v4053 = vpow.pop %v4052
    %v4054 = vmul.f32 %v3808, 1.442695
    %v4055 = vpow.pop %v4054
    %v4056 = vmul.f32 %v3809, 1.442695
    %v4057 = vpow.pop %v4056
    %v4058 = vmul.f32 %v3810, 1.442695
    %v4059 = vpow.pop %v4058
    %v4060 = vmul.f32 %v3811, 1.442695
    %v4061 = vpow.pop %v4060
    %v4062 = vmul.f32 %v3812, 1.442695
    %v4063 = vpow.pop %v4062
    %v4064 = vmul.f32 %v3813, 1.442695
    %v4065 = vpow.pop %v4064
    %v4066 = vmul.f32 %v3814, 1.442695
    %v4067 = vpow.pop %v4066
    %v4068 = vmul.f32 %v3815, 1.442695
    %v4069 = vpow.pop %v4068
    %v4070 = vmul.f32 %v3816, 1.442695
    %v4071 = vpow.pop %v4070
    %v4072 = vmul.f32 %v3817, 1.442695
    %v4073 = vpow.pop %v4072
    %4074 = vadd.xlane.f32.xlu0 %v3819
    %v4075 = vpop.xlane.xlu0 %4074
    %4076 = vadd.xlane.f32.xlu0 %v3821
    %v4077 = vpop.xlane.xlu0 %4076
    %4078 = vadd.xlane.f32.xlu0 %v3823
    %v4079 = vpop.xlane.xlu0 %4078
    %4080 = vadd.xlane.f32.xlu0 %v3825
    %v4081 = vpop.xlane.xlu0 %4080
    %4082 = vadd.xlane.f32.xlu0 %v3827
    %v4083 = vpop.xlane.xlu0 %4082
    %4084 = vadd.xlane.f32.xlu0 %v3829
    %v4085 = vpop.xlane.xlu0 %4084
    %4086 = vadd.xlane.f32.xlu0 %v3831
    %v4087 = vpop.xlane.xlu0 %4086
    %4088 = vadd.xlane.f32.xlu0 %v3833
    %v4089 = vpop.xlane.xlu0 %4088
    %4090 = vadd.xlane.f32.xlu0 %v3835
    %v4091 = vpop.xlane.xlu0 %4090
    %4092 = vadd.xlane.f32.xlu0 %v3837
    %v4093 = vpop.xlane.xlu0 %4092
    %4094 = vadd.xlane.f32.xlu0 %v3839
    %v4095 = vpop.xlane.xlu0 %4094
    %4096 = vadd.xlane.f32.xlu0 %v3841
    %v4097 = vpop.xlane.xlu0 %4096
    %4098 = vadd.xlane.f32.xlu0 %v3843
    %v4099 = vpop.xlane.xlu0 %4098
    %4100 = vadd.xlane.f32.xlu0 %v3845
    %v4101 = vpop.xlane.xlu0 %4100
    %4102 = vadd.xlane.f32.xlu0 %v3847
    %v4103 = vpop.xlane.xlu0 %4102
    %4104 = vadd.xlane.f32.xlu0 %v3849
    %v4105 = vpop.xlane.xlu0 %4104
    %4106 = vadd.xlane.f32.xlu0 %v3851
    %v4107 = vpop.xlane.xlu0 %4106
    %4108 = vadd.xlane.f32.xlu0 %v3853
    %v4109 = vpop.xlane.xlu0 %4108
    %4110 = vadd.xlane.f32.xlu0 %v3855
    %v4111 = vpop.xlane.xlu0 %4110
    %4112 = vadd.xlane.f32.xlu0 %v3857
    %v4113 = vpop.xlane.xlu0 %4112
    %4114 = vadd.xlane.f32.xlu0 %v3859
    %v4115 = vpop.xlane.xlu0 %4114
    %4116 = vadd.xlane.f32.xlu0 %v3861
    %v4117 = vpop.xlane.xlu0 %4116
    %4118 = vadd.xlane.f32.xlu0 %v3863
    %v4119 = vpop.xlane.xlu0 %4118
    %4120 = vadd.xlane.f32.xlu0 %v3865
    %v4121 = vpop.xlane.xlu0 %4120
    %4122 = vadd.xlane.f32.xlu0 %v3867
    %v4123 = vpop.xlane.xlu0 %4122
    %4124 = vadd.xlane.f32.xlu0 %v3869
    %v4125 = vpop.xlane.xlu0 %4124
    %4126 = vadd.xlane.f32.xlu0 %v3871
    %v4127 = vpop.xlane.xlu0 %4126
    %4128 = vadd.xlane.f32.xlu0 %v3873
    %v4129 = vpop.xlane.xlu0 %4128
    %4130 = vadd.xlane.f32.xlu0 %v3875
    %v4131 = vpop.xlane.xlu0 %4130
    %4132 = vadd.xlane.f32.xlu0 %v3877
    %v4133 = vpop.xlane.xlu0 %4132
    %4134 = vadd.xlane.f32.xlu0 %v3879
    %v4135 = vpop.xlane.xlu0 %4134
    %4136 = vadd.xlane.f32.xlu0 %v3881
    %v4137 = vpop.xlane.xlu0 %4136
    %4138 = vadd.xlane.f32.xlu0 %v3883
    %v4139 = vpop.xlane.xlu0 %4138
    %4140 = vadd.xlane.f32.xlu0 %v3885
    %v4141 = vpop.xlane.xlu0 %4140
    %4142 = vadd.xlane.f32.xlu0 %v3887
    %v4143 = vpop.xlane.xlu0 %4142
    %4144 = vadd.xlane.f32.xlu0 %v3889
    %v4145 = vpop.xlane.xlu0 %4144
    %4146 = vadd.xlane.f32.xlu0 %v3891
    %v4147 = vpop.xlane.xlu0 %4146
    %4148 = vadd.xlane.f32.xlu0 %v3893
    %v4149 = vpop.xlane.xlu0 %4148
    %4150 = vadd.xlane.f32.xlu0 %v3895
    %v4151 = vpop.xlane.xlu0 %4150
    %4152 = vadd.xlane.f32.xlu0 %v3897
    %v4153 = vpop.xlane.xlu0 %4152
    %4154 = vadd.xlane.f32.xlu0 %v3899
    %v4155 = vpop.xlane.xlu0 %4154
    %4156 = vadd.xlane.f32.xlu0 %v3901
    %v4157 = vpop.xlane.xlu0 %4156
    %4158 = vadd.xlane.f32.xlu0 %v3903
    %v4159 = vpop.xlane.xlu0 %4158
    %4160 = vadd.xlane.f32.xlu0 %v3905
    %v4161 = vpop.xlane.xlu0 %4160
    %4162 = vadd.xlane.f32.xlu0 %v3907
    %v4163 = vpop.xlane.xlu0 %4162
    %4164 = vadd.xlane.f32.xlu0 %v3909
    %v4165 = vpop.xlane.xlu0 %4164
    %4166 = vadd.xlane.f32.xlu0 %v3911
    %v4167 = vpop.xlane.xlu0 %4166
    %4168 = vadd.xlane.f32.xlu0 %v3913
    %v4169 = vpop.xlane.xlu0 %4168
    %4170 = vadd.xlane.f32.xlu0 %v3915
    %v4171 = vpop.xlane.xlu0 %4170
    %4172 = vadd.xlane.f32.xlu0 %v3917
    %v4173 = vpop.xlane.xlu0 %4172
    %4174 = vadd.xlane.f32.xlu0 %v3919
    %v4175 = vpop.xlane.xlu0 %4174
    %4176 = vadd.xlane.f32.xlu0 %v3921
    %v4177 = vpop.xlane.xlu0 %4176
    %4178 = vadd.xlane.f32.xlu0 %v3923
    %v4179 = vpop.xlane.xlu0 %4178
    %4180 = vadd.xlane.f32.xlu0 %v3925
    %v4181 = vpop.xlane.xlu0 %4180
    %4182 = vadd.xlane.f32.xlu0 %v3927
    %v4183 = vpop.xlane.xlu0 %4182
    %4184 = vadd.xlane.f32.xlu0 %v3929
    %v4185 = vpop.xlane.xlu0 %4184
    %4186 = vadd.xlane.f32.xlu0 %v3931
    %v4187 = vpop.xlane.xlu0 %4186
    %4188 = vadd.xlane.f32.xlu0 %v3933
    %v4189 = vpop.xlane.xlu0 %4188
    %4190 = vadd.xlane.f32.xlu0 %v3935
    %v4191 = vpop.xlane.xlu0 %4190
    %4192 = vadd.xlane.f32.xlu0 %v3937
    %v4193 = vpop.xlane.xlu0 %4192
    %4194 = vadd.xlane.f32.xlu0 %v3939
    %v4195 = vpop.xlane.xlu0 %4194
    %4196 = vadd.xlane.f32.xlu0 %v3941
    %v4197 = vpop.xlane.xlu0 %4196
    %4198 = vadd.xlane.f32.xlu0 %v3943
    %v4199 = vpop.xlane.xlu0 %4198
    %4200 = vadd.xlane.f32.xlu0 %v3945
    %v4201 = vpop.xlane.xlu0 %4200
    %4202 = vadd.xlane.f32.xlu0 %v3947
    %v4203 = vpop.xlane.xlu0 %4202
    %4204 = vadd.xlane.f32.xlu0 %v3949
    %v4205 = vpop.xlane.xlu0 %4204
    %4206 = vadd.xlane.f32.xlu0 %v3951
    %v4207 = vpop.xlane.xlu0 %4206
    %4208 = vadd.xlane.f32.xlu0 %v3953
    %v4209 = vpop.xlane.xlu0 %4208
    %4210 = vadd.xlane.f32.xlu0 %v3955
    %v4211 = vpop.xlane.xlu0 %4210
    %4212 = vadd.xlane.f32.xlu0 %v3957
    %v4213 = vpop.xlane.xlu0 %4212
    %4214 = vadd.xlane.f32.xlu0 %v3959
    %v4215 = vpop.xlane.xlu0 %4214
    %4216 = vadd.xlane.f32.xlu0 %v3961
    %v4217 = vpop.xlane.xlu0 %4216
    %4218 = vadd.xlane.f32.xlu0 %v3963
    %v4219 = vpop.xlane.xlu0 %4218
    %4220 = vadd.xlane.f32.xlu0 %v3965
    %v4221 = vpop.xlane.xlu0 %4220
    %4222 = vadd.xlane.f32.xlu0 %v3967
    %v4223 = vpop.xlane.xlu0 %4222
    %4224 = vadd.xlane.f32.xlu0 %v3969
    %v4225 = vpop.xlane.xlu0 %4224
    %4226 = vadd.xlane.f32.xlu0 %v3971
    %v4227 = vpop.xlane.xlu0 %4226
    %4228 = vadd.xlane.f32.xlu0 %v3973
    %v4229 = vpop.xlane.xlu0 %4228
    %4230 = vadd.xlane.f32.xlu0 %v3975
    %v4231 = vpop.xlane.xlu0 %4230
    %4232 = vadd.xlane.f32.xlu0 %v3977
    %v4233 = vpop.xlane.xlu0 %4232
    %4234 = vadd.xlane.f32.xlu0 %v3979
    %v4235 = vpop.xlane.xlu0 %4234
    %4236 = vadd.xlane.f32.xlu0 %v3981
    %v4237 = vpop.xlane.xlu0 %4236
    %4238 = vadd.xlane.f32.xlu0 %v3983
    %v4239 = vpop.xlane.xlu0 %4238
    %4240 = vadd.xlane.f32.xlu0 %v3985
    %v4241 = vpop.xlane.xlu0 %4240
    %4242 = vadd.xlane.f32.xlu0 %v3987
    %v4243 = vpop.xlane.xlu0 %4242
    %4244 = vadd.xlane.f32.xlu0 %v3989
    %v4245 = vpop.xlane.xlu0 %4244
    %4246 = vadd.xlane.f32.xlu0 %v3991
    %v4247 = vpop.xlane.xlu0 %4246
    %4248 = vadd.xlane.f32.xlu0 %v3993
    %v4249 = vpop.xlane.xlu0 %4248
    %4250 = vadd.xlane.f32.xlu0 %v3995
    %v4251 = vpop.xlane.xlu0 %4250
    %4252 = vadd.xlane.f32.xlu0 %v3997
    %v4253 = vpop.xlane.xlu0 %4252
    %4254 = vadd.xlane.f32.xlu0 %v3999
    %v4255 = vpop.xlane.xlu0 %4254
    %4256 = vadd.xlane.f32.xlu0 %v4001
    %v4257 = vpop.xlane.xlu0 %4256
    %4258 = vadd.xlane.f32.xlu0 %v4003
    %v4259 = vpop.xlane.xlu0 %4258
    %4260 = vadd.xlane.f32.xlu0 %v4005
    %v4261 = vpop.xlane.xlu0 %4260
    %4262 = vadd.xlane.f32.xlu0 %v4007
    %v4263 = vpop.xlane.xlu0 %4262
    %4264 = vadd.xlane.f32.xlu0 %v4009
    %v4265 = vpop.xlane.xlu0 %4264
    %4266 = vadd.xlane.f32.xlu0 %v4011
    %v4267 = vpop.xlane.xlu0 %4266
    %4268 = vadd.xlane.f32.xlu0 %v4013
    %v4269 = vpop.xlane.xlu0 %4268
    %4270 = vadd.xlane.f32.xlu0 %v4015
    %v4271 = vpop.xlane.xlu0 %4270
    %4272 = vadd.xlane.f32.xlu0 %v4017
    %v4273 = vpop.xlane.xlu0 %4272
    %4274 = vadd.xlane.f32.xlu0 %v4019
    %v4275 = vpop.xlane.xlu0 %4274
    %4276 = vadd.xlane.f32.xlu0 %v4021
    %v4277 = vpop.xlane.xlu0 %4276
    %4278 = vadd.xlane.f32.xlu0 %v4023
    %v4279 = vpop.xlane.xlu0 %4278
    %4280 = vadd.xlane.f32.xlu0 %v4025
    %v4281 = vpop.xlane.xlu0 %4280
    %4282 = vadd.xlane.f32.xlu0 %v4027
    %v4283 = vpop.xlane.xlu0 %4282
    %4284 = vadd.xlane.f32.xlu0 %v4029
    %v4285 = vpop.xlane.xlu0 %4284
    %4286 = vadd.xlane.f32.xlu0 %v4031
    %v4287 = vpop.xlane.xlu0 %4286
    %4288 = vadd.xlane.f32.xlu0 %v4033
    %v4289 = vpop.xlane.xlu0 %4288
    %4290 = vadd.xlane.f32.xlu0 %v4035
    %v4291 = vpop.xlane.xlu0 %4290
    %4292 = vadd.xlane.f32.xlu0 %v4037
    %v4293 = vpop.xlane.xlu0 %4292
    %4294 = vadd.xlane.f32.xlu0 %v4039
    %v4295 = vpop.xlane.xlu0 %4294
    %4296 = vadd.xlane.f32.xlu0 %v4041
    %v4297 = vpop.xlane.xlu0 %4296
    %4298 = vadd.xlane.f32.xlu0 %v4043
    %v4299 = vpop.xlane.xlu0 %4298
    %4300 = vadd.xlane.f32.xlu0 %v4045
    %v4301 = vpop.xlane.xlu0 %4300
    %4302 = vadd.xlane.f32.xlu0 %v4047
    %v4303 = vpop.xlane.xlu0 %4302
    %4304 = vadd.xlane.f32.xlu0 %v4049
    %v4305 = vpop.xlane.xlu0 %4304
    %4306 = vadd.xlane.f32.xlu0 %v4051
    %v4307 = vpop.xlane.xlu0 %4306
    %4308 = vadd.xlane.f32.xlu0 %v4053
    %v4309 = vpop.xlane.xlu0 %4308
    %4310 = vadd.xlane.f32.xlu0 %v4055
    %v4311 = vpop.xlane.xlu0 %4310
    %4312 = vadd.xlane.f32.xlu0 %v4057
    %v4313 = vpop.xlane.xlu0 %4312
    %4314 = vadd.xlane.f32.xlu0 %v4059
    %v4315 = vpop.xlane.xlu0 %4314
    %4316 = vadd.xlane.f32.xlu0 %v4061
    %v4317 = vpop.xlane.xlu0 %4316
    %4318 = vadd.xlane.f32.xlu0 %v4063
    %v4319 = vpop.xlane.xlu0 %4318
    %4320 = vadd.xlane.f32.xlu0 %v4065
    %v4321 = vpop.xlane.xlu0 %4320
    %4322 = vadd.xlane.f32.xlu0 %v4067
    %v4323 = vpop.xlane.xlu0 %4322
    %4324 = vadd.xlane.f32.xlu0 %v4069
    %v4325 = vpop.xlane.xlu0 %4324
    %4326 = vadd.xlane.f32.xlu0 %v4071
    %v4327 = vpop.xlane.xlu0 %4326
    %4328 = vadd.xlane.f32.xlu0 %v4073
    %v4329 = vpop.xlane.xlu0 %4328
    %v4330 = vrcp.pop %v4075
    %v4331 = vrcp.pop %v4077
    %v4332 = vrcp.pop %v4079
    %v4333 = vrcp.pop %v4081
    %v4334 = vrcp.pop %v4083
    %v4335 = vrcp.pop %v4085
    %v4336 = vrcp.pop %v4087
    %v4337 = vrcp.pop %v4089
    %v4338 = vrcp.pop %v4091
    %v4339 = vrcp.pop %v4093
    %v4340 = vrcp.pop %v4095
    %v4341 = vrcp.pop %v4097
    %v4342 = vrcp.pop %v4099
    %v4343 = vrcp.pop %v4101
    %v4344 = vrcp.pop %v4103
    %v4345 = vrcp.pop %v4105
    %v4346 = vrcp.pop %v4107
    %v4347 = vrcp.pop %v4109
    %v4348 = vrcp.pop %v4111
    %v4349 = vrcp.pop %v4113
    %v4350 = vrcp.pop %v4115
    %v4351 = vrcp.pop %v4117
    %v4352 = vrcp.pop %v4119
    %v4353 = vrcp.pop %v4121
    %v4354 = vrcp.pop %v4123
    %v4355 = vrcp.pop %v4125
    %v4356 = vrcp.pop %v4127
    %v4357 = vrcp.pop %v4129
    %v4358 = vrcp.pop %v4131
    %v4359 = vrcp.pop %v4133
    %v4360 = vrcp.pop %v4135
    %v4361 = vrcp.pop %v4137
    %v4362 = vrcp.pop %v4139
    %v4363 = vrcp.pop %v4141
    %v4364 = vrcp.pop %v4143
    %v4365 = vrcp.pop %v4145
    %v4366 = vrcp.pop %v4147
    %v4367 = vrcp.pop %v4149
    %v4368 = vrcp.pop %v4151
    %v4369 = vrcp.pop %v4153
    %v4370 = vrcp.pop %v4155
    %v4371 = vrcp.pop %v4157
    %v4372 = vrcp.pop %v4159
    %v4373 = vrcp.pop %v4161
    %v4374 = vrcp.pop %v4163
    %v4375 = vrcp.pop %v4165
    %v4376 = vrcp.pop %v4167
    %v4377 = vrcp.pop %v4169
    %v4378 = vrcp.pop %v4171
    %v4379 = vrcp.pop %v4173
    %v4380 = vrcp.pop %v4175
    %v4381 = vrcp.pop %v4177
    %v4382 = vrcp.pop %v4179
    %v4383 = vrcp.pop %v4181
    %v4384 = vrcp.pop %v4183
    %v4385 = vrcp.pop %v4185
    %v4386 = vrcp.pop %v4187
    %v4387 = vrcp.pop %v4189
    %v4388 = vrcp.pop %v4191
    %v4389 = vrcp.pop %v4193
    %v4390 = vrcp.pop %v4195
    %v4391 = vrcp.pop %v4197
    %v4392 = vrcp.pop %v4199
    %v4393 = vrcp.pop %v4201
    %v4394 = vrcp.pop %v4203
    %v4395 = vrcp.pop %v4205
    %v4396 = vrcp.pop %v4207
    %v4397 = vrcp.pop %v4209
    %v4398 = vrcp.pop %v4211
    %v4399 = vrcp.pop %v4213
    %v4400 = vrcp.pop %v4215
    %v4401 = vrcp.pop %v4217
    %v4402 = vrcp.pop %v4219
    %v4403 = vrcp.pop %v4221
    %v4404 = vrcp.pop %v4223
    %v4405 = vrcp.pop %v4225
    %v4406 = vrcp.pop %v4227
    %v4407 = vrcp.pop %v4229
    %v4408 = vrcp.pop %v4231
    %v4409 = vrcp.pop %v4233
    %v4410 = vrcp.pop %v4235
    %v4411 = vrcp.pop %v4237
    %v4412 = vrcp.pop %v4239
    %v4413 = vrcp.pop %v4241
    %v4414 = vrcp.pop %v4243
    %v4415 = vrcp.pop %v4245
    %v4416 = vrcp.pop %v4247
    %v4417 = vrcp.pop %v4249
    %v4418 = vrcp.pop %v4251
    %v4419 = vrcp.pop %v4253
    %v4420 = vrcp.pop %v4255
    %v4421 = vrcp.pop %v4257
    %v4422 = vrcp.pop %v4259
    %v4423 = vrcp.pop %v4261
    %v4424 = vrcp.pop %v4263
    %v4425 = vrcp.pop %v4265
    %v4426 = vrcp.pop %v4267
    %v4427 = vrcp.pop %v4269
    %v4428 = vrcp.pop %v4271
    %v4429 = vrcp.pop %v4273
    %v4430 = vrcp.pop %v4275
    %v4431 = vrcp.pop %v4277
    %v4432 = vrcp.pop %v4279
    %v4433 = vrcp.pop %v4281
    %v4434 = vrcp.pop %v4283
    %v4435 = vrcp.pop %v4285
    %v4436 = vrcp.pop %v4287
    %v4437 = vrcp.pop %v4289
    %v4438 = vrcp.pop %v4291
    %v4439 = vrcp.pop %v4293
    %v4440 = vrcp.pop %v4295
    %v4441 = vrcp.pop %v4297
    %v4442 = vrcp.pop %v4299
    %v4443 = vrcp.pop %v4301
    %v4444 = vrcp.pop %v4303
    %v4445 = vrcp.pop %v4305
    %v4446 = vrcp.pop %v4307
    %v4447 = vrcp.pop %v4309
    %v4448 = vrcp.pop %v4311
    %v4449 = vrcp.pop %v4313
    %v4450 = vrcp.pop %v4315
    %v4451 = vrcp.pop %v4317
    %v4452 = vrcp.pop %v4319
    %v4453 = vrcp.pop %v4321
    %v4454 = vrcp.pop %v4323
    %v4455 = vrcp.pop %v4325
    %v4456 = vrcp.pop %v4327
    %v4457 = vrcp.pop %v4329
    %v4458 = vmul.f32 %v3819, %v4330
    %v4459 = vmul.f32 %v3821, %v4331
    %v4460 = vmul.f32 %v3823, %v4332
    %v4461 = vmul.f32 %v3825, %v4333
    %v4462 = vmul.f32 %v3827, %v4334
    %v4463 = vmul.f32 %v3829, %v4335
    %v4464 = vmul.f32 %v3831, %v4336
    %v4465 = vmul.f32 %v3833, %v4337
    %v4466 = vmul.f32 %v3835, %v4338
    %v4467 = vmul.f32 %v3837, %v4339
    %v4468 = vmul.f32 %v3839, %v4340
    %v4469 = vmul.f32 %v3841, %v4341
    %v4470 = vmul.f32 %v3843, %v4342
    %v4471 = vmul.f32 %v3845, %v4343
    %v4472 = vmul.f32 %v3847, %v4344
    %v4473 = vmul.f32 %v3849, %v4345
    %v4474 = vmul.f32 %v3851, %v4346
    %v4475 = vmul.f32 %v3853, %v4347
    %v4476 = vmul.f32 %v3855, %v4348
    %v4477 = vmul.f32 %v3857, %v4349
    %v4478 = vmul.f32 %v3859, %v4350
    %v4479 = vmul.f32 %v3861, %v4351
    %v4480 = vmul.f32 %v3863, %v4352
    %v4481 = vmul.f32 %v3865, %v4353
    %v4482 = vmul.f32 %v3867, %v4354
    %v4483 = vmul.f32 %v3869, %v4355
    %v4484 = vmul.f32 %v3871, %v4356
    %v4485 = vmul.f32 %v3873, %v4357
    %v4486 = vmul.f32 %v3875, %v4358
    %v4487 = vmul.f32 %v3877, %v4359
    %v4488 = vmul.f32 %v3879, %v4360
    %v4489 = vmul.f32 %v3881, %v4361
    %v4490 = vmul.f32 %v3883, %v4362
    %v4491 = vmul.f32 %v3885, %v4363
    %v4492 = vmul.f32 %v3887, %v4364
    %v4493 = vmul.f32 %v3889, %v4365
    %v4494 = vmul.f32 %v3891, %v4366
    %v4495 = vmul.f32 %v3893, %v4367
    %v4496 = vmul.f32 %v3895, %v4368
    %v4497 = vmul.f32 %v3897, %v4369
    %v4498 = vmul.f32 %v3899, %v4370
    %v4499 = vmul.f32 %v3901, %v4371
    %v4500 = vmul.f32 %v3903, %v4372
    %v4501 = vmul.f32 %v3905, %v4373
    %v4502 = vmul.f32 %v3907, %v4374
    %v4503 = vmul.f32 %v3909, %v4375
    %v4504 = vmul.f32 %v3911, %v4376
    %v4505 = vmul.f32 %v3913, %v4377
    %v4506 = vmul.f32 %v3915, %v4378
    %v4507 = vmul.f32 %v3917, %v4379
    %v4508 = vmul.f32 %v3919, %v4380
    %v4509 = vmul.f32 %v3921, %v4381
    %v4510 = vmul.f32 %v3923, %v4382
    %v4511 = vmul.f32 %v3925, %v4383
    %v4512 = vmul.f32 %v3927, %v4384
    %v4513 = vmul.f32 %v3929, %v4385
    %v4514 = vmul.f32 %v3931, %v4386
    %v4515 = vmul.f32 %v3933, %v4387
    %v4516 = vmul.f32 %v3935, %v4388
    %v4517 = vmul.f32 %v3937, %v4389
    %v4518 = vmul.f32 %v3939, %v4390
    %v4519 = vmul.f32 %v3941, %v4391
    %v4520 = vmul.f32 %v3943, %v4392
    %v4521 = vmul.f32 %v3945, %v4393
    %v4522 = vmul.f32 %v3947, %v4394
    %v4523 = vmul.f32 %v3949, %v4395
    %v4524 = vmul.f32 %v3951, %v4396
    %v4525 = vmul.f32 %v3953, %v4397
    %v4526 = vmul.f32 %v3955, %v4398
    %v4527 = vmul.f32 %v3957, %v4399
    %v4528 = vmul.f32 %v3959, %v4400
    %v4529 = vmul.f32 %v3961, %v4401
    %v4530 = vmul.f32 %v3963, %v4402
    %v4531 = vmul.f32 %v3965, %v4403
    %v4532 = vmul.f32 %v3967, %v4404
    %v4533 = vmul.f32 %v3969, %v4405
    %v4534 = vmul.f32 %v3971, %v4406
    %v4535 = vmul.f32 %v3973, %v4407
    %v4536 = vmul.f32 %v3975, %v4408
    %v4537 = vmul.f32 %v3977, %v4409
    %v4538 = vmul.f32 %v3979, %v4410
    %v4539 = vmul.f32 %v3981, %v4411
    %v4540 = vmul.f32 %v3983, %v4412
    %v4541 = vmul.f32 %v3985, %v4413
    %v4542 = vmul.f32 %v3987, %v4414
    %v4543 = vmul.f32 %v3989, %v4415
    %v4544 = vmul.f32 %v3991, %v4416
    %v4545 = vmul.f32 %v3993, %v4417
    %v4546 = vmul.f32 %v3995, %v4418
    %v4547 = vmul.f32 %v3997, %v4419
    %v4548 = vmul.f32 %v3999, %v4420
    %v4549 = vmul.f32 %v4001, %v4421
    %v4550 = vmul.f32 %v4003, %v4422
    %v4551 = vmul.f32 %v4005, %v4423
    %v4552 = vmul.f32 %v4007, %v4424
    %v4553 = vmul.f32 %v4009, %v4425
    %v4554 = vmul.f32 %v4011, %v4426
    %v4555 = vmul.f32 %v4013, %v4427
    %v4556 = vmul.f32 %v4015, %v4428
    %v4557 = vmul.f32 %v4017, %v4429
    %v4558 = vmul.f32 %v4019, %v4430
    %v4559 = vmul.f32 %v4021, %v4431
    %v4560 = vmul.f32 %v4023, %v4432
    %v4561 = vmul.f32 %v4025, %v4433
    %v4562 = vmul.f32 %v4027, %v4434
    %v4563 = vmul.f32 %v4029, %v4435
    %v4564 = vmul.f32 %v4031, %v4436
    %v4565 = vmul.f32 %v4033, %v4437
    %v4566 = vmul.f32 %v4035, %v4438
    %v4567 = vmul.f32 %v4037, %v4439
    %v4568 = vmul.f32 %v4039, %v4440
    %v4569 = vmul.f32 %v4041, %v4441
    %v4570 = vmul.f32 %v4043, %v4442
    %v4571 = vmul.f32 %v4045, %v4443
    %v4572 = vmul.f32 %v4047, %v4444
    %v4573 = vmul.f32 %v4049, %v4445
    %v4574 = vmul.f32 %v4051, %v4446
    %v4575 = vmul.f32 %v4053, %v4447
    %v4576 = vmul.f32 %v4055, %v4448
    %v4577 = vmul.f32 %v4057, %v4449
    %v4578 = vmul.f32 %v4059, %v4450
    %v4579 = vmul.f32 %v4061, %v4451
    %v4580 = vmul.f32 %v4063, %v4452
    %v4581 = vmul.f32 %v4065, %v4453
    %v4582 = vmul.f32 %v4067, %v4454
    %v4583 = vmul.f32 %v4069, %v4455
    %v4584 = vmul.f32 %v4071, %v4456
    %v4585 = vmul.f32 %v4073, %v4457
    %4586 = vmatprep.subr.mxu0 0.0
    %4587 = vmatpush1.xpose.msra.mxu0 %v4458
    %4588 = vmatprep.subr.mxu0 0.0
    %4589 = vmatpush1.xpose.msra.mxu0 %v4459
    %4590 = vmatprep.subr.mxu0 0.0
    %4591 = vmatpush1.xpose.msra.mxu0 %v4460
    %4592 = vmatprep.subr.mxu0 0.0
    %4593 = vmatpush1.xpose.msra.mxu0 %v4461
    %4594 = vmatprep.subr.mxu0 0.0
    %4595 = vmatpush1.xpose.msra.mxu0 %v4462
    %4596 = vmatprep.subr.mxu0 0.0
    %4597 = vmatpush1.xpose.msra.mxu0 %v4463
    %4598 = vmatprep.subr.mxu0 0.0
    %4599 = vmatpush1.xpose.msra.mxu0 %v4464
    %4600 = vmatprep.subr.mxu0 0.0
    %4601 = vmatpush1.xpose.msra.mxu0 %v4465
    %4602 = vmatprep.subr.mxu0 0.0
    %4603 = vmatpush1.xpose.msra.mxu0 %v4466
    %4604 = vmatprep.subr.mxu0 0.0
    %4605 = vmatpush1.xpose.msra.mxu0 %v4467
    %4606 = vmatprep.subr.mxu0 0.0
    %4607 = vmatpush1.xpose.msra.mxu0 %v4468
    %4608 = vmatprep.subr.mxu0 0.0
    %4609 = vmatpush1.xpose.msra.mxu0 %v4469
    %4610 = vmatprep.subr.mxu0 0.0
    %4611 = vmatpush1.xpose.msra.mxu0 %v4470
    %4612 = vmatprep.subr.mxu0 0.0
    %4613 = vmatpush1.xpose.msra.mxu0 %v4471
    %4614 = vmatprep.subr.mxu0 0.0
    %4615 = vmatpush1.xpose.msra.mxu0 %v4472
    %4616 = vmatprep.subr.mxu0 0.0
    %4617 = vmatpush1.xpose.msra.mxu0 %v4473
    %4618 = vmatprep.subr.mxu0 0.0
    %4619 = vmatpush1.xpose.msra.mxu0 0.0
    %4620 = vmatprep.subr.mxu0 0.0
    %4621 = vmatpush1.xpose.msra.mxu0 0.0
    %4622 = vmatprep.subr.mxu0 0.0
    %4623 = vmatpush1.xpose.msra.mxu0 0.0
    %4624 = vmatprep.subr.mxu0 0.0
    %4625 = vmatpush1.xpose.msra.mxu0 0.0
    %4626 = vmatprep.subr.mxu0 0.0
    %4627 = vmatpush1.xpose.msra.mxu0 0.0
    %4628 = vmatprep.subr.mxu0 0.0
    %4629 = vmatpush1.xpose.msra.mxu0 0.0
    %4630 = vmatprep.subr.mxu0 0.0
    %4631 = vmatpush1.xpose.msra.mxu0 0.0
    %4632 = vmatprep.subr.mxu0 0.0
    %4633 = vmatpush1.xpose.msra.mxu0 0.0
    %4634 = vmatprep.subr.mxu0 0.0
    %4635 = vmatpush1.xpose.msra.mxu0 0.0
    %4636 = vmatprep.subr.mxu0 0.0
    %4637 = vmatpush1.xpose.msra.mxu0 0.0
    %4638 = vmatprep.subr.mxu0 0.0
    %4639 = vmatpush1.xpose.msra.mxu0 0.0
    %4640 = vmatprep.subr.mxu0 0.0
    %4641 = vmatpush1.xpose.msra.mxu0 0.0
    %4642 = vmatprep.subr.mxu0 0.0
    %4643 = vmatpush1.xpose.msra.mxu0 0.0
    %4644 = vmatprep.subr.mxu0 0.0
    %4645 = vmatpush1.xpose.msra.mxu0 0.0
    %4646 = vmatprep.subr.mxu0 0.0
    %4647 = vmatpush1.xpose.msra.mxu0 0.0
    %4648 = vmatprep.subr.mxu0 0.0
    %4649 = vmatpush1.xpose.msra.mxu0 0.0
    %4650 = vmatprep.mubr.f32.mxu0 0.0
    %4651 = vmatmul.mubr.f32.gmra.mrb[0].mxu0 %v1586
    %v4652 = vpop.f32.mrb[0].mxu0
    %v4653 = vadd.f32 0.0, %v4652
    %v4654 = vpop.f32.mrb[0].mxu0
    %4655 = vmatprep.mubr.f32.mxu0 0.0
    %4656 = vmatmul.mubr.f32.gmra.mrb[0].mxu0 %v1587
    %v4657 = vpop.f32.mrb[0].mxu0
    %v4658 = vadd.f32 0.0, %v4657
    %v4659 = vpop.f32.mrb[0].mxu0
    %4660 = vmatprep.mubr.f32.mxu0 0.0
    %4661 = vmatmul.mubr.f32.gmra.mrb[0].mxu0 %v1588
    %v4662 = vpop.f32.mrb[0].mxu0
    %v4663 = vadd.f32 0.0, %v4662
    %v4664 = vpop.f32.mrb[0].mxu0
    %4665 = vmatprep.mubr.f32.mxu0 0.0
    %4666 = vmatmul.mubr.f32.gmra.mrb[0].mxu0 %v1589
    %v4667 = vpop.f32.mrb[0].mxu0
    %v4668 = vadd.f32 0.0, %v4667
    %v4669 = vpop.f32.mrb[0].mxu0
    %4670 = vdwg.mxu0
    %4671 = vmatprep.subr.mxu0 0.0
    %4672 = vmatpush1.xpose.msra.mxu0 %v4474
    %4673 = vmatprep.subr.mxu0 0.0
    %4674 = vmatpush1.xpose.msra.mxu0 %v4475
    %4675 = vmatprep.subr.mxu0 0.0
    %4676 = vmatpush1.xpose.msra.mxu0 %v4476
    %4677 = vmatprep.subr.mxu0 0.0
    %4678 = vmatpush1.xpose.msra.mxu0 %v4477
    %4679 = vmatprep.subr.mxu0 0.0
    %4680 = vmatpush1.xpose.msra.mxu0 %v4478
    %4681 = vmatprep.subr.mxu0 0.0
    %4682 = vmatpush1.xpose.msra.mxu0 %v4479
    %4683 = vmatprep.subr.mxu0 0.0
    %4684 = vmatpush1.xpose.msra.mxu0 %v4480
    %4685 = vmatprep.subr.mxu0 0.0
    %4686 = vmatpush1.xpose.msra.mxu0 %v4481
    %4687 = vmatprep.subr.mxu0 0.0
    %4688 = vmatpush1.xpose.msra.mxu0 %v4482
    %4689 = vmatprep.subr.mxu0 0.0
    %4690 = vmatpush1.xpose.msra.mxu0 %v4483
    %4691 = vmatprep.subr.mxu0 0.0
    %4692 = vmatpush1.xpose.msra.mxu0 %v4484
    %4693 = vmatprep.subr.mxu0 0.0
    %4694 = vmatpush1.xpose.msra.mxu0 %v4485
    %4695 = vmatprep.subr.mxu0 0.0
    %4696 = vmatpush1.xpose.msra.mxu0 %v4486
    %4697 = vmatprep.subr.mxu0 0.0
    %4698 = vmatpush1.xpose.msra.mxu0 %v4487
    %4699 = vmatprep.subr.mxu0 0.0
    %4700 = vmatpush1.xpose.msra.mxu0 %v4488
    %4701 = vmatprep.subr.mxu0 0.0
    %4702 = vmatpush1.xpose.msra.mxu0 %v4489
    %4703 = vmatprep.subr.mxu0 0.0
    %4704 = vmatpush1.xpose.msra.mxu0 0.0
    %4705 = vmatprep.subr.mxu0 0.0
    %4706 = vmatpush1.xpose.msra.mxu0 0.0
    %4707 = vmatprep.subr.mxu0 0.0
    %4708 = vmatpush1.xpose.msra.mxu0 0.0
    %4709 = vmatprep.subr.mxu0 0.0
    %4710 = vmatpush1.xpose.msra.mxu0 0.0
    %4711 = vmatprep.subr.mxu0 0.0
    %4712 = vmatpush1.xpose.msra.mxu0 0.0
    %4713 = vmatprep.subr.mxu0 0.0
    %4714 = vmatpush1.xpose.msra.mxu0 0.0
    %4715 = vmatprep.subr.mxu0 0.0
    %4716 = vmatpush1.xpose.msra.mxu0 0.0
    %4717 = vmatprep.subr.mxu0 0.0
    %4718 = vmatpush1.xpose.msra.mxu0 0.0
    %4719 = vmatprep.subr.mxu0 0.0
    %4720 = vmatpush1.xpose.msra.mxu0 0.0
    %4721 = vmatprep.subr.mxu0 0.0
    %4722 = vmatpush1.xpose.msra.mxu0 0.0
    %4723 = vmatprep.subr.mxu0 0.0
    %4724 = vmatpush1.xpose.msra.mxu0 0.0
    %4725 = vmatprep.subr.mxu0 0.0
    %4726 = vmatpush1.xpose.msra.mxu0 0.0
    %4727 = vmatprep.subr.mxu0 0.0
    %4728 = vmatpush1.xpose.msra.mxu0 0.0
    %4729 = vmatprep.subr.mxu0 0.0
    %4730 = vmatpush1.xpose.msra.mxu0 0.0
    %4731 = vmatprep.subr.mxu0 0.0
    %4732 = vmatpush1.xpose.msra.mxu0 0.0
    %4733 = vmatprep.subr.mxu0 0.0
    %4734 = vmatpush1.xpose.msra.mxu0 0.0
    %4735 = vmatprep.mubr.f32.mxu0 0.0
    %4736 = vmatmul.mubr.f32.gmra.mrb[0].mxu0 %v1590
    %v4737 = vpop.f32.mrb[0].mxu0
    %v4738 = vadd.f32 0.0, %v4737
    %v4739 = vpop.f32.mrb[0].mxu0
    %4740 = vmatprep.mubr.f32.mxu0 0.0
    %4741 = vmatmul.mubr.f32.gmra.mrb[0].mxu0 %v1591
    %v4742 = vpop.f32.mrb[0].mxu0
    %v4743 = vadd.f32 0.0, %v4742
    %v4744 = vpop.f32.mrb[0].mxu0
    %4745 = vmatprep.mubr.f32.mxu0 0.0
    %4746 = vmatmul.mubr.f32.gmra.mrb[0].mxu0 %v1592
    %v4747 = vpop.f32.mrb[0].mxu0
    %v4748 = vadd.f32 0.0, %v4747
    %v4749 = vpop.f32.mrb[0].mxu0
    %4750 = vmatprep.mubr.f32.mxu0 0.0
    %4751 = vmatmul.mubr.f32.gmra.mrb[0].mxu0 %v1593
    %v4752 = vpop.f32.mrb[0].mxu0
    %v4753 = vadd.f32 0.0, %v4752
    %v4754 = vpop.f32.mrb[0].mxu0
    %4755 = vdwg.mxu0
    %4756 = vmatprep.subr.mxu0 0.0
    %4757 = vmatpush1.xpose.msra.mxu0 %v4490
    %4758 = vmatprep.subr.mxu0 0.0
    %4759 = vmatpush1.xpose.msra.mxu0 %v4491
    %4760 = vmatprep.subr.mxu0 0.0
    %4761 = vmatpush1.xpose.msra.mxu0 %v4492
    %4762 = vmatprep.subr.mxu0 0.0
    %4763 = vmatpush1.xpose.msra.mxu0 %v4493
    %4764 = vmatprep.subr.mxu0 0.0
    %4765 = vmatpush1.xpose.msra.mxu0 %v4494
    %4766 = vmatprep.subr.mxu0 0.0
    %4767 = vmatpush1.xpose.msra.mxu0 %v4495
    %4768 = vmatprep.subr.mxu0 0.0
    %4769 = vmatpush1.xpose.msra.mxu0 %v4496
    %4770 = vmatprep.subr.mxu0 0.0
    %4771 = vmatpush1.xpose.msra.mxu0 %v4497
    %4772 = vmatprep.subr.mxu0 0.0
    %4773 = vmatpush1.xpose.msra.mxu0 %v4498
    %4774 = vmatprep.subr.mxu0 0.0
    %4775 = vmatpush1.xpose.msra.mxu0 %v4499
    %4776 = vmatprep.subr.mxu0 0.0
    %4777 = vmatpush1.xpose.msra.mxu0 %v4500
    %4778 = vmatprep.subr.mxu0 0.0
    %4779 = vmatpush1.xpose.msra.mxu0 %v4501
    %4780 = vmatprep.subr.mxu0 0.0
    %4781 = vmatpush1.xpose.msra.mxu0 %v4502
    %4782 = vmatprep.subr.mxu0 0.0
    %4783 = vmatpush1.xpose.msra.mxu0 %v4503
    %4784 = vmatprep.subr.mxu0 0.0
    %4785 = vmatpush1.xpose.msra.mxu0 %v4504
    %4786 = vmatprep.subr.mxu0 0.0
    %4787 = vmatpush1.xpose.msra.mxu0 %v4505
    %4788 = vmatprep.subr.mxu0 0.0
    %4789 = vmatpush1.xpose.msra.mxu0 0.0
    %4790 = vmatprep.subr.mxu0 0.0
    %4791 = vmatpush1.xpose.msra.mxu0 0.0
    %4792 = vmatprep.subr.mxu0 0.0
    %4793 = vmatpush1.xpose.msra.mxu0 0.0
    %4794 = vmatprep.subr.mxu0 0.0
    %4795 = vmatpush1.xpose.msra.mxu0 0.0
    %4796 = vmatprep.subr.mxu0 0.0
    %4797 = vmatpush1.xpose.msra.mxu0 0.0
    %4798 = vmatprep.subr.mxu0 0.0
    %4799 = vmatpush1.xpose.msra.mxu0 0.0
    %4800 = vmatprep.subr.mxu0 0.0
    %4801 = vmatpush1.xpose.msra.mxu0 0.0
    %4802 = vmatprep.subr.mxu0 0.0
    %4803 = vmatpush1.xpose.msra.mxu0 0.0
    %4804 = vmatprep.subr.mxu0 0.0
    %4805 = vmatpush1.xpose.msra.mxu0 0.0
    %4806 = vmatprep.subr.mxu0 0.0
    %4807 = vmatpush1.xpose.msra.mxu0 0.0
    %4808 = vmatprep.subr.mxu0 0.0
    %4809 = vmatpush1.xpose.msra.mxu0 0.0
    %4810 = vmatprep.subr.mxu0 0.0
    %4811 = vmatpush1.xpose.msra.mxu0 0.0
    %4812 = vmatprep.subr.mxu0 0.0
    %4813 = vmatpush1.xpose.msra.mxu0 0.0
    %4814 = vmatprep.subr.mxu0 0.0
    %4815 = vmatpush1.xpose.msra.mxu0 0.0
    %4816 = vmatprep.subr.mxu0 0.0
    %4817 = vmatpush1.xpose.msra.mxu0 0.0
    %4818 = vmatprep.subr.mxu0 0.0
    %4819 = vmatpush1.xpose.msra.mxu0 0.0
    %4820 = vmatprep.mubr.f32.mxu0 0.0
    %4821 = vmatmul.mubr.f32.gmra.mrb[0].mxu0 %v1594
    %v4822 = vpop.f32.mrb[0].mxu0
    %v4823 = vadd.f32 0.0, %v4822
    %v4824 = vpop.f32.mrb[0].mxu0
    %4825 = vmatprep.mubr.f32.mxu0 0.0
    %4826 = vmatmul.mubr.f32.gmra.mrb[0].mxu0 %v1595
    %v4827 = vpop.f32.mrb[0].mxu0
    %v4828 = vadd.f32 0.0, %v4827
    %v4829 = vpop.f32.mrb[0].mxu0
    %4830 = vmatprep.mubr.f32.mxu0 0.0
    %4831 = vmatmul.mubr.f32.gmra.mrb[0].mxu0 %v1596
    %v4832 = vpop.f32.mrb[0].mxu0
    %v4833 = vadd.f32 0.0, %v4832
    %v4834 = vpop.f32.mrb[0].mxu0
    %4835 = vmatprep.mubr.f32.mxu0 0.0
    %4836 = vmatmul.mubr.f32.gmra.mrb[0].mxu0 %v1597
    %v4837 = vpop.f32.mrb[0].mxu0
    %v4838 = vadd.f32 0.0, %v4837
    %v4839 = vpop.f32.mrb[0].mxu0
    %4840 = vdwg.mxu0
    %4841 = vmatprep.subr.mxu0 0.0
    %4842 = vmatpush1.xpose.msra.mxu0 %v4506
    %4843 = vmatprep.subr.mxu0 0.0
    %4844 = vmatpush1.xpose.msra.mxu0 %v4507
    %4845 = vmatprep.subr.mxu0 0.0
    %4846 = vmatpush1.xpose.msra.mxu0 %v4508
    %4847 = vmatprep.subr.mxu0 0.0
    %4848 = vmatpush1.xpose.msra.mxu0 %v4509
    %4849 = vmatprep.subr.mxu0 0.0
    %4850 = vmatpush1.xpose.msra.mxu0 %v4510
    %4851 = vmatprep.subr.mxu0 0.0
    %4852 = vmatpush1.xpose.msra.mxu0 %v4511
    %4853 = vmatprep.subr.mxu0 0.0
    %4854 = vmatpush1.xpose.msra.mxu0 %v4512
    %4855 = vmatprep.subr.mxu0 0.0
    %4856 = vmatpush1.xpose.msra.mxu0 %v4513
    %4857 = vmatprep.subr.mxu0 0.0
    %4858 = vmatpush1.xpose.msra.mxu0 %v4514
    %4859 = vmatprep.subr.mxu0 0.0
    %4860 = vmatpush1.xpose.msra.mxu0 %v4515
    %4861 = vmatprep.subr.mxu0 0.0
    %4862 = vmatpush1.xpose.msra.mxu0 %v4516
    %4863 = vmatprep.subr.mxu0 0.0
    %4864 = vmatpush1.xpose.msra.mxu0 %v4517
    %4865 = vmatprep.subr.mxu0 0.0
    %4866 = vmatpush1.xpose.msra.mxu0 %v4518
    %4867 = vmatprep.subr.mxu0 0.0
    %4868 = vmatpush1.xpose.msra.mxu0 %v4519
    %4869 = vmatprep.subr.mxu0 0.0
    %4870 = vmatpush1.xpose.msra.mxu0 %v4520
    %4871 = vmatprep.subr.mxu0 0.0
    %4872 = vmatpush1.xpose.msra.mxu0 %v4521
    %4873 = vmatprep.subr.mxu0 0.0
    %4874 = vmatpush1.xpose.msra.mxu0 0.0
    %4875 = vmatprep.subr.mxu0 0.0
    %4876 = vmatpush1.xpose.msra.mxu0 0.0
    %4877 = vmatprep.subr.mxu0 0.0
    %4878 = vmatpush1.xpose.msra.mxu0 0.0
    %4879 = vmatprep.subr.mxu0 0.0
    %4880 = vmatpush1.xpose.msra.mxu0 0.0
    %4881 = vmatprep.subr.mxu0 0.0
    %4882 = vmatpush1.xpose.msra.mxu0 0.0
    %4883 = vmatprep.subr.mxu0 0.0
    %4884 = vmatpush1.xpose.msra.mxu0 0.0
    %4885 = vmatprep.subr.mxu0 0.0
    %4886 = vmatpush1.xpose.msra.mxu0 0.0
    %4887 = vmatprep.subr.mxu0 0.0
    %4888 = vmatpush1.xpose.msra.mxu0 0.0
    %4889 = vmatprep.subr.mxu0 0.0
    %4890 = vmatpush1.xpose.msra.mxu0 0.0
    %4891 = vmatprep.subr.mxu0 0.0
    %4892 = vmatpush1.xpose.msra.mxu0 0.0
    %4893 = vmatprep.subr.mxu0 0.0
    %4894 = vmatpush1.xpose.msra.mxu0 0.0
    %4895 = vmatprep.subr.mxu0 0.0
    %4896 = vmatpush1.xpose.msra.mxu0 0.0
    %4897 = vmatprep.subr.mxu0 0.0
    %4898 = vmatpush1.xpose.msra.mxu0 0.0
    %4899 = vmatprep.subr.mxu0 0.0
    %4900 = vmatpush1.xpose.msra.mxu0 0.0
    %4901 = vmatprep.subr.mxu0 0.0
    %4902 = vmatpush1.xpose.msra.mxu0 0.0
    %4903 = vmatprep.subr.mxu0 0.0
    %4904 = vmatpush1.xpose.msra.mxu0 0.0
    %4905 = vmatprep.mubr.f32.mxu0 0.0
    %4906 = vmatmul.mubr.f32.gmra.mrb[0].mxu0 %v1598
    %v4907 = vpop.f32.mrb[0].mxu0
    %v4908 = vadd.f32 0.0, %v4907
    %v4909 = vpop.f32.mrb[0].mxu0
    %4910 = vmatprep.mubr.f32.mxu0 0.0
    %4911 = vmatmul.mubr.f32.gmra.mrb[0].mxu0 %v1599
    %v4912 = vpop.f32.mrb[0].mxu0
    %v4913 = vadd.f32 0.0, %v4912
    %v4914 = vpop.f32.mrb[0].mxu0
    %4915 = vmatprep.mubr.f32.mxu0 0.0
    %4916 = vmatmul.mubr.f32.gmra.mrb[0].mxu0 %v1600
    %v4917 = vpop.f32.mrb[0].mxu0
    %v4918 = vadd.f32 0.0, %v4917
    %v4919 = vpop.f32.mrb[0].mxu0
    %4920 = vmatprep.mubr.f32.mxu0 0.0
    %4921 = vmatmul.mubr.f32.gmra.mrb[0].mxu0 %v1601
    %v4922 = vpop.f32.mrb[0].mxu0
    %v4923 = vadd.f32 0.0, %v4922
    %v4924 = vpop.f32.mrb[0].mxu0
    %4925 = vdwg.mxu0
    %4926 = vmatprep.subr.mxu0 0.0
    %4927 = vmatpush1.xpose.msra.mxu0 %v4522
    %4928 = vmatprep.subr.mxu0 0.0
    %4929 = vmatpush1.xpose.msra.mxu0 %v4523
    %4930 = vmatprep.subr.mxu0 0.0
    %4931 = vmatpush1.xpose.msra.mxu0 %v4524
    %4932 = vmatprep.subr.mxu0 0.0
    %4933 = vmatpush1.xpose.msra.mxu0 %v4525
    %4934 = vmatprep.subr.mxu0 0.0
    %4935 = vmatpush1.xpose.msra.mxu0 %v4526
    %4936 = vmatprep.subr.mxu0 0.0
    %4937 = vmatpush1.xpose.msra.mxu0 %v4527
    %4938 = vmatprep.subr.mxu0 0.0
    %4939 = vmatpush1.xpose.msra.mxu0 %v4528
    %4940 = vmatprep.subr.mxu0 0.0
    %4941 = vmatpush1.xpose.msra.mxu0 %v4529
    %4942 = vmatprep.subr.mxu0 0.0
    %4943 = vmatpush1.xpose.msra.mxu0 %v4530
    %4944 = vmatprep.subr.mxu0 0.0
    %4945 = vmatpush1.xpose.msra.mxu0 %v4531
    %4946 = vmatprep.subr.mxu0 0.0
    %4947 = vmatpush1.xpose.msra.mxu0 %v4532
    %4948 = vmatprep.subr.mxu0 0.0
    %4949 = vmatpush1.xpose.msra.mxu0 %v4533
    %4950 = vmatprep.subr.mxu0 0.0
    %4951 = vmatpush1.xpose.msra.mxu0 %v4534
    %4952 = vmatprep.subr.mxu0 0.0
    %4953 = vmatpush1.xpose.msra.mxu0 %v4535
    %4954 = vmatprep.subr.mxu0 0.0
    %4955 = vmatpush1.xpose.msra.mxu0 %v4536
    %4956 = vmatprep.subr.mxu0 0.0
    %4957 = vmatpush1.xpose.msra.mxu0 %v4537
    %4958 = vmatprep.subr.mxu0 0.0
    %4959 = vmatpush1.xpose.msra.mxu0 0.0
    %4960 = vmatprep.subr.mxu0 0.0
    %4961 = vmatpush1.xpose.msra.mxu0 0.0
    %4962 = vmatprep.subr.mxu0 0.0
    %4963 = vmatpush1.xpose.msra.mxu0 0.0
    %4964 = vmatprep.subr.mxu0 0.0
    %4965 = vmatpush1.xpose.msra.mxu0 0.0
    %4966 = vmatprep.subr.mxu0 0.0
    %4967 = vmatpush1.xpose.msra.mxu0 0.0
    %4968 = vmatprep.subr.mxu0 0.0
    %4969 = vmatpush1.xpose.msra.mxu0 0.0
    %4970 = vmatprep.subr.mxu0 0.0
    %4971 = vmatpush1.xpose.msra.mxu0 0.0
    %4972 = vmatprep.subr.mxu0 0.0
    %4973 = vmatpush1.xpose.msra.mxu0 0.0
    %4974 = vmatprep.subr.mxu0 0.0
    %4975 = vmatpush1.xpose.msra.mxu0 0.0
    %4976 = vmatprep.subr.mxu0 0.0
    %4977 = vmatpush1.xpose.msra.mxu0 0.0
    %4978 = vmatprep.subr.mxu0 0.0
    %4979 = vmatpush1.xpose.msra.mxu0 0.0
    %4980 = vmatprep.subr.mxu0 0.0
    %4981 = vmatpush1.xpose.msra.mxu0 0.0
    %4982 = vmatprep.subr.mxu0 0.0
    %4983 = vmatpush1.xpose.msra.mxu0 0.0
    %4984 = vmatprep.subr.mxu0 0.0
    %4985 = vmatpush1.xpose.msra.mxu0 0.0
    %4986 = vmatprep.subr.mxu0 0.0
    %4987 = vmatpush1.xpose.msra.mxu0 0.0
    %4988 = vmatprep.subr.mxu0 0.0
    %4989 = vmatpush1.xpose.msra.mxu0 0.0
    %4990 = vmatprep.mubr.f32.mxu0 0.0
    %4991 = vmatmul.mubr.f32.gmra.mrb[0].mxu0 %v1618
    %v4992 = vpop.f32.mrb[0].mxu0
    %v4993 = vadd.f32 0.0, %v4992
    %v4994 = vpop.f32.mrb[0].mxu0
    %4995 = vmatprep.mubr.f32.mxu0 0.0
    %4996 = vmatmul.mubr.f32.gmra.mrb[0].mxu0 %v1619
    %v4997 = vpop.f32.mrb[0].mxu0
    %v4998 = vadd.f32 0.0, %v4997
    %v4999 = vpop.f32.mrb[0].mxu0
    %5000 = vmatprep.mubr.f32.mxu0 0.0
    %5001 = vmatmul.mubr.f32.gmra.mrb[0].mxu0 %v1620
    %v5002 = vpop.f32.mrb[0].mxu0
    %v5003 = vadd.f32 0.0, %v5002
    %v5004 = vpop.f32.mrb[0].mxu0
    %5005 = vmatprep.mubr.f32.mxu0 0.0
    %5006 = vmatmul.mubr.f32.gmra.mrb[0].mxu0 %v1621
    %v5007 = vpop.f32.mrb[0].mxu0
    %v5008 = vadd.f32 0.0, %v5007
    %v5009 = vpop.f32.mrb[0].mxu0
    %5010 = vdwg.mxu0
    %5011 = vmatprep.subr.mxu0 0.0
    %5012 = vmatpush1.xpose.msra.mxu0 %v4538
    %5013 = vmatprep.subr.mxu0 0.0
    %5014 = vmatpush1.xpose.msra.mxu0 %v4539
    %5015 = vmatprep.subr.mxu0 0.0
    %5016 = vmatpush1.xpose.msra.mxu0 %v4540
    %5017 = vmatprep.subr.mxu0 0.0
    %5018 = vmatpush1.xpose.msra.mxu0 %v4541
    %5019 = vmatprep.subr.mxu0 0.0
    %5020 = vmatpush1.xpose.msra.mxu0 %v4542
    %5021 = vmatprep.subr.mxu0 0.0
    %5022 = vmatpush1.xpose.msra.mxu0 %v4543
    %5023 = vmatprep.subr.mxu0 0.0
    %5024 = vmatpush1.xpose.msra.mxu0 %v4544
    %5025 = vmatprep.subr.mxu0 0.0
    %5026 = vmatpush1.xpose.msra.mxu0 %v4545
    %5027 = vmatprep.subr.mxu0 0.0
    %5028 = vmatpush1.xpose.msra.mxu0 %v4546
    %5029 = vmatprep.subr.mxu0 0.0
    %5030 = vmatpush1.xpose.msra.mxu0 %v4547
    %5031 = vmatprep.subr.mxu0 0.0
    %5032 = vmatpush1.xpose.msra.mxu0 %v4548
    %5033 = vmatprep.subr.mxu0 0.0
    %5034 = vmatpush1.xpose.msra.mxu0 %v4549
    %5035 = vmatprep.subr.mxu0 0.0
    %5036 = vmatpush1.xpose.msra.mxu0 %v4550
    %5037 = vmatprep.subr.mxu0 0.0
    %5038 = vmatpush1.xpose.msra.mxu0 %v4551
    %5039 = vmatprep.subr.mxu0 0.0
    %5040 = vmatpush1.xpose.msra.mxu0 %v4552
    %5041 = vmatprep.subr.mxu0 0.0
    %5042 = vmatpush1.xpose.msra.mxu0 %v4553
    %5043 = vmatprep.subr.mxu0 0.0
    %5044 = vmatpush1.xpose.msra.mxu0 0.0
    %5045 = vmatprep.subr.mxu0 0.0
    %5046 = vmatpush1.xpose.msra.mxu0 0.0
    %5047 = vmatprep.subr.mxu0 0.0
    %5048 = vmatpush1.xpose.msra.mxu0 0.0
    %5049 = vmatprep.subr.mxu0 0.0
    %5050 = vmatpush1.xpose.msra.mxu0 0.0
    %5051 = vmatprep.subr.mxu0 0.0
    %5052 = vmatpush1.xpose.msra.mxu0 0.0
    %5053 = vmatprep.subr.mxu0 0.0
    %5054 = vmatpush1.xpose.msra.mxu0 0.0
    %5055 = vmatprep.subr.mxu0 0.0
    %5056 = vmatpush1.xpose.msra.mxu0 0.0
    %5057 = vmatprep.subr.mxu0 0.0
    %5058 = vmatpush1.xpose.msra.mxu0 0.0
    %5059 = vmatprep.subr.mxu0 0.0
    %5060 = vmatpush1.xpose.msra.mxu0 0.0
    %5061 = vmatprep.subr.mxu0 0.0
    %5062 = vmatpush1.xpose.msra.mxu0 0.0
    %5063 = vmatprep.subr.mxu0 0.0
    %5064 = vmatpush1.xpose.msra.mxu0 0.0
    %5065 = vmatprep.subr.mxu0 0.0
    %5066 = vmatpush1.xpose.msra.mxu0 0.0
    %5067 = vmatprep.subr.mxu0 0.0
    %5068 = vmatpush1.xpose.msra.mxu0 0.0
    %5069 = vmatprep.subr.mxu0 0.0
    %5070 = vmatpush1.xpose.msra.mxu0 0.0
    %5071 = vmatprep.subr.mxu0 0.0
    %5072 = vmatpush1.xpose.msra.mxu0 0.0
    %5073 = vmatprep.subr.mxu0 0.0
    %5074 = vmatpush1.xpose.msra.mxu0 0.0
    %5075 = vmatprep.mubr.f32.mxu0 0.0
    %5076 = vmatmul.mubr.f32.gmra.mrb[0].mxu0 %v1622
    %v5077 = vpop.f32.mrb[0].mxu0
    %v5078 = vadd.f32 0.0, %v5077
    %v5079 = vpop.f32.mrb[0].mxu0
    %5080 = vmatprep.mubr.f32.mxu0 0.0
    %5081 = vmatmul.mubr.f32.gmra.mrb[0].mxu0 %v1623
    %v5082 = vpop.f32.mrb[0].mxu0
    %v5083 = vadd.f32 0.0, %v5082
    %v5084 = vpop.f32.mrb[0].mxu0
    %5085 = vmatprep.mubr.f32.mxu0 0.0
    %5086 = vmatmul.mubr.f32.gmra.mrb[0].mxu0 %v1624
    %v5087 = vpop.f32.mrb[0].mxu0
    %v5088 = vadd.f32 0.0, %v5087
    %v5089 = vpop.f32.mrb[0].mxu0
    %5090 = vmatprep.mubr.f32.mxu0 0.0
    %5091 = vmatmul.mubr.f32.gmra.mrb[0].mxu0 %v1625
    %v5092 = vpop.f32.mrb[0].mxu0
    %v5093 = vadd.f32 0.0, %v5092
    %v5094 = vpop.f32.mrb[0].mxu0
    %5095 = vdwg.mxu0
    %5096 = vmatprep.subr.mxu0 0.0
    %5097 = vmatpush1.xpose.msra.mxu0 %v4554
    %5098 = vmatprep.subr.mxu0 0.0
    %5099 = vmatpush1.xpose.msra.mxu0 %v4555
    %5100 = vmatprep.subr.mxu0 0.0
    %5101 = vmatpush1.xpose.msra.mxu0 %v4556
    %5102 = vmatprep.subr.mxu0 0.0
    %5103 = vmatpush1.xpose.msra.mxu0 %v4557
    %5104 = vmatprep.subr.mxu0 0.0
    %5105 = vmatpush1.xpose.msra.mxu0 %v4558
    %5106 = vmatprep.subr.mxu0 0.0
    %5107 = vmatpush1.xpose.msra.mxu0 %v4559
    %5108 = vmatprep.subr.mxu0 0.0
    %5109 = vmatpush1.xpose.msra.mxu0 %v4560
    %5110 = vmatprep.subr.mxu0 0.0
    %5111 = vmatpush1.xpose.msra.mxu0 %v4561
    %5112 = vmatprep.subr.mxu0 0.0
    %5113 = vmatpush1.xpose.msra.mxu0 %v4562
    %5114 = vmatprep.subr.mxu0 0.0
    %5115 = vmatpush1.xpose.msra.mxu0 %v4563
    %5116 = vmatprep.subr.mxu0 0.0
    %5117 = vmatpush1.xpose.msra.mxu0 %v4564
    %5118 = vmatprep.subr.mxu0 0.0
    %5119 = vmatpush1.xpose.msra.mxu0 %v4565
    %5120 = vmatprep.subr.mxu0 0.0
    %5121 = vmatpush1.xpose.msra.mxu0 %v4566
    %5122 = vmatprep.subr.mxu0 0.0
    %5123 = vmatpush1.xpose.msra.mxu0 %v4567
    %5124 = vmatprep.subr.mxu0 0.0
    %5125 = vmatpush1.xpose.msra.mxu0 %v4568
    %5126 = vmatprep.subr.mxu0 0.0
    %5127 = vmatpush1.xpose.msra.mxu0 %v4569
    %5128 = vmatprep.subr.mxu0 0.0
    %5129 = vmatpush1.xpose.msra.mxu0 0.0
    %5130 = vmatprep.subr.mxu0 0.0
    %5131 = vmatpush1.xpose.msra.mxu0 0.0
    %5132 = vmatprep.subr.mxu0 0.0
    %5133 = vmatpush1.xpose.msra.mxu0 0.0
    %5134 = vmatprep.subr.mxu0 0.0
    %5135 = vmatpush1.xpose.msra.mxu0 0.0
    %5136 = vmatprep.subr.mxu0 0.0
    %5137 = vmatpush1.xpose.msra.mxu0 0.0
    %5138 = vmatprep.subr.mxu0 0.0
    %5139 = vmatpush1.xpose.msra.mxu0 0.0
    %5140 = vmatprep.subr.mxu0 0.0
    %5141 = vmatpush1.xpose.msra.mxu0 0.0
    %5142 = vmatprep.subr.mxu0 0.0
    %5143 = vmatpush1.xpose.msra.mxu0 0.0
    %5144 = vmatprep.subr.mxu0 0.0
    %5145 = vmatpush1.xpose.msra.mxu0 0.0
    %5146 = vmatprep.subr.mxu0 0.0
    %5147 = vmatpush1.xpose.msra.mxu0 0.0
    %5148 = vmatprep.subr.mxu0 0.0
    %5149 = vmatpush1.xpose.msra.mxu0 0.0
    %5150 = vmatprep.subr.mxu0 0.0
    %5151 = vmatpush1.xpose.msra.mxu0 0.0
    %5152 = vmatprep.subr.mxu0 0.0
    %5153 = vmatpush1.xpose.msra.mxu0 0.0
    %5154 = vmatprep.subr.mxu0 0.0
    %5155 = vmatpush1.xpose.msra.mxu0 0.0
    %5156 = vmatprep.subr.mxu0 0.0
    %5157 = vmatpush1.xpose.msra.mxu0 0.0
    %5158 = vmatprep.subr.mxu0 0.0
    %5159 = vmatpush1.xpose.msra.mxu0 0.0
    %5160 = vmatprep.mubr.f32.mxu0 0.0
    %5161 = vmatmul.mubr.f32.gmra.mrb[0].mxu0 %v1626
    %v5162 = vpop.f32.mrb[0].mxu0
    %v5163 = vadd.f32 0.0, %v5162
    %v5164 = vpop.f32.mrb[0].mxu0
    %5165 = vmatprep.mubr.f32.mxu0 0.0
    %5166 = vmatmul.mubr.f32.gmra.mrb[0].mxu0 %v1627
    %v5167 = vpop.f32.mrb[0].mxu0
    %v5168 = vadd.f32 0.0, %v5167
    %v5169 = vpop.f32.mrb[0].mxu0
    %5170 = vmatprep.mubr.f32.mxu0 0.0
    %5171 = vmatmul.mubr.f32.gmra.mrb[0].mxu0 %v1628
    %v5172 = vpop.f32.mrb[0].mxu0
    %v5173 = vadd.f32 0.0, %v5172
    %v5174 = vpop.f32.mrb[0].mxu0
    %5175 = vmatprep.mubr.f32.mxu0 0.0
    %5176 = vmatmul.mubr.f32.gmra.mrb[0].mxu0 %v1629
    %v5177 = vpop.f32.mrb[0].mxu0
    %v5178 = vadd.f32 0.0, %v5177
    %v5179 = vpop.f32.mrb[0].mxu0
    %5180 = vdwg.mxu0
    %5181 = vmatprep.subr.mxu0 0.0
    %5182 = vmatpush1.xpose.msra.mxu0 %v4570
    %5183 = vmatprep.subr.mxu0 0.0
    %5184 = vmatpush1.xpose.msra.mxu0 %v4571
    %5185 = vmatprep.subr.mxu0 0.0
    %5186 = vmatpush1.xpose.msra.mxu0 %v4572
    %5187 = vmatprep.subr.mxu0 0.0
    %5188 = vmatpush1.xpose.msra.mxu0 %v4573
    %5189 = vmatprep.subr.mxu0 0.0
    %5190 = vmatpush1.xpose.msra.mxu0 %v4574
    %5191 = vmatprep.subr.mxu0 0.0
    %5192 = vmatpush1.xpose.msra.mxu0 %v4575
    %5193 = vmatprep.subr.mxu0 0.0
    %5194 = vmatpush1.xpose.msra.mxu0 %v4576
    %5195 = vmatprep.subr.mxu0 0.0
    %5196 = vmatpush1.xpose.msra.mxu0 %v4577
    %5197 = vmatprep.subr.mxu0 0.0
    %5198 = vmatpush1.xpose.msra.mxu0 %v4578
    %5199 = vmatprep.subr.mxu0 0.0
    %5200 = vmatpush1.xpose.msra.mxu0 %v4579
    %5201 = vmatprep.subr.mxu0 0.0
    %5202 = vmatpush1.xpose.msra.mxu0 %v4580
    %5203 = vmatprep.subr.mxu0 0.0
    %5204 = vmatpush1.xpose.msra.mxu0 %v4581
    %5205 = vmatprep.subr.mxu0 0.0
    %5206 = vmatpush1.xpose.msra.mxu0 %v4582
    %5207 = vmatprep.subr.mxu0 0.0
    %5208 = vmatpush1.xpose.msra.mxu0 %v4583
    %5209 = vmatprep.subr.mxu0 0.0
    %5210 = vmatpush1.xpose.msra.mxu0 %v4584
    %5211 = vmatprep.subr.mxu0 0.0
    %5212 = vmatpush1.xpose.msra.mxu0 %v4585
    %5213 = vmatprep.subr.mxu0 0.0
    %5214 = vmatpush1.xpose.msra.mxu0 0.0
    %5215 = vmatprep.subr.mxu0 0.0
    %5216 = vmatpush1.xpose.msra.mxu0 0.0
    %5217 = vmatprep.subr.mxu0 0.0
    %5218 = vmatpush1.xpose.msra.mxu0 0.0
    %5219 = vmatprep.subr.mxu0 0.0
    %5220 = vmatpush1.xpose.msra.mxu0 0.0
    %5221 = vmatprep.subr.mxu0 0.0
    %5222 = vmatpush1.xpose.msra.mxu0 0.0
    %5223 = vmatprep.subr.mxu0 0.0
    %5224 = vmatpush1.xpose.msra.mxu0 0.0
    %5225 = vmatprep.subr.mxu0 0.0
    %5226 = vmatpush1.xpose.msra.mxu0 0.0
    %5227 = vmatprep.subr.mxu0 0.0
    %5228 = vmatpush1.xpose.msra.mxu0 0.0
    %5229 = vmatprep.subr.mxu0 0.0
    %5230 = vmatpush1.xpose.msra.mxu0 0.0
    %5231 = vmatprep.subr.mxu0 0.0
    %5232 = vmatpush1.xpose.msra.mxu0 0.0
    %5233 = vmatprep.subr.mxu0 0.0
    %5234 = vmatpush1.xpose.msra.mxu0 0.0
    %5235 = vmatprep.subr.mxu0 0.0
    %5236 = vmatpush1.xpose.msra.mxu0 0.0
    %5237 = vmatprep.subr.mxu0 0.0
    %5238 = vmatpush1.xpose.msra.mxu0 0.0
    %5239 = vmatprep.subr.mxu0 0.0
    %5240 = vmatpush1.xpose.msra.mxu0 0.0
    %5241 = vmatprep.subr.mxu0 0.0
    %5242 = vmatpush1.xpose.msra.mxu0 0.0
    %5243 = vmatprep.subr.mxu0 0.0
    %5244 = vmatpush1.xpose.msra.mxu0 0.0
    %5245 = vmatprep.mubr.f32.mxu0 0.0
    %5246 = vmatmul.mubr.f32.gmra.mrb[0].mxu0 %v1630
    %v5247 = vpop.f32.mrb[0].mxu0
    %v5248 = vadd.f32 0.0, %v5247
    %v5249 = vpop.f32.mrb[0].mxu0
    %5250 = vmatprep.mubr.f32.mxu0 0.0
    %5251 = vmatmul.mubr.f32.gmra.mrb[0].mxu0 %v1631
    %v5252 = vpop.f32.mrb[0].mxu0
    %v5253 = vadd.f32 0.0, %v5252
    %v5254 = vpop.f32.mrb[0].mxu0
    %5255 = vmatprep.mubr.f32.mxu0 0.0
    %5256 = vmatmul.mubr.f32.gmra.mrb[0].mxu0 %v1632
    %v5257 = vpop.f32.mrb[0].mxu0
    %v5258 = vadd.f32 0.0, %v5257
    %v5259 = vpop.f32.mrb[0].mxu0
    %5260 = vmatprep.mubr.f32.mxu0 0.0
    %5261 = vmatmul.mubr.f32.gmra.mrb[0].mxu0 %v1633
    %v5262 = vpop.f32.mrb[0].mxu0
    %v5263 = vadd.f32 0.0, %v5262
    %v5264 = vpop.f32.mrb[0].mxu0
    %5265 = vdwg.mxu0
    %5266 = vxpose.xlu0.b32.start [1/16] %v4653, 128
    %5267 = vxpose.xlu0.b32.cont [2/16] %v4658, 128
    %5268 = vxpose.xlu0.b32.cont [3/16] %v4663, 128
    %5269 = vxpose.xlu0.b32.cont [4/16] %v4668, 128
    %5270 = vxpose.xlu0.b32.cont [5/16] %v4738, 128
    %5271 = vxpose.xlu0.b32.cont [6/16] %v4743, 128
    %5272 = vxpose.xlu0.b32.cont [7/16] %v4748, 128
    %5273 = vxpose.xlu0.b32.cont [8/16] %v4753, 128
    %5274 = vxpose.xlu0.b32.cont [9/16] %v4823, 128
    %5275 = vxpose.xlu0.b32.cont [10/16] %v4828, 128
    %5276 = vxpose.xlu0.b32.cont [11/16] %v4833, 128
    %5277 = vxpose.xlu0.b32.cont [12/16] %v4838, 128
    %5278 = vxpose.xlu0.b32.cont [13/16] %v4908, 128
    %5279 = vxpose.xlu0.b32.cont [14/16] %v4913, 128
    %5280 = vxpose.xlu0.b32.cont [15/16] %v4918, 128
    %5281 = vxpose.xlu0.b32.end [16/16] %v4923, 128
    %v5282 = vpop.trf.xlu0
    %v5283 = vpop.trf.xlu0
    %v5284 = vpop.trf.xlu0
    %v5285 = vpop.trf.xlu0
    %v5286 = vpop.trf.xlu0
    %v5287 = vpop.trf.xlu0
    %v5288 = vpop.trf.xlu0
    %v5289 = vpop.trf.xlu0
    %v5290 = vpop.trf.xlu0
    %v5291 = vpop.trf.xlu0
    %v5292 = vpop.trf.xlu0
    %v5293 = vpop.trf.xlu0
    %v5294 = vpop.trf.xlu0
    %v5295 = vpop.trf.xlu0
    %v5296 = vpop.trf.xlu0
    %v5297 = vpop.trf.xlu0
    %5298 = vxpose.xlu0.b32.start [1/16] %v4993, 128
    %5299 = vxpose.xlu0.b32.cont [2/16] %v4998, 128
    %5300 = vxpose.xlu0.b32.cont [3/16] %v5003, 128
    %5301 = vxpose.xlu0.b32.cont [4/16] %v5008, 128
    %5302 = vxpose.xlu0.b32.cont [5/16] %v5078, 128
    %5303 = vxpose.xlu0.b32.cont [6/16] %v5083, 128
    %5304 = vxpose.xlu0.b32.cont [7/16] %v5088, 128
    %5305 = vxpose.xlu0.b32.cont [8/16] %v5093, 128
    %5306 = vxpose.xlu0.b32.cont [9/16] %v5163, 128
    %5307 = vxpose.xlu0.b32.cont [10/16] %v5168, 128
    %5308 = vxpose.xlu0.b32.cont [11/16] %v5173, 128
    %5309 = vxpose.xlu0.b32.cont [12/16] %v5178, 128
    %5310 = vxpose.xlu0.b32.cont [13/16] %v5248, 128
    %5311 = vxpose.xlu0.b32.cont [14/16] %v5253, 128
    %5312 = vxpose.xlu0.b32.cont [15/16] %v5258, 128
    %5313 = vxpose.xlu0.b32.end [16/16] %v5263, 128
    %v5314 = vpop.trf.xlu0
    %v5315 = vpop.trf.xlu0
    %v5316 = vpop.trf.xlu0
    %v5317 = vpop.trf.xlu0
    %v5318 = vpop.trf.xlu0
    %v5319 = vpop.trf.xlu0
    %v5320 = vpop.trf.xlu0
    %v5321 = vpop.trf.xlu0
    %v5322 = vpop.trf.xlu0
    %v5323 = vpop.trf.xlu0
    %v5324 = vpop.trf.xlu0
    %v5325 = vpop.trf.xlu0
    %v5326 = vpop.trf.xlu0
    %v5327 = vpop.trf.xlu0
    %v5328 = vpop.trf.xlu0
    %v5329 = vpop.trf.xlu0
    %v5330 = vld [vmem:[#allocation22] sm:$0xff]
    %v5331 = vld [vmem:[#allocation22 + $0x8] sm:$0xff]
    %v5332 = vld [vmem:[#allocation22 + $0x10] sm:$0xff]
    %v5333 = vld [vmem:[#allocation22 + $0x18] sm:$0xff]
    %v5334 = vld [vmem:[#allocation22 + $0x20] sm:$0xff]
    %v5335 = vld [vmem:[#allocation22 + $0x28] sm:$0xff]
    %v5336 = vld [vmem:[#allocation22 + $0x30] sm:$0xff]
    %v5337 = vld [vmem:[#allocation22 + $0x38] sm:$0xff]
    %v5338 = vld [vmem:[#allocation22 + $0x40] sm:$0xff]
    %v5339 = vld [vmem:[#allocation22 + $0x48] sm:$0xff]
    %v5340 = vld [vmem:[#allocation22 + $0x50] sm:$0xff]
    %v5341 = vld [vmem:[#allocation22 + $0x58] sm:$0xff]
    %v5342 = vld [vmem:[#allocation22 + $0x60] sm:$0xff]
    %v5343 = vld [vmem:[#allocation22 + $0x68] sm:$0xff]
    %v5344 = vld [vmem:[#allocation22 + $0x70] sm:$0xff]
    %v5345 = vld [vmem:[#allocation22 + $0x78] sm:$0xff]
    %v5346 = vld [vmem:[#allocation23] sm:$0x1]
    %v5348 = vlaneseq
    %v5349 = vshrl.u32 %v5348, 7
    %v5350 = vsub.s32 0, %v5349
    %v5351 = vrot.slane %v5346, %v5350
    %5353 = vmatprep.subr.mxu0 0.0
    %5354 = vmatpush1.msra.mxu0 %v5330
    %5355 = vmatprep.subr.mxu0 0.0
    %5356 = vmatpush1.msra.mxu0 %v5331
    %5357 = vmatprep.subr.mxu0 0.0
    %5358 = vmatpush1.msra.mxu0 %v5332
    %5359 = vmatprep.subr.mxu0 0.0
    %5360 = vmatpush1.msra.mxu0 %v5333
    %5361 = vmatprep.subr.mxu0 0.0
    %5362 = vmatpush1.msra.mxu0 %v5334
    %5363 = vmatprep.subr.mxu0 0.0
    %5364 = vmatpush1.msra.mxu0 %v5335
    %5365 = vmatprep.subr.mxu0 0.0
    %5366 = vmatpush1.msra.mxu0 %v5336
    %5367 = vmatprep.subr.mxu0 0.0
    %5368 = vmatpush1.msra.mxu0 %v5337
    %5369 = vmatprep.subr.mxu0 0.0
    %5370 = vmatpush1.msra.mxu0 %v5338
    %5371 = vmatprep.subr.mxu0 0.0
    %5372 = vmatpush1.msra.mxu0 %v5339
    %5373 = vmatprep.subr.mxu0 0.0
    %5374 = vmatpush1.msra.mxu0 %v5340
    %5375 = vmatprep.subr.mxu0 0.0
    %5376 = vmatpush1.msra.mxu0 %v5341
    %5377 = vmatprep.subr.mxu0 0.0
    %5378 = vmatpush1.msra.mxu0 %v5342
    %5379 = vmatprep.subr.mxu0 0.0
    %5380 = vmatpush1.msra.mxu0 %v5343
    %5381 = vmatprep.subr.mxu0 0.0
    %5382 = vmatpush1.msra.mxu0 %v5344
    %5383 = vmatprep.subr.mxu0 0.0
    %5384 = vmatpush1.msra.mxu0 %v5345
    %5385 = vmatprep.subr.mxu0 0.0
    %5386 = vmatpush1.msra.mxu0 0.0
    %5387 = vmatprep.subr.mxu0 0.0
    %5388 = vmatpush1.msra.mxu0 0.0
    %5389 = vmatprep.subr.mxu0 0.0
    %5390 = vmatpush1.msra.mxu0 0.0
    %5391 = vmatprep.subr.mxu0 0.0
    %5392 = vmatpush1.msra.mxu0 0.0
    %5393 = vmatprep.subr.mxu0 0.0
    %5394 = vmatpush1.msra.mxu0 0.0
    %5395 = vmatprep.subr.mxu0 0.0
    %5396 = vmatpush1.msra.mxu0 0.0
    %5397 = vmatprep.subr.mxu0 0.0
    %5398 = vmatpush1.msra.mxu0 0.0
    %5399 = vmatprep.subr.mxu0 0.0
    %5400 = vmatpush1.msra.mxu0 0.0
    %5401 = vmatprep.subr.mxu0 0.0
    %5402 = vmatpush1.msra.mxu0 0.0
    %5403 = vmatprep.subr.mxu0 0.0
    %5404 = vmatpush1.msra.mxu0 0.0
    %5405 = vmatprep.subr.mxu0 0.0
    %5406 = vmatpush1.msra.mxu0 0.0
    %5407 = vmatprep.subr.mxu0 0.0
    %5408 = vmatpush1.msra.mxu0 0.0
    %5409 = vmatprep.subr.mxu0 0.0
    %5410 = vmatpush1.msra.mxu0 0.0
    %5411 = vmatprep.subr.mxu0 0.0
    %5412 = vmatpush1.msra.mxu0 0.0
    %5413 = vmatprep.subr.mxu0 0.0
    %5414 = vmatpush1.msra.mxu0 0.0
    %5415 = vmatprep.subr.mxu0 0.0
    %5416 = vmatpush1.msra.mxu0 0.0
    %5417 = vmatprep.mubr.f32.mxu0 0.0
    %5418 = vmatmul.mubr.f32.gmra.mrb[0].mxu0 %v5282
    %v5419 = vpop.f32.mrb[0].mxu0
    %v5420 = vadd.f32 %v5351, %v5419
    %v5421 = vpop.f32.mrb[0].mxu0
    %5422 = vmatprep.mubr.f32.mxu0 0.0
    %5423 = vmatmul.mubr.f32.gmra.mrb[0].mxu0 %v5283
    %v5424 = vpop.f32.mrb[0].mxu0
    %v5425 = vadd.f32 %v5351, %v5424
    %v5426 = vpop.f32.mrb[0].mxu0
    %5427 = vmatprep.mubr.f32.mxu0 0.0
    %5428 = vmatmul.mubr.f32.gmra.mrb[0].mxu0 %v5284
    %v5429 = vpop.f32.mrb[0].mxu0
    %v5430 = vadd.f32 %v5351, %v5429
    %v5431 = vpop.f32.mrb[0].mxu0
    %5432 = vmatprep.mubr.f32.mxu0 0.0
    %5433 = vmatmul.mubr.f32.gmra.mrb[0].mxu0 %v5285
    %v5434 = vpop.f32.mrb[0].mxu0
    %v5435 = vadd.f32 %v5351, %v5434
    %v5436 = vpop.f32.mrb[0].mxu0
    %5437 = vmatprep.mubr.f32.mxu0 0.0
    %5438 = vmatmul.mubr.f32.gmra.mrb[0].mxu0 %v5286
    %v5439 = vpop.f32.mrb[0].mxu0
    %v5440 = vadd.f32 %v5351, %v5439
    %v5441 = vpop.f32.mrb[0].mxu0
    %5442 = vmatprep.mubr.f32.mxu0 0.0
    %5443 = vmatmul.mubr.f32.gmra.mrb[0].mxu0 %v5287
    %v5444 = vpop.f32.mrb[0].mxu0
    %v5445 = vadd.f32 %v5351, %v5444
    %v5446 = vpop.f32.mrb[0].mxu0
    %5447 = vmatprep.mubr.f32.mxu0 0.0
    %5448 = vmatmul.mubr.f32.gmra.mrb[0].mxu0 %v5288
    %v5449 = vpop.f32.mrb[0].mxu0
    %v5450 = vadd.f32 %v5351, %v5449
    %v5451 = vpop.f32.mrb[0].mxu0
    %5452 = vmatprep.mubr.f32.mxu0 0.0
    %5453 = vmatmul.mubr.f32.gmra.mrb[0].mxu0 %v5289
    %v5454 = vpop.f32.mrb[0].mxu0
    %v5455 = vadd.f32 %v5351, %v5454
    %v5456 = vpop.f32.mrb[0].mxu0
    %5457 = vmatprep.mubr.f32.mxu0 0.0
    %5458 = vmatmul.mubr.f32.gmra.mrb[0].mxu0 %v5290
    %v5459 = vpop.f32.mrb[0].mxu0
    %v5460 = vadd.f32 %v5351, %v5459
    %v5461 = vpop.f32.mrb[0].mxu0
    %5462 = vmatprep.mubr.f32.mxu0 0.0
    %5463 = vmatmul.mubr.f32.gmra.mrb[0].mxu0 %v5291
    %v5464 = vpop.f32.mrb[0].mxu0
    %v5465 = vadd.f32 %v5351, %v5464
    %v5466 = vpop.f32.mrb[0].mxu0
    %5467 = vmatprep.mubr.f32.mxu0 0.0
    %5468 = vmatmul.mubr.f32.gmra.mrb[0].mxu0 %v5292
    %v5469 = vpop.f32.mrb[0].mxu0
    %v5470 = vadd.f32 %v5351, %v5469
    %v5471 = vpop.f32.mrb[0].mxu0
    %5472 = vmatprep.mubr.f32.mxu0 0.0
    %5473 = vmatmul.mubr.f32.gmra.mrb[0].mxu0 %v5293
    %v5474 = vpop.f32.mrb[0].mxu0
    %v5475 = vadd.f32 %v5351, %v5474
    %v5476 = vpop.f32.mrb[0].mxu0
    %5477 = vmatprep.mubr.f32.mxu0 0.0
    %5478 = vmatmul.mubr.f32.gmra.mrb[0].mxu0 %v5294
    %v5479 = vpop.f32.mrb[0].mxu0
    %v5480 = vadd.f32 %v5351, %v5479
    %v5481 = vpop.f32.mrb[0].mxu0
    %5482 = vmatprep.mubr.f32.mxu0 0.0
    %5483 = vmatmul.mubr.f32.gmra.mrb[0].mxu0 %v5295
    %v5484 = vpop.f32.mrb[0].mxu0
    %v5485 = vadd.f32 %v5351, %v5484
    %v5486 = vpop.f32.mrb[0].mxu0
    %5487 = vmatprep.mubr.f32.mxu0 0.0
    %5488 = vmatmul.mubr.f32.gmra.mrb[0].mxu0 %v5296
    %v5489 = vpop.f32.mrb[0].mxu0
    %v5490 = vadd.f32 %v5351, %v5489
    %v5491 = vpop.f32.mrb[0].mxu0
    %5492 = vmatprep.mubr.f32.mxu0 0.0
    %5493 = vmatmul.mubr.f32.gmra.mrb[0].mxu0 %v5297
    %v5494 = vpop.f32.mrb[0].mxu0
    %v5495 = vadd.f32 %v5351, %v5494
    %v5496 = vpop.f32.mrb[0].mxu0
    %5497 = vmatprep.mubr.f32.mxu0 0.0
    %5498 = vmatmul.mubr.f32.gmra.mrb[0].mxu0 %v5314
    %v5499 = vpop.f32.mrb[0].mxu0
    %v5500 = vadd.f32 %v5351, %v5499
    %v5501 = vpop.f32.mrb[0].mxu0
    %5502 = vmatprep.mubr.f32.mxu0 0.0
    %5503 = vmatmul.mubr.f32.gmra.mrb[0].mxu0 %v5315
    %v5504 = vpop.f32.mrb[0].mxu0
    %v5505 = vadd.f32 %v5351, %v5504
    %v5506 = vpop.f32.mrb[0].mxu0
    %5507 = vmatprep.mubr.f32.mxu0 0.0
    %5508 = vmatmul.mubr.f32.gmra.mrb[0].mxu0 %v5316
    %v5509 = vpop.f32.mrb[0].mxu0
    %v5510 = vadd.f32 %v5351, %v5509
    %v5511 = vpop.f32.mrb[0].mxu0
    %5512 = vmatprep.mubr.f32.mxu0 0.0
    %5513 = vmatmul.mubr.f32.gmra.mrb[0].mxu0 %v5317
    %v5514 = vpop.f32.mrb[0].mxu0
    %v5515 = vadd.f32 %v5351, %v5514
    %v5516 = vpop.f32.mrb[0].mxu0
    %5517 = vmatprep.mubr.f32.mxu0 0.0
    %5518 = vmatmul.mubr.f32.gmra.mrb[0].mxu0 %v5318
    %v5519 = vpop.f32.mrb[0].mxu0
    %v5520 = vadd.f32 %v5351, %v5519
    %v5521 = vpop.f32.mrb[0].mxu0
    %5522 = vmatprep.mubr.f32.mxu0 0.0
    %5523 = vmatmul.mubr.f32.gmra.mrb[0].mxu0 %v5319
    %v5524 = vpop.f32.mrb[0].mxu0
    %v5525 = vadd.f32 %v5351, %v5524
    %v5526 = vpop.f32.mrb[0].mxu0
    %5527 = vmatprep.mubr.f32.mxu0 0.0
    %5528 = vmatmul.mubr.f32.gmra.mrb[0].mxu0 %v5320
    %v5529 = vpop.f32.mrb[0].mxu0
    %v5530 = vadd.f32 %v5351, %v5529
    %v5531 = vpop.f32.mrb[0].mxu0
    %5532 = vmatprep.mubr.f32.mxu0 0.0
    %5533 = vmatmul.mubr.f32.gmra.mrb[0].mxu0 %v5321
    %v5534 = vpop.f32.mrb[0].mxu0
    %v5535 = vadd.f32 %v5351, %v5534
    %v5536 = vpop.f32.mrb[0].mxu0
    %5537 = vmatprep.mubr.f32.mxu0 0.0
    %5538 = vmatmul.mubr.f32.gmra.mrb[0].mxu0 %v5322
    %v5539 = vpop.f32.mrb[0].mxu0
    %v5540 = vadd.f32 %v5351, %v5539
    %v5541 = vpop.f32.mrb[0].mxu0
    %5542 = vmatprep.mubr.f32.mxu0 0.0
    %5543 = vmatmul.mubr.f32.gmra.mrb[0].mxu0 %v5323
    %v5544 = vpop.f32.mrb[0].mxu0
    %v5545 = vadd.f32 %v5351, %v5544
    %v5546 = vpop.f32.mrb[0].mxu0
    %5547 = vmatprep.mubr.f32.mxu0 0.0
    %5548 = vmatmul.mubr.f32.gmra.mrb[0].mxu0 %v5324
    %v5549 = vpop.f32.mrb[0].mxu0
    %v5550 = vadd.f32 %v5351, %v5549
    %v5551 = vpop.f32.mrb[0].mxu0
    %5552 = vmatprep.mubr.f32.mxu0 0.0
    %5553 = vmatmul.mubr.f32.gmra.mrb[0].mxu0 %v5325
    %v5554 = vpop.f32.mrb[0].mxu0
    %v5555 = vadd.f32 %v5351, %v5554
    %v5556 = vpop.f32.mrb[0].mxu0
    %5557 = vmatprep.mubr.f32.mxu0 0.0
    %5558 = vmatmul.mubr.f32.gmra.mrb[0].mxu0 %v5326
    %v5559 = vpop.f32.mrb[0].mxu0
    %v5560 = vadd.f32 %v5351, %v5559
    %v5561 = vpop.f32.mrb[0].mxu0
    %5562 = vmatprep.mubr.f32.mxu0 0.0
    %5563 = vmatmul.mubr.f32.gmra.mrb[0].mxu0 %v5327
    %v5564 = vpop.f32.mrb[0].mxu0
    %v5565 = vadd.f32 %v5351, %v5564
    %v5566 = vpop.f32.mrb[0].mxu0
    %5567 = vmatprep.mubr.f32.mxu0 0.0
    %5568 = vmatmul.mubr.f32.gmra.mrb[0].mxu0 %v5328
    %v5569 = vpop.f32.mrb[0].mxu0
    %v5570 = vadd.f32 %v5351, %v5569
    %v5571 = vpop.f32.mrb[0].mxu0
    %5572 = vmatprep.mubr.f32.mxu0 0.0
    %5573 = vmatmul.mubr.f32.gmra.mrb[0].mxu0 %v5329
    %v5574 = vpop.f32.mrb[0].mxu0
    %v5575 = vadd.f32 %v5351, %v5574
    %v5576 = vpop.f32.mrb[0].mxu0
    %5577 = vdwg.mxu0
    %v5578 = vadd.f32 %v831, %v5420
    %v5579 = vadd.f32 %v832, %v5425
    %v5580 = vadd.f32 %v833, %v5430
    %v5581 = vadd.f32 %v834, %v5435
    %v5582 = vadd.f32 %v835, %v5440
    %v5583 = vadd.f32 %v836, %v5445
    %v5584 = vadd.f32 %v837, %v5450
    %v5585 = vadd.f32 %v838, %v5455
    %v5586 = vadd.f32 %v839, %v5460
    %v5587 = vadd.f32 %v840, %v5465
    %v5588 = vadd.f32 %v841, %v5470
    %v5589 = vadd.f32 %v842, %v5475
    %v5590 = vadd.f32 %v843, %v5480
    %v5591 = vadd.f32 %v844, %v5485
    %v5592 = vadd.f32 %v845, %v5490
    %v5593 = vadd.f32 %v846, %v5495
    %v5594 = vadd.f32 %v847, %v5500
    %v5595 = vadd.f32 %v848, %v5505
    %v5596 = vadd.f32 %v849, %v5510
    %v5597 = vadd.f32 %v850, %v5515
    %v5598 = vadd.f32 %v851, %v5520
    %v5599 = vadd.f32 %v852, %v5525
    %v5600 = vadd.f32 %v853, %v5530
    %v5601 = vadd.f32 %v854, %v5535
    %v5602 = vadd.f32 %v855, %v5540
    %v5603 = vadd.f32 %v856, %v5545
    %v5604 = vadd.f32 %v857, %v5550
    %v5605 = vadd.f32 %v858, %v5555
    %v5606 = vadd.f32 %v859, %v5560
    %v5607 = vadd.f32 %v860, %v5565
    %v5608 = vadd.f32 %v861, %v5570
    %v5609 = vadd.f32 %v862, %v5575
    %5610 = vadd.xlane.f32.xlu0 %v5578
    %v5611 = vpop.xlane.xlu0 %5610
    %5612 = vadd.xlane.f32.xlu0 %v5579
    %v5613 = vpop.xlane.xlu0 %5612
    %5614 = vadd.xlane.f32.xlu0 %v5580
    %v5615 = vpop.xlane.xlu0 %5614
    %5616 = vadd.xlane.f32.xlu0 %v5581
    %v5617 = vpop.xlane.xlu0 %5616
    %5618 = vadd.xlane.f32.xlu0 %v5582
    %v5619 = vpop.xlane.xlu0 %5618
    %5620 = vadd.xlane.f32.xlu0 %v5583
    %v5621 = vpop.xlane.xlu0 %5620
    %5622 = vadd.xlane.f32.xlu0 %v5584
    %v5623 = vpop.xlane.xlu0 %5622
    %5624 = vadd.xlane.f32.xlu0 %v5585
    %v5625 = vpop.xlane.xlu0 %5624
    %5626 = vadd.xlane.f32.xlu0 %v5586
    %v5627 = vpop.xlane.xlu0 %5626
    %5628 = vadd.xlane.f32.xlu0 %v5587
    %v5629 = vpop.xlane.xlu0 %5628
    %5630 = vadd.xlane.f32.xlu0 %v5588
    %v5631 = vpop.xlane.xlu0 %5630
    %5632 = vadd.xlane.f32.xlu0 %v5589
    %v5633 = vpop.xlane.xlu0 %5632
    %5634 = vadd.xlane.f32.xlu0 %v5590
    %v5635 = vpop.xlane.xlu0 %5634
    %5636 = vadd.xlane.f32.xlu0 %v5591
    %v5637 = vpop.xlane.xlu0 %5636
    %5638 = vadd.xlane.f32.xlu0 %v5592
    %v5639 = vpop.xlane.xlu0 %5638
    %5640 = vadd.xlane.f32.xlu0 %v5593
    %v5641 = vpop.xlane.xlu0 %5640
    %5642 = vadd.xlane.f32.xlu0 %v5594
    %v5643 = vpop.xlane.xlu0 %5642
    %5644 = vadd.xlane.f32.xlu0 %v5595
    %v5645 = vpop.xlane.xlu0 %5644
    %5646 = vadd.xlane.f32.xlu0 %v5596
    %v5647 = vpop.xlane.xlu0 %5646
    %5648 = vadd.xlane.f32.xlu0 %v5597
    %v5649 = vpop.xlane.xlu0 %5648
    %5650 = vadd.xlane.f32.xlu0 %v5598
    %v5651 = vpop.xlane.xlu0 %5650
    %5652 = vadd.xlane.f32.xlu0 %v5599
    %v5653 = vpop.xlane.xlu0 %5652
    %5654 = vadd.xlane.f32.xlu0 %v5600
    %v5655 = vpop.xlane.xlu0 %5654
    %5656 = vadd.xlane.f32.xlu0 %v5601
    %v5657 = vpop.xlane.xlu0 %5656
    %5658 = vadd.xlane.f32.xlu0 %v5602
    %v5659 = vpop.xlane.xlu0 %5658
    %5660 = vadd.xlane.f32.xlu0 %v5603
    %v5661 = vpop.xlane.xlu0 %5660
    %5662 = vadd.xlane.f32.xlu0 %v5604
    %v5663 = vpop.xlane.xlu0 %5662
    %5664 = vadd.xlane.f32.xlu0 %v5605
    %v5665 = vpop.xlane.xlu0 %5664
    %5666 = vadd.xlane.f32.xlu0 %v5606
    %v5667 = vpop.xlane.xlu0 %5666
    %5668 = vadd.xlane.f32.xlu0 %v5607
    %v5669 = vpop.xlane.xlu0 %5668
    %5670 = vadd.xlane.f32.xlu0 %v5608
    %v5671 = vpop.xlane.xlu0 %5670
    %5672 = vadd.xlane.f32.xlu0 %v5609
    %v5673 = vpop.xlane.xlu0 %5672
    %v5674 = vmul.f32 %v5611, %v674
    %v5675 = vmul.f32 %v5613, %v674
    %v5676 = vmul.f32 %v5615, %v674
    %v5677 = vmul.f32 %v5617, %v674
    %v5678 = vmul.f32 %v5619, %v674
    %v5679 = vmul.f32 %v5621, %v674
    %v5680 = vmul.f32 %v5623, %v674
    %v5681 = vmul.f32 %v5625, %v674
    %v5682 = vmul.f32 %v5627, %v674
    %v5683 = vmul.f32 %v5629, %v674
    %v5684 = vmul.f32 %v5631, %v674
    %v5685 = vmul.f32 %v5633, %v674
    %v5686 = vmul.f32 %v5635, %v674
    %v5687 = vmul.f32 %v5637, %v674
    %v5688 = vmul.f32 %v5639, %v674
    %v5689 = vmul.f32 %v5641, %v674
    %v5690 = vmul.f32 %v5643, %v674
    %v5691 = vmul.f32 %v5645, %v674
    %v5692 = vmul.f32 %v5647, %v674
    %v5693 = vmul.f32 %v5649, %v674
    %v5694 = vmul.f32 %v5651, %v674
    %v5695 = vmul.f32 %v5653, %v674
    %v5696 = vmul.f32 %v5655, %v674
    %v5697 = vmul.f32 %v5657, %v674
    %v5698 = vmul.f32 %v5659, %v674
    %v5699 = vmul.f32 %v5661, %v674
    %v5700 = vmul.f32 %v5663, %v674
    %v5701 = vmul.f32 %v5665, %v674
    %v5702 = vmul.f32 %v5667, %v674
    %v5703 = vmul.f32 %v5669, %v674
    %v5704 = vmul.f32 %v5671, %v674
    %v5705 = vmul.f32 %v5673, %v674
    %v5706 = vsub.f32 %v5578, %v5674
    %v5707 = vsub.f32 %v5579, %v5675
    %v5708 = vsub.f32 %v5580, %v5676
    %v5709 = vsub.f32 %v5581, %v5677
    %v5710 = vsub.f32 %v5582, %v5678
    %v5711 = vsub.f32 %v5583, %v5679
    %v5712 = vsub.f32 %v5584, %v5680
    %v5713 = vsub.f32 %v5585, %v5681
    %v5714 = vsub.f32 %v5586, %v5682
    %v5715 = vsub.f32 %v5587, %v5683
    %v5716 = vsub.f32 %v5588, %v5684
    %v5717 = vsub.f32 %v5589, %v5685
    %v5718 = vsub.f32 %v5590, %v5686
    %v5719 = vsub.f32 %v5591, %v5687
    %v5720 = vsub.f32 %v5592, %v5688
    %v5721 = vsub.f32 %v5593, %v5689
    %v5722 = vsub.f32 %v5594, %v5690
    %v5723 = vsub.f32 %v5595, %v5691
    %v5724 = vsub.f32 %v5596, %v5692
    %v5725 = vsub.f32 %v5597, %v5693
    %v5726 = vsub.f32 %v5598, %v5694
    %v5727 = vsub.f32 %v5599, %v5695
    %v5728 = vsub.f32 %v5600, %v5696
    %v5729 = vsub.f32 %v5601, %v5697
    %v5730 = vsub.f32 %v5602, %v5698
    %v5731 = vsub.f32 %v5603, %v5699
    %v5732 = vsub.f32 %v5604, %v5700
    %v5733 = vsub.f32 %v5605, %v5701
    %v5734 = vsub.f32 %v5606, %v5702
    %v5735 = vsub.f32 %v5607, %v5703
    %v5736 = vsub.f32 %v5608, %v5704
    %v5737 = vsub.f32 %v5609, %v5705
    %v5738 = vmul.f32 %v5706, %v5706
    %v5739 = vmul.f32 %v5707, %v5707
    %v5740 = vmul.f32 %v5708, %v5708
    %v5741 = vmul.f32 %v5709, %v5709
    %v5742 = vmul.f32 %v5710, %v5710
    %v5743 = vmul.f32 %v5711, %v5711
    %v5744 = vmul.f32 %v5712, %v5712
    %v5745 = vmul.f32 %v5713, %v5713
    %v5746 = vmul.f32 %v5714, %v5714
    %v5747 = vmul.f32 %v5715, %v5715
    %v5748 = vmul.f32 %v5716, %v5716
    %v5749 = vmul.f32 %v5717, %v5717
    %v5750 = vmul.f32 %v5718, %v5718
    %v5751 = vmul.f32 %v5719, %v5719
    %v5752 = vmul.f32 %v5720, %v5720
    %v5753 = vmul.f32 %v5721, %v5721
    %v5754 = vmul.f32 %v5722, %v5722
    %v5755 = vmul.f32 %v5723, %v5723
    %v5756 = vmul.f32 %v5724, %v5724
    %v5757 = vmul.f32 %v5725, %v5725
    %v5758 = vmul.f32 %v5726, %v5726
    %v5759 = vmul.f32 %v5727, %v5727
    %v5760 = vmul.f32 %v5728, %v5728
    %v5761 = vmul.f32 %v5729, %v5729
    %v5762 = vmul.f32 %v5730, %v5730
    %v5763 = vmul.f32 %v5731, %v5731
    %v5764 = vmul.f32 %v5732, %v5732
    %v5765 = vmul.f32 %v5733, %v5733
    %v5766 = vmul.f32 %v5734, %v5734
    %v5767 = vmul.f32 %v5735, %v5735
    %v5768 = vmul.f32 %v5736, %v5736
    %v5769 = vmul.f32 %v5737, %v5737
    %5770 = vadd.xlane.f32.xlu0 %v5738
    %v5771 = vpop.xlane.xlu0 %5770
    %5772 = vadd.xlane.f32.xlu0 %v5739
    %v5773 = vpop.xlane.xlu0 %5772
    %5774 = vadd.xlane.f32.xlu0 %v5740
    %v5775 = vpop.xlane.xlu0 %5774
    %5776 = vadd.xlane.f32.xlu0 %v5741
    %v5777 = vpop.xlane.xlu0 %5776
    %5778 = vadd.xlane.f32.xlu0 %v5742
    %v5779 = vpop.xlane.xlu0 %5778
    %5780 = vadd.xlane.f32.xlu0 %v5743
    %v5781 = vpop.xlane.xlu0 %5780
    %5782 = vadd.xlane.f32.xlu0 %v5744
    %v5783 = vpop.xlane.xlu0 %5782
    %5784 = vadd.xlane.f32.xlu0 %v5745
    %v5785 = vpop.xlane.xlu0 %5784
    %5786 = vadd.xlane.f32.xlu0 %v5746
    %v5787 = vpop.xlane.xlu0 %5786
    %5788 = vadd.xlane.f32.xlu0 %v5747
    %v5789 = vpop.xlane.xlu0 %5788
    %5790 = vadd.xlane.f32.xlu0 %v5748
    %v5791 = vpop.xlane.xlu0 %5790
    %5792 = vadd.xlane.f32.xlu0 %v5749
    %v5793 = vpop.xlane.xlu0 %5792
    %5794 = vadd.xlane.f32.xlu0 %v5750
    %v5795 = vpop.xlane.xlu0 %5794
    %5796 = vadd.xlane.f32.xlu0 %v5751
    %v5797 = vpop.xlane.xlu0 %5796
    %5798 = vadd.xlane.f32.xlu0 %v5752
    %v5799 = vpop.xlane.xlu0 %5798
    %5800 = vadd.xlane.f32.xlu0 %v5753
    %v5801 = vpop.xlane.xlu0 %5800
    %5802 = vadd.xlane.f32.xlu0 %v5754
    %v5803 = vpop.xlane.xlu0 %5802
    %5804 = vadd.xlane.f32.xlu0 %v5755
    %v5805 = vpop.xlane.xlu0 %5804
    %5806 = vadd.xlane.f32.xlu0 %v5756
    %v5807 = vpop.xlane.xlu0 %5806
    %5808 = vadd.xlane.f32.xlu0 %v5757
    %v5809 = vpop.xlane.xlu0 %5808
    %5810 = vadd.xlane.f32.xlu0 %v5758
    %v5811 = vpop.xlane.xlu0 %5810
    %5812 = vadd.xlane.f32.xlu0 %v5759
    %v5813 = vpop.xlane.xlu0 %5812
    %5814 = vadd.xlane.f32.xlu0 %v5760
    %v5815 = vpop.xlane.xlu0 %5814
    %5816 = vadd.xlane.f32.xlu0 %v5761
    %v5817 = vpop.xlane.xlu0 %5816
    %5818 = vadd.xlane.f32.xlu0 %v5762
    %v5819 = vpop.xlane.xlu0 %5818
    %5820 = vadd.xlane.f32.xlu0 %v5763
    %v5821 = vpop.xlane.xlu0 %5820
    %5822 = vadd.xlane.f32.xlu0 %v5764
    %v5823 = vpop.xlane.xlu0 %5822
    %5824 = vadd.xlane.f32.xlu0 %v5765
    %v5825 = vpop.xlane.xlu0 %5824
    %5826 = vadd.xlane.f32.xlu0 %v5766
    %v5827 = vpop.xlane.xlu0 %5826
    %5828 = vadd.xlane.f32.xlu0 %v5767
    %v5829 = vpop.xlane.xlu0 %5828
    %5830 = vadd.xlane.f32.xlu0 %v5768
    %v5831 = vpop.xlane.xlu0 %5830
    %5832 = vadd.xlane.f32.xlu0 %v5769
    %v5833 = vpop.xlane.xlu0 %5832
    %v5834 = vmul.f32 %v5771, %v674
    %v5835 = vmul.f32 %v5773, %v674
    %v5836 = vmul.f32 %v5775, %v674
    %v5837 = vmul.f32 %v5777, %v674
    %v5838 = vmul.f32 %v5779, %v674
    %v5839 = vmul.f32 %v5781, %v674
    %v5840 = vmul.f32 %v5783, %v674
    %v5841 = vmul.f32 %v5785, %v674
    %v5842 = vmul.f32 %v5787, %v674
    %v5843 = vmul.f32 %v5789, %v674
    %v5844 = vmul.f32 %v5791, %v674
    %v5845 = vmul.f32 %v5793, %v674
    %v5846 = vmul.f32 %v5795, %v674
    %v5847 = vmul.f32 %v5797, %v674
    %v5848 = vmul.f32 %v5799, %v674
    %v5849 = vmul.f32 %v5801, %v674
    %v5850 = vmul.f32 %v5803, %v674
    %v5851 = vmul.f32 %v5805, %v674
    %v5852 = vmul.f32 %v5807, %v674
    %v5853 = vmul.f32 %v5809, %v674
    %v5854 = vmul.f32 %v5811, %v674
    %v5855 = vmul.f32 %v5813, %v674
    %v5856 = vmul.f32 %v5815, %v674
    %v5857 = vmul.f32 %v5817, %v674
    %v5858 = vmul.f32 %v5819, %v674
    %v5859 = vmul.f32 %v5821, %v674
    %v5860 = vmul.f32 %v5823, %v674
    %v5861 = vmul.f32 %v5825, %v674
    %v5862 = vmul.f32 %v5827, %v674
    %v5863 = vmul.f32 %v5829, %v674
    %v5864 = vmul.f32 %v5831, %v674
    %v5865 = vmul.f32 %v5833, %v674
    %v5866 = vadd.f32 %v5834, 1e-05
    %v5867 = vadd.f32 %v5835, 1e-05
    %v5868 = vadd.f32 %v5836, 1e-05
    %v5869 = vadd.f32 %v5837, 1e-05
    %v5870 = vadd.f32 %v5838, 1e-05
    %v5871 = vadd.f32 %v5839, 1e-05
    %v5872 = vadd.f32 %v5840, 1e-05
    %v5873 = vadd.f32 %v5841, 1e-05
    %v5874 = vadd.f32 %v5842, 1e-05
    %v5875 = vadd.f32 %v5843, 1e-05
    %v5876 = vadd.f32 %v5844, 1e-05
    %v5877 = vadd.f32 %v5845, 1e-05
    %v5878 = vadd.f32 %v5846, 1e-05
    %v5879 = vadd.f32 %v5847, 1e-05
    %v5880 = vadd.f32 %v5848, 1e-05
    %v5881 = vadd.f32 %v5849, 1e-05
    %v5882 = vadd.f32 %v5850, 1e-05
    %v5883 = vadd.f32 %v5851, 1e-05
    %v5884 = vadd.f32 %v5852, 1e-05
    %v5885 = vadd.f32 %v5853, 1e-05
    %v5886 = vadd.f32 %v5854, 1e-05
    %v5887 = vadd.f32 %v5855, 1e-05
    %v5888 = vadd.f32 %v5856, 1e-05
    %v5889 = vadd.f32 %v5857, 1e-05
    %v5890 = vadd.f32 %v5858, 1e-05
    %v5891 = vadd.f32 %v5859, 1e-05
    %v5892 = vadd.f32 %v5860, 1e-05
    %v5893 = vadd.f32 %v5861, 1e-05
    %v5894 = vadd.f32 %v5862, 1e-05
    %v5895 = vadd.f32 %v5863, 1e-05
    %v5896 = vadd.f32 %v5864, 1e-05
    %v5897 = vadd.f32 %v5865, 1e-05
    %v5898 = vrsqrt.pop %v5866
    %v5899 = vrsqrt.pop %v5867
    %v5900 = vrsqrt.pop %v5868
    %v5901 = vrsqrt.pop %v5869
    %v5902 = vrsqrt.pop %v5870
    %v5903 = vrsqrt.pop %v5871
    %v5904 = vrsqrt.pop %v5872
    %v5905 = vrsqrt.pop %v5873
    %v5906 = vrsqrt.pop %v5874
    %v5907 = vrsqrt.pop %v5875
    %v5908 = vrsqrt.pop %v5876
    %v5909 = vrsqrt.pop %v5877
    %v5910 = vrsqrt.pop %v5878
    %v5911 = vrsqrt.pop %v5879
    %v5912 = vrsqrt.pop %v5880
    %v5913 = vrsqrt.pop %v5881
    %v5914 = vrsqrt.pop %v5882
    %v5915 = vrsqrt.pop %v5883
    %v5916 = vrsqrt.pop %v5884
    %v5917 = vrsqrt.pop %v5885
    %v5918 = vrsqrt.pop %v5886
    %v5919 = vrsqrt.pop %v5887
    %v5920 = vrsqrt.pop %v5888
    %v5921 = vrsqrt.pop %v5889
    %v5922 = vrsqrt.pop %v5890
    %v5923 = vrsqrt.pop %v5891
    %v5924 = vrsqrt.pop %v5892
    %v5925 = vrsqrt.pop %v5893
    %v5926 = vrsqrt.pop %v5894
    %v5927 = vrsqrt.pop %v5895
    %v5928 = vrsqrt.pop %v5896
    %v5929 = vrsqrt.pop %v5897
    %v5930 = vmul.f32 %v5706, %v5898
    %v5931 = vmul.f32 %v5707, %v5899
    %v5932 = vmul.f32 %v5708, %v5900
    %v5933 = vmul.f32 %v5709, %v5901
    %v5934 = vmul.f32 %v5710, %v5902
    %v5935 = vmul.f32 %v5711, %v5903
    %v5936 = vmul.f32 %v5712, %v5904
    %v5937 = vmul.f32 %v5713, %v5905
    %v5938 = vmul.f32 %v5714, %v5906
    %v5939 = vmul.f32 %v5715, %v5907
    %v5940 = vmul.f32 %v5716, %v5908
    %v5941 = vmul.f32 %v5717, %v5909
    %v5942 = vmul.f32 %v5718, %v5910
    %v5943 = vmul.f32 %v5719, %v5911
    %v5944 = vmul.f32 %v5720, %v5912
    %v5945 = vmul.f32 %v5721, %v5913
    %v5946 = vmul.f32 %v5722, %v5914
    %v5947 = vmul.f32 %v5723, %v5915
    %v5948 = vmul.f32 %v5724, %v5916
    %v5949 = vmul.f32 %v5725, %v5917
    %v5950 = vmul.f32 %v5726, %v5918
    %v5951 = vmul.f32 %v5727, %v5919
    %v5952 = vmul.f32 %v5728, %v5920
    %v5953 = vmul.f32 %v5729, %v5921
    %v5954 = vmul.f32 %v5730, %v5922
    %v5955 = vmul.f32 %v5731, %v5923
    %v5956 = vmul.f32 %v5732, %v5924
    %v5957 = vmul.f32 %v5733, %v5925
    %v5958 = vmul.f32 %v5734, %v5926
    %v5959 = vmul.f32 %v5735, %v5927
    %v5960 = vmul.f32 %v5736, %v5928
    %v5961 = vmul.f32 %v5737, %v5929
    %v5962 = vld [vmem:[#allocation25] sm:$0x1]
    %v5964 = vlaneseq
    %v5965 = vshrl.u32 %v5964, 7
    %v5966 = vsub.s32 0, %v5965
    %v5967 = vrot.slane %v5962, %v5966
    %v5969 = vmul.f32 %v5930, %v5967
    %v5970 = vmul.f32 %v5931, %v5967
    %v5971 = vmul.f32 %v5932, %v5967
    %v5972 = vmul.f32 %v5933, %v5967
    %v5973 = vmul.f32 %v5934, %v5967
    %v5974 = vmul.f32 %v5935, %v5967
    %v5975 = vmul.f32 %v5936, %v5967
    %v5976 = vmul.f32 %v5937, %v5967
    %v5977 = vmul.f32 %v5938, %v5967
    %v5978 = vmul.f32 %v5939, %v5967
    %v5979 = vmul.f32 %v5940, %v5967
    %v5980 = vmul.f32 %v5941, %v5967
    %v5981 = vmul.f32 %v5942, %v5967
    %v5982 = vmul.f32 %v5943, %v5967
    %v5983 = vmul.f32 %v5944, %v5967
    %v5984 = vmul.f32 %v5945, %v5967
    %v5985 = vmul.f32 %v5946, %v5967
    %v5986 = vmul.f32 %v5947, %v5967
    %v5987 = vmul.f32 %v5948, %v5967
    %v5988 = vmul.f32 %v5949, %v5967
    %v5989 = vmul.f32 %v5950, %v5967
    %v5990 = vmul.f32 %v5951, %v5967
    %v5991 = vmul.f32 %v5952, %v5967
    %v5992 = vmul.f32 %v5953, %v5967
    %v5993 = vmul.f32 %v5954, %v5967
    %v5994 = vmul.f32 %v5955, %v5967
    %v5995 = vmul.f32 %v5956, %v5967
    %v5996 = vmul.f32 %v5957, %v5967
    %v5997 = vmul.f32 %v5958, %v5967
    %v5998 = vmul.f32 %v5959, %v5967
    %v5999 = vmul.f32 %v5960, %v5967
    %v6000 = vmul.f32 %v5961, %v5967
    %v6001 = vld [vmem:[#allocation26] sm:$0x1]
    %v6003 = vlaneseq
    %v6004 = vshrl.u32 %v6003, 7
    %v6005 = vsub.s32 0, %v6004
    %v6006 = vrot.slane %v6001, %v6005
    %v6008 = vadd.f32 %v5969, %v6006
    %v6009 = vadd.f32 %v5970, %v6006
    %v6010 = vadd.f32 %v5971, %v6006
    %v6011 = vadd.f32 %v5972, %v6006
    %v6012 = vadd.f32 %v5973, %v6006
    %v6013 = vadd.f32 %v5974, %v6006
    %v6014 = vadd.f32 %v5975, %v6006
    %v6015 = vadd.f32 %v5976, %v6006
    %v6016 = vadd.f32 %v5977, %v6006
    %v6017 = vadd.f32 %v5978, %v6006
    %v6018 = vadd.f32 %v5979, %v6006
    %v6019 = vadd.f32 %v5980, %v6006
    %v6020 = vadd.f32 %v5981, %v6006
    %v6021 = vadd.f32 %v5982, %v6006
    %v6022 = vadd.f32 %v5983, %v6006
    %v6023 = vadd.f32 %v5984, %v6006
    %v6024 = vadd.f32 %v5985, %v6006
    %v6025 = vadd.f32 %v5986, %v6006
    %v6026 = vadd.f32 %v5987, %v6006
    %v6027 = vadd.f32 %v5988, %v6006
    %v6028 = vadd.f32 %v5989, %v6006
    %v6029 = vadd.f32 %v5990, %v6006
    %v6030 = vadd.f32 %v5991, %v6006
    %v6031 = vadd.f32 %v5992, %v6006
    %v6032 = vadd.f32 %v5993, %v6006
    %v6033 = vadd.f32 %v5994, %v6006
    %v6034 = vadd.f32 %v5995, %v6006
    %v6035 = vadd.f32 %v5996, %v6006
    %v6036 = vadd.f32 %v5997, %v6006
    %v6037 = vadd.f32 %v5998, %v6006
    %v6038 = vadd.f32 %v5999, %v6006
    %v6039 = vadd.f32 %v6000, %v6006
    %v6040 = vadd.f32 %v6008, %v6009
    %v6041 = vadd.f32 %v6040, %v6010
    %v6042 = vadd.f32 %v6041, %v6011
    %v6043 = vadd.f32 %v6042, %v6012
    %v6044 = vadd.f32 %v6043, %v6013
    %v6045 = vadd.f32 %v6044, %v6014
    %v6046 = vadd.f32 %v6045, %v6015
    %v6047 = vadd.f32 %v6046, %v6016
    %v6048 = vadd.f32 %v6047, %v6017
    %v6049 = vadd.f32 %v6048, %v6018
    %v6050 = vadd.f32 %v6049, %v6019
    %v6051 = vadd.f32 %v6050, %v6020
    %v6052 = vadd.f32 %v6051, %v6021
    %v6053 = vadd.f32 %v6052, %v6022
    %v6054 = vadd.f32 %v6053, %v6023
    %v6055 = vrot.slane %v6054, 4
    %v6056 = vadd.f32 %v6054, %v6055
    %v6057 = vrot.slane %v6056, 2
    %v6058 = vadd.f32 %v6056, %v6057
    %v6059 = vrot.slane %v6058, 1
    %v6060 = vadd.f32 %v6058, %v6059
    %v6061 = vadd.f32 %v6024, %v6025
    %v6062 = vadd.f32 %v6061, %v6026
    %v6063 = vadd.f32 %v6062, %v6027
    %v6064 = vadd.f32 %v6063, %v6028
    %v6065 = vadd.f32 %v6064, %v6029
    %v6066 = vadd.f32 %v6065, %v6030
    %v6067 = vadd.f32 %v6066, %v6031
    %v6068 = vadd.f32 %v6067, %v6032
    %v6069 = vadd.f32 %v6068, %v6033
    %v6070 = vadd.f32 %v6069, %v6034
    %v6071 = vadd.f32 %v6070, %v6035
    %v6072 = vadd.f32 %v6071, %v6036
    %v6073 = vadd.f32 %v6072, %v6037
    %v6074 = vadd.f32 %v6073, %v6038
    %v6075 = vadd.f32 %v6074, %v6039
    %v6076 = vrot.slane %v6075, 4
    %v6077 = vadd.f32 %v6075, %v6076
    %v6078 = vrot.slane %v6077, 2
    %v6079 = vadd.f32 %v6077, %v6078
    %v6080 = vrot.slane %v6079, 1
    %v6081 = vadd.f32 %v6079, %v6080
    %v6082 = vmul.f32 %v6060, %v674
    %v6083 = vmul.f32 %v6081, %v674
    %v6084 = vld [vmem:[%s18] sm:$0xff]
    %v6085 = vld [vmem:[%s18 + $0x8] sm:$0xff]
    %v6086 = vld [vmem:[%s18 + $0x10] sm:$0xff]
    %v6087 = vld [vmem:[%s18 + $0x18] sm:$0xff]
    %v6088 = vld [vmem:[%s18 + $0x20] sm:$0xff]
    %v6089 = vld [vmem:[%s18 + $0x28] sm:$0xff]
    %v6090 = vld [vmem:[%s18 + $0x30] sm:$0xff]
    %v6091 = vld [vmem:[%s18 + $0x38] sm:$0xff]
    %v6092 = vld [vmem:[%s18 + $0x40] sm:$0xff]
    %v6093 = vld [vmem:[%s18 + $0x48] sm:$0xff]
    %v6094 = vld [vmem:[%s18 + $0x50] sm:$0xff]
    %v6095 = vld [vmem:[%s18 + $0x58] sm:$0xff]
    %v6096 = vld [vmem:[%s18 + $0x60] sm:$0xff]
    %v6097 = vld [vmem:[%s18 + $0x68] sm:$0xff]
    %v6098 = vld [vmem:[%s18 + $0x70] sm:$0xff]
    %v6099 = vld [vmem:[%s18 + $0x78] sm:$0xff]
    %v6100 = vld [vmem:[%s19] sm:$0x1]
    %v6102 = vlaneseq
    %v6103 = vshrl.u32 %v6102, 7
    %v6104 = vsub.s32 0, %v6103
    %v6105 = vrot.slane %v6100, %v6104
    %v6109 = vsel %vm309, %v6083, %v6082
    %6111 = vmatprep.subr.mxu0 0.0
    %6112 = vmatpush1.msra.mxu0 %v6084
    %6113 = vmatprep.subr.mxu0 0.0
    %6114 = vmatpush1.msra.mxu0 %v6085
    %6115 = vmatprep.subr.mxu0 0.0
    %6116 = vmatpush1.msra.mxu0 %v6086
    %6117 = vmatprep.subr.mxu0 0.0
    %6118 = vmatpush1.msra.mxu0 %v6087
    %6119 = vmatprep.subr.mxu0 0.0
    %6120 = vmatpush1.msra.mxu0 %v6088
    %6121 = vmatprep.subr.mxu0 0.0
    %6122 = vmatpush1.msra.mxu0 %v6089
    %6123 = vmatprep.subr.mxu0 0.0
    %6124 = vmatpush1.msra.mxu0 %v6090
    %6125 = vmatprep.subr.mxu0 0.0
    %6126 = vmatpush1.msra.mxu0 %v6091
    %6127 = vmatprep.subr.mxu0 0.0
    %6128 = vmatpush1.msra.mxu0 %v6092
    %6129 = vmatprep.subr.mxu0 0.0
    %6130 = vmatpush1.msra.mxu0 %v6093
    %6131 = vmatprep.subr.mxu0 0.0
    %6132 = vmatpush1.msra.mxu0 %v6094
    %6133 = vmatprep.subr.mxu0 0.0
    %6134 = vmatpush1.msra.mxu0 %v6095
    %6135 = vmatprep.subr.mxu0 0.0
    %6136 = vmatpush1.msra.mxu0 %v6096
    %6137 = vmatprep.subr.mxu0 0.0
    %6138 = vmatpush1.msra.mxu0 %v6097
    %6139 = vmatprep.subr.mxu0 0.0
    %6140 = vmatpush1.msra.mxu0 %v6098
    %6141 = vmatprep.subr.mxu0 0.0
    %6142 = vmatpush1.msra.mxu0 %v6099
    %6143 = vmatprep.subr.mxu0 0.0
    %6144 = vmatpush1.msra.mxu0 0.0
    %6145 = vmatprep.subr.mxu0 0.0
    %6146 = vmatpush1.msra.mxu0 0.0
    %6147 = vmatprep.subr.mxu0 0.0
    %6148 = vmatpush1.msra.mxu0 0.0
    %6149 = vmatprep.subr.mxu0 0.0
    %6150 = vmatpush1.msra.mxu0 0.0
    %6151 = vmatprep.subr.mxu0 0.0
    %6152 = vmatpush1.msra.mxu0 0.0
    %6153 = vmatprep.subr.mxu0 0.0
    %6154 = vmatpush1.msra.mxu0 0.0
    %6155 = vmatprep.subr.mxu0 0.0
    %6156 = vmatpush1.msra.mxu0 0.0
    %6157 = vmatprep.subr.mxu0 0.0
    %6158 = vmatpush1.msra.mxu0 0.0
    %6159 = vmatprep.subr.mxu0 0.0
    %6160 = vmatpush1.msra.mxu0 0.0
    %6161 = vmatprep.subr.mxu0 0.0
    %6162 = vmatpush1.msra.mxu0 0.0
    %6163 = vmatprep.subr.mxu0 0.0
    %6164 = vmatpush1.msra.mxu0 0.0
    %6165 = vmatprep.subr.mxu0 0.0
    %6166 = vmatpush1.msra.mxu0 0.0
    %6167 = vmatprep.subr.mxu0 0.0
    %6168 = vmatpush1.msra.mxu0 0.0
    %6169 = vmatprep.subr.mxu0 0.0
    %6170 = vmatpush1.msra.mxu0 0.0
    %6171 = vmatprep.subr.mxu0 0.0
    %6172 = vmatpush1.msra.mxu0 0.0
    %6173 = vmatprep.subr.mxu0 0.0
    %6174 = vmatpush1.msra.mxu0 0.0
    %6175 = vmatprep.mubr.f32.mxu0 0.0
    %6176 = vmatmul.mubr.f32.gmra.mrb[0].mxu0 %v6109
    %v6177 = vpop.f32.mrb[0].mxu0
    %v6178 = vadd.f32 %v6105, %v6177
    %v6179 = vpop.f32.mrb[0].mxu0
    %6180 = vdwg.mxu0
    %v6181 = vmul.f32 %v6178, %v6178
    %v6182 = vmul.f32 %v6178, %v6181
    %v6183 = vmul.f32 %v6182, 0.044715
    %v6184 = vadd.f32 %v6178, %v6183
    %v6185 = vmul.f32 %v6184, 0.7978846
    %v6186 = vtanh.pop %v6185
    %v6187 = vadd.f32 %v6186, 1.0
    %v6188 = vmul.f32 %v6187, 0.5
    %v6189 = vmul.f32 %v6178, %v6188
    %v6190 = vld [vmem:[%s20] sm:$0xff]
    %v6191 = vld [vmem:[%s20 + $0x8] sm:$0xff]
    %v6192 = vld [vmem:[%s20 + $0x10] sm:$0xff]
    %v6193 = vld [vmem:[%s20 + $0x18] sm:$0xff]
    %v6194 = vld [vmem:[%s20 + $0x20] sm:$0xff]
    %v6195 = vld [vmem:[%s20 + $0x28] sm:$0xff]
    %v6196 = vld [vmem:[%s20 + $0x30] sm:$0xff]
    %v6197 = vld [vmem:[%s20 + $0x38] sm:$0xff]
    %v6198 = vld [vmem:[%s21] sm:$0x1]
    %v6200 = vlaneseq
    %v6201 = vshrl.u32 %v6200, 7
    %v6202 = vsub.s32 0, %v6201
    %v6203 = vrot.slane %v6198, %v6202
    %vm6205 = vcmask 523264
    %v6207 = vsel %vm6205, %v6189, 0
    %6209 = vmatprep.subr.mxu0 0.0
    %6210 = vmatpush1.msra.mxu0 %v6190
    %6211 = vmatprep.subr.mxu0 0.0
    %6212 = vmatpush1.msra.mxu0 %v6191
    %6213 = vmatprep.subr.mxu0 0.0
    %6214 = vmatpush1.msra.mxu0 %v6192
    %6215 = vmatprep.subr.mxu0 0.0
    %6216 = vmatpush1.msra.mxu0 %v6193
    %6217 = vmatprep.subr.mxu0 0.0
    %6218 = vmatpush1.msra.mxu0 %v6194
    %6219 = vmatprep.subr.mxu0 0.0
    %6220 = vmatpush1.msra.mxu0 %v6195
    %6221 = vmatprep.subr.mxu0 0.0
    %6222 = vmatpush1.msra.mxu0 %v6196
    %6223 = vmatprep.subr.mxu0 0.0
    %6224 = vmatpush1.msra.mxu0 %v6197
    %6225 = vmatprep.subr.mxu0 0.0
    %6226 = vmatpush1.msra.mxu0 0.0
    %6227 = vmatprep.subr.mxu0 0.0
    %6228 = vmatpush1.msra.mxu0 0.0
    %6229 = vmatprep.subr.mxu0 0.0
    %6230 = vmatpush1.msra.mxu0 0.0
    %6231 = vmatprep.subr.mxu0 0.0
    %6232 = vmatpush1.msra.mxu0 0.0
    %6233 = vmatprep.subr.mxu0 0.0
    %6234 = vmatpush1.msra.mxu0 0.0
    %6235 = vmatprep.subr.mxu0 0.0
    %6236 = vmatpush1.msra.mxu0 0.0
    %6237 = vmatprep.subr.mxu0 0.0
    %6238 = vmatpush1.msra.mxu0 0.0
    %6239 = vmatprep.subr.mxu0 0.0
    %6240 = vmatpush1.msra.mxu0 0.0
    %6241 = vmatprep.subr.mxu0 0.0
    %6242 = vmatpush1.msra.mxu0 0.0
    %6243 = vmatprep.subr.mxu0 0.0
    %6244 = vmatpush1.msra.mxu0 0.0
    %6245 = vmatprep.subr.mxu0 0.0
    %6246 = vmatpush1.msra.mxu0 0.0
    %6247 = vmatprep.subr.mxu0 0.0
    %6248 = vmatpush1.msra.mxu0 0.0
    %6249 = vmatprep.subr.mxu0 0.0
    %6250 = vmatpush1.msra.mxu0 0.0
    %6251 = vmatprep.subr.mxu0 0.0
    %6252 = vmatpush1.msra.mxu0 0.0
    %6253 = vmatprep.subr.mxu0 0.0
    %6254 = vmatpush1.msra.mxu0 0.0
    %6255 = vmatprep.subr.mxu0 0.0
    %6256 = vmatpush1.msra.mxu0 0.0
    %6257 = vmatprep.subr.mxu0 0.0
    %6258 = vmatpush1.msra.mxu0 0.0
    %6259 = vmatprep.subr.mxu0 0.0
    %6260 = vmatpush1.msra.mxu0 0.0
    %6261 = vmatprep.subr.mxu0 0.0
    %6262 = vmatpush1.msra.mxu0 0.0
    %6263 = vmatprep.subr.mxu0 0.0
    %6264 = vmatpush1.msra.mxu0 0.0
    %6265 = vmatprep.subr.mxu0 0.0
    %6266 = vmatpush1.msra.mxu0 0.0
    %6267 = vmatprep.subr.mxu0 0.0
    %6268 = vmatpush1.msra.mxu0 0.0
    %6269 = vmatprep.subr.mxu0 0.0
    %6270 = vmatpush1.msra.mxu0 0.0
    %6271 = vmatprep.subr.mxu0 0.0
    %6272 = vmatpush1.msra.mxu0 0.0
    %6273 = vmatprep.mubr.f32.mxu0 0.0
    %6274 = vmatmul.mubr.f32.gmra.mrb[0].mxu0 %v6207
    %v6275 = vpop.f32.mrb[0].mxu0
    %v6276 = vadd.f32 %v6203, %v6275
    %v6277 = vpop.f32.mrb[0].mxu0
    %6278 = vdwg.mxu0
    %6279 = vst [vmem:[#allocation28] sm:$0x3] %v6276
    // Predicated region
    $region154: #{tpu_custom_call.1} parent=1 // pred_check
      _
    $region155: #{tpu_custom_call.1} parent=1 // pred_check_branch
      %6281 = sbr.rel (0) target = $region157
    $region156: #{tpu_custom_call.1} parent=1 // pred_region
      %s6283 = ssub.s32 32, 32
      %6284 = vsyncadd [#allocation4], %s6283
      %s6286 = sshll.u32 [#allocation28], 4
      %s6287 = int_to_ptr.vmem [resolvable:$true] %s6286
      %6289 = dma.vmem_to_hbm [thread:$0]  %s6287, 32, %s22, [#allocation4]
    $region157: #{tpu_custom_call.1} parent=1 // pred_fallthru
      _
    // Predicated region
    $region158: #{tpu_custom_call.1} parent=1 // pred_check
      _
    $region159: #{tpu_custom_call.1} parent=1 // pred_check_branch
      %6291 = sbr.rel (0) target = $region161
    $region160: #{tpu_custom_call.1} parent=1 // pred_region
      %6292 = dma.done [#allocation4], 32
    $region161: #{tpu_custom_call.1} parent=1 // pred_fallthru
      _
    %6293 = vsyncpa [#allocation3], 1
    %6294 = vsyncpa [#allocation6], 1
    %6295 = vsyncpa [#allocation9], 1
    %6296 = vsyncpa [#allocation12], 1
    %6297 = vsyncpa [#allocation15], 1
    %6298 = vsyncpa [#allocation18], 1
    %6299 = vsyncpa [#allocation21], 1
    %6300 = vsyncpa [#allocation24], 1
    %6301 = vsyncpa [#allocation27], 1
    %6302 = vsyncpa [#allocation4], 1

</llo_original>
